<compile_context>
chip_gen: v6e
topology: v6e:2x2x1
jax: 0.10.0
libtpu: 0.0.40
codegen_flags: <defaults>
</compile_context>

<pallas_src>
import math
import numpy as np
import jax
import jax.numpy as jnp
from jax.experimental import pallas as pl
from jax.experimental.pallas import tpu as pltpu


def _cdiv(a, b):
    return -(-a // b)


# ---------------------------------------------------------------------------
# Kernel 1: 3x3x3 conv as one im2col matmul per depth tile + BN stat partials
# ---------------------------------------------------------------------------
def _make_conv_kernel(TL, PP, W2):
    """TL: rows per tile (whole padded planes), PP=(H+2)*(W+2), W2=W+2."""
    L1 = TL + 2 * PP + 2 * W2          # rows needed after folding kw
    L2 = TL + 2 * PP                   # rows needed after folding kh

    def kernel(cur_ref, nxt_ref, w_ref, mask_ref, y_ref, ps_ref, pq_ref):
        # Halo'd window for this tile: current depth tile + next tile.  Promote to
        # f32 so the sublane-unaligned static slices below use the plain (8,128)
        # layout (the HBM copies stay bf16).
        window = jnp.concatenate(
            [cur_ref[...].astype(jnp.float32), nxt_ref[...].astype(jnp.float32)],
            axis=0)                                                   # (2*TL, Cin)

        # In-VMEM im2col: fold kw, then kh, then kd into the lane axis.
        # Lane order: ((kd*3 + kh)*3 + kw)*Cin + ci == w.reshape(27*Cin, Cout).
        a = jnp.concatenate([window[kw:kw + L1, :] for kw in range(3)], axis=-1)
        b = jnp.concatenate([a[kh * W2:kh * W2 + L2, :] for kh in range(3)], axis=-1)
        im = jnp.concatenate([b[kd * PP:kd * PP + TL, :] for kd in range(3)], axis=-1)

        # One big-K matmul on the MXU (bf16 operands, f32 accumulation).
        acc = jnp.dot(im.astype(jnp.bfloat16), w_ref[...],
                      preferred_element_type=jnp.float32)             # (TL, Cout)
        y_ref[...] = acc.astype(y_ref.dtype)

        # Per-tile BatchNorm statistics over valid voxels only (mask removes the
        # H/W halo columns and depth rows beyond D).  Emitted as per-step partials
        # so the grid stays fully "parallel"; the wrapper reduces them.
        macc = acc * mask_ref[...]                                    # (TL, Cout)
        ps = jnp.sum(macc, axis=0, keepdims=True)                     # (1, Cout)
        pq = jnp.sum(macc * acc, axis=0, keepdims=True)               # (1, Cout)
        ps_ref[...] = jnp.broadcast_to(ps, ps_ref.shape)
        pq_ref[...] = jnp.broadcast_to(pq, pq_ref.shape)

    return kernel


def _conv_stats_call(x_flat, w_col, mask, *, N, Cin, Cout, TL, n_tiles, PP, W2):
    Lpad = n_tiles * TL
    kernel = _make_conv_kernel(TL, PP, W2)
    y, ps, pq = pl.pallas_call(
        kernel,
        out_shape=(jax.ShapeDtypeStruct((N, Lpad, Cout), jnp.bfloat16),
                   jax.ShapeDtypeStruct((N, n_tiles * 8, Cout), jnp.float32),
                   jax.ShapeDtypeStruct((N, n_tiles * 8, Cout), jnp.float32)),
        grid=(N, n_tiles),
        in_specs=[
            pl.BlockSpec((None, TL, Cin), lambda n, l: (n, l, 0)),      # current tile
            pl.BlockSpec((None, TL, Cin), lambda n, l: (n, l + 1, 0)),  # halo = next tile
            pl.BlockSpec(w_col.shape, lambda n, l: (0, 0)),             # im2col weights
            pl.BlockSpec((TL, 1), lambda n, l: (l, 0)),                 # validity mask
        ],
        out_specs=(
            pl.BlockSpec((None, TL, Cout), lambda n, l: (n, l, 0)),     # pre-BN conv out
            pl.BlockSpec((None, 8, Cout), lambda n, l: (n, l, 0)),      # partial sum
            pl.BlockSpec((None, 8, Cout), lambda n, l: (n, l, 0)),      # partial sum-sq
        ),
        compiler_params=pltpu.CompilerParams(
            # No cross-step accumulation -> both grid axes parallel (uses both
            # TensorCores on v7x; free on v5e/v6e).
            dimension_semantics=("parallel", "parallel"),
            # Tiles are a few padded planes each; 32 MiB is safe on v5e/v6e/v7x.
            # For larger volumes/channels, shrink target_rows (v7x: ~half of v6e).
            vmem_limit_bytes=32 * 1024 * 1024),
    )(x_flat, x_flat, w_col, mask)
    return y, ps, pq


# ---------------------------------------------------------------------------
# Kernel 2: fused BatchNorm affine (precomputed scale/shift) + ReLU, lane-dense
# ---------------------------------------------------------------------------
def _bn_relu_kernel(y_ref, sc_ref, sh_ref, o_ref):
    y = y_ref[...].astype(jnp.float32)
    o_ref[...] = jnp.maximum(y * sc_ref[...] + sh_ref[...], 0.0).astype(o_ref.dtype)


def _pick_row_tile(rows, max_rows=1024):
    if rows <= max_rows:
        return rows
    for d in range(max_rows, 0, -1):
        if rows % d == 0 and d % 8 == 0:
            return d
    return rows


def _bn_relu_call(y, scale, shift, *, out_dtype):
    N, Lp, C = y.shape
    total = N * Lp * C
    scale = scale.astype(jnp.float32)
    shift = shift.astype(jnp.float32)

    if 128 % C == 0 and total % 128 == 0:
        # Lane-dense view: each 128-lane row holds (128 // C) voxels x C channels,
        # with the per-channel scale/shift tiled across the 128 lanes.
        R = total // 128
        TR = _pick_row_tile(R)
        y2d = y.reshape(R, 128)
        sc = jnp.tile(scale, 128 // C).reshape(1, 128)
        sh = jnp.tile(shift, 128 // C).reshape(1, 128)
        out = pl.pallas_call(
            _bn_relu_kernel,
            out_shape=jax.ShapeDtypeStruct((R, 128), out_dtype),
            grid=(R // TR,),
            in_specs=[pl.BlockSpec((TR, 128), lambda r: (r, 0)),
                      pl.BlockSpec((1, 128), lambda r: (0, 0)),
                      pl.BlockSpec((1, 128), lambda r: (0, 0))],
            out_specs=pl.BlockSpec((TR, 128), lambda r: (r, 0)),
            compiler_params=pltpu.CompilerParams(dimension_semantics=("parallel",)),
        )(y2d, sc, sh)
        return out.reshape(N, Lp, C)

    # Fallback (channel counts not dividing 128): plain (rows, C) blocks, which are
    # already lane-dense when C is a multiple of 128.
    rows = N * Lp
    TRr = _pick_row_tile(rows)
    y2d = y.reshape(rows, C)
    out = pl.pallas_call(
        _bn_relu_kernel,
        out_shape=jax.ShapeDtypeStruct((rows, C), out_dtype),
        grid=(rows // TRr,),
        in_specs=[pl.BlockSpec((TRr, C), lambda r: (r, 0)),
                  pl.BlockSpec((1, C), lambda r: (0, 0)),
                  pl.BlockSpec((1, C), lambda r: (0, 0))],
        out_specs=pl.BlockSpec((TRr, C), lambda r: (r, 0)),
        compiler_params=pltpu.CompilerParams(dimension_semantics=("parallel",)),
    )(y2d, scale.reshape(1, C), shift.reshape(1, C))
    return out.reshape(N, Lp, C)


# ---------------------------------------------------------------------------
# One Conv3d + BatchNorm3d(train) + ReLU stage
# ---------------------------------------------------------------------------
def _choose_depth_tile(D, PP, target_rows=512):
    """Tile the depth axis in whole padded (H+2)*(W+2) planes.

    (t * PP) is kept a multiple of 8 (sublane tile) and at least 3 planes so the
    3x3x3 halo of a tile is fully covered by the next tile.
    """
    t0 = 8 // math.gcd(PP, 8)
    t = max(1, _cdiv(target_rows, PP))
    t = _cdiv(t, t0) * t0
    t = min(t, _cdiv(D, t0) * t0)        # never coarser than the whole volume
    t = max(t, _cdiv(3, t0) * t0)        # halo (< 3 planes) must fit in one tile
    TL = t * PP
    n_tiles = _cdiv(D, t)
    return TL, n_tiles


def _conv_bn_relu_stage(x_ndhwc, w_dhwio, gamma, beta, *, eps=1e-5,
                        out_dtype=jnp.bfloat16, target_rows=512):
    N, D, H, W, Cin = x_ndhwc.shape
    Cout = w_dhwio.shape[-1]
    W2 = W + 2
    PP = (H + 2) * W2                                   # rows per padded depth plane
    TL, n_tiles = _choose_depth_tile(D, PP, target_rows)
    Lpad = n_tiles * TL
    Sp = (D + 2) * PP                                   # rows of the zero-padded volume
    Sp_pad = (n_tiles + 1) * TL                         # + one tile so the halo block fits
    halo = 2 * PP + 2 * W2 + 2
    assert TL % 8 == 0 and halo <= TL and Sp_pad >= Sp

    # Zero-pad (SAME for 3x3x3), flatten the padded spatial dims, cast to bf16 once.
    xp = jnp.pad(x_ndhwc, ((0, 0), (1, 1), (1, 1), (1, 1), (0, 0)))
    x_flat = xp.reshape(N, Sp, Cin)
    x_flat = jnp.pad(x_flat, ((0, 0), (0, Sp_pad - Sp), (0, 0))).astype(jnp.bfloat16)

    # im2col weights: (27*Cin, Cout) in (kd, kh, kw, ci) order.
    w_col = w_dhwio.reshape(27 * Cin, Cout).astype(jnp.bfloat16)

    # Validity mask over the padded-output layout (drops H/W halo columns, depth rows
    # beyond D and tile-tail padding); only used for the BN statistics.
    q = np.arange(Lpad)
    rem = q % PP
    valid = (q // PP < D) & (rem // W2 < H) & (rem % W2 < W)
    mask = jnp.asarray(valid.astype(np.float32)[:, None])              # (Lpad, 1)

    y, ps, pq = _conv_stats_call(x_flat, w_col, mask, N=N, Cin=Cin, Cout=Cout,
                                 TL=TL, n_tiles=n_tiles, PP=PP, W2=W2)

    # Training-mode BatchNorm statistics from the per-tile partials.  The conv bias
    # is omitted entirely: the batch-mean subtraction absorbs it exactly.
    cnt = float(N * D * H * W)
    s = ps.reshape(N * n_tiles, 8, Cout)[:, 0, :].sum(axis=0)
    ss = pq.reshape(N * n_tiles, 8, Cout)[:, 0, :].sum(axis=0)
    mean = s / cnt
    var = ss / cnt - mean * mean                        # biased var (PyTorch train BN)
    scale = gamma / jnp.sqrt(var + eps)
    shift = beta - mean * scale

    act = _bn_relu_call(y, scale, shift, out_dtype=out_dtype)          # (N, Lpad, Cout)
    act = act.reshape(N, Lpad // PP, H + 2, W + 2, Cout)[:, :D, :H, :W, :]
    return act


# ---------------------------------------------------------------------------
# Double_Conv forward (NCDHW in, NCDHW out — matches the PyTorch module)
# ---------------------------------------------------------------------------
def double_conv_forward(x_ncdhw, params, eps=1e-5):
    # params["b1"], params["b2"] (conv biases) are accepted for interface parity but
    # unused: train-mode BatchNorm absorbs them exactly.
    x = jnp.transpose(x_ncdhw, (0, 2, 3, 4, 1)).astype(jnp.float32)    # NCDHW -> NDHWC
    a1 = _conv_bn_relu_stage(x, params["w1"], params["g1"], params["beta1"],
                             eps=eps, out_dtype=jnp.bfloat16)
    a2 = _conv_bn_relu_stage(a1, params["w2"], params["g2"], params["beta2"],
                             eps=eps, out_dtype=jnp.float32)
    return jnp.transpose(a2, (0, 4, 1, 2, 3))                          # -> NCDHW


# ---------------------------------------------------------------------------
# Pure-JAX reference (lax conv + bias + training-mode BN + ReLU) for validation
# ---------------------------------------------------------------------------
def ref_double_conv(x_ncdhw, params, eps=1e-5):
    x = jnp.transpose(x_ncdhw, (0, 2, 3, 4, 1)).astype(jnp.float32)

    def block(x, w, b, g, be):
        y = jax.lax.conv_general_dilated(
            x, w, window_strides=(1, 1, 1),
            padding=((1, 1), (1, 1), (1, 1)),
            dimension_numbers=("NDHWC", "DHWIO", "NDHWC"),
            precision=jax.lax.Precision.HIGHEST) + b
        m = jnp.mean(y, axis=(0, 1, 2, 3))
        v = jnp.mean((y - m) ** 2, axis=(0, 1, 2, 3))
        return jnp.maximum((y - m) / jnp.sqrt(v + eps) * g + be, 0.0)

    a1 = block(x, params["w1"], params["b1"], params["g1"], params["beta1"])
    a2 = block(a1, params["w2"], params["b2"], params["g2"], params["beta2"])
    return jnp.transpose(a2, (0, 4, 1, 2, 3))


if __name__ == "__main__":
    key = jax.random.PRNGKey(0)
    N, Cin, Cout, D, H, W = 2, 4, 8, 10, 8, 8

    ks = jax.random.split(key, 9)
    fan1 = float(Cin * 27)
    fan2 = float(Cout * 27)
    # Deterministic synthetic init; weights stored as (kd,kh,kw,Cin,Cout), i.e. the
    # transpose of Conv3d's (Cout,Cin,kd,kh,kw).
    params = {
        "w1": jax.random.uniform(ks[0], (3, 3, 3, Cin, Cout), jnp.float32, -1.0, 1.0) / np.sqrt(fan1),
        "b1": jax.random.uniform(ks[1], (Cout,), jnp.float32, -1.0, 1.0) / np.sqrt(fan1),
        "g1": 1.0 + 0.1 * jax.random.normal(ks[2], (Cout,), jnp.float32),
        "beta1": 0.1 * jax.random.normal(ks[3], (Cout,), jnp.float32),
        "w2": jax.random.uniform(ks[4], (3, 3, 3, Cout, Cout), jnp.float32, -1.0, 1.0) / np.sqrt(fan2),
        "b2": jax.random.uniform(ks[5], (Cout,), jnp.float32, -1.0, 1.0) / np.sqrt(fan2),
        "g2": 1.0 + 0.1 * jax.random.normal(ks[6], (Cout,), jnp.float32),
        "beta2": 0.1 * jax.random.normal(ks[7], (Cout,), jnp.float32),
    }
    x = jax.random.normal(ks[8], (N, Cin, D, H, W), jnp.float32)       # NCDHW like PyTorch

    out = jax.jit(double_conv_forward)(x, params)
    out = jax.block_until_ready(out)
    assert out.shape == (N, Cout, D, H, W)

    # Tolerance sized for two stacked conv+BN layers with bf16 MXU operands.
    ref = ref_double_conv(x, params)
    np.testing.assert_allclose(np.asarray(out), np.asarray(ref), rtol=3e-2, atol=3e-2)

    print("KERNEL_OK")
</pallas_src>

<mosaic_0001>
module attributes {stable_mosaic.version = 11 : i64} {
  func.func @kernel(%arg0: i32, %arg1: i32, %arg2: memref<1x600x4xbf16, #tpu.memory_space<vmem>>, %arg3: memref<1x600x4xbf16, #tpu.memory_space<vmem>>, %arg4: memref<108x8xbf16, #tpu.memory_space<vmem>>, %arg5: memref<600x1xf32, #tpu.memory_space<vmem>>, %arg6: memref<1x600x8xbf16, #tpu.memory_space<vmem>>, %arg7: memref<1x8x8xf32, #tpu.memory_space<vmem>>, %arg8: memref<1x8x8xf32, #tpu.memory_space<vmem>>) attributes {dimension_semantics = [#tpu.dimension_semantics<parallel>, #tpu.dimension_semantics<parallel>], iteration_bounds = array<i64: 2, 2>, scalar_prefetch = 0 : i64, scratch_operands = 0 : i64, tpu.core_type = #tpu.core_type<tc>, window_params = [{transform_indices = @transform_0, window_bounds = array<i64: 1, 600, 4>}, {transform_indices = @transform_1, window_bounds = array<i64: 1, 600, 4>}, {pipeline_mode = #tpu.pipeline_mode<synchronous>, transform_indices = @transform_2, window_bounds = array<i64: 108, 8>}, {transform_indices = @transform_3, window_bounds = array<i64: 600, 1>}, {transform_indices = @transform_4, window_bounds = array<i64: 1, 600, 8>}, {transform_indices = @transform_5, window_bounds = array<i64: 1, 8, 8>}, {transform_indices = @transform_6, window_bounds = array<i64: 1, 8, 8>}]} {
    %c0 = arith.constant 0 : index
    %c0_0 = arith.constant 0 : index
    %c0_1 = arith.constant 0 : index
    %0 = vector.load %arg2[%c0, %c0_0, %c0_1] : memref<1x600x4xbf16, #tpu.memory_space<vmem>>, vector<1x600x4xbf16>
    %1 = vector.shape_cast %0 : vector<1x600x4xbf16> to vector<600x4xbf16>
    %2 = arith.extf %1 : vector<600x4xbf16> to vector<600x4xf32>
    %c0_2 = arith.constant 0 : index
    %c0_3 = arith.constant 0 : index
    %c0_4 = arith.constant 0 : index
    %3 = vector.load %arg3[%c0_2, %c0_3, %c0_4] : memref<1x600x4xbf16, #tpu.memory_space<vmem>>, vector<1x600x4xbf16>
    %4 = vector.shape_cast %3 : vector<1x600x4xbf16> to vector<600x4xbf16>
    %5 = arith.extf %4 : vector<600x4xbf16> to vector<600x4xf32>
    %6 = tpu.concatenate %2, %5 in 0 : vector<600x4xf32>, vector<600x4xf32> -> vector<1200x4xf32>
    %7 = vector.extract_strided_slice %6 {offsets = [0, 0], sizes = [820, 4], strides = [1, 1]} : vector<1200x4xf32> to vector<820x4xf32>
    %8 = vector.extract_strided_slice %6 {offsets = [1, 0], sizes = [820, 4], strides = [1, 1]} : vector<1200x4xf32> to vector<820x4xf32>
    %9 = vector.extract_strided_slice %6 {offsets = [2, 0], sizes = [820, 4], strides = [1, 1]} : vector<1200x4xf32> to vector<820x4xf32>
    %10 = tpu.concatenate %7, %8, %9 in 1 : vector<820x4xf32>, vector<820x4xf32>, vector<820x4xf32> -> vector<820x12xf32>
    %11 = vector.extract_strided_slice %10 {offsets = [0, 0], sizes = [800, 12], strides = [1, 1]} : vector<820x12xf32> to vector<800x12xf32>
    %12 = vector.extract_strided_slice %10 {offsets = [10, 0], sizes = [800, 12], strides = [1, 1]} : vector<820x12xf32> to vector<800x12xf32>
    %13 = vector.extract_strided_slice %10 {offsets = [20, 0], sizes = [800, 12], strides = [1, 1]} : vector<820x12xf32> to vector<800x12xf32>
    %14 = tpu.concatenate %11, %12, %13 in 1 : vector<800x12xf32>, vector<800x12xf32>, vector<800x12xf32> -> vector<800x36xf32>
    %15 = vector.extract_strided_slice %14 {offsets = [0, 0], sizes = [600, 36], strides = [1, 1]} : vector<800x36xf32> to vector<600x36xf32>
    %16 = vector.extract_strided_slice %14 {offsets = [100, 0], sizes = [600, 36], strides = [1, 1]} : vector<800x36xf32> to vector<600x36xf32>
    %17 = vector.extract_strided_slice %14 {offsets = [200, 0], sizes = [600, 36], strides = [1, 1]} : vector<800x36xf32> to vector<600x36xf32>
    %18 = tpu.concatenate %15, %16, %17 in 1 : vector<600x36xf32>, vector<600x36xf32>, vector<600x36xf32> -> vector<600x108xf32>
    %19 = arith.truncf %18 : vector<600x108xf32> to vector<600x108xbf16>
    %c0_5 = arith.constant 0 : index
    %c0_6 = arith.constant 0 : index
    %20 = vector.load %arg4[%c0_5, %c0_6] : memref<108x8xbf16, #tpu.memory_space<vmem>>, vector<108x8xbf16>
    %cst = arith.constant dense<0.000000e+00> : vector<600x8xf32>
    %21 = tpu.matmul %19, %20, %cst {dimension_numbers = #tpu.dot_dimension_numbers<[1], [0], [0], [1], [0, 0, 1, 1], [], []>} : vector<600x108xbf16>, vector<108x8xbf16>, vector<600x8xf32> -> vector<600x8xf32>
    %22 = arith.truncf %21 : vector<600x8xf32> to vector<600x8xbf16>
    %c0_7 = arith.constant 0 : index
    %c0_8 = arith.constant 0 : index
    %c0_9 = arith.constant 0 : index
    %23 = vector.load %arg6[%c0_7, %c0_8, %c0_9] : memref<1x600x8xbf16, #tpu.memory_space<vmem>>, vector<1x600x8xbf16>
    %24 = vector.shape_cast %23 : vector<1x600x8xbf16> to vector<600x8xbf16>
    %25 = vector.shape_cast %22 : vector<600x8xbf16> to vector<1x600x8xbf16>
    tpu.vector_store %arg6[%c0_7, %c0_8, %c0_9], %25 {strides = array<i32>} : memref<1x600x8xbf16, #tpu.memory_space<vmem>>, vector<1x600x8xbf16>,
    %c0_10 = arith.constant 0 : index
    %c0_11 = arith.constant 0 : index
    %26 = vector.load %arg5[%c0_10, %c0_11] : memref<600x1xf32, #tpu.memory_space<vmem>>, vector<600x1xf32>
    %27 = vector.broadcast %26 : vector<600x1xf32> to vector<600x8xf32>
    %28 = arith.mulf %21, %27 : vector<600x8xf32>
    %cst_12 = arith.constant dense<0.000000e+00> : vector<8xf32>
    %29 = vector.multi_reduction <add>, %28, %cst_12 [0] : vector<600x8xf32> to vector<8xf32>
    %30 = vector.shape_cast %29 : vector<8xf32> to vector<1x8xf32>
    %31 = arith.mulf %28, %21 : vector<600x8xf32>
    %cst_13 = arith.constant dense<0.000000e+00> : vector<8xf32>
    %32 = vector.multi_reduction <add>, %31, %cst_13 [0] : vector<600x8xf32> to vector<8xf32>
    %33 = vector.shape_cast %32 : vector<8xf32> to vector<1x8xf32>
    %34 = vector.shape_cast %30 : vector<1x8xf32> to vector<1x8xf32>
    %35 = vector.broadcast %34 : vector<1x8xf32> to vector<8x8xf32>
    %c0_14 = arith.constant 0 : index
    %c0_15 = arith.constant 0 : index
    %c0_16 = arith.constant 0 : index
    %36 = vector.load %arg7[%c0_14, %c0_15, %c0_16] : memref<1x8x8xf32, #tpu.memory_space<vmem>>, vector<1x8x8xf32>
    %37 = vector.shape_cast %36 : vector<1x8x8xf32> to vector<8x8xf32>
    %38 = vector.shape_cast %35 : vector<8x8xf32> to vector<1x8x8xf32>
    tpu.vector_store %arg7[%c0_14, %c0_15, %c0_16], %38 {strides = array<i32>} : memref<1x8x8xf32, #tpu.memory_space<vmem>>, vector<1x8x8xf32>,
    %39 = vector.shape_cast %33 : vector<1x8xf32> to vector<1x8xf32>
    %40 = vector.broadcast %39 : vector<1x8xf32> to vector<8x8xf32>
    %c0_17 = arith.constant 0 : index
    %c0_18 = arith.constant 0 : index
    %c0_19 = arith.constant 0 : index
    %41 = vector.load %arg8[%c0_17, %c0_18, %c0_19] : memref<1x8x8xf32, #tpu.memory_space<vmem>>, vector<1x8x8xf32>
    %42 = vector.shape_cast %41 : vector<1x8x8xf32> to vector<8x8xf32>
    %43 = vector.shape_cast %40 : vector<8x8xf32> to vector<1x8x8xf32>
    tpu.vector_store %arg8[%c0_17, %c0_18, %c0_19], %43 {strides = array<i32>} : memref<1x8x8xf32, #tpu.memory_space<vmem>>, vector<1x8x8xf32>,
    return
  }
  func.func @transform_0(%arg0: i32, %arg1: i32) -> (i32, i32, i32) {
    %c0_i32 = arith.constant 0 : i32
    %c0_i32_0 = arith.constant 0 : i32
    return %arg0, %arg1, %c0_i32 : i32, i32, i32
  }
  func.func @transform_1(%arg0: i32, %arg1: i32) -> (i32, i32, i32) {
    %c1_i32 = arith.constant 1 : i32
    %0 = arith.addi %arg1, %c1_i32 : i32
    %c0_i32 = arith.constant 0 : i32
    %c0_i32_0 = arith.constant 0 : i32
    return %arg0, %0, %c0_i32 : i32, i32, i32
  }
  func.func @transform_2(%arg0: i32, %arg1: i32) -> (i32, i32) {
    %c0_i32 = arith.constant 0 : i32
    %c0_i32_0 = arith.constant 0 : i32
    %c0_i32_1 = arith.constant 0 : i32
    return %c0_i32, %c0_i32_0 : i32, i32
  }
  func.func @transform_3(%arg0: i32, %arg1: i32) -> (i32, i32) {
    %c0_i32 = arith.constant 0 : i32
    %c0_i32_0 = arith.constant 0 : i32
    return %arg1, %c0_i32 : i32, i32
  }
  func.func @transform_4(%arg0: i32, %arg1: i32) -> (i32, i32, i32) {
    %c0_i32 = arith.constant 0 : i32
    %c0_i32_0 = arith.constant 0 : i32
    return %arg0, %arg1, %c0_i32 : i32, i32, i32
  }
  func.func @transform_5(%arg0: i32, %arg1: i32) -> (i32, i32, i32) {
    %c0_i32 = arith.constant 0 : i32
    %c0_i32_0 = arith.constant 0 : i32
    return %arg0, %arg1, %c0_i32 : i32, i32, i32
  }
  func.func @transform_6(%arg0: i32, %arg1: i32) -> (i32, i32, i32) {
    %c0_i32 = arith.constant 0 : i32
    %c0_i32_0 = arith.constant 0 : i32
    return %arg0, %arg1, %c0_i32 : i32, i32, i32
  }
}

module attributes {stable_mosaic.version = 11 : i64} {
  func.func @_bn_relu_kernel(%arg0: i32, %arg1: memref<150x128xbf16, #tpu.memory_space<vmem>>, %arg2: memref<1x128xf32, #tpu.memory_space<vmem>>, %arg3: memref<1x128xf32, #tpu.memory_space<vmem>>, %arg4: memref<150x128xbf16, #tpu.memory_space<vmem>>) attributes {dimension_semantics = [#tpu.dimension_semantics<parallel>], iteration_bounds = array<i64: 1>, scalar_prefetch = 0 : i64, scratch_operands = 0 : i64, tpu.core_type = #tpu.core_type<tc>, window_params = [{transform_indices = @transform_0, window_bounds = array<i64: 150, 128>}, {pipeline_mode = #tpu.pipeline_mode<synchronous>, transform_indices = @transform_1, window_bounds = array<i64: 1, 128>}, {pipeline_mode = #tpu.pipeline_mode<synchronous>, transform_indices = @transform_2, window_bounds = array<i64: 1, 128>}, {transform_indices = @transform_3, window_bounds = array<i64: 150, 128>}]} {
    %c0 = arith.constant 0 : index
    %c0_0 = arith.constant 0 : index
    %0 = vector.load %arg1[%c0, %c0_0] : memref<150x128xbf16, #tpu.memory_space<vmem>>, vector<150x128xbf16>
    %1 = arith.extf %0 : vector<150x128xbf16> to vector<150x128xf32>
    %c0_1 = arith.constant 0 : index
    %c0_2 = arith.constant 0 : index
    %2 = vector.load %arg2[%c0_1, %c0_2] : memref<1x128xf32, #tpu.memory_space<vmem>>, vector<1x128xf32>
    %3 = vector.broadcast %2 : vector<1x128xf32> to vector<150x128xf32>
    %4 = arith.mulf %1, %3 : vector<150x128xf32>
    %c0_3 = arith.constant 0 : index
    %c0_4 = arith.constant 0 : index
    %5 = vector.load %arg3[%c0_3, %c0_4] : memref<1x128xf32, #tpu.memory_space<vmem>>, vector<1x128xf32>
    %6 = vector.broadcast %5 : vector<1x128xf32> to vector<150x128xf32>
    %7 = arith.addf %4, %6 : vector<150x128xf32>
    %cst = arith.constant 0.000000e+00 : f32
    %8 = vector.broadcast %cst : f32 to vector<150x128xf32>
    %9 = arith.maximumf %7, %8 : vector<150x128xf32>
    %10 = arith.truncf %9 : vector<150x128xf32> to vector<150x128xbf16>
    %c0_5 = arith.constant 0 : index
    %c0_6 = arith.constant 0 : index
    %11 = vector.load %arg4[%c0_5, %c0_6] : memref<150x128xbf16, #tpu.memory_space<vmem>>, vector<150x128xbf16>
    tpu.vector_store %arg4[%c0_5, %c0_6], %10 {strides = array<i32>} : memref<150x128xbf16, #tpu.memory_space<vmem>>, vector<150x128xbf16>,
    return
  }
  func.func @transform_0(%arg0: i32) -> (i32, i32) {
    %c0_i32 = arith.constant 0 : i32
    %c0_i32_0 = arith.constant 0 : i32
    return %arg0, %c0_i32 : i32, i32
  }
  func.func @transform_1(%arg0: i32) -> (i32, i32) {
    %c0_i32 = arith.constant 0 : i32
    %c0_i32_0 = arith.constant 0 : i32
    %c0_i32_1 = arith.constant 0 : i32
    return %c0_i32, %c0_i32_0 : i32, i32
  }
  func.func @transform_2(%arg0: i32) -> (i32, i32) {
    %c0_i32 = arith.constant 0 : i32
    %c0_i32_0 = arith.constant 0 : i32
    %c0_i32_1 = arith.constant 0 : i32
    return %c0_i32, %c0_i32_0 : i32, i32
  }
  func.func @transform_3(%arg0: i32) -> (i32, i32) {
    %c0_i32 = arith.constant 0 : i32
    %c0_i32_0 = arith.constant 0 : i32
    return %arg0, %c0_i32 : i32, i32
  }
}

module attributes {stable_mosaic.version = 11 : i64} {
  func.func @kernel(%arg0: i32, %arg1: i32, %arg2: memref<1x600x8xbf16, #tpu.memory_space<vmem>>, %arg3: memref<1x600x8xbf16, #tpu.memory_space<vmem>>, %arg4: memref<216x8xbf16, #tpu.memory_space<vmem>>, %arg5: memref<600x1xf32, #tpu.memory_space<vmem>>, %arg6: memref<1x600x8xbf16, #tpu.memory_space<vmem>>, %arg7: memref<1x8x8xf32, #tpu.memory_space<vmem>>, %arg8: memref<1x8x8xf32, #tpu.memory_space<vmem>>) attributes {dimension_semantics = [#tpu.dimension_semantics<parallel>, #tpu.dimension_semantics<parallel>], iteration_bounds = array<i64: 2, 2>, scalar_prefetch = 0 : i64, scratch_operands = 0 : i64, tpu.core_type = #tpu.core_type<tc>, window_params = [{transform_indices = @transform_0, window_bounds = array<i64: 1, 600, 8>}, {transform_indices = @transform_1, window_bounds = array<i64: 1, 600, 8>}, {pipeline_mode = #tpu.pipeline_mode<synchronous>, transform_indices = @transform_2, window_bounds = array<i64: 216, 8>}, {transform_indices = @transform_3, window_bounds = array<i64: 600, 1>}, {transform_indices = @transform_4, window_bounds = array<i64: 1, 600, 8>}, {transform_indices = @transform_5, window_bounds = array<i64: 1, 8, 8>}, {transform_indices = @transform_6, window_bounds = array<i64: 1, 8, 8>}]} {
    %c0 = arith.constant 0 : index
    %c0_0 = arith.constant 0 : index
    %c0_1 = arith.constant 0 : index
    %0 = vector.load %arg2[%c0, %c0_0, %c0_1] : memref<1x600x8xbf16, #tpu.memory_space<vmem>>, vector<1x600x8xbf16>
    %1 = vector.shape_cast %0 : vector<1x600x8xbf16> to vector<600x8xbf16>
    %2 = arith.extf %1 : vector<600x8xbf16> to vector<600x8xf32>
    %c0_2 = arith.constant 0 : index
    %c0_3 = arith.constant 0 : index
    %c0_4 = arith.constant 0 : index
    %3 = vector.load %arg3[%c0_2, %c0_3, %c0_4] : memref<1x600x8xbf16, #tpu.memory_space<vmem>>, vector<1x600x8xbf16>
    %4 = vector.shape_cast %3 : vector<1x600x8xbf16> to vector<600x8xbf16>
    %5 = arith.extf %4 : vector<600x8xbf16> to vector<600x8xf32>
    %6 = tpu.concatenate %2, %5 in 0 : vector<600x8xf32>, vector<600x8xf32> -> vector<1200x8xf32>
    %7 = vector.extract_strided_slice %6 {offsets = [0, 0], sizes = [820, 8], strides = [1, 1]} : vector<1200x8xf32> to vector<820x8xf32>
    %8 = vector.extract_strided_slice %6 {offsets = [1, 0], sizes = [820, 8], strides = [1, 1]} : vector<1200x8xf32> to vector<820x8xf32>
    %9 = vector.extract_strided_slice %6 {offsets = [2, 0], sizes = [820, 8], strides = [1, 1]} : vector<1200x8xf32> to vector<820x8xf32>
    %10 = tpu.concatenate %7, %8, %9 in 1 : vector<820x8xf32>, vector<820x8xf32>, vector<820x8xf32> -> vector<820x24xf32>
    %11 = vector.extract_strided_slice %10 {offsets = [0, 0], sizes = [800, 24], strides = [1, 1]} : vector<820x24xf32> to vector<800x24xf32>
    %12 = vector.extract_strided_slice %10 {offsets = [10, 0], sizes = [800, 24], strides = [1, 1]} : vector<820x24xf32> to vector<800x24xf32>
    %13 = vector.extract_strided_slice %10 {offsets = [20, 0], sizes = [800, 24], strides = [1, 1]} : vector<820x24xf32> to vector<800x24xf32>
    %14 = tpu.concatenate %11, %12, %13 in 1 : vector<800x24xf32>, vector<800x24xf32>, vector<800x24xf32> -> vector<800x72xf32>
    %15 = vector.extract_strided_slice %14 {offsets = [0, 0], sizes = [600, 72], strides = [1, 1]} : vector<800x72xf32> to vector<600x72xf32>
    %16 = vector.extract_strided_slice %14 {offsets = [100, 0], sizes = [600, 72], strides = [1, 1]} : vector<800x72xf32> to vector<600x72xf32>
    %17 = vector.extract_strided_slice %14 {offsets = [200, 0], sizes = [600, 72], strides = [1, 1]} : vector<800x72xf32> to vector<600x72xf32>
    %18 = tpu.concatenate %15, %16, %17 in 1 : vector<600x72xf32>, vector<600x72xf32>, vector<600x72xf32> -> vector<600x216xf32>
    %19 = arith.truncf %18 : vector<600x216xf32> to vector<600x216xbf16>
    %c0_5 = arith.constant 0 : index
    %c0_6 = arith.constant 0 : index
    %20 = vector.load %arg4[%c0_5, %c0_6] : memref<216x8xbf16, #tpu.memory_space<vmem>>, vector<216x8xbf16>
    %cst = arith.constant dense<0.000000e+00> : vector<600x8xf32>
    %21 = tpu.matmul %19, %20, %cst {dimension_numbers = #tpu.dot_dimension_numbers<[1], [0], [0], [1], [0, 0, 1, 1], [], []>} : vector<600x216xbf16>, vector<216x8xbf16>, vector<600x8xf32> -> vector<600x8xf32>
    %22 = arith.truncf %21 : vector<600x8xf32> to vector<600x8xbf16>
    %c0_7 = arith.constant 0 : index
    %c0_8 = arith.constant 0 : index
    %c0_9 = arith.constant 0 : index
    %23 = vector.load %arg6[%c0_7, %c0_8, %c0_9] : memref<1x600x8xbf16, #tpu.memory_space<vmem>>, vector<1x600x8xbf16>
    %24 = vector.shape_cast %23 : vector<1x600x8xbf16> to vector<600x8xbf16>
    %25 = vector.shape_cast %22 : vector<600x8xbf16> to vector<1x600x8xbf16>
    tpu.vector_store %arg6[%c0_7, %c0_8, %c0_9], %25 {strides = array<i32>} : memref<1x600x8xbf16, #tpu.memory_space<vmem>>, vector<1x600x8xbf16>,
    %c0_10 = arith.constant 0 : index
    %c0_11 = arith.constant 0 : index
    %26 = vector.load %arg5[%c0_10, %c0_11] : memref<600x1xf32, #tpu.memory_space<vmem>>, vector<600x1xf32>
    %27 = vector.broadcast %26 : vector<600x1xf32> to vector<600x8xf32>
    %28 = arith.mulf %21, %27 : vector<600x8xf32>
    %cst_12 = arith.constant dense<0.000000e+00> : vector<8xf32>
    %29 = vector.multi_reduction <add>, %28, %cst_12 [0] : vector<600x8xf32> to vector<8xf32>
    %30 = vector.shape_cast %29 : vector<8xf32> to vector<1x8xf32>
    %31 = arith.mulf %28, %21 : vector<600x8xf32>
    %cst_13 = arith.constant dense<0.000000e+00> : vector<8xf32>
    %32 = vector.multi_reduction <add>, %31, %cst_13 [0] : vector<600x8xf32> to vector<8xf32>
    %33 = vector.shape_cast %32 : vector<8xf32> to vector<1x8xf32>
    %34 = vector.shape_cast %30 : vector<1x8xf32> to vector<1x8xf32>
    %35 = vector.broadcast %34 : vector<1x8xf32> to vector<8x8xf32>
    %c0_14 = arith.constant 0 : index
    %c0_15 = arith.constant 0 : index
    %c0_16 = arith.constant 0 : index
    %36 = vector.load %arg7[%c0_14, %c0_15, %c0_16] : memref<1x8x8xf32, #tpu.memory_space<vmem>>, vector<1x8x8xf32>
    %37 = vector.shape_cast %36 : vector<1x8x8xf32> to vector<8x8xf32>
    %38 = vector.shape_cast %35 : vector<8x8xf32> to vector<1x8x8xf32>
    tpu.vector_store %arg7[%c0_14, %c0_15, %c0_16], %38 {strides = array<i32>} : memref<1x8x8xf32, #tpu.memory_space<vmem>>, vector<1x8x8xf32>,
    %39 = vector.shape_cast %33 : vector<1x8xf32> to vector<1x8xf32>
    %40 = vector.broadcast %39 : vector<1x8xf32> to vector<8x8xf32>
    %c0_17 = arith.constant 0 : index
    %c0_18 = arith.constant 0 : index
    %c0_19 = arith.constant 0 : index
    %41 = vector.load %arg8[%c0_17, %c0_18, %c0_19] : memref<1x8x8xf32, #tpu.memory_space<vmem>>, vector<1x8x8xf32>
    %42 = vector.shape_cast %41 : vector<1x8x8xf32> to vector<8x8xf32>
    %43 = vector.shape_cast %40 : vector<8x8xf32> to vector<1x8x8xf32>
    tpu.vector_store %arg8[%c0_17, %c0_18, %c0_19], %43 {strides = array<i32>} : memref<1x8x8xf32, #tpu.memory_space<vmem>>, vector<1x8x8xf32>,
    return
  }
  func.func @transform_0(%arg0: i32, %arg1: i32) -> (i32, i32, i32) {
    %c0_i32 = arith.constant 0 : i32
    %c0_i32_0 = arith.constant 0 : i32
    return %arg0, %arg1, %c0_i32 : i32, i32, i32
  }
  func.func @transform_1(%arg0: i32, %arg1: i32) -> (i32, i32, i32) {
    %c1_i32 = arith.constant 1 : i32
    %0 = arith.addi %arg1, %c1_i32 : i32
    %c0_i32 = arith.constant 0 : i32
    %c0_i32_0 = arith.constant 0 : i32
    return %arg0, %0, %c0_i32 : i32, i32, i32
  }
  func.func @transform_2(%arg0: i32, %arg1: i32) -> (i32, i32) {
    %c0_i32 = arith.constant 0 : i32
    %c0_i32_0 = arith.constant 0 : i32
    %c0_i32_1 = arith.constant 0 : i32
    return %c0_i32, %c0_i32_0 : i32, i32
  }
  func.func @transform_3(%arg0: i32, %arg1: i32) -> (i32, i32) {
    %c0_i32 = arith.constant 0 : i32
    %c0_i32_0 = arith.constant 0 : i32
    return %arg1, %c0_i32 : i32, i32
  }
  func.func @transform_4(%arg0: i32, %arg1: i32) -> (i32, i32, i32) {
    %c0_i32 = arith.constant 0 : i32
    %c0_i32_0 = arith.constant 0 : i32
    return %arg0, %arg1, %c0_i32 : i32, i32, i32
  }
  func.func @transform_5(%arg0: i32, %arg1: i32) -> (i32, i32, i32) {
    %c0_i32 = arith.constant 0 : i32
    %c0_i32_0 = arith.constant 0 : i32
    return %arg0, %arg1, %c0_i32 : i32, i32, i32
  }
  func.func @transform_6(%arg0: i32, %arg1: i32) -> (i32, i32, i32) {
    %c0_i32 = arith.constant 0 : i32
    %c0_i32_0 = arith.constant 0 : i32
    return %arg0, %arg1, %c0_i32 : i32, i32, i32
  }
}

module attributes {stable_mosaic.version = 11 : i64} {
  func.func @_bn_relu_kernel(%arg0: i32, %arg1: memref<150x128xbf16, #tpu.memory_space<vmem>>, %arg2: memref<1x128xf32, #tpu.memory_space<vmem>>, %arg3: memref<1x128xf32, #tpu.memory_space<vmem>>, %arg4: memref<150x128xf32, #tpu.memory_space<vmem>>) attributes {dimension_semantics = [#tpu.dimension_semantics<parallel>], iteration_bounds = array<i64: 1>, scalar_prefetch = 0 : i64, scratch_operands = 0 : i64, tpu.core_type = #tpu.core_type<tc>, window_params = [{transform_indices = @transform_0, window_bounds = array<i64: 150, 128>}, {pipeline_mode = #tpu.pipeline_mode<synchronous>, transform_indices = @transform_1, window_bounds = array<i64: 1, 128>}, {pipeline_mode = #tpu.pipeline_mode<synchronous>, transform_indices = @transform_2, window_bounds = array<i64: 1, 128>}, {transform_indices = @transform_3, window_bounds = array<i64: 150, 128>}]} {
    %c0 = arith.constant 0 : index
    %c0_0 = arith.constant 0 : index
    %0 = vector.load %arg1[%c0, %c0_0] : memref<150x128xbf16, #tpu.memory_space<vmem>>, vector<150x128xbf16>
    %1 = arith.extf %0 : vector<150x128xbf16> to vector<150x128xf32>
    %c0_1 = arith.constant 0 : index
    %c0_2 = arith.constant 0 : index
    %2 = vector.load %arg2[%c0_1, %c0_2] : memref<1x128xf32, #tpu.memory_space<vmem>>, vector<1x128xf32>
    %3 = vector.broadcast %2 : vector<1x128xf32> to vector<150x128xf32>
    %4 = arith.mulf %1, %3 : vector<150x128xf32>
    %c0_3 = arith.constant 0 : index
    %c0_4 = arith.constant 0 : index
    %5 = vector.load %arg3[%c0_3, %c0_4] : memref<1x128xf32, #tpu.memory_space<vmem>>, vector<1x128xf32>
    %6 = vector.broadcast %5 : vector<1x128xf32> to vector<150x128xf32>
    %7 = arith.addf %4, %6 : vector<150x128xf32>
    %cst = arith.constant 0.000000e+00 : f32
    %8 = vector.broadcast %cst : f32 to vector<150x128xf32>
    %9 = arith.maximumf %7, %8 : vector<150x128xf32>
    %c0_5 = arith.constant 0 : index
    %c0_6 = arith.constant 0 : index
    %10 = vector.load %arg4[%c0_5, %c0_6] : memref<150x128xf32, #tpu.memory_space<vmem>>, vector<150x128xf32>
    tpu.vector_store %arg4[%c0_5, %c0_6], %9 {strides = array<i32>} : memref<150x128xf32, #tpu.memory_space<vmem>>, vector<150x128xf32>,
    return
  }
  func.func @transform_0(%arg0: i32) -> (i32, i32) {
    %c0_i32 = arith.constant 0 : i32
    %c0_i32_0 = arith.constant 0 : i32
    return %arg0, %c0_i32 : i32, i32
  }
  func.func @transform_1(%arg0: i32) -> (i32, i32) {
    %c0_i32 = arith.constant 0 : i32
    %c0_i32_0 = arith.constant 0 : i32
    %c0_i32_1 = arith.constant 0 : i32
    return %c0_i32, %c0_i32_0 : i32, i32
  }
  func.func @transform_2(%arg0: i32) -> (i32, i32) {
    %c0_i32 = arith.constant 0 : i32
    %c0_i32_0 = arith.constant 0 : i32
    %c0_i32_1 = arith.constant 0 : i32
    return %c0_i32, %c0_i32_0 : i32, i32
  }
  func.func @transform_3(%arg0: i32) -> (i32, i32) {
    %c0_i32 = arith.constant 0 : i32
    %c0_i32_0 = arith.constant 0 : i32
    return %arg0, %c0_i32 : i32, i32
  }
}

</mosaic_0001>

<llo_original>
// kernel: tile.28
$region0: #{tile.28}
  #allocation0 [shape = 's32[1]{0}', space=sflag, size = 0x4, scoped, tag = 'scoped memory for tile.28']
  %s0 = inlined_call_operand.vmem [shape: f32[8], index: 0, kind: input, shape index: {}]
  %s1 = inlined_call_operand.vmem [shape: f32[16,8], index: 1, kind: output, shape index: {}]
  // Predicated region
  $region2: #{tile.28} parent=0 // pred_check
    _
  $region3: #{tile.28} parent=0 // pred_check_branch
    %3 = sbr.rel (0) target = $region5
  $region4: #{tile.28} parent=0 // pred_region
    _
  $region5: #{tile.28} parent=0 // pred_fallthru
    _
  %v4 = vld [vmem:[%s0] ss:$0 sm:$0xff]
  %5 = vst [vmem:[%s1] sm:$0xff] %v4
  %s6 = scalar_lea.vmem %s1, 8
  %7 = vst [vmem:[%s6] sm:$0xff] %v4

// kernel: tile.29
$region0: #{tile.29}
  %s0 = inlined_call_operand.vmem [shape: f32[16,8], index: 0, kind: input, shape index: {}]
  %s1 = inlined_call_operand.vmem [shape: f32[1,128], index: 1, kind: output, shape index: {}]
  $region1: #{tile.29} parent=0
    #allocation0 [shape = 'u8[4096]{0}', space=vmem, size = 0x1000, scoped, tag = 'scoped mem for output reshape']
    %v2 = vld [vmem:[%s0] sm:$0x1]
    %vm3 = vcmask 64512
    %4 = vst.msk [vmem:[#allocation0] sm:$0x1] %vm3, %v2
    %s5 = scalar_lea.vmem %s0, 15
    %v6 = vld [vmem:[%s5] sm:$0x1]
    %7 = vrot.lane.b32.xlu0 %v6, 120
    %v8 = vpop.permute.xlu0 %7
    %vm9 = vcmask 1048512
    %10 = vst.msk [vmem:[#allocation0] sm:$0x1] %vm9, %v8
    %s11 = scalar_lea.vmem %s0, 14
    %v12 = vld [vmem:[%s11] sm:$0x1]
    %13 = vrot.lane.b32.xlu0 %v12, 112
    %v14 = vpop.permute.xlu0 %13
    %vm15 = vcmask 982912
    %16 = vst.msk [vmem:[#allocation0] sm:$0x1] %vm15, %v14
    %s17 = scalar_lea.vmem %s0, 13
    %v18 = vld [vmem:[%s17] sm:$0x1]
    %19 = vrot.lane.b32.xlu0 %v18, 104
    %v20 = vpop.permute.xlu0 %19
    %vm21 = vcmask 917312
    %22 = vst.msk [vmem:[#allocation0] sm:$0x1] %vm21, %v20
    %s23 = scalar_lea.vmem %s0, 12
    %v24 = vld [vmem:[%s23] sm:$0x1]
    %25 = vrot.lane.b32.xlu0 %v24, 96
    %v26 = vpop.permute.xlu0 %25
    %vm27 = vcmask 851712
    %28 = vst.msk [vmem:[#allocation0] sm:$0x1] %vm27, %v26
    %s29 = scalar_lea.vmem %s0, 11
    %v30 = vld [vmem:[%s29] sm:$0x1]
    %31 = vrot.lane.b32.xlu0 %v30, 88
    %v32 = vpop.permute.xlu0 %31
    %vm33 = vcmask 786112
    %34 = vst.msk [vmem:[#allocation0] sm:$0x1] %vm33, %v32
    %s35 = scalar_lea.vmem %s0, 10
    %v36 = vld [vmem:[%s35] sm:$0x1]
    %37 = vrot.lane.b32.xlu0 %v36, 80
    %v38 = vpop.permute.xlu0 %37
    %vm39 = vcmask 720512
    %40 = vst.msk [vmem:[#allocation0] sm:$0x1] %vm39, %v38
    %s41 = scalar_lea.vmem %s0, 9
    %v42 = vld [vmem:[%s41] sm:$0x1]
    %43 = vrot.lane.b32.xlu0 %v42, 72
    %v44 = vpop.permute.xlu0 %43
    %vm45 = vcmask 654912
    %46 = vst.msk [vmem:[#allocation0] sm:$0x1] %vm45, %v44
    %s47 = scalar_lea.vmem %s0, 8
    %v48 = vld [vmem:[%s47] sm:$0x1]
    %49 = vrot.lane.b32.xlu0 %v48, 64
    %v50 = vpop.permute.xlu0 %49
    %vm51 = vcmask 589312
    %52 = vst.msk [vmem:[#allocation0] sm:$0x1] %vm51, %v50
    %s53 = scalar_lea.vmem %s0, 7
    %v54 = vld [vmem:[%s53] sm:$0x1]
    %55 = vrot.lane.b32.xlu0 %v54, 56
    %v56 = vpop.permute.xlu0 %55
    %vm57 = vcmask 523712
    %58 = vst.msk [vmem:[#allocation0] sm:$0x1] %vm57, %v56
    %s59 = scalar_lea.vmem %s0, 6
    %v60 = vld [vmem:[%s59] sm:$0x1]
    %61 = vrot.lane.b32.xlu0 %v60, 48
    %v62 = vpop.permute.xlu0 %61
    %vm63 = vcmask 458112
    %64 = vst.msk [vmem:[#allocation0] sm:$0x1] %vm63, %v62
    %s65 = scalar_lea.vmem %s0, 5
    %v66 = vld [vmem:[%s65] sm:$0x1]
    %67 = vrot.lane.b32.xlu0 %v66, 40
    %v68 = vpop.permute.xlu0 %67
    %vm69 = vcmask 392512
    %70 = vst.msk [vmem:[#allocation0] sm:$0x1] %vm69, %v68
    %s71 = scalar_lea.vmem %s0, 4
    %v72 = vld [vmem:[%s71] sm:$0x1]
    %73 = vrot.lane.b32.xlu0 %v72, 32
    %v74 = vpop.permute.xlu0 %73
    %vm75 = vcmask 326912
    %76 = vst.msk [vmem:[#allocation0] sm:$0x1] %vm75, %v74
    %s77 = scalar_lea.vmem %s0, 3
    %v78 = vld [vmem:[%s77] sm:$0x1]
    %79 = vrot.lane.b32.xlu0 %v78, 24
    %v80 = vpop.permute.xlu0 %79
    %vm81 = vcmask 261312
    %82 = vst.msk [vmem:[#allocation0] sm:$0x1] %vm81, %v80
    %s83 = scalar_lea.vmem %s0, 2
    %v84 = vld [vmem:[%s83] sm:$0x1]
    %85 = vrot.lane.b32.xlu0 %v84, 16
    %v86 = vpop.permute.xlu0 %85
    %vm87 = vcmask 195712
    %88 = vst.msk [vmem:[#allocation0] sm:$0x1] %vm87, %v86
    %s89 = scalar_lea.vmem %s0, 1
    %v90 = vld [vmem:[%s89] sm:$0x1]
    %91 = vrot.lane.b32.xlu0 %v90, 8
    %v92 = vpop.permute.xlu0 %91
    %vm93 = vcmask 130112
    %94 = vst.msk [vmem:[#allocation0] sm:$0x1] %vm93, %v92
    %s96 = sshll.u32 1, 1
    %s97 = ssub.s32 %s96, 1
    %v99 = vld [vmem:[#allocation0] sm:%s97]
    %s100 = sshll.u32 1, 1
    %s101 = ssub.s32 %s100, 1
    %102 = vst [vmem:[%s1] sm:%s101] %v99

// kernel: double_conv_forward.5
$region0: #{double_conv_forward.5}
  #allocation0 [shape = 'u32[]', space=smem, size = 0x4, offset = 0x4, fixed_abs, tag = 'smem constant byte address 0x4 - core index']
  #allocation1 [shape = 'u32[144,128]{1,0:T(1,128)}', space=vmem, size = 0x12000, scoped, tag = 'internal scratch']
  %s0 = inlined_call_operand.vmem [shape: bf16[150,128], index: 0, kind: input, shape index: {}]
  %s1 = inlined_call_operand.vmem [shape: f32[1,128], index: 1, kind: input, shape index: {}]
  %s2 = inlined_call_operand.vmem [shape: f32[1,128], index: 2, kind: input, shape index: {}]
  %s3 = inlined_call_operand.vmem [shape: bf16[150,128], index: 3, kind: output, shape index: {}]
  %s4 = sld [smem:[#allocation0]]
  $region22: #{double_conv_forward.5} parent=0
    _
  %s6 = ssub.s32 1, %s4
  %s7 = scalar_select 0, %s6, %s4
  // Predicated region
  $region2: #{double_conv_forward.5} parent=0 // pred_check
    _
  $region3: #{double_conv_forward.5} parent=0 // pred_check_branch
    %9 = sbr.rel (0) target = $region5
  $region4: #{double_conv_forward.5} parent=0 // pred_region
    _
  $region5: #{double_conv_forward.5} parent=0 // pred_fallthru
    _
  // Predicated region
  $region6: #{double_conv_forward.5} parent=0 // pred_check
    _
  $region7: #{double_conv_forward.5} parent=0 // pred_check_branch
    %11 = sbr.rel (0) target = $region9
  $region8: #{double_conv_forward.5} parent=0 // pred_region
    _
  $region9: #{double_conv_forward.5} parent=0 // pred_fallthru
    _
  // Predicated region
  $region10: #{double_conv_forward.5} parent=0 // pred_check
    _
  $region11: #{double_conv_forward.5} parent=0 // pred_check_branch
    %13 = sbr.rel (0) target = $region13
  $region12: #{double_conv_forward.5} parent=0 // pred_region
    _
  $region13: #{double_conv_forward.5} parent=0 // pred_fallthru
    _
  %v14 = vld [vmem:[%s0] sm:$0xf]
  %v15 = vld [vmem:[%s0 + $0x4] sm:$0xf]
  %v16 = vld [vmem:[%s0 + $0x8] sm:$0xf]
  %v17 = vld [vmem:[%s0 + $0xc] sm:$0xf]
  %v18 = vld [vmem:[%s0 + $0x10] sm:$0xf]
  %v19 = vld [vmem:[%s0 + $0x14] sm:$0xf]
  %v20 = vld [vmem:[%s0 + $0x18] sm:$0xf]
  %v21 = vld [vmem:[%s0 + $0x1c] sm:$0xf]
  %v22 = vld [vmem:[%s0 + $0x20] sm:$0xf]
  %v23 = vld [vmem:[%s0 + $0x24] sm:$0xf]
  %v24 = vld [vmem:[%s0 + $0x28] sm:$0xf]
  %v25 = vld [vmem:[%s0 + $0x2c] sm:$0xf]
  %v26 = vld [vmem:[%s0 + $0x30] sm:$0xf]
  %v27 = vld [vmem:[%s0 + $0x34] sm:$0xf]
  %v28 = vld [vmem:[%s0 + $0x38] sm:$0xf]
  %v29 = vld [vmem:[%s0 + $0x3c] sm:$0xf]
  %v30 = vld [vmem:[%s0 + $0x40] sm:$0xf]
  %v31 = vld [vmem:[%s0 + $0x44] sm:$0xf]
  %v32 = vld [vmem:[%s0 + $0x48] sm:$0x7]
  %v33 = vunpack.c.l.bf16 %v14
  %v34 = vunpack.c.l.bf16 %v15
  %v35 = vunpack.c.l.bf16 %v16
  %v36 = vunpack.c.l.bf16 %v17
  %v37 = vunpack.c.l.bf16 %v18
  %v38 = vunpack.c.l.bf16 %v19
  %v39 = vunpack.c.l.bf16 %v20
  %v40 = vunpack.c.l.bf16 %v21
  %v41 = vunpack.c.l.bf16 %v22
  %v42 = vunpack.c.l.bf16 %v23
  %v43 = vunpack.c.l.bf16 %v24
  %v44 = vunpack.c.l.bf16 %v25
  %v45 = vunpack.c.l.bf16 %v26
  %v46 = vunpack.c.l.bf16 %v27
  %v47 = vunpack.c.l.bf16 %v28
  %v48 = vunpack.c.l.bf16 %v29
  %v49 = vunpack.c.l.bf16 %v30
  %v50 = vunpack.c.l.bf16 %v31
  %v51 = vunpack.c.l.bf16 %v32
  %v52 = vld [vmem:[%s1] sm:$0x1]
  %v54 = vlaneseq
  %v55 = vshrl.u32 %v54, 7
  %v56 = vsub.s32 0, %v55
  %v57 = vrot.slane %v52, %v56
  %v59 = vmul.f32 %v33, %v57
  %v60 = vmul.f32 %v34, %v57
  %v61 = vmul.f32 %v35, %v57
  %v62 = vmul.f32 %v36, %v57
  %v63 = vmul.f32 %v37, %v57
  %v64 = vmul.f32 %v38, %v57
  %v65 = vmul.f32 %v39, %v57
  %v66 = vmul.f32 %v40, %v57
  %v67 = vmul.f32 %v41, %v57
  %v68 = vmul.f32 %v42, %v57
  %v69 = vmul.f32 %v43, %v57
  %v70 = vmul.f32 %v44, %v57
  %v71 = vmul.f32 %v45, %v57
  %v72 = vmul.f32 %v46, %v57
  %v73 = vmul.f32 %v47, %v57
  %v74 = vmul.f32 %v48, %v57
  %v75 = vmul.f32 %v49, %v57
  %v76 = vmul.f32 %v50, %v57
  %v77 = vmul.f32 %v51, %v57
  %v78 = vld [vmem:[%s2] sm:$0x1]
  %v80 = vlaneseq
  %v81 = vshrl.u32 %v80, 7
  %v82 = vsub.s32 0, %v81
  %v83 = vrot.slane %v78, %v82
  %v85 = vadd.f32 %v59, %v83
  %v86 = vadd.f32 %v60, %v83
  %v87 = vadd.f32 %v61, %v83
  %v88 = vadd.f32 %v62, %v83
  %v89 = vadd.f32 %v63, %v83
  %v90 = vadd.f32 %v64, %v83
  %v91 = vadd.f32 %v65, %v83
  %v92 = vadd.f32 %v66, %v83
  %v93 = vadd.f32 %v67, %v83
  %v94 = vadd.f32 %v68, %v83
  %v95 = vadd.f32 %v69, %v83
  %v96 = vadd.f32 %v70, %v83
  %v97 = vadd.f32 %v71, %v83
  %v98 = vadd.f32 %v72, %v83
  %v99 = vadd.f32 %v73, %v83
  %v100 = vadd.f32 %v74, %v83
  %v101 = vadd.f32 %v75, %v83
  %v102 = vadd.f32 %v76, %v83
  %v103 = vadd.f32 %v77, %v83
  %v104 = vmax.f32 %v85, 0.0
  %v105 = vmax.f32 %v86, 0.0
  %v106 = vmax.f32 %v87, 0.0
  %v107 = vmax.f32 %v88, 0.0
  %v108 = vmax.f32 %v89, 0.0
  %v109 = vmax.f32 %v90, 0.0
  %v110 = vmax.f32 %v91, 0.0
  %v111 = vmax.f32 %v92, 0.0
  %v112 = vmax.f32 %v93, 0.0
  %v113 = vmax.f32 %v94, 0.0
  %v114 = vmax.f32 %v95, 0.0
  %v115 = vmax.f32 %v96, 0.0
  %v116 = vmax.f32 %v97, 0.0
  %v117 = vmax.f32 %v98, 0.0
  %v118 = vmax.f32 %v99, 0.0
  %v119 = vmax.f32 %v100, 0.0
  %v120 = vmax.f32 %v101, 0.0
  %v121 = vmax.f32 %v102, 0.0
  %v122 = vmax.f32 %v103, 0.0
  %v123 = vpack.c.bf16 %v105, %v104
  %v124 = vpack.c.bf16 %v107, %v106
  %v125 = vpack.c.bf16 %v109, %v108
  %v126 = vpack.c.bf16 %v111, %v110
  %v127 = vpack.c.bf16 %v113, %v112
  %v128 = vpack.c.bf16 %v115, %v114
  %v129 = vpack.c.bf16 %v117, %v116
  %v130 = vpack.c.bf16 %v119, %v118
  %v131 = vpack.c.bf16 %v121, %v120
  %v132 = vpack.c.bf16 %v122, %v122
  %v143 = vunpack.c.l.b16 %v123
  %v144 = vunpack.c.h.b16 %v123
  %v145 = vunpack.c.l.b16 %v124
  %v146 = vunpack.c.h.b16 %v124
  %v147 = vunpack.c.l.b16 %v125
  %v148 = vunpack.c.h.b16 %v125
  %v149 = vunpack.c.l.b16 %v126
  %v150 = vunpack.c.h.b16 %v126
  %v151 = vunpack.c.l.b16 %v127
  %v152 = vunpack.c.h.b16 %v127
  %v153 = vunpack.c.l.b16 %v128
  %v154 = vunpack.c.h.b16 %v128
  %v155 = vunpack.c.l.b16 %v129
  %v156 = vunpack.c.h.b16 %v129
  %v157 = vunpack.c.l.b16 %v130
  %v158 = vunpack.c.h.b16 %v130
  %v159 = vunpack.c.l.b16 %v131
  %v160 = vunpack.c.h.b16 %v131
  %v161 = vunpack.c.l.b16 %v132
  %v162 = vpack.c.b16 %v143, %v143
  %v163 = vpack.c.b16 %v144, %v144
  %v164 = vpack.c.b16 %v145, %v145
  %v165 = vpack.c.b16 %v146, %v146
  %v166 = vpack.c.b16 %v147, %v147
  %v167 = vpack.c.b16 %v148, %v148
  %v168 = vpack.c.b16 %v149, %v149
  %v169 = vpack.c.b16 %v150, %v150
  %v170 = vpack.c.b16 %v151, %v151
  %v171 = vpack.c.b16 %v152, %v152
  %v172 = vpack.c.b16 %v153, %v153
  %v173 = vpack.c.b16 %v154, %v154
  %v174 = vpack.c.b16 %v155, %v155
  %v175 = vpack.c.b16 %v156, %v156
  %v176 = vpack.c.b16 %v157, %v157
  %v177 = vpack.c.b16 %v158, %v158
  %v178 = vpack.c.b16 %v159, %v159
  %v179 = vpack.c.b16 %v160, %v160
  %v180 = vpack.c.b16 %v161, %v161
  %200 = vst [vmem:[%s3] sm:$0xf] %v162
  %201 = vst [vmem:[%s3 + $0x4] sm:$0xf] %v163
  %202 = vst [vmem:[%s3 + $0x8] sm:$0xf] %v164
  %203 = vst [vmem:[%s3 + $0xc] sm:$0xf] %v165
  %204 = vst [vmem:[%s3 + $0x10] sm:$0xf] %v166
  %205 = vst [vmem:[%s3 + $0x14] sm:$0xf] %v167
  %206 = vst [vmem:[%s3 + $0x18] sm:$0xf] %v168
  %207 = vst [vmem:[%s3 + $0x1c] sm:$0xf] %v169
  %208 = vst [vmem:[%s3 + $0x20] sm:$0xf] %v170
  %209 = vst [vmem:[%s3 + $0x24] sm:$0xf] %v171
  %210 = vst [vmem:[%s3 + $0x28] sm:$0xf] %v172
  %211 = vst [vmem:[%s3 + $0x2c] sm:$0xf] %v173
  %212 = vst [vmem:[%s3 + $0x30] sm:$0xf] %v174
  %213 = vst [vmem:[%s3 + $0x34] sm:$0xf] %v175
  %214 = vst [vmem:[%s3 + $0x38] sm:$0xf] %v176
  %215 = vst [vmem:[%s3 + $0x3c] sm:$0xf] %v177
  %216 = vst [vmem:[%s3 + $0x40] sm:$0xf] %v178
  %217 = vst [vmem:[%s3 + $0x44] sm:$0xf] %v179
  %218 = vst [vmem:[%s3 + $0x48] sm:$0x7] %v180
  // Predicated region
  $region14: #{double_conv_forward.5} parent=0 // pred_check
    _
  $region15: #{double_conv_forward.5} parent=0 // pred_check_branch
    %220 = sbr.rel (0) target = $region17
  $region16: #{double_conv_forward.5} parent=0 // pred_region
    _
  $region17: #{double_conv_forward.5} parent=0 // pred_fallthru
    _
  // Predicated region
  $region18: #{double_conv_forward.5} parent=0 // pred_check
    _
  $region19: #{double_conv_forward.5} parent=0 // pred_check_branch
    %222 = sbr.rel (0) target = $region21
  $region20: #{double_conv_forward.5} parent=0 // pred_region
    _
  $region21: #{double_conv_forward.5} parent=0 // pred_fallthru
    _

// kernel: double_conv_forward.4
$region0: #{double_conv_forward.4}
  #allocation0 [shape = 'u32[]', space=smem, size = 0x4, offset = 0x4, fixed_abs, tag = 'smem constant byte address 0x4 - core index']
  #allocation1 [shape = 'u32[144,128]{1,0:T(1,128)}', space=vmem, size = 0x12000, scoped, tag = 'internal scratch']
  %s0 = inlined_call_operand.vmem [shape: bf16[2,1800,4], index: 0, kind: input, shape index: {}, may-alias: {0,1}]
  %s1 = inlined_call_operand.vmem [shape: bf16[2,1800,4], index: 1, kind: input, shape index: {}, may-alias: {0,1}]
  %s2 = inlined_call_operand.vmem [shape: bf16[108,8], index: 2, kind: input, shape index: {}]
  %s3 = inlined_call_operand.vmem [shape: f32[1200,1], index: 3, kind: input, shape index: {}]
  %s4 = inlined_call_operand.vmem [shape: bf16[2,1200,8], index: 4, kind: output, shape index: {0}]
  %s5 = inlined_call_operand.vmem [shape: f32[2,16,8], index: 5, kind: output, shape index: {1}]
  %s6 = inlined_call_operand.vmem [shape: f32[2,16,8], index: 6, kind: output, shape index: {2}]
  %7 = xla_tuple %s4, %s5, %s6
  %s8 = sld [smem:[#allocation0]]
  $region65: #{double_conv_forward.4} parent=0
    _
  %s10 = ssub.s32 1, %s8
  %s11 = scalar_select 0, %s10, %s8
  loop: start=0, step=1, limit=6
  $region2: #{double_conv_forward.4} parent=0 // loop_pre_header
    _
  $region3: #{double_conv_forward.4} parent=0 // loop_header
    %s13 = sphi 0, %s17
    %p14 = scmp.ge.s32.totalorder %s13, 6
    %s20 = sphi 0, %s32
    %s21 = sphi 0, %s28
    %s22 = sphi 0, %s20
    %s23 = sphi 0, %s21
    %s24 = sphi 0, %s22
    %s25 = sphi 0, %s23
    %s37 = sphi 0, %s39
    %s40 = sphi 0, %s37
    %s41 = sphi 0, %s40
    %s57 = sphi 0, %s41
    %s67 = sphi 0, %s69
    %s70 = sphi 0, %s67
    %s71 = sphi 0, %s70
    %s87 = sphi 0, %s71
    %s91 = sphi 0, %s91
    %s93 = sphi 0, %s91
    %s94 = sphi 0, %s93
    %s108 = sphi 0, %s94
    %s114 = sphi 0, %s116
    %s117 = sphi 0, %s114
    %s118 = sphi 0, %s117
    %s134 = sphi 0, %s118
    %s142 = sphi 0, %s144
    %s145 = sphi 0, %s142
    %s146 = sphi 0, %s145
    %s162 = sphi 0, %s146
    %s170 = sphi 0, %s172
    %s173 = sphi 0, %s170
    %s174 = sphi 0, %s173
    %s190 = sphi 0, %s174
    %s198 = sphi 0, %s200
    %s201 = sphi 0, %s198
    %s202 = sphi 0, %s201
    %s218 = sphi 0, %s202
  $region4: #{double_conv_forward.4} parent=0 // loop_header_branch
    %16 = sbr.rel (%p14) target = $region8
  $region5: #{double_conv_forward.4} parent=0 // loop_body
    %s18 = ssub.s32 %s13, 1
    %s19 = ssub.s32 %s13, 2
    %s26 = sadd.s32 1, %s21
    %p27 = scmp.ge.s32.totalorder %s26, 2
    %s28 = scalar_select %p27, 0, %s26
    %s29 = sadd.s32 1, %s20
    %s30 = scalar_select %p27, %s29, %s20
    %p31 = scmp.ge.s32.totalorder %s30, 2
    %s32 = scalar_select %p31, 0, %s30
    %s33 = ssub.s32 %s20, %s32
    %s34 = ssub.s32 %s21, %s28
    %s35 = sor.u32 %s33, %s34
    %p36 = scmp.eq.s32.totalorder %s35, 0
    %s38 = sadd.s32 %s37, 1
    %s39 = scalar_select %p36, %s37, %s38
    %p42 = pneg %p36
    %p43 = scmp.eq.s32.totalorder %s13, 3
    %p44 = por %p42, %p43
    %p45 = scmp.ne.s32.totalorder %s37, %s40
    %p46 = scmp.eq.s32.totalorder %s13, 0
    %p47 = por %p45, %p46
    %p48 = scmp.ne.s32.totalorder %s37, %s40
    %p49 = scmp.eq.s32.totalorder %s18, 3
    %p50 = por %p48, %p49
    %p51 = scmp.ne.s32.totalorder %s40, %s41
    %p52 = scmp.eq.s32.totalorder %s18, 0
    %p53 = por %p51, %p52
    %p54 = scmp.ne.s32.totalorder %s40, %s41
    %p55 = scmp.eq.s32.totalorder %s19, 3
    %p56 = por %p54, %p55
    %p58 = scmp.ne.s32.totalorder %s41, %s57
    %p59 = scmp.eq.s32.totalorder %s19, 0
    %p60 = por %p58, %p59
    %s61 = sadd.s32 %s21, 1
    %s62 = sadd.s32 %s28, 1
    %s63 = ssub.s32 %s20, %s32
    %s64 = ssub.s32 %s61, %s62
    %s65 = sor.u32 %s63, %s64
    %p66 = scmp.eq.s32.totalorder %s65, 0
    %s68 = sadd.s32 %s67, 1
    %s69 = scalar_select %p66, %s67, %s68
    %p72 = pneg %p66
    %p73 = scmp.eq.s32.totalorder %s13, 3
    %p74 = por %p72, %p73
    %p75 = scmp.ne.s32.totalorder %s67, %s70
    %p76 = scmp.eq.s32.totalorder %s13, 0
    %p77 = por %p75, %p76
    %p78 = scmp.ne.s32.totalorder %s67, %s70
    %p79 = scmp.eq.s32.totalorder %s18, 3
    %p80 = por %p78, %p79
    %p81 = scmp.ne.s32.totalorder %s70, %s71
    %p82 = scmp.eq.s32.totalorder %s18, 0
    %p83 = por %p81, %p82
    %p84 = scmp.ne.s32.totalorder %s70, %s71
    %p85 = scmp.eq.s32.totalorder %s19, 3
    %p86 = por %p84, %p85
    %p88 = scmp.ne.s32.totalorder %s71, %s87
    %p89 = scmp.eq.s32.totalorder %s19, 0
    %p90 = por %p88, %p89
    %s92 = sadd.s32 %s91, 1
    %p95 = scmp.eq.s32.totalorder %s13, 3
    %p96 = scmp.ne.s32.totalorder %s91, %s93
    %p97 = scmp.eq.s32.totalorder %s13, 0
    %p98 = por %p96, %p97
    %p99 = scmp.ne.s32.totalorder %s91, %s93
    %p100 = scmp.eq.s32.totalorder %s18, 3
    %p101 = por %p99, %p100
    %p102 = scmp.ne.s32.totalorder %s93, %s94
    %p103 = scmp.eq.s32.totalorder %s18, 0
    %p104 = por %p102, %p103
    %p105 = scmp.ne.s32.totalorder %s93, %s94
    %p106 = scmp.eq.s32.totalorder %s19, 3
    %p107 = por %p105, %p106
    %p109 = scmp.ne.s32.totalorder %s94, %s108
    %p110 = scmp.eq.s32.totalorder %s19, 0
    %p111 = por %p109, %p110
    %s112 = ssub.s32 %s21, %s28
    %p113 = scmp.eq.s32.totalorder %s112, 0
    %s115 = sadd.s32 %s114, 1
    %s116 = scalar_select %p113, %s114, %s115
    %p119 = pneg %p113
    %p120 = scmp.eq.s32.totalorder %s13, 3
    %p121 = por %p119, %p120
    %p122 = scmp.ne.s32.totalorder %s114, %s117
    %p123 = scmp.eq.s32.totalorder %s13, 0
    %p124 = por %p122, %p123
    %p125 = scmp.ne.s32.totalorder %s114, %s117
    %p126 = scmp.eq.s32.totalorder %s18, 3
    %p127 = por %p125, %p126
    %p128 = scmp.ne.s32.totalorder %s117, %s118
    %p129 = scmp.eq.s32.totalorder %s18, 0
    %p130 = por %p128, %p129
    %p131 = scmp.ne.s32.totalorder %s117, %s118
    %p132 = scmp.eq.s32.totalorder %s19, 3
    %p133 = por %p131, %p132
    %p135 = scmp.ne.s32.totalorder %s118, %s134
    %p136 = scmp.eq.s32.totalorder %s19, 0
    %p137 = por %p135, %p136
    %s138 = ssub.s32 %s20, %s32
    %s139 = ssub.s32 %s21, %s28
    %s140 = sor.u32 %s138, %s139
    %p141 = scmp.eq.s32.totalorder %s140, 0
    %s143 = sadd.s32 %s142, 1
    %s144 = scalar_select %p141, %s142, %s143
    %p147 = pneg %p141
    %p148 = scmp.eq.s32.totalorder %s13, 3
    %p149 = por %p147, %p148
    %p150 = scmp.ne.s32.totalorder %s142, %s145
    %p151 = scmp.eq.s32.totalorder %s13, 0
    %p152 = por %p150, %p151
    %p153 = scmp.ne.s32.totalorder %s142, %s145
    %p154 = scmp.eq.s32.totalorder %s18, 3
    %p155 = por %p153, %p154
    %p156 = scmp.ne.s32.totalorder %s145, %s146
    %p157 = scmp.eq.s32.totalorder %s18, 0
    %p158 = por %p156, %p157
    %p159 = scmp.ne.s32.totalorder %s145, %s146
    %p160 = scmp.eq.s32.totalorder %s19, 3
    %p161 = por %p159, %p160
    %p163 = scmp.ne.s32.totalorder %s146, %s162
    %p164 = scmp.eq.s32.totalorder %s19, 0
    %p165 = por %p163, %p164
    %s166 = ssub.s32 %s20, %s32
    %s167 = ssub.s32 %s21, %s28
    %s168 = sor.u32 %s166, %s167
    %p169 = scmp.eq.s32.totalorder %s168, 0
    %s171 = sadd.s32 %s170, 1
    %s172 = scalar_select %p169, %s170, %s171
    %p175 = pneg %p169
    %p176 = scmp.eq.s32.totalorder %s13, 3
    %p177 = por %p175, %p176
    %p178 = scmp.ne.s32.totalorder %s170, %s173
    %p179 = scmp.eq.s32.totalorder %s13, 0
    %p180 = por %p178, %p179
    %p181 = scmp.ne.s32.totalorder %s170, %s173
    %p182 = scmp.eq.s32.totalorder %s18, 3
    %p183 = por %p181, %p182
    %p184 = scmp.ne.s32.totalorder %s173, %s174
    %p185 = scmp.eq.s32.totalorder %s18, 0
    %p186 = por %p184, %p185
    %p187 = scmp.ne.s32.totalorder %s173, %s174
    %p188 = scmp.eq.s32.totalorder %s19, 3
    %p189 = por %p187, %p188
    %p191 = scmp.ne.s32.totalorder %s174, %s190
    %p192 = scmp.eq.s32.totalorder %s19, 0
    %p193 = por %p191, %p192
    %s194 = ssub.s32 %s20, %s32
    %s195 = ssub.s32 %s21, %s28
    %s196 = sor.u32 %s194, %s195
    %p197 = scmp.eq.s32.totalorder %s196, 0
    %s199 = sadd.s32 %s198, 1
    %s200 = scalar_select %p197, %s198, %s199
    %p203 = pneg %p197
    %p204 = scmp.eq.s32.totalorder %s13, 3
    %p205 = por %p203, %p204
    %p206 = scmp.ne.s32.totalorder %s198, %s201
    %p207 = scmp.eq.s32.totalorder %s13, 0
    %p208 = por %p206, %p207
    %p209 = scmp.ne.s32.totalorder %s198, %s201
    %p210 = scmp.eq.s32.totalorder %s18, 3
    %p211 = por %p209, %p210
    %p212 = scmp.ne.s32.totalorder %s201, %s202
    %p213 = scmp.eq.s32.totalorder %s18, 0
    %p214 = por %p212, %p213
    %p215 = scmp.ne.s32.totalorder %s201, %s202
    %p216 = scmp.eq.s32.totalorder %s19, 3
    %p217 = por %p215, %p216
    %p219 = scmp.ne.s32.totalorder %s202, %s218
    %p220 = scmp.eq.s32.totalorder %s19, 0
    %p221 = por %p219, %p220
    %p222 = scmp.le.s32.totalorder 1, %s13
    %p223 = scmp.lt.s32.totalorder %s13, 5
    %p224 = pnand %p222, %p223
    %p225 = pneg %p224
    // Predicated region
    $region9: #{double_conv_forward.4} parent=5 // pred_check
      _
    $region10: #{double_conv_forward.4} parent=5 // pred_check_branch
      %227 = sbr.rel (%p224) target = $region12
    $region11: #{double_conv_forward.4} parent=5 // pred_region
      %s228 = ssub.s32 %s13, 1
      // Predicated region
      $region13: #{double_conv_forward.4} parent=11 // pred_check
        %p229 = pneg %p104
      $region14: #{double_conv_forward.4} parent=11 // pred_check_branch
        %231 = sbr.rel (%p229) target = $region16
      $region15: #{double_conv_forward.4} parent=11 // pred_region
        _
      $region16: #{double_conv_forward.4} parent=11 // pred_fallthru
        _
    $region12: #{double_conv_forward.4} parent=5 // pred_fallthru
      _
    %p232 = scmp.lt.s32.totalorder %s13, 4
    // Predicated region
    $region17: #{double_conv_forward.4} parent=5 // pred_check
      %p233 = pneg %p232
    $region18: #{double_conv_forward.4} parent=5 // pred_check_branch
      %235 = sbr.rel (%p233) target = $region20
    $region19: #{double_conv_forward.4} parent=5 // pred_region
      // Predicated region
      $region21: #{double_conv_forward.4} parent=19 // pred_check
        %p236 = pneg %p47
      $region22: #{double_conv_forward.4} parent=19 // pred_check_branch
        %238 = sbr.rel (%p236) target = $region24
      $region23: #{double_conv_forward.4} parent=19 // pred_region
        %s239 = smul.u32 75, %s21
        %p240 = scmp.lt.s32.totalorder %s20, 1
        %s241 = scalar_select %p240, %s20, 1
        %p242 = scmp.lt.s32.totalorder %s239, 224
        %s243 = scalar_select %p242, %s239, 224
        %s244 = smul.addr %s241, 225
        %s245 = sadd.s32 %s243, %s244
        %s246 = smul.addr %s245, 4
        %s247 = scalar_lea.vmem %s0, %s246
        %s248 = smul.u32 75, %s21
      $region24: #{double_conv_forward.4} parent=19 // pred_fallthru
        _
      // Predicated region
      $region25: #{double_conv_forward.4} parent=19 // pred_check
        %p249 = pneg %p77
      $region26: #{double_conv_forward.4} parent=19 // pred_check_branch
        %251 = sbr.rel (%p249) target = $region28
      $region27: #{double_conv_forward.4} parent=19 // pred_region
        %s252 = sadd.s32 %s21, 1
        %s253 = smul.u32 75, %s252
        %p254 = scmp.lt.s32.totalorder %s20, 1
        %s255 = scalar_select %p254, %s20, 1
        %p256 = scmp.lt.s32.totalorder %s253, 224
        %s257 = scalar_select %p256, %s253, 224
        %s258 = smul.addr %s255, 225
        %s259 = sadd.s32 %s257, %s258
        %s260 = smul.addr %s259, 4
        %s261 = scalar_lea.vmem %s1, %s260
        %s262 = sadd.s32 %s21, 1
        %s263 = smul.u32 75, %s262
      $region28: #{double_conv_forward.4} parent=19 // pred_fallthru
        _
      // Predicated region
      $region29: #{double_conv_forward.4} parent=19 // pred_check
        %p264 = pneg %p124
      $region30: #{double_conv_forward.4} parent=19 // pred_check_branch
        %266 = sbr.rel (%p264) target = $region32
      $region31: #{double_conv_forward.4} parent=19 // pred_region
        %s267 = smul.u32 75, %s21
        %p268 = scmp.lt.s32.totalorder %s267, 149
        %s269 = scalar_select %p268, %s267, 149
        %s270 = smul.addr %s269, 8
        %s271 = scalar_lea.vmem %s3, %s270
        %s272 = smul.u32 75, %s21
      $region32: #{double_conv_forward.4} parent=19 // pred_fallthru
        _
    $region20: #{double_conv_forward.4} parent=5 // pred_fallthru
      _
    %p273 = scmp.le.s32.totalorder 1, %s13
    %p274 = scmp.lt.s32.totalorder %s13, 5
    %p275 = pnand %p273, %p274
    %p276 = pneg %p275
    // Predicated region
    $region33: #{double_conv_forward.4} parent=5 // pred_check
      _
    $region34: #{double_conv_forward.4} parent=5 // pred_check_branch
      %278 = sbr.rel (%p275) target = $region36
    $region35: #{double_conv_forward.4} parent=5 // pred_region
      %s279 = ssub.s32 %s13, 1
      %s280 = smul.u32 75, %s23
      %p281 = scmp.lt.s32.totalorder %s22, 1
      %s282 = scalar_select %p281, %s22, 1
      %p283 = scmp.lt.s32.totalorder %s280, 224
      %s284 = scalar_select %p283, %s280, 224
      %s285 = smul.addr %s282, 225
      %s286 = sadd.s32 %s284, %s285
      %s287 = smul.addr %s286, 4
      %s288 = scalar_lea.vmem %s0, %s287
      %p289 = pneg %p53
      %p290 = pneg %p50
      %s291 = sadd.s32 %s23, 1
      %s292 = smul.u32 75, %s291
      %p293 = scmp.lt.s32.totalorder %s22, 1
      %s294 = scalar_select %p293, %s22, 1
      %p295 = scmp.lt.s32.totalorder %s292, 224
      %s296 = scalar_select %p295, %s292, 224
      %s297 = smul.addr %s294, 225
      %s298 = sadd.s32 %s296, %s297
      %s299 = smul.addr %s298, 4
      %s300 = scalar_lea.vmem %s1, %s299
      %p301 = pneg %p83
      %p302 = pneg %p80
      %p303 = pneg %p104
      %p304 = pneg %p101
      %s305 = smul.u32 75, %s23
      %p306 = scmp.lt.s32.totalorder %s305, 149
      %s307 = scalar_select %p306, %s305, 149
      %s308 = smul.addr %s307, 8
      %s309 = scalar_lea.vmem %s3, %s308
      %p310 = pneg %p130
      %p311 = pneg %p127
      %p312 = pneg %p158
      %p313 = pneg %p155
      %s314 = smul.u32 75, %s23
      %p315 = scmp.lt.s32.totalorder %s22, 1
      %s316 = scalar_select %p315, %s22, 1
      %p317 = scmp.lt.s32.totalorder %s314, 149
      %s318 = scalar_select %p317, %s314, 149
      %s319 = smul.addr %s316, 150
      %s320 = sadd.s32 %s318, %s319
      %s321 = smul.addr %s320, 4
      %s322 = scalar_lea.vmem %s4, %s321
      %p323 = pneg %p186
      %p324 = pneg %p183
      %p325 = scmp.lt.s32.totalorder %s22, 1
      %s326 = scalar_select %p325, %s22, 1
      %p327 = scmp.lt.s32.totalorder %s23, 1
      %s328 = scalar_select %p327, %s23, 1
      %s329 = smul.addr %s326, 2
      %s330 = sadd.s32 %s328, %s329
      %s331 = smul.addr %s330, 8
      %s332 = scalar_lea.vmem %s5, %s331
      %p333 = pneg %p214
      %p334 = pneg %p211
      %p335 = scmp.lt.s32.totalorder %s22, 1
      %s336 = scalar_select %p335, %s22, 1
      %p337 = scmp.lt.s32.totalorder %s23, 1
      %s338 = scalar_select %p337, %s23, 1
      %s339 = smul.addr %s336, 2
      %s340 = sadd.s32 %s338, %s339
      %s341 = smul.addr %s340, 8
      %s342 = scalar_lea.vmem %s6, %s341
      %s343 = smul.u32 75, %s23
      %p344 = scmp.lt.s32.totalorder %s22, 1
      %s345 = scalar_select %p344, %s22, 1
      %p346 = scmp.lt.s32.totalorder %s343, 224
      %s347 = scalar_select %p346, %s343, 224
      %s348 = smul.addr %s345, 225
      %s349 = sadd.s32 %s347, %s348
      %s350 = smul.addr %s349, 4
      %s351 = scalar_lea.vmem %s0, %s350
      %s352 = smul.u32 75, %s23
      %s353 = sadd.s32 %s23, 1
      %s354 = smul.u32 75, %s353
      %p355 = scmp.lt.s32.totalorder %s22, 1
      %s356 = scalar_select %p355, %s22, 1
      %p357 = scmp.lt.s32.totalorder %s354, 224
      %s358 = scalar_select %p357, %s354, 224
      %s359 = smul.addr %s356, 225
      %s360 = sadd.s32 %s358, %s359
      %s361 = smul.addr %s360, 4
      %s362 = scalar_lea.vmem %s1, %s361
      %s363 = sadd.s32 %s23, 1
      %s364 = smul.u32 75, %s363
      %s365 = smul.u32 75, %s23
      %p366 = scmp.lt.s32.totalorder %s365, 149
      %s367 = scalar_select %p366, %s365, 149
      %s368 = smul.addr %s367, 8
      %s369 = scalar_lea.vmem %s3, %s368
      %s370 = smul.u32 75, %s23
      %s371 = smul.u32 75, %s23
      %p372 = scmp.lt.s32.totalorder %s22, 1
      %s373 = scalar_select %p372, %s22, 1
      %p374 = scmp.lt.s32.totalorder %s371, 149
      %s375 = scalar_select %p374, %s371, 149
      %s376 = smul.addr %s373, 150
      %s377 = sadd.s32 %s375, %s376
      %s378 = smul.addr %s377, 4
      %s379 = scalar_lea.vmem %s4, %s378
      %s380 = smul.u32 75, %s23
      %p381 = scmp.lt.s32.totalorder %s22, 1
      %s382 = scalar_select %p381, %s22, 1
      %p383 = scmp.lt.s32.totalorder %s23, 1
      %s384 = scalar_select %p383, %s23, 1
      %s385 = smul.addr %s382, 2
      %s386 = sadd.s32 %s384, %s385
      %s387 = smul.addr %s386, 8
      %s388 = scalar_lea.vmem %s5, %s387
      %p389 = scmp.lt.s32.totalorder %s22, 1
      %s390 = scalar_select %p389, %s22, 1
      %p391 = scmp.lt.s32.totalorder %s23, 1
      %s392 = scalar_select %p391, %s23, 1
      %s393 = smul.addr %s390, 2
      %s394 = sadd.s32 %s392, %s393
      %s395 = smul.addr %s394, 8
      %s396 = scalar_lea.vmem %s6, %s395
      %v398 = vld [vmem:[%s351] sm:$0xf]
      %v399 = vld [vmem:[%s351 + $0x4] sm:$0xf]
      %v400 = vld [vmem:[%s351 + $0x8] sm:$0xf]
      %v401 = vld [vmem:[%s351 + $0xc] sm:$0xf]
      %v402 = vld [vmem:[%s351 + $0x10] sm:$0xf]
      %v403 = vld [vmem:[%s351 + $0x14] sm:$0xf]
      %v404 = vld [vmem:[%s351 + $0x18] sm:$0xf]
      %v405 = vld [vmem:[%s351 + $0x1c] sm:$0xf]
      %v406 = vld [vmem:[%s351 + $0x20] sm:$0xf]
      %v407 = vld [vmem:[%s351 + $0x24] sm:$0xf]
      %v408 = vld [vmem:[%s351 + $0x28] sm:$0xf]
      %v409 = vld [vmem:[%s351 + $0x2c] sm:$0xf]
      %v410 = vld [vmem:[%s351 + $0x30] sm:$0xf]
      %v411 = vld [vmem:[%s351 + $0x34] sm:$0xf]
      %v412 = vld [vmem:[%s351 + $0x38] sm:$0xf]
      %v413 = vld [vmem:[%s351 + $0x3c] sm:$0xf]
      %v414 = vld [vmem:[%s351 + $0x40] sm:$0xf]
      %v415 = vld [vmem:[%s351 + $0x44] sm:$0xf]
      %v416 = vld [vmem:[%s351 + $0x48] sm:$0xf]
      %v417 = vld [vmem:[%s351 + $0x4c] sm:$0xf]
      %v418 = vld [vmem:[%s351 + $0x50] sm:$0xf]
      %v419 = vld [vmem:[%s351 + $0x54] sm:$0xf]
      %v420 = vld [vmem:[%s351 + $0x58] sm:$0xf]
      %v421 = vld [vmem:[%s351 + $0x5c] sm:$0xf]
      %v422 = vld [vmem:[%s351 + $0x60] sm:$0xf]
      %v423 = vld [vmem:[%s351 + $0x64] sm:$0xf]
      %v424 = vld [vmem:[%s351 + $0x68] sm:$0xf]
      %v425 = vld [vmem:[%s351 + $0x6c] sm:$0xf]
      %v426 = vld [vmem:[%s351 + $0x70] sm:$0xf]
      %v427 = vld [vmem:[%s351 + $0x74] sm:$0xf]
      %v428 = vld [vmem:[%s351 + $0x78] sm:$0xf]
      %v429 = vld [vmem:[%s351 + $0x7c] sm:$0xf]
      %v430 = vld [vmem:[%s351 + $0x80] sm:$0xf]
      %v431 = vld [vmem:[%s351 + $0x84] sm:$0xf]
      %v432 = vld [vmem:[%s351 + $0x88] sm:$0xf]
      %v433 = vld [vmem:[%s351 + $0x8c] sm:$0xf]
      %v434 = vld [vmem:[%s351 + $0x90] sm:$0xf]
      %v435 = vld [vmem:[%s351 + $0x94] sm:$0xf]
      %v436 = vld [vmem:[%s351 + $0x98] sm:$0xf]
      %v437 = vld [vmem:[%s351 + $0x9c] sm:$0xf]
      %v438 = vld [vmem:[%s351 + $0xa0] sm:$0xf]
      %v439 = vld [vmem:[%s351 + $0xa4] sm:$0xf]
      %v440 = vld [vmem:[%s351 + $0xa8] sm:$0xf]
      %v441 = vld [vmem:[%s351 + $0xac] sm:$0xf]
      %v442 = vld [vmem:[%s351 + $0xb0] sm:$0xf]
      %v443 = vld [vmem:[%s351 + $0xb4] sm:$0xf]
      %v444 = vld [vmem:[%s351 + $0xb8] sm:$0xf]
      %v445 = vld [vmem:[%s351 + $0xbc] sm:$0xf]
      %v446 = vld [vmem:[%s351 + $0xc0] sm:$0xf]
      %v447 = vld [vmem:[%s351 + $0xc4] sm:$0xf]
      %v448 = vld [vmem:[%s351 + $0xc8] sm:$0xf]
      %v449 = vld [vmem:[%s351 + $0xcc] sm:$0xf]
      %v450 = vld [vmem:[%s351 + $0xd0] sm:$0xf]
      %v451 = vld [vmem:[%s351 + $0xd4] sm:$0xf]
      %v452 = vld [vmem:[%s351 + $0xd8] sm:$0xf]
      %v453 = vld [vmem:[%s351 + $0xdc] sm:$0xf]
      %v454 = vld [vmem:[%s351 + $0xe0] sm:$0xf]
      %v455 = vld [vmem:[%s351 + $0xe4] sm:$0xf]
      %v456 = vld [vmem:[%s351 + $0xe8] sm:$0xf]
      %v457 = vld [vmem:[%s351 + $0xec] sm:$0xf]
      %v458 = vld [vmem:[%s351 + $0xf0] sm:$0xf]
      %v459 = vld [vmem:[%s351 + $0xf4] sm:$0xf]
      %v460 = vld [vmem:[%s351 + $0xf8] sm:$0xf]
      %v461 = vld [vmem:[%s351 + $0xfc] sm:$0xf]
      %v462 = vld [vmem:[%s351 + $0x100] sm:$0xf]
      %v463 = vld [vmem:[%s351 + $0x104] sm:$0xf]
      %v464 = vld [vmem:[%s351 + $0x108] sm:$0xf]
      %v465 = vld [vmem:[%s351 + $0x10c] sm:$0xf]
      %v466 = vld [vmem:[%s351 + $0x110] sm:$0xf]
      %v467 = vld [vmem:[%s351 + $0x114] sm:$0xf]
      %v468 = vld [vmem:[%s351 + $0x118] sm:$0xf]
      %v469 = vld [vmem:[%s351 + $0x11c] sm:$0xf]
      %v470 = vld [vmem:[%s351 + $0x120] sm:$0xf]
      %v471 = vld [vmem:[%s351 + $0x124] sm:$0xf]
      %v472 = vld [vmem:[%s351 + $0x128] sm:$0xf]
      %v473 = vunpack.c.l.bf16 %v398
      %v474 = vunpack.c.l.bf16 %v399
      %v475 = vunpack.c.l.bf16 %v400
      %v476 = vunpack.c.l.bf16 %v401
      %v477 = vunpack.c.l.bf16 %v402
      %v478 = vunpack.c.l.bf16 %v403
      %v479 = vunpack.c.l.bf16 %v404
      %v480 = vunpack.c.l.bf16 %v405
      %v481 = vunpack.c.l.bf16 %v406
      %v482 = vunpack.c.l.bf16 %v407
      %v483 = vunpack.c.l.bf16 %v408
      %v484 = vunpack.c.l.bf16 %v409
      %v485 = vunpack.c.l.bf16 %v410
      %v486 = vunpack.c.l.bf16 %v411
      %v487 = vunpack.c.l.bf16 %v412
      %v488 = vunpack.c.l.bf16 %v413
      %v489 = vunpack.c.l.bf16 %v414
      %v490 = vunpack.c.l.bf16 %v415
      %v491 = vunpack.c.l.bf16 %v416
      %v492 = vunpack.c.l.bf16 %v417
      %v493 = vunpack.c.l.bf16 %v418
      %v494 = vunpack.c.l.bf16 %v419
      %v495 = vunpack.c.l.bf16 %v420
      %v496 = vunpack.c.l.bf16 %v421
      %v497 = vunpack.c.l.bf16 %v422
      %v498 = vunpack.c.l.bf16 %v423
      %v499 = vunpack.c.l.bf16 %v424
      %v500 = vunpack.c.l.bf16 %v425
      %v501 = vunpack.c.l.bf16 %v426
      %v502 = vunpack.c.l.bf16 %v427
      %v503 = vunpack.c.l.bf16 %v428
      %v504 = vunpack.c.l.bf16 %v429
      %v505 = vunpack.c.l.bf16 %v430
      %v506 = vunpack.c.l.bf16 %v431
      %v507 = vunpack.c.l.bf16 %v432
      %v508 = vunpack.c.l.bf16 %v433
      %v509 = vunpack.c.l.bf16 %v434
      %v510 = vunpack.c.l.bf16 %v435
      %v511 = vunpack.c.l.bf16 %v436
      %v512 = vunpack.c.l.bf16 %v437
      %v513 = vunpack.c.l.bf16 %v438
      %v514 = vunpack.c.l.bf16 %v439
      %v515 = vunpack.c.l.bf16 %v440
      %v516 = vunpack.c.l.bf16 %v441
      %v517 = vunpack.c.l.bf16 %v442
      %v518 = vunpack.c.l.bf16 %v443
      %v519 = vunpack.c.l.bf16 %v444
      %v520 = vunpack.c.l.bf16 %v445
      %v521 = vunpack.c.l.bf16 %v446
      %v522 = vunpack.c.l.bf16 %v447
      %v523 = vunpack.c.l.bf16 %v448
      %v524 = vunpack.c.l.bf16 %v449
      %v525 = vunpack.c.l.bf16 %v450
      %v526 = vunpack.c.l.bf16 %v451
      %v527 = vunpack.c.l.bf16 %v452
      %v528 = vunpack.c.l.bf16 %v453
      %v529 = vunpack.c.l.bf16 %v454
      %v530 = vunpack.c.l.bf16 %v455
      %v531 = vunpack.c.l.bf16 %v456
      %v532 = vunpack.c.l.bf16 %v457
      %v533 = vunpack.c.l.bf16 %v458
      %v534 = vunpack.c.l.bf16 %v459
      %v535 = vunpack.c.l.bf16 %v460
      %v536 = vunpack.c.l.bf16 %v461
      %v537 = vunpack.c.l.bf16 %v462
      %v538 = vunpack.c.l.bf16 %v463
      %v539 = vunpack.c.l.bf16 %v464
      %v540 = vunpack.c.l.bf16 %v465
      %v541 = vunpack.c.l.bf16 %v466
      %v542 = vunpack.c.l.bf16 %v467
      %v543 = vunpack.c.l.bf16 %v468
      %v544 = vunpack.c.l.bf16 %v469
      %v545 = vunpack.c.l.bf16 %v470
      %v546 = vunpack.c.l.bf16 %v471
      %v547 = vunpack.c.l.bf16 %v472
      %v548 = vld [vmem:[%s362] sm:$0xf]
      %v549 = vld [vmem:[%s362 + $0x4] sm:$0xf]
      %v550 = vld [vmem:[%s362 + $0x8] sm:$0xf]
      %v551 = vld [vmem:[%s362 + $0xc] sm:$0xf]
      %v552 = vld [vmem:[%s362 + $0x10] sm:$0xf]
      %v553 = vld [vmem:[%s362 + $0x14] sm:$0xf]
      %v554 = vld [vmem:[%s362 + $0x18] sm:$0xf]
      %v555 = vld [vmem:[%s362 + $0x1c] sm:$0xf]
      %v556 = vld [vmem:[%s362 + $0x20] sm:$0xf]
      %v557 = vld [vmem:[%s362 + $0x24] sm:$0xf]
      %v558 = vld [vmem:[%s362 + $0x28] sm:$0xf]
      %v559 = vld [vmem:[%s362 + $0x2c] sm:$0xf]
      %v560 = vld [vmem:[%s362 + $0x30] sm:$0xf]
      %v561 = vld [vmem:[%s362 + $0x34] sm:$0xf]
      %v562 = vld [vmem:[%s362 + $0x38] sm:$0xf]
      %v563 = vld [vmem:[%s362 + $0x3c] sm:$0xf]
      %v564 = vld [vmem:[%s362 + $0x40] sm:$0xf]
      %v565 = vld [vmem:[%s362 + $0x44] sm:$0xf]
      %v566 = vld [vmem:[%s362 + $0x48] sm:$0xf]
      %v567 = vld [vmem:[%s362 + $0x4c] sm:$0xf]
      %v568 = vld [vmem:[%s362 + $0x50] sm:$0xf]
      %v569 = vld [vmem:[%s362 + $0x54] sm:$0xf]
      %v570 = vld [vmem:[%s362 + $0x58] sm:$0xf]
      %v571 = vld [vmem:[%s362 + $0x5c] sm:$0xf]
      %v572 = vld [vmem:[%s362 + $0x60] sm:$0xf]
      %v573 = vld [vmem:[%s362 + $0x64] sm:$0xf]
      %v574 = vld [vmem:[%s362 + $0x68] sm:$0xf]
      %v575 = vld [vmem:[%s362 + $0x6c] sm:$0xf]
      %v576 = vunpack.c.l.bf16 %v548
      %v577 = vunpack.c.l.bf16 %v549
      %v578 = vunpack.c.l.bf16 %v550
      %v579 = vunpack.c.l.bf16 %v551
      %v580 = vunpack.c.l.bf16 %v552
      %v581 = vunpack.c.l.bf16 %v553
      %v582 = vunpack.c.l.bf16 %v554
      %v583 = vunpack.c.l.bf16 %v555
      %v584 = vunpack.c.l.bf16 %v556
      %v585 = vunpack.c.l.bf16 %v557
      %v586 = vunpack.c.l.bf16 %v558
      %v587 = vunpack.c.l.bf16 %v559
      %v588 = vunpack.c.l.bf16 %v560
      %v589 = vunpack.c.l.bf16 %v561
      %v590 = vunpack.c.l.bf16 %v562
      %v591 = vunpack.c.l.bf16 %v563
      %v592 = vunpack.c.l.bf16 %v564
      %v593 = vunpack.c.l.bf16 %v565
      %v594 = vunpack.c.l.bf16 %v566
      %v595 = vunpack.c.l.bf16 %v567
      %v596 = vunpack.c.l.bf16 %v568
      %v597 = vunpack.c.l.bf16 %v569
      %v598 = vunpack.c.l.bf16 %v570
      %v599 = vunpack.c.l.bf16 %v571
      %v600 = vunpack.c.l.bf16 %v572
      %v601 = vunpack.c.l.bf16 %v573
      %v602 = vunpack.c.l.bf16 %v574
      %v603 = vunpack.c.l.bf16 %v575
      %vm707 = vcmask 1046528
      %v708 = vrot.slane %v473, 1
      %v709 = vrot.slane %v474, 1
      %v710 = vsel %vm707, %v708, %v709
      %v711 = vrot.slane %v475, 1
      %v712 = vsel %vm707, %v709, %v711
      %v713 = vrot.slane %v476, 1
      %v714 = vsel %vm707, %v711, %v713
      %v715 = vrot.slane %v477, 1
      %v716 = vsel %vm707, %v713, %v715
      %v717 = vrot.slane %v478, 1
      %v718 = vsel %vm707, %v715, %v717
      %v719 = vrot.slane %v479, 1
      %v720 = vsel %vm707, %v717, %v719
      %v721 = vrot.slane %v480, 1
      %v722 = vsel %vm707, %v719, %v721
      %v723 = vrot.slane %v481, 1
      %v724 = vsel %vm707, %v721, %v723
      %v725 = vrot.slane %v482, 1
      %v726 = vsel %vm707, %v723, %v725
      %v727 = vrot.slane %v483, 1
      %v728 = vsel %vm707, %v725, %v727
      %v729 = vrot.slane %v484, 1
      %v730 = vsel %vm707, %v727, %v729
      %v731 = vrot.slane %v485, 1
      %v732 = vsel %vm707, %v729, %v731
      %v733 = vrot.slane %v486, 1
      %v734 = vsel %vm707, %v731, %v733
      %v735 = vrot.slane %v487, 1
      %v736 = vsel %vm707, %v733, %v735
      %v737 = vrot.slane %v488, 1
      %v738 = vsel %vm707, %v735, %v737
      %v739 = vrot.slane %v489, 1
      %v740 = vsel %vm707, %v737, %v739
      %v741 = vrot.slane %v490, 1
      %v742 = vsel %vm707, %v739, %v741
      %v743 = vrot.slane %v491, 1
      %v744 = vsel %vm707, %v741, %v743
      %v745 = vrot.slane %v492, 1
      %v746 = vsel %vm707, %v743, %v745
      %v747 = vrot.slane %v493, 1
      %v748 = vsel %vm707, %v745, %v747
      %v749 = vrot.slane %v494, 1
      %v750 = vsel %vm707, %v747, %v749
      %v751 = vrot.slane %v495, 1
      %v752 = vsel %vm707, %v749, %v751
      %v753 = vrot.slane %v496, 1
      %v754 = vsel %vm707, %v751, %v753
      %v755 = vrot.slane %v497, 1
      %v756 = vsel %vm707, %v753, %v755
      %v757 = vrot.slane %v498, 1
      %v758 = vsel %vm707, %v755, %v757
      %v759 = vrot.slane %v499, 1
      %v760 = vsel %vm707, %v757, %v759
      %v761 = vrot.slane %v500, 1
      %v762 = vsel %vm707, %v759, %v761
      %v763 = vrot.slane %v501, 1
      %v764 = vsel %vm707, %v761, %v763
      %v765 = vrot.slane %v502, 1
      %v766 = vsel %vm707, %v763, %v765
      %v767 = vrot.slane %v503, 1
      %v768 = vsel %vm707, %v765, %v767
      %v769 = vrot.slane %v504, 1
      %v770 = vsel %vm707, %v767, %v769
      %v771 = vrot.slane %v505, 1
      %v772 = vsel %vm707, %v769, %v771
      %v773 = vrot.slane %v506, 1
      %v774 = vsel %vm707, %v771, %v773
      %v775 = vrot.slane %v507, 1
      %v776 = vsel %vm707, %v773, %v775
      %v777 = vrot.slane %v508, 1
      %v778 = vsel %vm707, %v775, %v777
      %v779 = vrot.slane %v509, 1
      %v780 = vsel %vm707, %v777, %v779
      %v781 = vrot.slane %v510, 1
      %v782 = vsel %vm707, %v779, %v781
      %v783 = vrot.slane %v511, 1
      %v784 = vsel %vm707, %v781, %v783
      %v785 = vrot.slane %v512, 1
      %v786 = vsel %vm707, %v783, %v785
      %v787 = vrot.slane %v513, 1
      %v788 = vsel %vm707, %v785, %v787
      %v789 = vrot.slane %v514, 1
      %v790 = vsel %vm707, %v787, %v789
      %v791 = vrot.slane %v515, 1
      %v792 = vsel %vm707, %v789, %v791
      %v793 = vrot.slane %v516, 1
      %v794 = vsel %vm707, %v791, %v793
      %v795 = vrot.slane %v517, 1
      %v796 = vsel %vm707, %v793, %v795
      %v797 = vrot.slane %v518, 1
      %v798 = vsel %vm707, %v795, %v797
      %v799 = vrot.slane %v519, 1
      %v800 = vsel %vm707, %v797, %v799
      %v801 = vrot.slane %v520, 1
      %v802 = vsel %vm707, %v799, %v801
      %v803 = vrot.slane %v521, 1
      %v804 = vsel %vm707, %v801, %v803
      %v805 = vrot.slane %v522, 1
      %v806 = vsel %vm707, %v803, %v805
      %v807 = vrot.slane %v523, 1
      %v808 = vsel %vm707, %v805, %v807
      %v809 = vrot.slane %v524, 1
      %v810 = vsel %vm707, %v807, %v809
      %v811 = vrot.slane %v525, 1
      %v812 = vsel %vm707, %v809, %v811
      %v813 = vrot.slane %v526, 1
      %v814 = vsel %vm707, %v811, %v813
      %v815 = vrot.slane %v527, 1
      %v816 = vsel %vm707, %v813, %v815
      %v817 = vrot.slane %v528, 1
      %v818 = vsel %vm707, %v815, %v817
      %v819 = vrot.slane %v529, 1
      %v820 = vsel %vm707, %v817, %v819
      %v821 = vrot.slane %v530, 1
      %v822 = vsel %vm707, %v819, %v821
      %v823 = vrot.slane %v531, 1
      %v824 = vsel %vm707, %v821, %v823
      %v825 = vrot.slane %v532, 1
      %v826 = vsel %vm707, %v823, %v825
      %v827 = vrot.slane %v533, 1
      %v828 = vsel %vm707, %v825, %v827
      %v829 = vrot.slane %v534, 1
      %v830 = vsel %vm707, %v827, %v829
      %v831 = vrot.slane %v535, 1
      %v832 = vsel %vm707, %v829, %v831
      %v833 = vrot.slane %v536, 1
      %v834 = vsel %vm707, %v831, %v833
      %v835 = vrot.slane %v537, 1
      %v836 = vsel %vm707, %v833, %v835
      %v837 = vrot.slane %v538, 1
      %v838 = vsel %vm707, %v835, %v837
      %v839 = vrot.slane %v539, 1
      %v840 = vsel %vm707, %v837, %v839
      %v841 = vrot.slane %v540, 1
      %v842 = vsel %vm707, %v839, %v841
      %v843 = vrot.slane %v541, 1
      %v844 = vsel %vm707, %v841, %v843
      %v845 = vrot.slane %v542, 1
      %v846 = vsel %vm707, %v843, %v845
      %v847 = vrot.slane %v543, 1
      %v848 = vsel %vm707, %v845, %v847
      %v849 = vrot.slane %v544, 1
      %v850 = vsel %vm707, %v847, %v849
      %v851 = vrot.slane %v545, 1
      %v852 = vsel %vm707, %v849, %v851
      %v853 = vrot.slane %v546, 1
      %v854 = vsel %vm707, %v851, %v853
      %v855 = vrot.slane %v547, 1
      %v856 = vsel %vm707, %v853, %v855
      %v857 = vrot.slane %v576, 1
      %v858 = vsel %vm707, %v855, %v857
      %v859 = vrot.slane %v577, 1
      %v860 = vsel %vm707, %v857, %v859
      %v861 = vrot.slane %v578, 1
      %v862 = vsel %vm707, %v859, %v861
      %v863 = vrot.slane %v579, 1
      %v864 = vsel %vm707, %v861, %v863
      %v865 = vrot.slane %v580, 1
      %v866 = vsel %vm707, %v863, %v865
      %v867 = vrot.slane %v581, 1
      %v868 = vsel %vm707, %v865, %v867
      %v869 = vrot.slane %v582, 1
      %v870 = vsel %vm707, %v867, %v869
      %v871 = vrot.slane %v583, 1
      %v872 = vsel %vm707, %v869, %v871
      %v873 = vrot.slane %v584, 1
      %v874 = vsel %vm707, %v871, %v873
      %v875 = vrot.slane %v585, 1
      %v876 = vsel %vm707, %v873, %v875
      %v877 = vrot.slane %v586, 1
      %v878 = vsel %vm707, %v875, %v877
      %v879 = vrot.slane %v587, 1
      %v880 = vsel %vm707, %v877, %v879
      %v881 = vrot.slane %v588, 1
      %v882 = vsel %vm707, %v879, %v881
      %v883 = vrot.slane %v589, 1
      %v884 = vsel %vm707, %v881, %v883
      %v885 = vrot.slane %v590, 1
      %v886 = vsel %vm707, %v883, %v885
      %v887 = vrot.slane %v591, 1
      %v888 = vsel %vm707, %v885, %v887
      %v889 = vrot.slane %v592, 1
      %v890 = vsel %vm707, %v887, %v889
      %v891 = vrot.slane %v593, 1
      %v892 = vsel %vm707, %v889, %v891
      %v893 = vrot.slane %v594, 1
      %v894 = vsel %vm707, %v891, %v893
      %v895 = vrot.slane %v595, 1
      %v896 = vsel %vm707, %v893, %v895
      %v897 = vrot.slane %v596, 1
      %v898 = vsel %vm707, %v895, %v897
      %v899 = vrot.slane %v597, 1
      %v900 = vsel %vm707, %v897, %v899
      %v901 = vrot.slane %v598, 1
      %v902 = vsel %vm707, %v899, %v901
      %v903 = vrot.slane %v599, 1
      %v904 = vsel %vm707, %v901, %v903
      %v905 = vrot.slane %v600, 1
      %v906 = vsel %vm707, %v903, %v905
      %v907 = vrot.slane %v601, 1
      %v908 = vsel %vm707, %v905, %v907
      %v909 = vrot.slane %v602, 1
      %v910 = vsel %vm707, %v907, %v909
      %v911 = vrot.slane %v603, 1
      %v912 = vsel %vm707, %v909, %v911
      %913 = vrot.lane.b32.xlu0 %v710, 4
      %v914 = vpop.permute.xlu0 %913
      %915 = vrot.lane.b32.xlu0 %v712, 4
      %v916 = vpop.permute.xlu0 %915
      %917 = vrot.lane.b32.xlu0 %v714, 4
      %v918 = vpop.permute.xlu0 %917
      %919 = vrot.lane.b32.xlu0 %v716, 4
      %v920 = vpop.permute.xlu0 %919
      %921 = vrot.lane.b32.xlu0 %v718, 4
      %v922 = vpop.permute.xlu0 %921
      %923 = vrot.lane.b32.xlu0 %v720, 4
      %v924 = vpop.permute.xlu0 %923
      %925 = vrot.lane.b32.xlu0 %v722, 4
      %v926 = vpop.permute.xlu0 %925
      %927 = vrot.lane.b32.xlu0 %v724, 4
      %v928 = vpop.permute.xlu0 %927
      %929 = vrot.lane.b32.xlu0 %v726, 4
      %v930 = vpop.permute.xlu0 %929
      %931 = vrot.lane.b32.xlu0 %v728, 4
      %v932 = vpop.permute.xlu0 %931
      %933 = vrot.lane.b32.xlu0 %v730, 4
      %v934 = vpop.permute.xlu0 %933
      %935 = vrot.lane.b32.xlu0 %v732, 4
      %v936 = vpop.permute.xlu0 %935
      %937 = vrot.lane.b32.xlu0 %v734, 4
      %v938 = vpop.permute.xlu0 %937
      %939 = vrot.lane.b32.xlu0 %v736, 4
      %v940 = vpop.permute.xlu0 %939
      %941 = vrot.lane.b32.xlu0 %v738, 4
      %v942 = vpop.permute.xlu0 %941
      %943 = vrot.lane.b32.xlu0 %v740, 4
      %v944 = vpop.permute.xlu0 %943
      %945 = vrot.lane.b32.xlu0 %v742, 4
      %v946 = vpop.permute.xlu0 %945
      %947 = vrot.lane.b32.xlu0 %v744, 4
      %v948 = vpop.permute.xlu0 %947
      %949 = vrot.lane.b32.xlu0 %v746, 4
      %v950 = vpop.permute.xlu0 %949
      %951 = vrot.lane.b32.xlu0 %v748, 4
      %v952 = vpop.permute.xlu0 %951
      %953 = vrot.lane.b32.xlu0 %v750, 4
      %v954 = vpop.permute.xlu0 %953
      %955 = vrot.lane.b32.xlu0 %v752, 4
      %v956 = vpop.permute.xlu0 %955
      %957 = vrot.lane.b32.xlu0 %v754, 4
      %v958 = vpop.permute.xlu0 %957
      %959 = vrot.lane.b32.xlu0 %v756, 4
      %v960 = vpop.permute.xlu0 %959
      %961 = vrot.lane.b32.xlu0 %v758, 4
      %v962 = vpop.permute.xlu0 %961
      %963 = vrot.lane.b32.xlu0 %v760, 4
      %v964 = vpop.permute.xlu0 %963
      %965 = vrot.lane.b32.xlu0 %v762, 4
      %v966 = vpop.permute.xlu0 %965
      %967 = vrot.lane.b32.xlu0 %v764, 4
      %v968 = vpop.permute.xlu0 %967
      %969 = vrot.lane.b32.xlu0 %v766, 4
      %v970 = vpop.permute.xlu0 %969
      %971 = vrot.lane.b32.xlu0 %v768, 4
      %v972 = vpop.permute.xlu0 %971
      %973 = vrot.lane.b32.xlu0 %v770, 4
      %v974 = vpop.permute.xlu0 %973
      %975 = vrot.lane.b32.xlu0 %v772, 4
      %v976 = vpop.permute.xlu0 %975
      %977 = vrot.lane.b32.xlu0 %v774, 4
      %v978 = vpop.permute.xlu0 %977
      %979 = vrot.lane.b32.xlu0 %v776, 4
      %v980 = vpop.permute.xlu0 %979
      %981 = vrot.lane.b32.xlu0 %v778, 4
      %v982 = vpop.permute.xlu0 %981
      %983 = vrot.lane.b32.xlu0 %v780, 4
      %v984 = vpop.permute.xlu0 %983
      %985 = vrot.lane.b32.xlu0 %v782, 4
      %v986 = vpop.permute.xlu0 %985
      %987 = vrot.lane.b32.xlu0 %v784, 4
      %v988 = vpop.permute.xlu0 %987
      %989 = vrot.lane.b32.xlu0 %v786, 4
      %v990 = vpop.permute.xlu0 %989
      %991 = vrot.lane.b32.xlu0 %v788, 4
      %v992 = vpop.permute.xlu0 %991
      %993 = vrot.lane.b32.xlu0 %v790, 4
      %v994 = vpop.permute.xlu0 %993
      %995 = vrot.lane.b32.xlu0 %v792, 4
      %v996 = vpop.permute.xlu0 %995
      %997 = vrot.lane.b32.xlu0 %v794, 4
      %v998 = vpop.permute.xlu0 %997
      %999 = vrot.lane.b32.xlu0 %v796, 4
      %v1000 = vpop.permute.xlu0 %999
      %1001 = vrot.lane.b32.xlu0 %v798, 4
      %v1002 = vpop.permute.xlu0 %1001
      %1003 = vrot.lane.b32.xlu0 %v800, 4
      %v1004 = vpop.permute.xlu0 %1003
      %1005 = vrot.lane.b32.xlu0 %v802, 4
      %v1006 = vpop.permute.xlu0 %1005
      %1007 = vrot.lane.b32.xlu0 %v804, 4
      %v1008 = vpop.permute.xlu0 %1007
      %1009 = vrot.lane.b32.xlu0 %v806, 4
      %v1010 = vpop.permute.xlu0 %1009
      %1011 = vrot.lane.b32.xlu0 %v808, 4
      %v1012 = vpop.permute.xlu0 %1011
      %1013 = vrot.lane.b32.xlu0 %v810, 4
      %v1014 = vpop.permute.xlu0 %1013
      %1015 = vrot.lane.b32.xlu0 %v812, 4
      %v1016 = vpop.permute.xlu0 %1015
      %1017 = vrot.lane.b32.xlu0 %v814, 4
      %v1018 = vpop.permute.xlu0 %1017
      %1019 = vrot.lane.b32.xlu0 %v816, 4
      %v1020 = vpop.permute.xlu0 %1019
      %1021 = vrot.lane.b32.xlu0 %v818, 4
      %v1022 = vpop.permute.xlu0 %1021
      %1023 = vrot.lane.b32.xlu0 %v820, 4
      %v1024 = vpop.permute.xlu0 %1023
      %1025 = vrot.lane.b32.xlu0 %v822, 4
      %v1026 = vpop.permute.xlu0 %1025
      %1027 = vrot.lane.b32.xlu0 %v824, 4
      %v1028 = vpop.permute.xlu0 %1027
      %1029 = vrot.lane.b32.xlu0 %v826, 4
      %v1030 = vpop.permute.xlu0 %1029
      %1031 = vrot.lane.b32.xlu0 %v828, 4
      %v1032 = vpop.permute.xlu0 %1031
      %1033 = vrot.lane.b32.xlu0 %v830, 4
      %v1034 = vpop.permute.xlu0 %1033
      %1035 = vrot.lane.b32.xlu0 %v832, 4
      %v1036 = vpop.permute.xlu0 %1035
      %1037 = vrot.lane.b32.xlu0 %v834, 4
      %v1038 = vpop.permute.xlu0 %1037
      %1039 = vrot.lane.b32.xlu0 %v836, 4
      %v1040 = vpop.permute.xlu0 %1039
      %1041 = vrot.lane.b32.xlu0 %v838, 4
      %v1042 = vpop.permute.xlu0 %1041
      %1043 = vrot.lane.b32.xlu0 %v840, 4
      %v1044 = vpop.permute.xlu0 %1043
      %1045 = vrot.lane.b32.xlu0 %v842, 4
      %v1046 = vpop.permute.xlu0 %1045
      %1047 = vrot.lane.b32.xlu0 %v844, 4
      %v1048 = vpop.permute.xlu0 %1047
      %1049 = vrot.lane.b32.xlu0 %v846, 4
      %v1050 = vpop.permute.xlu0 %1049
      %1051 = vrot.lane.b32.xlu0 %v848, 4
      %v1052 = vpop.permute.xlu0 %1051
      %1053 = vrot.lane.b32.xlu0 %v850, 4
      %v1054 = vpop.permute.xlu0 %1053
      %1055 = vrot.lane.b32.xlu0 %v852, 4
      %v1056 = vpop.permute.xlu0 %1055
      %1057 = vrot.lane.b32.xlu0 %v854, 4
      %v1058 = vpop.permute.xlu0 %1057
      %1059 = vrot.lane.b32.xlu0 %v856, 4
      %v1060 = vpop.permute.xlu0 %1059
      %1061 = vrot.lane.b32.xlu0 %v858, 4
      %v1062 = vpop.permute.xlu0 %1061
      %1063 = vrot.lane.b32.xlu0 %v860, 4
      %v1064 = vpop.permute.xlu0 %1063
      %1065 = vrot.lane.b32.xlu0 %v862, 4
      %v1066 = vpop.permute.xlu0 %1065
      %1067 = vrot.lane.b32.xlu0 %v864, 4
      %v1068 = vpop.permute.xlu0 %1067
      %1069 = vrot.lane.b32.xlu0 %v866, 4
      %v1070 = vpop.permute.xlu0 %1069
      %1071 = vrot.lane.b32.xlu0 %v868, 4
      %v1072 = vpop.permute.xlu0 %1071
      %1073 = vrot.lane.b32.xlu0 %v870, 4
      %v1074 = vpop.permute.xlu0 %1073
      %1075 = vrot.lane.b32.xlu0 %v872, 4
      %v1076 = vpop.permute.xlu0 %1075
      %1077 = vrot.lane.b32.xlu0 %v874, 4
      %v1078 = vpop.permute.xlu0 %1077
      %1079 = vrot.lane.b32.xlu0 %v876, 4
      %v1080 = vpop.permute.xlu0 %1079
      %1081 = vrot.lane.b32.xlu0 %v878, 4
      %v1082 = vpop.permute.xlu0 %1081
      %1083 = vrot.lane.b32.xlu0 %v880, 4
      %v1084 = vpop.permute.xlu0 %1083
      %1085 = vrot.lane.b32.xlu0 %v882, 4
      %v1086 = vpop.permute.xlu0 %1085
      %1087 = vrot.lane.b32.xlu0 %v884, 4
      %v1088 = vpop.permute.xlu0 %1087
      %1089 = vrot.lane.b32.xlu0 %v886, 4
      %v1090 = vpop.permute.xlu0 %1089
      %1091 = vrot.lane.b32.xlu0 %v888, 4
      %v1092 = vpop.permute.xlu0 %1091
      %1093 = vrot.lane.b32.xlu0 %v890, 4
      %v1094 = vpop.permute.xlu0 %1093
      %1095 = vrot.lane.b32.xlu0 %v892, 4
      %v1096 = vpop.permute.xlu0 %1095
      %1097 = vrot.lane.b32.xlu0 %v894, 4
      %v1098 = vpop.permute.xlu0 %1097
      %1099 = vrot.lane.b32.xlu0 %v896, 4
      %v1100 = vpop.permute.xlu0 %1099
      %1101 = vrot.lane.b32.xlu0 %v898, 4
      %v1102 = vpop.permute.xlu0 %1101
      %1103 = vrot.lane.b32.xlu0 %v900, 4
      %v1104 = vpop.permute.xlu0 %1103
      %1105 = vrot.lane.b32.xlu0 %v902, 4
      %v1106 = vpop.permute.xlu0 %1105
      %1107 = vrot.lane.b32.xlu0 %v904, 4
      %v1108 = vpop.permute.xlu0 %1107
      %1109 = vrot.lane.b32.xlu0 %v906, 4
      %v1110 = vpop.permute.xlu0 %1109
      %1111 = vrot.lane.b32.xlu0 %v908, 4
      %v1112 = vpop.permute.xlu0 %1111
      %1113 = vrot.lane.b32.xlu0 %v910, 4
      %v1114 = vpop.permute.xlu0 %1113
      %1115 = vrot.lane.b32.xlu0 %v912, 4
      %v1116 = vpop.permute.xlu0 %1115
      %1117 = vrot.lane.b32.xlu0 %v911, 4
      %v1118 = vpop.permute.xlu0 %1117
      %vm1222 = vcmask 1045504
      %v1223 = vrot.slane %v473, 2
      %v1224 = vrot.slane %v474, 2
      %v1225 = vsel %vm1222, %v1223, %v1224
      %v1226 = vrot.slane %v475, 2
      %v1227 = vsel %vm1222, %v1224, %v1226
      %v1228 = vrot.slane %v476, 2
      %v1229 = vsel %vm1222, %v1226, %v1228
      %v1230 = vrot.slane %v477, 2
      %v1231 = vsel %vm1222, %v1228, %v1230
      %v1232 = vrot.slane %v478, 2
      %v1233 = vsel %vm1222, %v1230, %v1232
      %v1234 = vrot.slane %v479, 2
      %v1235 = vsel %vm1222, %v1232, %v1234
      %v1236 = vrot.slane %v480, 2
      %v1237 = vsel %vm1222, %v1234, %v1236
      %v1238 = vrot.slane %v481, 2
      %v1239 = vsel %vm1222, %v1236, %v1238
      %v1240 = vrot.slane %v482, 2
      %v1241 = vsel %vm1222, %v1238, %v1240
      %v1242 = vrot.slane %v483, 2
      %v1243 = vsel %vm1222, %v1240, %v1242
      %v1244 = vrot.slane %v484, 2
      %v1245 = vsel %vm1222, %v1242, %v1244
      %v1246 = vrot.slane %v485, 2
      %v1247 = vsel %vm1222, %v1244, %v1246
      %v1248 = vrot.slane %v486, 2
      %v1249 = vsel %vm1222, %v1246, %v1248
      %v1250 = vrot.slane %v487, 2
      %v1251 = vsel %vm1222, %v1248, %v1250
      %v1252 = vrot.slane %v488, 2
      %v1253 = vsel %vm1222, %v1250, %v1252
      %v1254 = vrot.slane %v489, 2
      %v1255 = vsel %vm1222, %v1252, %v1254
      %v1256 = vrot.slane %v490, 2
      %v1257 = vsel %vm1222, %v1254, %v1256
      %v1258 = vrot.slane %v491, 2
      %v1259 = vsel %vm1222, %v1256, %v1258
      %v1260 = vrot.slane %v492, 2
      %v1261 = vsel %vm1222, %v1258, %v1260
      %v1262 = vrot.slane %v493, 2
      %v1263 = vsel %vm1222, %v1260, %v1262
      %v1264 = vrot.slane %v494, 2
      %v1265 = vsel %vm1222, %v1262, %v1264
      %v1266 = vrot.slane %v495, 2
      %v1267 = vsel %vm1222, %v1264, %v1266
      %v1268 = vrot.slane %v496, 2
      %v1269 = vsel %vm1222, %v1266, %v1268
      %v1270 = vrot.slane %v497, 2
      %v1271 = vsel %vm1222, %v1268, %v1270
      %v1272 = vrot.slane %v498, 2
      %v1273 = vsel %vm1222, %v1270, %v1272
      %v1274 = vrot.slane %v499, 2
      %v1275 = vsel %vm1222, %v1272, %v1274
      %v1276 = vrot.slane %v500, 2
      %v1277 = vsel %vm1222, %v1274, %v1276
      %v1278 = vrot.slane %v501, 2
      %v1279 = vsel %vm1222, %v1276, %v1278
      %v1280 = vrot.slane %v502, 2
      %v1281 = vsel %vm1222, %v1278, %v1280
      %v1282 = vrot.slane %v503, 2
      %v1283 = vsel %vm1222, %v1280, %v1282
      %v1284 = vrot.slane %v504, 2
      %v1285 = vsel %vm1222, %v1282, %v1284
      %v1286 = vrot.slane %v505, 2
      %v1287 = vsel %vm1222, %v1284, %v1286
      %v1288 = vrot.slane %v506, 2
      %v1289 = vsel %vm1222, %v1286, %v1288
      %v1290 = vrot.slane %v507, 2
      %v1291 = vsel %vm1222, %v1288, %v1290
      %v1292 = vrot.slane %v508, 2
      %v1293 = vsel %vm1222, %v1290, %v1292
      %v1294 = vrot.slane %v509, 2
      %v1295 = vsel %vm1222, %v1292, %v1294
      %v1296 = vrot.slane %v510, 2
      %v1297 = vsel %vm1222, %v1294, %v1296
      %v1298 = vrot.slane %v511, 2
      %v1299 = vsel %vm1222, %v1296, %v1298
      %v1300 = vrot.slane %v512, 2
      %v1301 = vsel %vm1222, %v1298, %v1300
      %v1302 = vrot.slane %v513, 2
      %v1303 = vsel %vm1222, %v1300, %v1302
      %v1304 = vrot.slane %v514, 2
      %v1305 = vsel %vm1222, %v1302, %v1304
      %v1306 = vrot.slane %v515, 2
      %v1307 = vsel %vm1222, %v1304, %v1306
      %v1308 = vrot.slane %v516, 2
      %v1309 = vsel %vm1222, %v1306, %v1308
      %v1310 = vrot.slane %v517, 2
      %v1311 = vsel %vm1222, %v1308, %v1310
      %v1312 = vrot.slane %v518, 2
      %v1313 = vsel %vm1222, %v1310, %v1312
      %v1314 = vrot.slane %v519, 2
      %v1315 = vsel %vm1222, %v1312, %v1314
      %v1316 = vrot.slane %v520, 2
      %v1317 = vsel %vm1222, %v1314, %v1316
      %v1318 = vrot.slane %v521, 2
      %v1319 = vsel %vm1222, %v1316, %v1318
      %v1320 = vrot.slane %v522, 2
      %v1321 = vsel %vm1222, %v1318, %v1320
      %v1322 = vrot.slane %v523, 2
      %v1323 = vsel %vm1222, %v1320, %v1322
      %v1324 = vrot.slane %v524, 2
      %v1325 = vsel %vm1222, %v1322, %v1324
      %v1326 = vrot.slane %v525, 2
      %v1327 = vsel %vm1222, %v1324, %v1326
      %v1328 = vrot.slane %v526, 2
      %v1329 = vsel %vm1222, %v1326, %v1328
      %v1330 = vrot.slane %v527, 2
      %v1331 = vsel %vm1222, %v1328, %v1330
      %v1332 = vrot.slane %v528, 2
      %v1333 = vsel %vm1222, %v1330, %v1332
      %v1334 = vrot.slane %v529, 2
      %v1335 = vsel %vm1222, %v1332, %v1334
      %v1336 = vrot.slane %v530, 2
      %v1337 = vsel %vm1222, %v1334, %v1336
      %v1338 = vrot.slane %v531, 2
      %v1339 = vsel %vm1222, %v1336, %v1338
      %v1340 = vrot.slane %v532, 2
      %v1341 = vsel %vm1222, %v1338, %v1340
      %v1342 = vrot.slane %v533, 2
      %v1343 = vsel %vm1222, %v1340, %v1342
      %v1344 = vrot.slane %v534, 2
      %v1345 = vsel %vm1222, %v1342, %v1344
      %v1346 = vrot.slane %v535, 2
      %v1347 = vsel %vm1222, %v1344, %v1346
      %v1348 = vrot.slane %v536, 2
      %v1349 = vsel %vm1222, %v1346, %v1348
      %v1350 = vrot.slane %v537, 2
      %v1351 = vsel %vm1222, %v1348, %v1350
      %v1352 = vrot.slane %v538, 2
      %v1353 = vsel %vm1222, %v1350, %v1352
      %v1354 = vrot.slane %v539, 2
      %v1355 = vsel %vm1222, %v1352, %v1354
      %v1356 = vrot.slane %v540, 2
      %v1357 = vsel %vm1222, %v1354, %v1356
      %v1358 = vrot.slane %v541, 2
      %v1359 = vsel %vm1222, %v1356, %v1358
      %v1360 = vrot.slane %v542, 2
      %v1361 = vsel %vm1222, %v1358, %v1360
      %v1362 = vrot.slane %v543, 2
      %v1363 = vsel %vm1222, %v1360, %v1362
      %v1364 = vrot.slane %v544, 2
      %v1365 = vsel %vm1222, %v1362, %v1364
      %v1366 = vrot.slane %v545, 2
      %v1367 = vsel %vm1222, %v1364, %v1366
      %v1368 = vrot.slane %v546, 2
      %v1369 = vsel %vm1222, %v1366, %v1368
      %v1370 = vrot.slane %v547, 2
      %v1371 = vsel %vm1222, %v1368, %v1370
      %v1372 = vrot.slane %v576, 2
      %v1373 = vsel %vm1222, %v1370, %v1372
      %v1374 = vrot.slane %v577, 2
      %v1375 = vsel %vm1222, %v1372, %v1374
      %v1376 = vrot.slane %v578, 2
      %v1377 = vsel %vm1222, %v1374, %v1376
      %v1378 = vrot.slane %v579, 2
      %v1379 = vsel %vm1222, %v1376, %v1378
      %v1380 = vrot.slane %v580, 2
      %v1381 = vsel %vm1222, %v1378, %v1380
      %v1382 = vrot.slane %v581, 2
      %v1383 = vsel %vm1222, %v1380, %v1382
      %v1384 = vrot.slane %v582, 2
      %v1385 = vsel %vm1222, %v1382, %v1384
      %v1386 = vrot.slane %v583, 2
      %v1387 = vsel %vm1222, %v1384, %v1386
      %v1388 = vrot.slane %v584, 2
      %v1389 = vsel %vm1222, %v1386, %v1388
      %v1390 = vrot.slane %v585, 2
      %v1391 = vsel %vm1222, %v1388, %v1390
      %v1392 = vrot.slane %v586, 2
      %v1393 = vsel %vm1222, %v1390, %v1392
      %v1394 = vrot.slane %v587, 2
      %v1395 = vsel %vm1222, %v1392, %v1394
      %v1396 = vrot.slane %v588, 2
      %v1397 = vsel %vm1222, %v1394, %v1396
      %v1398 = vrot.slane %v589, 2
      %v1399 = vsel %vm1222, %v1396, %v1398
      %v1400 = vrot.slane %v590, 2
      %v1401 = vsel %vm1222, %v1398, %v1400
      %v1402 = vrot.slane %v591, 2
      %v1403 = vsel %vm1222, %v1400, %v1402
      %v1404 = vrot.slane %v592, 2
      %v1405 = vsel %vm1222, %v1402, %v1404
      %v1406 = vrot.slane %v593, 2
      %v1407 = vsel %vm1222, %v1404, %v1406
      %v1408 = vrot.slane %v594, 2
      %v1409 = vsel %vm1222, %v1406, %v1408
      %v1410 = vrot.slane %v595, 2
      %v1411 = vsel %vm1222, %v1408, %v1410
      %v1412 = vrot.slane %v596, 2
      %v1413 = vsel %vm1222, %v1410, %v1412
      %v1414 = vrot.slane %v597, 2
      %v1415 = vsel %vm1222, %v1412, %v1414
      %v1416 = vrot.slane %v598, 2
      %v1417 = vsel %vm1222, %v1414, %v1416
      %v1418 = vrot.slane %v599, 2
      %v1419 = vsel %vm1222, %v1416, %v1418
      %v1420 = vrot.slane %v600, 2
      %v1421 = vsel %vm1222, %v1418, %v1420
      %v1422 = vrot.slane %v601, 2
      %v1423 = vsel %vm1222, %v1420, %v1422
      %v1424 = vrot.slane %v602, 2
      %v1425 = vsel %vm1222, %v1422, %v1424
      %v1426 = vrot.slane %v603, 2
      %v1427 = vsel %vm1222, %v1424, %v1426
      %1428 = vrot.lane.b32.xlu0 %v1225, 8
      %v1429 = vpop.permute.xlu0 %1428
      %1430 = vrot.lane.b32.xlu0 %v1227, 8
      %v1431 = vpop.permute.xlu0 %1430
      %1432 = vrot.lane.b32.xlu0 %v1229, 8
      %v1433 = vpop.permute.xlu0 %1432
      %1434 = vrot.lane.b32.xlu0 %v1231, 8
      %v1435 = vpop.permute.xlu0 %1434
      %1436 = vrot.lane.b32.xlu0 %v1233, 8
      %v1437 = vpop.permute.xlu0 %1436
      %1438 = vrot.lane.b32.xlu0 %v1235, 8
      %v1439 = vpop.permute.xlu0 %1438
      %1440 = vrot.lane.b32.xlu0 %v1237, 8
      %v1441 = vpop.permute.xlu0 %1440
      %1442 = vrot.lane.b32.xlu0 %v1239, 8
      %v1443 = vpop.permute.xlu0 %1442
      %1444 = vrot.lane.b32.xlu0 %v1241, 8
      %v1445 = vpop.permute.xlu0 %1444
      %1446 = vrot.lane.b32.xlu0 %v1243, 8
      %v1447 = vpop.permute.xlu0 %1446
      %1448 = vrot.lane.b32.xlu0 %v1245, 8
      %v1449 = vpop.permute.xlu0 %1448
      %1450 = vrot.lane.b32.xlu0 %v1247, 8
      %v1451 = vpop.permute.xlu0 %1450
      %1452 = vrot.lane.b32.xlu0 %v1249, 8
      %v1453 = vpop.permute.xlu0 %1452
      %1454 = vrot.lane.b32.xlu0 %v1251, 8
      %v1455 = vpop.permute.xlu0 %1454
      %1456 = vrot.lane.b32.xlu0 %v1253, 8
      %v1457 = vpop.permute.xlu0 %1456
      %1458 = vrot.lane.b32.xlu0 %v1255, 8
      %v1459 = vpop.permute.xlu0 %1458
      %1460 = vrot.lane.b32.xlu0 %v1257, 8
      %v1461 = vpop.permute.xlu0 %1460
      %1462 = vrot.lane.b32.xlu0 %v1259, 8
      %v1463 = vpop.permute.xlu0 %1462
      %1464 = vrot.lane.b32.xlu0 %v1261, 8
      %v1465 = vpop.permute.xlu0 %1464
      %1466 = vrot.lane.b32.xlu0 %v1263, 8
      %v1467 = vpop.permute.xlu0 %1466
      %1468 = vrot.lane.b32.xlu0 %v1265, 8
      %v1469 = vpop.permute.xlu0 %1468
      %1470 = vrot.lane.b32.xlu0 %v1267, 8
      %v1471 = vpop.permute.xlu0 %1470
      %1472 = vrot.lane.b32.xlu0 %v1269, 8
      %v1473 = vpop.permute.xlu0 %1472
      %1474 = vrot.lane.b32.xlu0 %v1271, 8
      %v1475 = vpop.permute.xlu0 %1474
      %1476 = vrot.lane.b32.xlu0 %v1273, 8
      %v1477 = vpop.permute.xlu0 %1476
      %1478 = vrot.lane.b32.xlu0 %v1275, 8
      %v1479 = vpop.permute.xlu0 %1478
      %1480 = vrot.lane.b32.xlu0 %v1277, 8
      %v1481 = vpop.permute.xlu0 %1480
      %1482 = vrot.lane.b32.xlu0 %v1279, 8
      %v1483 = vpop.permute.xlu0 %1482
      %1484 = vrot.lane.b32.xlu0 %v1281, 8
      %v1485 = vpop.permute.xlu0 %1484
      %1486 = vrot.lane.b32.xlu0 %v1283, 8
      %v1487 = vpop.permute.xlu0 %1486
      %1488 = vrot.lane.b32.xlu0 %v1285, 8
      %v1489 = vpop.permute.xlu0 %1488
      %1490 = vrot.lane.b32.xlu0 %v1287, 8
      %v1491 = vpop.permute.xlu0 %1490
      %1492 = vrot.lane.b32.xlu0 %v1289, 8
      %v1493 = vpop.permute.xlu0 %1492
      %1494 = vrot.lane.b32.xlu0 %v1291, 8
      %v1495 = vpop.permute.xlu0 %1494
      %1496 = vrot.lane.b32.xlu0 %v1293, 8
      %v1497 = vpop.permute.xlu0 %1496
      %1498 = vrot.lane.b32.xlu0 %v1295, 8
      %v1499 = vpop.permute.xlu0 %1498
      %1500 = vrot.lane.b32.xlu0 %v1297, 8
      %v1501 = vpop.permute.xlu0 %1500
      %1502 = vrot.lane.b32.xlu0 %v1299, 8
      %v1503 = vpop.permute.xlu0 %1502
      %1504 = vrot.lane.b32.xlu0 %v1301, 8
      %v1505 = vpop.permute.xlu0 %1504
      %1506 = vrot.lane.b32.xlu0 %v1303, 8
      %v1507 = vpop.permute.xlu0 %1506
      %1508 = vrot.lane.b32.xlu0 %v1305, 8
      %v1509 = vpop.permute.xlu0 %1508
      %1510 = vrot.lane.b32.xlu0 %v1307, 8
      %v1511 = vpop.permute.xlu0 %1510
      %1512 = vrot.lane.b32.xlu0 %v1309, 8
      %v1513 = vpop.permute.xlu0 %1512
      %1514 = vrot.lane.b32.xlu0 %v1311, 8
      %v1515 = vpop.permute.xlu0 %1514
      %1516 = vrot.lane.b32.xlu0 %v1313, 8
      %v1517 = vpop.permute.xlu0 %1516
      %1518 = vrot.lane.b32.xlu0 %v1315, 8
      %v1519 = vpop.permute.xlu0 %1518
      %1520 = vrot.lane.b32.xlu0 %v1317, 8
      %v1521 = vpop.permute.xlu0 %1520
      %1522 = vrot.lane.b32.xlu0 %v1319, 8
      %v1523 = vpop.permute.xlu0 %1522
      %1524 = vrot.lane.b32.xlu0 %v1321, 8
      %v1525 = vpop.permute.xlu0 %1524
      %1526 = vrot.lane.b32.xlu0 %v1323, 8
      %v1527 = vpop.permute.xlu0 %1526
      %1528 = vrot.lane.b32.xlu0 %v1325, 8
      %v1529 = vpop.permute.xlu0 %1528
      %1530 = vrot.lane.b32.xlu0 %v1327, 8
      %v1531 = vpop.permute.xlu0 %1530
      %1532 = vrot.lane.b32.xlu0 %v1329, 8
      %v1533 = vpop.permute.xlu0 %1532
      %1534 = vrot.lane.b32.xlu0 %v1331, 8
      %v1535 = vpop.permute.xlu0 %1534
      %1536 = vrot.lane.b32.xlu0 %v1333, 8
      %v1537 = vpop.permute.xlu0 %1536
      %1538 = vrot.lane.b32.xlu0 %v1335, 8
      %v1539 = vpop.permute.xlu0 %1538
      %1540 = vrot.lane.b32.xlu0 %v1337, 8
      %v1541 = vpop.permute.xlu0 %1540
      %1542 = vrot.lane.b32.xlu0 %v1339, 8
      %v1543 = vpop.permute.xlu0 %1542
      %1544 = vrot.lane.b32.xlu0 %v1341, 8
      %v1545 = vpop.permute.xlu0 %1544
      %1546 = vrot.lane.b32.xlu0 %v1343, 8
      %v1547 = vpop.permute.xlu0 %1546
      %1548 = vrot.lane.b32.xlu0 %v1345, 8
      %v1549 = vpop.permute.xlu0 %1548
      %1550 = vrot.lane.b32.xlu0 %v1347, 8
      %v1551 = vpop.permute.xlu0 %1550
      %1552 = vrot.lane.b32.xlu0 %v1349, 8
      %v1553 = vpop.permute.xlu0 %1552
      %1554 = vrot.lane.b32.xlu0 %v1351, 8
      %v1555 = vpop.permute.xlu0 %1554
      %1556 = vrot.lane.b32.xlu0 %v1353, 8
      %v1557 = vpop.permute.xlu0 %1556
      %1558 = vrot.lane.b32.xlu0 %v1355, 8
      %v1559 = vpop.permute.xlu0 %1558
      %1560 = vrot.lane.b32.xlu0 %v1357, 8
      %v1561 = vpop.permute.xlu0 %1560
      %1562 = vrot.lane.b32.xlu0 %v1359, 8
      %v1563 = vpop.permute.xlu0 %1562
      %1564 = vrot.lane.b32.xlu0 %v1361, 8
      %v1565 = vpop.permute.xlu0 %1564
      %1566 = vrot.lane.b32.xlu0 %v1363, 8
      %v1567 = vpop.permute.xlu0 %1566
      %1568 = vrot.lane.b32.xlu0 %v1365, 8
      %v1569 = vpop.permute.xlu0 %1568
      %1570 = vrot.lane.b32.xlu0 %v1367, 8
      %v1571 = vpop.permute.xlu0 %1570
      %1572 = vrot.lane.b32.xlu0 %v1369, 8
      %v1573 = vpop.permute.xlu0 %1572
      %1574 = vrot.lane.b32.xlu0 %v1371, 8
      %v1575 = vpop.permute.xlu0 %1574
      %1576 = vrot.lane.b32.xlu0 %v1373, 8
      %v1577 = vpop.permute.xlu0 %1576
      %1578 = vrot.lane.b32.xlu0 %v1375, 8
      %v1579 = vpop.permute.xlu0 %1578
      %1580 = vrot.lane.b32.xlu0 %v1377, 8
      %v1581 = vpop.permute.xlu0 %1580
      %1582 = vrot.lane.b32.xlu0 %v1379, 8
      %v1583 = vpop.permute.xlu0 %1582
      %1584 = vrot.lane.b32.xlu0 %v1381, 8
      %v1585 = vpop.permute.xlu0 %1584
      %1586 = vrot.lane.b32.xlu0 %v1383, 8
      %v1587 = vpop.permute.xlu0 %1586
      %1588 = vrot.lane.b32.xlu0 %v1385, 8
      %v1589 = vpop.permute.xlu0 %1588
      %1590 = vrot.lane.b32.xlu0 %v1387, 8
      %v1591 = vpop.permute.xlu0 %1590
      %1592 = vrot.lane.b32.xlu0 %v1389, 8
      %v1593 = vpop.permute.xlu0 %1592
      %1594 = vrot.lane.b32.xlu0 %v1391, 8
      %v1595 = vpop.permute.xlu0 %1594
      %1596 = vrot.lane.b32.xlu0 %v1393, 8
      %v1597 = vpop.permute.xlu0 %1596
      %1598 = vrot.lane.b32.xlu0 %v1395, 8
      %v1599 = vpop.permute.xlu0 %1598
      %1600 = vrot.lane.b32.xlu0 %v1397, 8
      %v1601 = vpop.permute.xlu0 %1600
      %1602 = vrot.lane.b32.xlu0 %v1399, 8
      %v1603 = vpop.permute.xlu0 %1602
      %1604 = vrot.lane.b32.xlu0 %v1401, 8
      %v1605 = vpop.permute.xlu0 %1604
      %1606 = vrot.lane.b32.xlu0 %v1403, 8
      %v1607 = vpop.permute.xlu0 %1606
      %1608 = vrot.lane.b32.xlu0 %v1405, 8
      %v1609 = vpop.permute.xlu0 %1608
      %1610 = vrot.lane.b32.xlu0 %v1407, 8
      %v1611 = vpop.permute.xlu0 %1610
      %1612 = vrot.lane.b32.xlu0 %v1409, 8
      %v1613 = vpop.permute.xlu0 %1612
      %1614 = vrot.lane.b32.xlu0 %v1411, 8
      %v1615 = vpop.permute.xlu0 %1614
      %1616 = vrot.lane.b32.xlu0 %v1413, 8
      %v1617 = vpop.permute.xlu0 %1616
      %1618 = vrot.lane.b32.xlu0 %v1415, 8
      %v1619 = vpop.permute.xlu0 %1618
      %1620 = vrot.lane.b32.xlu0 %v1417, 8
      %v1621 = vpop.permute.xlu0 %1620
      %1622 = vrot.lane.b32.xlu0 %v1419, 8
      %v1623 = vpop.permute.xlu0 %1622
      %1624 = vrot.lane.b32.xlu0 %v1421, 8
      %v1625 = vpop.permute.xlu0 %1624
      %1626 = vrot.lane.b32.xlu0 %v1423, 8
      %v1627 = vpop.permute.xlu0 %1626
      %1628 = vrot.lane.b32.xlu0 %v1425, 8
      %v1629 = vpop.permute.xlu0 %1628
      %1630 = vrot.lane.b32.xlu0 %v1427, 8
      %v1631 = vpop.permute.xlu0 %1630
      %1632 = vrot.lane.b32.xlu0 %v1426, 8
      %v1633 = vpop.permute.xlu0 %1632
      %vm1737 = vcmask 31744
      %v1738 = vsel %vm1737, %v473, %v914
      %v1739 = vsel %vm1737, %v474, %v916
      %v1740 = vsel %vm1737, %v475, %v918
      %v1741 = vsel %vm1737, %v476, %v920
      %v1742 = vsel %vm1737, %v477, %v922
      %v1743 = vsel %vm1737, %v478, %v924
      %v1744 = vsel %vm1737, %v479, %v926
      %v1745 = vsel %vm1737, %v480, %v928
      %v1746 = vsel %vm1737, %v481, %v930
      %v1747 = vsel %vm1737, %v482, %v932
      %v1748 = vsel %vm1737, %v483, %v934
      %v1749 = vsel %vm1737, %v484, %v936
      %v1750 = vsel %vm1737, %v485, %v938
      %v1751 = vsel %vm1737, %v486, %v940
      %v1752 = vsel %vm1737, %v487, %v942
      %v1753 = vsel %vm1737, %v488, %v944
      %v1754 = vsel %vm1737, %v489, %v946
      %v1755 = vsel %vm1737, %v490, %v948
      %v1756 = vsel %vm1737, %v491, %v950
      %v1757 = vsel %vm1737, %v492, %v952
      %v1758 = vsel %vm1737, %v493, %v954
      %v1759 = vsel %vm1737, %v494, %v956
      %v1760 = vsel %vm1737, %v495, %v958
      %v1761 = vsel %vm1737, %v496, %v960
      %v1762 = vsel %vm1737, %v497, %v962
      %v1763 = vsel %vm1737, %v498, %v964
      %v1764 = vsel %vm1737, %v499, %v966
      %v1765 = vsel %vm1737, %v500, %v968
      %v1766 = vsel %vm1737, %v501, %v970
      %v1767 = vsel %vm1737, %v502, %v972
      %v1768 = vsel %vm1737, %v503, %v974
      %v1769 = vsel %vm1737, %v504, %v976
      %v1770 = vsel %vm1737, %v505, %v978
      %v1771 = vsel %vm1737, %v506, %v980
      %v1772 = vsel %vm1737, %v507, %v982
      %v1773 = vsel %vm1737, %v508, %v984
      %v1774 = vsel %vm1737, %v509, %v986
      %v1775 = vsel %vm1737, %v510, %v988
      %v1776 = vsel %vm1737, %v511, %v990
      %v1777 = vsel %vm1737, %v512, %v992
      %v1778 = vsel %vm1737, %v513, %v994
      %v1779 = vsel %vm1737, %v514, %v996
      %v1780 = vsel %vm1737, %v515, %v998
      %v1781 = vsel %vm1737, %v516, %v1000
      %v1782 = vsel %vm1737, %v517, %v1002
      %v1783 = vsel %vm1737, %v518, %v1004
      %v1784 = vsel %vm1737, %v519, %v1006
      %v1785 = vsel %vm1737, %v520, %v1008
      %v1786 = vsel %vm1737, %v521, %v1010
      %v1787 = vsel %vm1737, %v522, %v1012
      %v1788 = vsel %vm1737, %v523, %v1014
      %v1789 = vsel %vm1737, %v524, %v1016
      %v1790 = vsel %vm1737, %v525, %v1018
      %v1791 = vsel %vm1737, %v526, %v1020
      %v1792 = vsel %vm1737, %v527, %v1022
      %v1793 = vsel %vm1737, %v528, %v1024
      %v1794 = vsel %vm1737, %v529, %v1026
      %v1795 = vsel %vm1737, %v530, %v1028
      %v1796 = vsel %vm1737, %v531, %v1030
      %v1797 = vsel %vm1737, %v532, %v1032
      %v1798 = vsel %vm1737, %v533, %v1034
      %v1799 = vsel %vm1737, %v534, %v1036
      %v1800 = vsel %vm1737, %v535, %v1038
      %v1801 = vsel %vm1737, %v536, %v1040
      %v1802 = vsel %vm1737, %v537, %v1042
      %v1803 = vsel %vm1737, %v538, %v1044
      %v1804 = vsel %vm1737, %v539, %v1046
      %v1805 = vsel %vm1737, %v540, %v1048
      %v1806 = vsel %vm1737, %v541, %v1050
      %v1807 = vsel %vm1737, %v542, %v1052
      %v1808 = vsel %vm1737, %v543, %v1054
      %v1809 = vsel %vm1737, %v544, %v1056
      %v1810 = vsel %vm1737, %v545, %v1058
      %v1811 = vsel %vm1737, %v546, %v1060
      %v1812 = vsel %vm1737, %v547, %v1062
      %v1813 = vsel %vm1737, %v576, %v1064
      %v1814 = vsel %vm1737, %v577, %v1066
      %v1815 = vsel %vm1737, %v578, %v1068
      %v1816 = vsel %vm1737, %v579, %v1070
      %v1817 = vsel %vm1737, %v580, %v1072
      %v1818 = vsel %vm1737, %v581, %v1074
      %v1819 = vsel %vm1737, %v582, %v1076
      %v1820 = vsel %vm1737, %v583, %v1078
      %v1821 = vsel %vm1737, %v584, %v1080
      %v1822 = vsel %vm1737, %v585, %v1082
      %v1823 = vsel %vm1737, %v586, %v1084
      %v1824 = vsel %vm1737, %v587, %v1086
      %v1825 = vsel %vm1737, %v588, %v1088
      %v1826 = vsel %vm1737, %v589, %v1090
      %v1827 = vsel %vm1737, %v590, %v1092
      %v1828 = vsel %vm1737, %v591, %v1094
      %v1829 = vsel %vm1737, %v592, %v1096
      %v1830 = vsel %vm1737, %v593, %v1098
      %v1831 = vsel %vm1737, %v594, %v1100
      %v1832 = vsel %vm1737, %v595, %v1102
      %v1833 = vsel %vm1737, %v596, %v1104
      %v1834 = vsel %vm1737, %v597, %v1106
      %v1835 = vsel %vm1737, %v598, %v1108
      %v1836 = vsel %vm1737, %v599, %v1110
      %v1837 = vsel %vm1737, %v600, %v1112
      %v1838 = vsel %vm1737, %v601, %v1114
      %v1839 = vsel %vm1737, %v602, %v1116
      %v1840 = vsel %vm1737, %v603, %v1118
      %vm1841 = vcmask 64512
      %v1842 = vsel %vm1841, %v1738, %v1429
      %v1843 = vsel %vm1841, %v1739, %v1431
      %v1844 = vsel %vm1841, %v1740, %v1433
      %v1845 = vsel %vm1841, %v1741, %v1435
      %v1846 = vsel %vm1841, %v1742, %v1437
      %v1847 = vsel %vm1841, %v1743, %v1439
      %v1848 = vsel %vm1841, %v1744, %v1441
      %v1849 = vsel %vm1841, %v1745, %v1443
      %v1850 = vsel %vm1841, %v1746, %v1445
      %v1851 = vsel %vm1841, %v1747, %v1447
      %v1852 = vsel %vm1841, %v1748, %v1449
      %v1853 = vsel %vm1841, %v1749, %v1451
      %v1854 = vsel %vm1841, %v1750, %v1453
      %v1855 = vsel %vm1841, %v1751, %v1455
      %v1856 = vsel %vm1841, %v1752, %v1457
      %v1857 = vsel %vm1841, %v1753, %v1459
      %v1858 = vsel %vm1841, %v1754, %v1461
      %v1859 = vsel %vm1841, %v1755, %v1463
      %v1860 = vsel %vm1841, %v1756, %v1465
      %v1861 = vsel %vm1841, %v1757, %v1467
      %v1862 = vsel %vm1841, %v1758, %v1469
      %v1863 = vsel %vm1841, %v1759, %v1471
      %v1864 = vsel %vm1841, %v1760, %v1473
      %v1865 = vsel %vm1841, %v1761, %v1475
      %v1866 = vsel %vm1841, %v1762, %v1477
      %v1867 = vsel %vm1841, %v1763, %v1479
      %v1868 = vsel %vm1841, %v1764, %v1481
      %v1869 = vsel %vm1841, %v1765, %v1483
      %v1870 = vsel %vm1841, %v1766, %v1485
      %v1871 = vsel %vm1841, %v1767, %v1487
      %v1872 = vsel %vm1841, %v1768, %v1489
      %v1873 = vsel %vm1841, %v1769, %v1491
      %v1874 = vsel %vm1841, %v1770, %v1493
      %v1875 = vsel %vm1841, %v1771, %v1495
      %v1876 = vsel %vm1841, %v1772, %v1497
      %v1877 = vsel %vm1841, %v1773, %v1499
      %v1878 = vsel %vm1841, %v1774, %v1501
      %v1879 = vsel %vm1841, %v1775, %v1503
      %v1880 = vsel %vm1841, %v1776, %v1505
      %v1881 = vsel %vm1841, %v1777, %v1507
      %v1882 = vsel %vm1841, %v1778, %v1509
      %v1883 = vsel %vm1841, %v1779, %v1511
      %v1884 = vsel %vm1841, %v1780, %v1513
      %v1885 = vsel %vm1841, %v1781, %v1515
      %v1886 = vsel %vm1841, %v1782, %v1517
      %v1887 = vsel %vm1841, %v1783, %v1519
      %v1888 = vsel %vm1841, %v1784, %v1521
      %v1889 = vsel %vm1841, %v1785, %v1523
      %v1890 = vsel %vm1841, %v1786, %v1525
      %v1891 = vsel %vm1841, %v1787, %v1527
      %v1892 = vsel %vm1841, %v1788, %v1529
      %v1893 = vsel %vm1841, %v1789, %v1531
      %v1894 = vsel %vm1841, %v1790, %v1533
      %v1895 = vsel %vm1841, %v1791, %v1535
      %v1896 = vsel %vm1841, %v1792, %v1537
      %v1897 = vsel %vm1841, %v1793, %v1539
      %v1898 = vsel %vm1841, %v1794, %v1541
      %v1899 = vsel %vm1841, %v1795, %v1543
      %v1900 = vsel %vm1841, %v1796, %v1545
      %v1901 = vsel %vm1841, %v1797, %v1547
      %v1902 = vsel %vm1841, %v1798, %v1549
      %v1903 = vsel %vm1841, %v1799, %v1551
      %v1904 = vsel %vm1841, %v1800, %v1553
      %v1905 = vsel %vm1841, %v1801, %v1555
      %v1906 = vsel %vm1841, %v1802, %v1557
      %v1907 = vsel %vm1841, %v1803, %v1559
      %v1908 = vsel %vm1841, %v1804, %v1561
      %v1909 = vsel %vm1841, %v1805, %v1563
      %v1910 = vsel %vm1841, %v1806, %v1565
      %v1911 = vsel %vm1841, %v1807, %v1567
      %v1912 = vsel %vm1841, %v1808, %v1569
      %v1913 = vsel %vm1841, %v1809, %v1571
      %v1914 = vsel %vm1841, %v1810, %v1573
      %v1915 = vsel %vm1841, %v1811, %v1575
      %v1916 = vsel %vm1841, %v1812, %v1577
      %v1917 = vsel %vm1841, %v1813, %v1579
      %v1918 = vsel %vm1841, %v1814, %v1581
      %v1919 = vsel %vm1841, %v1815, %v1583
      %v1920 = vsel %vm1841, %v1816, %v1585
      %v1921 = vsel %vm1841, %v1817, %v1587
      %v1922 = vsel %vm1841, %v1818, %v1589
      %v1923 = vsel %vm1841, %v1819, %v1591
      %v1924 = vsel %vm1841, %v1820, %v1593
      %v1925 = vsel %vm1841, %v1821, %v1595
      %v1926 = vsel %vm1841, %v1822, %v1597
      %v1927 = vsel %vm1841, %v1823, %v1599
      %v1928 = vsel %vm1841, %v1824, %v1601
      %v1929 = vsel %vm1841, %v1825, %v1603
      %v1930 = vsel %vm1841, %v1826, %v1605
      %v1931 = vsel %vm1841, %v1827, %v1607
      %v1932 = vsel %vm1841, %v1828, %v1609
      %v1933 = vsel %vm1841, %v1829, %v1611
      %v1934 = vsel %vm1841, %v1830, %v1613
      %v1935 = vsel %vm1841, %v1831, %v1615
      %v1936 = vsel %vm1841, %v1832, %v1617
      %v1937 = vsel %vm1841, %v1833, %v1619
      %v1938 = vsel %vm1841, %v1834, %v1621
      %v1939 = vsel %vm1841, %v1835, %v1623
      %v1940 = vsel %vm1841, %v1836, %v1625
      %v1941 = vsel %vm1841, %v1837, %v1627
      %v1942 = vsel %vm1841, %v1838, %v1629
      %v1943 = vsel %vm1841, %v1839, %v1631
      %v1944 = vsel %vm1841, %v1840, %v1633
      %v2046 = vrot.slane %v1843, 2
      %v2047 = vrot.slane %v1844, 2
      %v2048 = vsel %vm1222, %v2046, %v2047
      %v2049 = vrot.slane %v1845, 2
      %v2050 = vsel %vm1222, %v2047, %v2049
      %v2051 = vrot.slane %v1846, 2
      %v2052 = vsel %vm1222, %v2049, %v2051
      %v2053 = vrot.slane %v1847, 2
      %v2054 = vsel %vm1222, %v2051, %v2053
      %v2055 = vrot.slane %v1848, 2
      %v2056 = vsel %vm1222, %v2053, %v2055
      %v2057 = vrot.slane %v1849, 2
      %v2058 = vsel %vm1222, %v2055, %v2057
      %v2059 = vrot.slane %v1850, 2
      %v2060 = vsel %vm1222, %v2057, %v2059
      %v2061 = vrot.slane %v1851, 2
      %v2062 = vsel %vm1222, %v2059, %v2061
      %v2063 = vrot.slane %v1852, 2
      %v2064 = vsel %vm1222, %v2061, %v2063
      %v2065 = vrot.slane %v1853, 2
      %v2066 = vsel %vm1222, %v2063, %v2065
      %v2067 = vrot.slane %v1854, 2
      %v2068 = vsel %vm1222, %v2065, %v2067
      %v2069 = vrot.slane %v1855, 2
      %v2070 = vsel %vm1222, %v2067, %v2069
      %v2071 = vrot.slane %v1856, 2
      %v2072 = vsel %vm1222, %v2069, %v2071
      %v2073 = vrot.slane %v1857, 2
      %v2074 = vsel %vm1222, %v2071, %v2073
      %v2075 = vrot.slane %v1858, 2
      %v2076 = vsel %vm1222, %v2073, %v2075
      %v2077 = vrot.slane %v1859, 2
      %v2078 = vsel %vm1222, %v2075, %v2077
      %v2079 = vrot.slane %v1860, 2
      %v2080 = vsel %vm1222, %v2077, %v2079
      %v2081 = vrot.slane %v1861, 2
      %v2082 = vsel %vm1222, %v2079, %v2081
      %v2083 = vrot.slane %v1862, 2
      %v2084 = vsel %vm1222, %v2081, %v2083
      %v2085 = vrot.slane %v1863, 2
      %v2086 = vsel %vm1222, %v2083, %v2085
      %v2087 = vrot.slane %v1864, 2
      %v2088 = vsel %vm1222, %v2085, %v2087
      %v2089 = vrot.slane %v1865, 2
      %v2090 = vsel %vm1222, %v2087, %v2089
      %v2091 = vrot.slane %v1866, 2
      %v2092 = vsel %vm1222, %v2089, %v2091
      %v2093 = vrot.slane %v1867, 2
      %v2094 = vsel %vm1222, %v2091, %v2093
      %v2095 = vrot.slane %v1868, 2
      %v2096 = vsel %vm1222, %v2093, %v2095
      %v2097 = vrot.slane %v1869, 2
      %v2098 = vsel %vm1222, %v2095, %v2097
      %v2099 = vrot.slane %v1870, 2
      %v2100 = vsel %vm1222, %v2097, %v2099
      %v2101 = vrot.slane %v1871, 2
      %v2102 = vsel %vm1222, %v2099, %v2101
      %v2103 = vrot.slane %v1872, 2
      %v2104 = vsel %vm1222, %v2101, %v2103
      %v2105 = vrot.slane %v1873, 2
      %v2106 = vsel %vm1222, %v2103, %v2105
      %v2107 = vrot.slane %v1874, 2
      %v2108 = vsel %vm1222, %v2105, %v2107
      %v2109 = vrot.slane %v1875, 2
      %v2110 = vsel %vm1222, %v2107, %v2109
      %v2111 = vrot.slane %v1876, 2
      %v2112 = vsel %vm1222, %v2109, %v2111
      %v2113 = vrot.slane %v1877, 2
      %v2114 = vsel %vm1222, %v2111, %v2113
      %v2115 = vrot.slane %v1878, 2
      %v2116 = vsel %vm1222, %v2113, %v2115
      %v2117 = vrot.slane %v1879, 2
      %v2118 = vsel %vm1222, %v2115, %v2117
      %v2119 = vrot.slane %v1880, 2
      %v2120 = vsel %vm1222, %v2117, %v2119
      %v2121 = vrot.slane %v1881, 2
      %v2122 = vsel %vm1222, %v2119, %v2121
      %v2123 = vrot.slane %v1882, 2
      %v2124 = vsel %vm1222, %v2121, %v2123
      %v2125 = vrot.slane %v1883, 2
      %v2126 = vsel %vm1222, %v2123, %v2125
      %v2127 = vrot.slane %v1884, 2
      %v2128 = vsel %vm1222, %v2125, %v2127
      %v2129 = vrot.slane %v1885, 2
      %v2130 = vsel %vm1222, %v2127, %v2129
      %v2131 = vrot.slane %v1886, 2
      %v2132 = vsel %vm1222, %v2129, %v2131
      %v2133 = vrot.slane %v1887, 2
      %v2134 = vsel %vm1222, %v2131, %v2133
      %v2135 = vrot.slane %v1888, 2
      %v2136 = vsel %vm1222, %v2133, %v2135
      %v2137 = vrot.slane %v1889, 2
      %v2138 = vsel %vm1222, %v2135, %v2137
      %v2139 = vrot.slane %v1890, 2
      %v2140 = vsel %vm1222, %v2137, %v2139
      %v2141 = vrot.slane %v1891, 2
      %v2142 = vsel %vm1222, %v2139, %v2141
      %v2143 = vrot.slane %v1892, 2
      %v2144 = vsel %vm1222, %v2141, %v2143
      %v2145 = vrot.slane %v1893, 2
      %v2146 = vsel %vm1222, %v2143, %v2145
      %v2147 = vrot.slane %v1894, 2
      %v2148 = vsel %vm1222, %v2145, %v2147
      %v2149 = vrot.slane %v1895, 2
      %v2150 = vsel %vm1222, %v2147, %v2149
      %v2151 = vrot.slane %v1896, 2
      %v2152 = vsel %vm1222, %v2149, %v2151
      %v2153 = vrot.slane %v1897, 2
      %v2154 = vsel %vm1222, %v2151, %v2153
      %v2155 = vrot.slane %v1898, 2
      %v2156 = vsel %vm1222, %v2153, %v2155
      %v2157 = vrot.slane %v1899, 2
      %v2158 = vsel %vm1222, %v2155, %v2157
      %v2159 = vrot.slane %v1900, 2
      %v2160 = vsel %vm1222, %v2157, %v2159
      %v2161 = vrot.slane %v1901, 2
      %v2162 = vsel %vm1222, %v2159, %v2161
      %v2163 = vrot.slane %v1902, 2
      %v2164 = vsel %vm1222, %v2161, %v2163
      %v2165 = vrot.slane %v1903, 2
      %v2166 = vsel %vm1222, %v2163, %v2165
      %v2167 = vrot.slane %v1904, 2
      %v2168 = vsel %vm1222, %v2165, %v2167
      %v2169 = vrot.slane %v1905, 2
      %v2170 = vsel %vm1222, %v2167, %v2169
      %v2171 = vrot.slane %v1906, 2
      %v2172 = vsel %vm1222, %v2169, %v2171
      %v2173 = vrot.slane %v1907, 2
      %v2174 = vsel %vm1222, %v2171, %v2173
      %v2175 = vrot.slane %v1908, 2
      %v2176 = vsel %vm1222, %v2173, %v2175
      %v2177 = vrot.slane %v1909, 2
      %v2178 = vsel %vm1222, %v2175, %v2177
      %v2179 = vrot.slane %v1910, 2
      %v2180 = vsel %vm1222, %v2177, %v2179
      %v2181 = vrot.slane %v1911, 2
      %v2182 = vsel %vm1222, %v2179, %v2181
      %v2183 = vrot.slane %v1912, 2
      %v2184 = vsel %vm1222, %v2181, %v2183
      %v2185 = vrot.slane %v1913, 2
      %v2186 = vsel %vm1222, %v2183, %v2185
      %v2187 = vrot.slane %v1914, 2
      %v2188 = vsel %vm1222, %v2185, %v2187
      %v2189 = vrot.slane %v1915, 2
      %v2190 = vsel %vm1222, %v2187, %v2189
      %v2191 = vrot.slane %v1916, 2
      %v2192 = vsel %vm1222, %v2189, %v2191
      %v2193 = vrot.slane %v1917, 2
      %v2194 = vsel %vm1222, %v2191, %v2193
      %v2195 = vrot.slane %v1918, 2
      %v2196 = vsel %vm1222, %v2193, %v2195
      %v2197 = vrot.slane %v1919, 2
      %v2198 = vsel %vm1222, %v2195, %v2197
      %v2199 = vrot.slane %v1920, 2
      %v2200 = vsel %vm1222, %v2197, %v2199
      %v2201 = vrot.slane %v1921, 2
      %v2202 = vsel %vm1222, %v2199, %v2201
      %v2203 = vrot.slane %v1922, 2
      %v2204 = vsel %vm1222, %v2201, %v2203
      %v2205 = vrot.slane %v1923, 2
      %v2206 = vsel %vm1222, %v2203, %v2205
      %v2207 = vrot.slane %v1924, 2
      %v2208 = vsel %vm1222, %v2205, %v2207
      %v2209 = vrot.slane %v1925, 2
      %v2210 = vsel %vm1222, %v2207, %v2209
      %v2211 = vrot.slane %v1926, 2
      %v2212 = vsel %vm1222, %v2209, %v2211
      %v2213 = vrot.slane %v1927, 2
      %v2214 = vsel %vm1222, %v2211, %v2213
      %v2215 = vrot.slane %v1928, 2
      %v2216 = vsel %vm1222, %v2213, %v2215
      %v2217 = vrot.slane %v1929, 2
      %v2218 = vsel %vm1222, %v2215, %v2217
      %v2219 = vrot.slane %v1930, 2
      %v2220 = vsel %vm1222, %v2217, %v2219
      %v2221 = vrot.slane %v1931, 2
      %v2222 = vsel %vm1222, %v2219, %v2221
      %v2223 = vrot.slane %v1932, 2
      %v2224 = vsel %vm1222, %v2221, %v2223
      %v2225 = vrot.slane %v1933, 2
      %v2226 = vsel %vm1222, %v2223, %v2225
      %v2227 = vrot.slane %v1934, 2
      %v2228 = vsel %vm1222, %v2225, %v2227
      %v2229 = vrot.slane %v1935, 2
      %v2230 = vsel %vm1222, %v2227, %v2229
      %v2231 = vrot.slane %v1936, 2
      %v2232 = vsel %vm1222, %v2229, %v2231
      %v2233 = vrot.slane %v1937, 2
      %v2234 = vsel %vm1222, %v2231, %v2233
      %v2235 = vrot.slane %v1938, 2
      %v2236 = vsel %vm1222, %v2233, %v2235
      %v2237 = vrot.slane %v1939, 2
      %v2238 = vsel %vm1222, %v2235, %v2237
      %v2239 = vrot.slane %v1940, 2
      %v2240 = vsel %vm1222, %v2237, %v2239
      %v2241 = vrot.slane %v1941, 2
      %v2242 = vsel %vm1222, %v2239, %v2241
      %v2243 = vrot.slane %v1942, 2
      %v2244 = vsel %vm1222, %v2241, %v2243
      %v2245 = vrot.slane %v1943, 2
      %v2246 = vsel %vm1222, %v2243, %v2245
      %2247 = vrot.lane.b32.xlu0 %v2048, 12
      %v2248 = vpop.permute.xlu0 %2247
      %2249 = vrot.lane.b32.xlu0 %v2050, 12
      %v2250 = vpop.permute.xlu0 %2249
      %2251 = vrot.lane.b32.xlu0 %v2052, 12
      %v2252 = vpop.permute.xlu0 %2251
      %2253 = vrot.lane.b32.xlu0 %v2054, 12
      %v2254 = vpop.permute.xlu0 %2253
      %2255 = vrot.lane.b32.xlu0 %v2056, 12
      %v2256 = vpop.permute.xlu0 %2255
      %2257 = vrot.lane.b32.xlu0 %v2058, 12
      %v2258 = vpop.permute.xlu0 %2257
      %2259 = vrot.lane.b32.xlu0 %v2060, 12
      %v2260 = vpop.permute.xlu0 %2259
      %2261 = vrot.lane.b32.xlu0 %v2062, 12
      %v2262 = vpop.permute.xlu0 %2261
      %2263 = vrot.lane.b32.xlu0 %v2064, 12
      %v2264 = vpop.permute.xlu0 %2263
      %2265 = vrot.lane.b32.xlu0 %v2066, 12
      %v2266 = vpop.permute.xlu0 %2265
      %2267 = vrot.lane.b32.xlu0 %v2068, 12
      %v2268 = vpop.permute.xlu0 %2267
      %2269 = vrot.lane.b32.xlu0 %v2070, 12
      %v2270 = vpop.permute.xlu0 %2269
      %2271 = vrot.lane.b32.xlu0 %v2072, 12
      %v2272 = vpop.permute.xlu0 %2271
      %2273 = vrot.lane.b32.xlu0 %v2074, 12
      %v2274 = vpop.permute.xlu0 %2273
      %2275 = vrot.lane.b32.xlu0 %v2076, 12
      %v2276 = vpop.permute.xlu0 %2275
      %2277 = vrot.lane.b32.xlu0 %v2078, 12
      %v2278 = vpop.permute.xlu0 %2277
      %2279 = vrot.lane.b32.xlu0 %v2080, 12
      %v2280 = vpop.permute.xlu0 %2279
      %2281 = vrot.lane.b32.xlu0 %v2082, 12
      %v2282 = vpop.permute.xlu0 %2281
      %2283 = vrot.lane.b32.xlu0 %v2084, 12
      %v2284 = vpop.permute.xlu0 %2283
      %2285 = vrot.lane.b32.xlu0 %v2086, 12
      %v2286 = vpop.permute.xlu0 %2285
      %2287 = vrot.lane.b32.xlu0 %v2088, 12
      %v2288 = vpop.permute.xlu0 %2287
      %2289 = vrot.lane.b32.xlu0 %v2090, 12
      %v2290 = vpop.permute.xlu0 %2289
      %2291 = vrot.lane.b32.xlu0 %v2092, 12
      %v2292 = vpop.permute.xlu0 %2291
      %2293 = vrot.lane.b32.xlu0 %v2094, 12
      %v2294 = vpop.permute.xlu0 %2293
      %2295 = vrot.lane.b32.xlu0 %v2096, 12
      %v2296 = vpop.permute.xlu0 %2295
      %2297 = vrot.lane.b32.xlu0 %v2098, 12
      %v2298 = vpop.permute.xlu0 %2297
      %2299 = vrot.lane.b32.xlu0 %v2100, 12
      %v2300 = vpop.permute.xlu0 %2299
      %2301 = vrot.lane.b32.xlu0 %v2102, 12
      %v2302 = vpop.permute.xlu0 %2301
      %2303 = vrot.lane.b32.xlu0 %v2104, 12
      %v2304 = vpop.permute.xlu0 %2303
      %2305 = vrot.lane.b32.xlu0 %v2106, 12
      %v2306 = vpop.permute.xlu0 %2305
      %2307 = vrot.lane.b32.xlu0 %v2108, 12
      %v2308 = vpop.permute.xlu0 %2307
      %2309 = vrot.lane.b32.xlu0 %v2110, 12
      %v2310 = vpop.permute.xlu0 %2309
      %2311 = vrot.lane.b32.xlu0 %v2112, 12
      %v2312 = vpop.permute.xlu0 %2311
      %2313 = vrot.lane.b32.xlu0 %v2114, 12
      %v2314 = vpop.permute.xlu0 %2313
      %2315 = vrot.lane.b32.xlu0 %v2116, 12
      %v2316 = vpop.permute.xlu0 %2315
      %2317 = vrot.lane.b32.xlu0 %v2118, 12
      %v2318 = vpop.permute.xlu0 %2317
      %2319 = vrot.lane.b32.xlu0 %v2120, 12
      %v2320 = vpop.permute.xlu0 %2319
      %2321 = vrot.lane.b32.xlu0 %v2122, 12
      %v2322 = vpop.permute.xlu0 %2321
      %2323 = vrot.lane.b32.xlu0 %v2124, 12
      %v2324 = vpop.permute.xlu0 %2323
      %2325 = vrot.lane.b32.xlu0 %v2126, 12
      %v2326 = vpop.permute.xlu0 %2325
      %2327 = vrot.lane.b32.xlu0 %v2128, 12
      %v2328 = vpop.permute.xlu0 %2327
      %2329 = vrot.lane.b32.xlu0 %v2130, 12
      %v2330 = vpop.permute.xlu0 %2329
      %2331 = vrot.lane.b32.xlu0 %v2132, 12
      %v2332 = vpop.permute.xlu0 %2331
      %2333 = vrot.lane.b32.xlu0 %v2134, 12
      %v2334 = vpop.permute.xlu0 %2333
      %2335 = vrot.lane.b32.xlu0 %v2136, 12
      %v2336 = vpop.permute.xlu0 %2335
      %2337 = vrot.lane.b32.xlu0 %v2138, 12
      %v2338 = vpop.permute.xlu0 %2337
      %2339 = vrot.lane.b32.xlu0 %v2140, 12
      %v2340 = vpop.permute.xlu0 %2339
      %2341 = vrot.lane.b32.xlu0 %v2142, 12
      %v2342 = vpop.permute.xlu0 %2341
      %2343 = vrot.lane.b32.xlu0 %v2144, 12
      %v2344 = vpop.permute.xlu0 %2343
      %2345 = vrot.lane.b32.xlu0 %v2146, 12
      %v2346 = vpop.permute.xlu0 %2345
      %2347 = vrot.lane.b32.xlu0 %v2148, 12
      %v2348 = vpop.permute.xlu0 %2347
      %2349 = vrot.lane.b32.xlu0 %v2150, 12
      %v2350 = vpop.permute.xlu0 %2349
      %2351 = vrot.lane.b32.xlu0 %v2152, 12
      %v2352 = vpop.permute.xlu0 %2351
      %2353 = vrot.lane.b32.xlu0 %v2154, 12
      %v2354 = vpop.permute.xlu0 %2353
      %2355 = vrot.lane.b32.xlu0 %v2156, 12
      %v2356 = vpop.permute.xlu0 %2355
      %2357 = vrot.lane.b32.xlu0 %v2158, 12
      %v2358 = vpop.permute.xlu0 %2357
      %2359 = vrot.lane.b32.xlu0 %v2160, 12
      %v2360 = vpop.permute.xlu0 %2359
      %2361 = vrot.lane.b32.xlu0 %v2162, 12
      %v2362 = vpop.permute.xlu0 %2361
      %2363 = vrot.lane.b32.xlu0 %v2164, 12
      %v2364 = vpop.permute.xlu0 %2363
      %2365 = vrot.lane.b32.xlu0 %v2166, 12
      %v2366 = vpop.permute.xlu0 %2365
      %2367 = vrot.lane.b32.xlu0 %v2168, 12
      %v2368 = vpop.permute.xlu0 %2367
      %2369 = vrot.lane.b32.xlu0 %v2170, 12
      %v2370 = vpop.permute.xlu0 %2369
      %2371 = vrot.lane.b32.xlu0 %v2172, 12
      %v2372 = vpop.permute.xlu0 %2371
      %2373 = vrot.lane.b32.xlu0 %v2174, 12
      %v2374 = vpop.permute.xlu0 %2373
      %2375 = vrot.lane.b32.xlu0 %v2176, 12
      %v2376 = vpop.permute.xlu0 %2375
      %2377 = vrot.lane.b32.xlu0 %v2178, 12
      %v2378 = vpop.permute.xlu0 %2377
      %2379 = vrot.lane.b32.xlu0 %v2180, 12
      %v2380 = vpop.permute.xlu0 %2379
      %2381 = vrot.lane.b32.xlu0 %v2182, 12
      %v2382 = vpop.permute.xlu0 %2381
      %2383 = vrot.lane.b32.xlu0 %v2184, 12
      %v2384 = vpop.permute.xlu0 %2383
      %2385 = vrot.lane.b32.xlu0 %v2186, 12
      %v2386 = vpop.permute.xlu0 %2385
      %2387 = vrot.lane.b32.xlu0 %v2188, 12
      %v2388 = vpop.permute.xlu0 %2387
      %2389 = vrot.lane.b32.xlu0 %v2190, 12
      %v2390 = vpop.permute.xlu0 %2389
      %2391 = vrot.lane.b32.xlu0 %v2192, 12
      %v2392 = vpop.permute.xlu0 %2391
      %2393 = vrot.lane.b32.xlu0 %v2194, 12
      %v2394 = vpop.permute.xlu0 %2393
      %2395 = vrot.lane.b32.xlu0 %v2196, 12
      %v2396 = vpop.permute.xlu0 %2395
      %2397 = vrot.lane.b32.xlu0 %v2198, 12
      %v2398 = vpop.permute.xlu0 %2397
      %2399 = vrot.lane.b32.xlu0 %v2200, 12
      %v2400 = vpop.permute.xlu0 %2399
      %2401 = vrot.lane.b32.xlu0 %v2202, 12
      %v2402 = vpop.permute.xlu0 %2401
      %2403 = vrot.lane.b32.xlu0 %v2204, 12
      %v2404 = vpop.permute.xlu0 %2403
      %2405 = vrot.lane.b32.xlu0 %v2206, 12
      %v2406 = vpop.permute.xlu0 %2405
      %2407 = vrot.lane.b32.xlu0 %v2208, 12
      %v2408 = vpop.permute.xlu0 %2407
      %2409 = vrot.lane.b32.xlu0 %v2210, 12
      %v2410 = vpop.permute.xlu0 %2409
      %2411 = vrot.lane.b32.xlu0 %v2212, 12
      %v2412 = vpop.permute.xlu0 %2411
      %2413 = vrot.lane.b32.xlu0 %v2214, 12
      %v2414 = vpop.permute.xlu0 %2413
      %2415 = vrot.lane.b32.xlu0 %v2216, 12
      %v2416 = vpop.permute.xlu0 %2415
      %2417 = vrot.lane.b32.xlu0 %v2218, 12
      %v2418 = vpop.permute.xlu0 %2417
      %2419 = vrot.lane.b32.xlu0 %v2220, 12
      %v2420 = vpop.permute.xlu0 %2419
      %2421 = vrot.lane.b32.xlu0 %v2222, 12
      %v2422 = vpop.permute.xlu0 %2421
      %2423 = vrot.lane.b32.xlu0 %v2224, 12
      %v2424 = vpop.permute.xlu0 %2423
      %2425 = vrot.lane.b32.xlu0 %v2226, 12
      %v2426 = vpop.permute.xlu0 %2425
      %2427 = vrot.lane.b32.xlu0 %v2228, 12
      %v2428 = vpop.permute.xlu0 %2427
      %2429 = vrot.lane.b32.xlu0 %v2230, 12
      %v2430 = vpop.permute.xlu0 %2429
      %2431 = vrot.lane.b32.xlu0 %v2232, 12
      %v2432 = vpop.permute.xlu0 %2431
      %2433 = vrot.lane.b32.xlu0 %v2234, 12
      %v2434 = vpop.permute.xlu0 %2433
      %2435 = vrot.lane.b32.xlu0 %v2236, 12
      %v2436 = vpop.permute.xlu0 %2435
      %2437 = vrot.lane.b32.xlu0 %v2238, 12
      %v2438 = vpop.permute.xlu0 %2437
      %2439 = vrot.lane.b32.xlu0 %v2240, 12
      %v2440 = vpop.permute.xlu0 %2439
      %2441 = vrot.lane.b32.xlu0 %v2242, 12
      %v2442 = vpop.permute.xlu0 %2441
      %2443 = vrot.lane.b32.xlu0 %v2244, 12
      %v2444 = vpop.permute.xlu0 %2443
      %2445 = vrot.lane.b32.xlu0 %v2246, 12
      %v2446 = vpop.permute.xlu0 %2445
      %vm2548 = vcmask 1043456
      %v2549 = vrot.slane %v1844, 4
      %v2550 = vrot.slane %v1845, 4
      %v2551 = vsel %vm2548, %v2549, %v2550
      %v2552 = vrot.slane %v1846, 4
      %v2553 = vsel %vm2548, %v2550, %v2552
      %v2554 = vrot.slane %v1847, 4
      %v2555 = vsel %vm2548, %v2552, %v2554
      %v2556 = vrot.slane %v1848, 4
      %v2557 = vsel %vm2548, %v2554, %v2556
      %v2558 = vrot.slane %v1849, 4
      %v2559 = vsel %vm2548, %v2556, %v2558
      %v2560 = vrot.slane %v1850, 4
      %v2561 = vsel %vm2548, %v2558, %v2560
      %v2562 = vrot.slane %v1851, 4
      %v2563 = vsel %vm2548, %v2560, %v2562
      %v2564 = vrot.slane %v1852, 4
      %v2565 = vsel %vm2548, %v2562, %v2564
      %v2566 = vrot.slane %v1853, 4
      %v2567 = vsel %vm2548, %v2564, %v2566
      %v2568 = vrot.slane %v1854, 4
      %v2569 = vsel %vm2548, %v2566, %v2568
      %v2570 = vrot.slane %v1855, 4
      %v2571 = vsel %vm2548, %v2568, %v2570
      %v2572 = vrot.slane %v1856, 4
      %v2573 = vsel %vm2548, %v2570, %v2572
      %v2574 = vrot.slane %v1857, 4
      %v2575 = vsel %vm2548, %v2572, %v2574
      %v2576 = vrot.slane %v1858, 4
      %v2577 = vsel %vm2548, %v2574, %v2576
      %v2578 = vrot.slane %v1859, 4
      %v2579 = vsel %vm2548, %v2576, %v2578
      %v2580 = vrot.slane %v1860, 4
      %v2581 = vsel %vm2548, %v2578, %v2580
      %v2582 = vrot.slane %v1861, 4
      %v2583 = vsel %vm2548, %v2580, %v2582
      %v2584 = vrot.slane %v1862, 4
      %v2585 = vsel %vm2548, %v2582, %v2584
      %v2586 = vrot.slane %v1863, 4
      %v2587 = vsel %vm2548, %v2584, %v2586
      %v2588 = vrot.slane %v1864, 4
      %v2589 = vsel %vm2548, %v2586, %v2588
      %v2590 = vrot.slane %v1865, 4
      %v2591 = vsel %vm2548, %v2588, %v2590
      %v2592 = vrot.slane %v1866, 4
      %v2593 = vsel %vm2548, %v2590, %v2592
      %v2594 = vrot.slane %v1867, 4
      %v2595 = vsel %vm2548, %v2592, %v2594
      %v2596 = vrot.slane %v1868, 4
      %v2597 = vsel %vm2548, %v2594, %v2596
      %v2598 = vrot.slane %v1869, 4
      %v2599 = vsel %vm2548, %v2596, %v2598
      %v2600 = vrot.slane %v1870, 4
      %v2601 = vsel %vm2548, %v2598, %v2600
      %v2602 = vrot.slane %v1871, 4
      %v2603 = vsel %vm2548, %v2600, %v2602
      %v2604 = vrot.slane %v1872, 4
      %v2605 = vsel %vm2548, %v2602, %v2604
      %v2606 = vrot.slane %v1873, 4
      %v2607 = vsel %vm2548, %v2604, %v2606
      %v2608 = vrot.slane %v1874, 4
      %v2609 = vsel %vm2548, %v2606, %v2608
      %v2610 = vrot.slane %v1875, 4
      %v2611 = vsel %vm2548, %v2608, %v2610
      %v2612 = vrot.slane %v1876, 4
      %v2613 = vsel %vm2548, %v2610, %v2612
      %v2614 = vrot.slane %v1877, 4
      %v2615 = vsel %vm2548, %v2612, %v2614
      %v2616 = vrot.slane %v1878, 4
      %v2617 = vsel %vm2548, %v2614, %v2616
      %v2618 = vrot.slane %v1879, 4
      %v2619 = vsel %vm2548, %v2616, %v2618
      %v2620 = vrot.slane %v1880, 4
      %v2621 = vsel %vm2548, %v2618, %v2620
      %v2622 = vrot.slane %v1881, 4
      %v2623 = vsel %vm2548, %v2620, %v2622
      %v2624 = vrot.slane %v1882, 4
      %v2625 = vsel %vm2548, %v2622, %v2624
      %v2626 = vrot.slane %v1883, 4
      %v2627 = vsel %vm2548, %v2624, %v2626
      %v2628 = vrot.slane %v1884, 4
      %v2629 = vsel %vm2548, %v2626, %v2628
      %v2630 = vrot.slane %v1885, 4
      %v2631 = vsel %vm2548, %v2628, %v2630
      %v2632 = vrot.slane %v1886, 4
      %v2633 = vsel %vm2548, %v2630, %v2632
      %v2634 = vrot.slane %v1887, 4
      %v2635 = vsel %vm2548, %v2632, %v2634
      %v2636 = vrot.slane %v1888, 4
      %v2637 = vsel %vm2548, %v2634, %v2636
      %v2638 = vrot.slane %v1889, 4
      %v2639 = vsel %vm2548, %v2636, %v2638
      %v2640 = vrot.slane %v1890, 4
      %v2641 = vsel %vm2548, %v2638, %v2640
      %v2642 = vrot.slane %v1891, 4
      %v2643 = vsel %vm2548, %v2640, %v2642
      %v2644 = vrot.slane %v1892, 4
      %v2645 = vsel %vm2548, %v2642, %v2644
      %v2646 = vrot.slane %v1893, 4
      %v2647 = vsel %vm2548, %v2644, %v2646
      %v2648 = vrot.slane %v1894, 4
      %v2649 = vsel %vm2548, %v2646, %v2648
      %v2650 = vrot.slane %v1895, 4
      %v2651 = vsel %vm2548, %v2648, %v2650
      %v2652 = vrot.slane %v1896, 4
      %v2653 = vsel %vm2548, %v2650, %v2652
      %v2654 = vrot.slane %v1897, 4
      %v2655 = vsel %vm2548, %v2652, %v2654
      %v2656 = vrot.slane %v1898, 4
      %v2657 = vsel %vm2548, %v2654, %v2656
      %v2658 = vrot.slane %v1899, 4
      %v2659 = vsel %vm2548, %v2656, %v2658
      %v2660 = vrot.slane %v1900, 4
      %v2661 = vsel %vm2548, %v2658, %v2660
      %v2662 = vrot.slane %v1901, 4
      %v2663 = vsel %vm2548, %v2660, %v2662
      %v2664 = vrot.slane %v1902, 4
      %v2665 = vsel %vm2548, %v2662, %v2664
      %v2666 = vrot.slane %v1903, 4
      %v2667 = vsel %vm2548, %v2664, %v2666
      %v2668 = vrot.slane %v1904, 4
      %v2669 = vsel %vm2548, %v2666, %v2668
      %v2670 = vrot.slane %v1905, 4
      %v2671 = vsel %vm2548, %v2668, %v2670
      %v2672 = vrot.slane %v1906, 4
      %v2673 = vsel %vm2548, %v2670, %v2672
      %v2674 = vrot.slane %v1907, 4
      %v2675 = vsel %vm2548, %v2672, %v2674
      %v2676 = vrot.slane %v1908, 4
      %v2677 = vsel %vm2548, %v2674, %v2676
      %v2678 = vrot.slane %v1909, 4
      %v2679 = vsel %vm2548, %v2676, %v2678
      %v2680 = vrot.slane %v1910, 4
      %v2681 = vsel %vm2548, %v2678, %v2680
      %v2682 = vrot.slane %v1911, 4
      %v2683 = vsel %vm2548, %v2680, %v2682
      %v2684 = vrot.slane %v1912, 4
      %v2685 = vsel %vm2548, %v2682, %v2684
      %v2686 = vrot.slane %v1913, 4
      %v2687 = vsel %vm2548, %v2684, %v2686
      %v2688 = vrot.slane %v1914, 4
      %v2689 = vsel %vm2548, %v2686, %v2688
      %v2690 = vrot.slane %v1915, 4
      %v2691 = vsel %vm2548, %v2688, %v2690
      %v2692 = vrot.slane %v1916, 4
      %v2693 = vsel %vm2548, %v2690, %v2692
      %v2694 = vrot.slane %v1917, 4
      %v2695 = vsel %vm2548, %v2692, %v2694
      %v2696 = vrot.slane %v1918, 4
      %v2697 = vsel %vm2548, %v2694, %v2696
      %v2698 = vrot.slane %v1919, 4
      %v2699 = vsel %vm2548, %v2696, %v2698
      %v2700 = vrot.slane %v1920, 4
      %v2701 = vsel %vm2548, %v2698, %v2700
      %v2702 = vrot.slane %v1921, 4
      %v2703 = vsel %vm2548, %v2700, %v2702
      %v2704 = vrot.slane %v1922, 4
      %v2705 = vsel %vm2548, %v2702, %v2704
      %v2706 = vrot.slane %v1923, 4
      %v2707 = vsel %vm2548, %v2704, %v2706
      %v2708 = vrot.slane %v1924, 4
      %v2709 = vsel %vm2548, %v2706, %v2708
      %v2710 = vrot.slane %v1925, 4
      %v2711 = vsel %vm2548, %v2708, %v2710
      %v2712 = vrot.slane %v1926, 4
      %v2713 = vsel %vm2548, %v2710, %v2712
      %v2714 = vrot.slane %v1927, 4
      %v2715 = vsel %vm2548, %v2712, %v2714
      %v2716 = vrot.slane %v1928, 4
      %v2717 = vsel %vm2548, %v2714, %v2716
      %v2718 = vrot.slane %v1929, 4
      %v2719 = vsel %vm2548, %v2716, %v2718
      %v2720 = vrot.slane %v1930, 4
      %v2721 = vsel %vm2548, %v2718, %v2720
      %v2722 = vrot.slane %v1931, 4
      %v2723 = vsel %vm2548, %v2720, %v2722
      %v2724 = vrot.slane %v1932, 4
      %v2725 = vsel %vm2548, %v2722, %v2724
      %v2726 = vrot.slane %v1933, 4
      %v2727 = vsel %vm2548, %v2724, %v2726
      %v2728 = vrot.slane %v1934, 4
      %v2729 = vsel %vm2548, %v2726, %v2728
      %v2730 = vrot.slane %v1935, 4
      %v2731 = vsel %vm2548, %v2728, %v2730
      %v2732 = vrot.slane %v1936, 4
      %v2733 = vsel %vm2548, %v2730, %v2732
      %v2734 = vrot.slane %v1937, 4
      %v2735 = vsel %vm2548, %v2732, %v2734
      %v2736 = vrot.slane %v1938, 4
      %v2737 = vsel %vm2548, %v2734, %v2736
      %v2738 = vrot.slane %v1939, 4
      %v2739 = vsel %vm2548, %v2736, %v2738
      %v2740 = vrot.slane %v1940, 4
      %v2741 = vsel %vm2548, %v2738, %v2740
      %v2742 = vrot.slane %v1941, 4
      %v2743 = vsel %vm2548, %v2740, %v2742
      %v2744 = vrot.slane %v1942, 4
      %v2745 = vsel %vm2548, %v2742, %v2744
      %v2746 = vrot.slane %v1943, 4
      %v2747 = vsel %vm2548, %v2744, %v2746
      %v2748 = vrot.slane %v1944, 4
      %v2749 = vsel %vm2548, %v2746, %v2748
      %2750 = vrot.lane.b32.xlu0 %v2551, 24
      %v2751 = vpop.permute.xlu0 %2750
      %2752 = vrot.lane.b32.xlu0 %v2553, 24
      %v2753 = vpop.permute.xlu0 %2752
      %2754 = vrot.lane.b32.xlu0 %v2555, 24
      %v2755 = vpop.permute.xlu0 %2754
      %2756 = vrot.lane.b32.xlu0 %v2557, 24
      %v2757 = vpop.permute.xlu0 %2756
      %2758 = vrot.lane.b32.xlu0 %v2559, 24
      %v2759 = vpop.permute.xlu0 %2758
      %2760 = vrot.lane.b32.xlu0 %v2561, 24
      %v2761 = vpop.permute.xlu0 %2760
      %2762 = vrot.lane.b32.xlu0 %v2563, 24
      %v2763 = vpop.permute.xlu0 %2762
      %2764 = vrot.lane.b32.xlu0 %v2565, 24
      %v2765 = vpop.permute.xlu0 %2764
      %2766 = vrot.lane.b32.xlu0 %v2567, 24
      %v2767 = vpop.permute.xlu0 %2766
      %2768 = vrot.lane.b32.xlu0 %v2569, 24
      %v2769 = vpop.permute.xlu0 %2768
      %2770 = vrot.lane.b32.xlu0 %v2571, 24
      %v2771 = vpop.permute.xlu0 %2770
      %2772 = vrot.lane.b32.xlu0 %v2573, 24
      %v2773 = vpop.permute.xlu0 %2772
      %2774 = vrot.lane.b32.xlu0 %v2575, 24
      %v2775 = vpop.permute.xlu0 %2774
      %2776 = vrot.lane.b32.xlu0 %v2577, 24
      %v2777 = vpop.permute.xlu0 %2776
      %2778 = vrot.lane.b32.xlu0 %v2579, 24
      %v2779 = vpop.permute.xlu0 %2778
      %2780 = vrot.lane.b32.xlu0 %v2581, 24
      %v2781 = vpop.permute.xlu0 %2780
      %2782 = vrot.lane.b32.xlu0 %v2583, 24
      %v2783 = vpop.permute.xlu0 %2782
      %2784 = vrot.lane.b32.xlu0 %v2585, 24
      %v2785 = vpop.permute.xlu0 %2784
      %2786 = vrot.lane.b32.xlu0 %v2587, 24
      %v2787 = vpop.permute.xlu0 %2786
      %2788 = vrot.lane.b32.xlu0 %v2589, 24
      %v2789 = vpop.permute.xlu0 %2788
      %2790 = vrot.lane.b32.xlu0 %v2591, 24
      %v2791 = vpop.permute.xlu0 %2790
      %2792 = vrot.lane.b32.xlu0 %v2593, 24
      %v2793 = vpop.permute.xlu0 %2792
      %2794 = vrot.lane.b32.xlu0 %v2595, 24
      %v2795 = vpop.permute.xlu0 %2794
      %2796 = vrot.lane.b32.xlu0 %v2597, 24
      %v2797 = vpop.permute.xlu0 %2796
      %2798 = vrot.lane.b32.xlu0 %v2599, 24
      %v2799 = vpop.permute.xlu0 %2798
      %2800 = vrot.lane.b32.xlu0 %v2601, 24
      %v2801 = vpop.permute.xlu0 %2800
      %2802 = vrot.lane.b32.xlu0 %v2603, 24
      %v2803 = vpop.permute.xlu0 %2802
      %2804 = vrot.lane.b32.xlu0 %v2605, 24
      %v2805 = vpop.permute.xlu0 %2804
      %2806 = vrot.lane.b32.xlu0 %v2607, 24
      %v2807 = vpop.permute.xlu0 %2806
      %2808 = vrot.lane.b32.xlu0 %v2609, 24
      %v2809 = vpop.permute.xlu0 %2808
      %2810 = vrot.lane.b32.xlu0 %v2611, 24
      %v2811 = vpop.permute.xlu0 %2810
      %2812 = vrot.lane.b32.xlu0 %v2613, 24
      %v2813 = vpop.permute.xlu0 %2812
      %2814 = vrot.lane.b32.xlu0 %v2615, 24
      %v2815 = vpop.permute.xlu0 %2814
      %2816 = vrot.lane.b32.xlu0 %v2617, 24
      %v2817 = vpop.permute.xlu0 %2816
      %2818 = vrot.lane.b32.xlu0 %v2619, 24
      %v2819 = vpop.permute.xlu0 %2818
      %2820 = vrot.lane.b32.xlu0 %v2621, 24
      %v2821 = vpop.permute.xlu0 %2820
      %2822 = vrot.lane.b32.xlu0 %v2623, 24
      %v2823 = vpop.permute.xlu0 %2822
      %2824 = vrot.lane.b32.xlu0 %v2625, 24
      %v2825 = vpop.permute.xlu0 %2824
      %2826 = vrot.lane.b32.xlu0 %v2627, 24
      %v2827 = vpop.permute.xlu0 %2826
      %2828 = vrot.lane.b32.xlu0 %v2629, 24
      %v2829 = vpop.permute.xlu0 %2828
      %2830 = vrot.lane.b32.xlu0 %v2631, 24
      %v2831 = vpop.permute.xlu0 %2830
      %2832 = vrot.lane.b32.xlu0 %v2633, 24
      %v2833 = vpop.permute.xlu0 %2832
      %2834 = vrot.lane.b32.xlu0 %v2635, 24
      %v2835 = vpop.permute.xlu0 %2834
      %2836 = vrot.lane.b32.xlu0 %v2637, 24
      %v2837 = vpop.permute.xlu0 %2836
      %2838 = vrot.lane.b32.xlu0 %v2639, 24
      %v2839 = vpop.permute.xlu0 %2838
      %2840 = vrot.lane.b32.xlu0 %v2641, 24
      %v2841 = vpop.permute.xlu0 %2840
      %2842 = vrot.lane.b32.xlu0 %v2643, 24
      %v2843 = vpop.permute.xlu0 %2842
      %2844 = vrot.lane.b32.xlu0 %v2645, 24
      %v2845 = vpop.permute.xlu0 %2844
      %2846 = vrot.lane.b32.xlu0 %v2647, 24
      %v2847 = vpop.permute.xlu0 %2846
      %2848 = vrot.lane.b32.xlu0 %v2649, 24
      %v2849 = vpop.permute.xlu0 %2848
      %2850 = vrot.lane.b32.xlu0 %v2651, 24
      %v2851 = vpop.permute.xlu0 %2850
      %2852 = vrot.lane.b32.xlu0 %v2653, 24
      %v2853 = vpop.permute.xlu0 %2852
      %2854 = vrot.lane.b32.xlu0 %v2655, 24
      %v2855 = vpop.permute.xlu0 %2854
      %2856 = vrot.lane.b32.xlu0 %v2657, 24
      %v2857 = vpop.permute.xlu0 %2856
      %2858 = vrot.lane.b32.xlu0 %v2659, 24
      %v2859 = vpop.permute.xlu0 %2858
      %2860 = vrot.lane.b32.xlu0 %v2661, 24
      %v2861 = vpop.permute.xlu0 %2860
      %2862 = vrot.lane.b32.xlu0 %v2663, 24
      %v2863 = vpop.permute.xlu0 %2862
      %2864 = vrot.lane.b32.xlu0 %v2665, 24
      %v2865 = vpop.permute.xlu0 %2864
      %2866 = vrot.lane.b32.xlu0 %v2667, 24
      %v2867 = vpop.permute.xlu0 %2866
      %2868 = vrot.lane.b32.xlu0 %v2669, 24
      %v2869 = vpop.permute.xlu0 %2868
      %2870 = vrot.lane.b32.xlu0 %v2671, 24
      %v2871 = vpop.permute.xlu0 %2870
      %2872 = vrot.lane.b32.xlu0 %v2673, 24
      %v2873 = vpop.permute.xlu0 %2872
      %2874 = vrot.lane.b32.xlu0 %v2675, 24
      %v2875 = vpop.permute.xlu0 %2874
      %2876 = vrot.lane.b32.xlu0 %v2677, 24
      %v2877 = vpop.permute.xlu0 %2876
      %2878 = vrot.lane.b32.xlu0 %v2679, 24
      %v2879 = vpop.permute.xlu0 %2878
      %2880 = vrot.lane.b32.xlu0 %v2681, 24
      %v2881 = vpop.permute.xlu0 %2880
      %2882 = vrot.lane.b32.xlu0 %v2683, 24
      %v2883 = vpop.permute.xlu0 %2882
      %2884 = vrot.lane.b32.xlu0 %v2685, 24
      %v2885 = vpop.permute.xlu0 %2884
      %2886 = vrot.lane.b32.xlu0 %v2687, 24
      %v2887 = vpop.permute.xlu0 %2886
      %2888 = vrot.lane.b32.xlu0 %v2689, 24
      %v2889 = vpop.permute.xlu0 %2888
      %2890 = vrot.lane.b32.xlu0 %v2691, 24
      %v2891 = vpop.permute.xlu0 %2890
      %2892 = vrot.lane.b32.xlu0 %v2693, 24
      %v2893 = vpop.permute.xlu0 %2892
      %2894 = vrot.lane.b32.xlu0 %v2695, 24
      %v2895 = vpop.permute.xlu0 %2894
      %2896 = vrot.lane.b32.xlu0 %v2697, 24
      %v2897 = vpop.permute.xlu0 %2896
      %2898 = vrot.lane.b32.xlu0 %v2699, 24
      %v2899 = vpop.permute.xlu0 %2898
      %2900 = vrot.lane.b32.xlu0 %v2701, 24
      %v2901 = vpop.permute.xlu0 %2900
      %2902 = vrot.lane.b32.xlu0 %v2703, 24
      %v2903 = vpop.permute.xlu0 %2902
      %2904 = vrot.lane.b32.xlu0 %v2705, 24
      %v2905 = vpop.permute.xlu0 %2904
      %2906 = vrot.lane.b32.xlu0 %v2707, 24
      %v2907 = vpop.permute.xlu0 %2906
      %2908 = vrot.lane.b32.xlu0 %v2709, 24
      %v2909 = vpop.permute.xlu0 %2908
      %2910 = vrot.lane.b32.xlu0 %v2711, 24
      %v2911 = vpop.permute.xlu0 %2910
      %2912 = vrot.lane.b32.xlu0 %v2713, 24
      %v2913 = vpop.permute.xlu0 %2912
      %2914 = vrot.lane.b32.xlu0 %v2715, 24
      %v2915 = vpop.permute.xlu0 %2914
      %2916 = vrot.lane.b32.xlu0 %v2717, 24
      %v2917 = vpop.permute.xlu0 %2916
      %2918 = vrot.lane.b32.xlu0 %v2719, 24
      %v2919 = vpop.permute.xlu0 %2918
      %2920 = vrot.lane.b32.xlu0 %v2721, 24
      %v2921 = vpop.permute.xlu0 %2920
      %2922 = vrot.lane.b32.xlu0 %v2723, 24
      %v2923 = vpop.permute.xlu0 %2922
      %2924 = vrot.lane.b32.xlu0 %v2725, 24
      %v2925 = vpop.permute.xlu0 %2924
      %2926 = vrot.lane.b32.xlu0 %v2727, 24
      %v2927 = vpop.permute.xlu0 %2926
      %2928 = vrot.lane.b32.xlu0 %v2729, 24
      %v2929 = vpop.permute.xlu0 %2928
      %2930 = vrot.lane.b32.xlu0 %v2731, 24
      %v2931 = vpop.permute.xlu0 %2930
      %2932 = vrot.lane.b32.xlu0 %v2733, 24
      %v2933 = vpop.permute.xlu0 %2932
      %2934 = vrot.lane.b32.xlu0 %v2735, 24
      %v2935 = vpop.permute.xlu0 %2934
      %2936 = vrot.lane.b32.xlu0 %v2737, 24
      %v2937 = vpop.permute.xlu0 %2936
      %2938 = vrot.lane.b32.xlu0 %v2739, 24
      %v2939 = vpop.permute.xlu0 %2938
      %2940 = vrot.lane.b32.xlu0 %v2741, 24
      %v2941 = vpop.permute.xlu0 %2940
      %2942 = vrot.lane.b32.xlu0 %v2743, 24
      %v2943 = vpop.permute.xlu0 %2942
      %2944 = vrot.lane.b32.xlu0 %v2745, 24
      %v2945 = vpop.permute.xlu0 %2944
      %2946 = vrot.lane.b32.xlu0 %v2747, 24
      %v2947 = vpop.permute.xlu0 %2946
      %2948 = vrot.lane.b32.xlu0 %v2749, 24
      %v2949 = vpop.permute.xlu0 %2948
      %vm3050 = vcmask 97280
      %v3051 = vsel %vm3050, %v1842, %v2248
      %v3052 = vsel %vm3050, %v1843, %v2250
      %v3053 = vsel %vm3050, %v1844, %v2252
      %v3054 = vsel %vm3050, %v1845, %v2254
      %v3055 = vsel %vm3050, %v1846, %v2256
      %v3056 = vsel %vm3050, %v1847, %v2258
      %v3057 = vsel %vm3050, %v1848, %v2260
      %v3058 = vsel %vm3050, %v1849, %v2262
      %v3059 = vsel %vm3050, %v1850, %v2264
      %v3060 = vsel %vm3050, %v1851, %v2266
      %v3061 = vsel %vm3050, %v1852, %v2268
      %v3062 = vsel %vm3050, %v1853, %v2270
      %v3063 = vsel %vm3050, %v1854, %v2272
      %v3064 = vsel %vm3050, %v1855, %v2274
      %v3065 = vsel %vm3050, %v1856, %v2276
      %v3066 = vsel %vm3050, %v1857, %v2278
      %v3067 = vsel %vm3050, %v1858, %v2280
      %v3068 = vsel %vm3050, %v1859, %v2282
      %v3069 = vsel %vm3050, %v1860, %v2284
      %v3070 = vsel %vm3050, %v1861, %v2286
      %v3071 = vsel %vm3050, %v1862, %v2288
      %v3072 = vsel %vm3050, %v1863, %v2290
      %v3073 = vsel %vm3050, %v1864, %v2292
      %v3074 = vsel %vm3050, %v1865, %v2294
      %v3075 = vsel %vm3050, %v1866, %v2296
      %v3076 = vsel %vm3050, %v1867, %v2298
      %v3077 = vsel %vm3050, %v1868, %v2300
      %v3078 = vsel %vm3050, %v1869, %v2302
      %v3079 = vsel %vm3050, %v1870, %v2304
      %v3080 = vsel %vm3050, %v1871, %v2306
      %v3081 = vsel %vm3050, %v1872, %v2308
      %v3082 = vsel %vm3050, %v1873, %v2310
      %v3083 = vsel %vm3050, %v1874, %v2312
      %v3084 = vsel %vm3050, %v1875, %v2314
      %v3085 = vsel %vm3050, %v1876, %v2316
      %v3086 = vsel %vm3050, %v1877, %v2318
      %v3087 = vsel %vm3050, %v1878, %v2320
      %v3088 = vsel %vm3050, %v1879, %v2322
      %v3089 = vsel %vm3050, %v1880, %v2324
      %v3090 = vsel %vm3050, %v1881, %v2326
      %v3091 = vsel %vm3050, %v1882, %v2328
      %v3092 = vsel %vm3050, %v1883, %v2330
      %v3093 = vsel %vm3050, %v1884, %v2332
      %v3094 = vsel %vm3050, %v1885, %v2334
      %v3095 = vsel %vm3050, %v1886, %v2336
      %v3096 = vsel %vm3050, %v1887, %v2338
      %v3097 = vsel %vm3050, %v1888, %v2340
      %v3098 = vsel %vm3050, %v1889, %v2342
      %v3099 = vsel %vm3050, %v1890, %v2344
      %v3100 = vsel %vm3050, %v1891, %v2346
      %v3101 = vsel %vm3050, %v1892, %v2348
      %v3102 = vsel %vm3050, %v1893, %v2350
      %v3103 = vsel %vm3050, %v1894, %v2352
      %v3104 = vsel %vm3050, %v1895, %v2354
      %v3105 = vsel %vm3050, %v1896, %v2356
      %v3106 = vsel %vm3050, %v1897, %v2358
      %v3107 = vsel %vm3050, %v1898, %v2360
      %v3108 = vsel %vm3050, %v1899, %v2362
      %v3109 = vsel %vm3050, %v1900, %v2364
      %v3110 = vsel %vm3050, %v1901, %v2366
      %v3111 = vsel %vm3050, %v1902, %v2368
      %v3112 = vsel %vm3050, %v1903, %v2370
      %v3113 = vsel %vm3050, %v1904, %v2372
      %v3114 = vsel %vm3050, %v1905, %v2374
      %v3115 = vsel %vm3050, %v1906, %v2376
      %v3116 = vsel %vm3050, %v1907, %v2378
      %v3117 = vsel %vm3050, %v1908, %v2380
      %v3118 = vsel %vm3050, %v1909, %v2382
      %v3119 = vsel %vm3050, %v1910, %v2384
      %v3120 = vsel %vm3050, %v1911, %v2386
      %v3121 = vsel %vm3050, %v1912, %v2388
      %v3122 = vsel %vm3050, %v1913, %v2390
      %v3123 = vsel %vm3050, %v1914, %v2392
      %v3124 = vsel %vm3050, %v1915, %v2394
      %v3125 = vsel %vm3050, %v1916, %v2396
      %v3126 = vsel %vm3050, %v1917, %v2398
      %v3127 = vsel %vm3050, %v1918, %v2400
      %v3128 = vsel %vm3050, %v1919, %v2402
      %v3129 = vsel %vm3050, %v1920, %v2404
      %v3130 = vsel %vm3050, %v1921, %v2406
      %v3131 = vsel %vm3050, %v1922, %v2408
      %v3132 = vsel %vm3050, %v1923, %v2410
      %v3133 = vsel %vm3050, %v1924, %v2412
      %v3134 = vsel %vm3050, %v1925, %v2414
      %v3135 = vsel %vm3050, %v1926, %v2416
      %v3136 = vsel %vm3050, %v1927, %v2418
      %v3137 = vsel %vm3050, %v1928, %v2420
      %v3138 = vsel %vm3050, %v1929, %v2422
      %v3139 = vsel %vm3050, %v1930, %v2424
      %v3140 = vsel %vm3050, %v1931, %v2426
      %v3141 = vsel %vm3050, %v1932, %v2428
      %v3142 = vsel %vm3050, %v1933, %v2430
      %v3143 = vsel %vm3050, %v1934, %v2432
      %v3144 = vsel %vm3050, %v1935, %v2434
      %v3145 = vsel %vm3050, %v1936, %v2436
      %v3146 = vsel %vm3050, %v1937, %v2438
      %v3147 = vsel %vm3050, %v1938, %v2440
      %v3148 = vsel %vm3050, %v1939, %v2442
      %v3149 = vsel %vm3050, %v1940, %v2444
      %v3150 = vsel %vm3050, %v1941, %v2446
      %vm3151 = vcmask 195584
      %v3152 = vsel %vm3151, %v3051, %v2751
      %v3153 = vsel %vm3151, %v3052, %v2753
      %v3154 = vsel %vm3151, %v3053, %v2755
      %v3155 = vsel %vm3151, %v3054, %v2757
      %v3156 = vsel %vm3151, %v3055, %v2759
      %v3157 = vsel %vm3151, %v3056, %v2761
      %v3158 = vsel %vm3151, %v3057, %v2763
      %v3159 = vsel %vm3151, %v3058, %v2765
      %v3160 = vsel %vm3151, %v3059, %v2767
      %v3161 = vsel %vm3151, %v3060, %v2769
      %v3162 = vsel %vm3151, %v3061, %v2771
      %v3163 = vsel %vm3151, %v3062, %v2773
      %v3164 = vsel %vm3151, %v3063, %v2775
      %v3165 = vsel %vm3151, %v3064, %v2777
      %v3166 = vsel %vm3151, %v3065, %v2779
      %v3167 = vsel %vm3151, %v3066, %v2781
      %v3168 = vsel %vm3151, %v3067, %v2783
      %v3169 = vsel %vm3151, %v3068, %v2785
      %v3170 = vsel %vm3151, %v3069, %v2787
      %v3171 = vsel %vm3151, %v3070, %v2789
      %v3172 = vsel %vm3151, %v3071, %v2791
      %v3173 = vsel %vm3151, %v3072, %v2793
      %v3174 = vsel %vm3151, %v3073, %v2795
      %v3175 = vsel %vm3151, %v3074, %v2797
      %v3176 = vsel %vm3151, %v3075, %v2799
      %v3177 = vsel %vm3151, %v3076, %v2801
      %v3178 = vsel %vm3151, %v3077, %v2803
      %v3179 = vsel %vm3151, %v3078, %v2805
      %v3180 = vsel %vm3151, %v3079, %v2807
      %v3181 = vsel %vm3151, %v3080, %v2809
      %v3182 = vsel %vm3151, %v3081, %v2811
      %v3183 = vsel %vm3151, %v3082, %v2813
      %v3184 = vsel %vm3151, %v3083, %v2815
      %v3185 = vsel %vm3151, %v3084, %v2817
      %v3186 = vsel %vm3151, %v3085, %v2819
      %v3187 = vsel %vm3151, %v3086, %v2821
      %v3188 = vsel %vm3151, %v3087, %v2823
      %v3189 = vsel %vm3151, %v3088, %v2825
      %v3190 = vsel %vm3151, %v3089, %v2827
      %v3191 = vsel %vm3151, %v3090, %v2829
      %v3192 = vsel %vm3151, %v3091, %v2831
      %v3193 = vsel %vm3151, %v3092, %v2833
      %v3194 = vsel %vm3151, %v3093, %v2835
      %v3195 = vsel %vm3151, %v3094, %v2837
      %v3196 = vsel %vm3151, %v3095, %v2839
      %v3197 = vsel %vm3151, %v3096, %v2841
      %v3198 = vsel %vm3151, %v3097, %v2843
      %v3199 = vsel %vm3151, %v3098, %v2845
      %v3200 = vsel %vm3151, %v3099, %v2847
      %v3201 = vsel %vm3151, %v3100, %v2849
      %v3202 = vsel %vm3151, %v3101, %v2851
      %v3203 = vsel %vm3151, %v3102, %v2853
      %v3204 = vsel %vm3151, %v3103, %v2855
      %v3205 = vsel %vm3151, %v3104, %v2857
      %v3206 = vsel %vm3151, %v3105, %v2859
      %v3207 = vsel %vm3151, %v3106, %v2861
      %v3208 = vsel %vm3151, %v3107, %v2863
      %v3209 = vsel %vm3151, %v3108, %v2865
      %v3210 = vsel %vm3151, %v3109, %v2867
      %v3211 = vsel %vm3151, %v3110, %v2869
      %v3212 = vsel %vm3151, %v3111, %v2871
      %v3213 = vsel %vm3151, %v3112, %v2873
      %v3214 = vsel %vm3151, %v3113, %v2875
      %v3215 = vsel %vm3151, %v3114, %v2877
      %v3216 = vsel %vm3151, %v3115, %v2879
      %v3217 = vsel %vm3151, %v3116, %v2881
      %v3218 = vsel %vm3151, %v3117, %v2883
      %v3219 = vsel %vm3151, %v3118, %v2885
      %v3220 = vsel %vm3151, %v3119, %v2887
      %v3221 = vsel %vm3151, %v3120, %v2889
      %v3222 = vsel %vm3151, %v3121, %v2891
      %v3223 = vsel %vm3151, %v3122, %v2893
      %v3224 = vsel %vm3151, %v3123, %v2895
      %v3225 = vsel %vm3151, %v3124, %v2897
      %v3226 = vsel %vm3151, %v3125, %v2899
      %v3227 = vsel %vm3151, %v3126, %v2901
      %v3228 = vsel %vm3151, %v3127, %v2903
      %v3229 = vsel %vm3151, %v3128, %v2905
      %v3230 = vsel %vm3151, %v3129, %v2907
      %v3231 = vsel %vm3151, %v3130, %v2909
      %v3232 = vsel %vm3151, %v3131, %v2911
      %v3233 = vsel %vm3151, %v3132, %v2913
      %v3234 = vsel %vm3151, %v3133, %v2915
      %v3235 = vsel %vm3151, %v3134, %v2917
      %v3236 = vsel %vm3151, %v3135, %v2919
      %v3237 = vsel %vm3151, %v3136, %v2921
      %v3238 = vsel %vm3151, %v3137, %v2923
      %v3239 = vsel %vm3151, %v3138, %v2925
      %v3240 = vsel %vm3151, %v3139, %v2927
      %v3241 = vsel %vm3151, %v3140, %v2929
      %v3242 = vsel %vm3151, %v3141, %v2931
      %v3243 = vsel %vm3151, %v3142, %v2933
      %v3244 = vsel %vm3151, %v3143, %v2935
      %v3245 = vsel %vm3151, %v3144, %v2937
      %v3246 = vsel %vm3151, %v3145, %v2939
      %v3247 = vsel %vm3151, %v3146, %v2941
      %v3248 = vsel %vm3151, %v3147, %v2943
      %v3249 = vsel %vm3151, %v3148, %v2945
      %v3250 = vsel %vm3151, %v3149, %v2947
      %v3251 = vsel %vm3151, %v3150, %v2949
      %v3328 = vrot.slane %v3164, 4
      %v3329 = vrot.slane %v3165, 4
      %v3330 = vsel %vm2548, %v3328, %v3329
      %v3331 = vrot.slane %v3166, 4
      %v3332 = vsel %vm2548, %v3329, %v3331
      %v3333 = vrot.slane %v3167, 4
      %v3334 = vsel %vm2548, %v3331, %v3333
      %v3335 = vrot.slane %v3168, 4
      %v3336 = vsel %vm2548, %v3333, %v3335
      %v3337 = vrot.slane %v3169, 4
      %v3338 = vsel %vm2548, %v3335, %v3337
      %v3339 = vrot.slane %v3170, 4
      %v3340 = vsel %vm2548, %v3337, %v3339
      %v3341 = vrot.slane %v3171, 4
      %v3342 = vsel %vm2548, %v3339, %v3341
      %v3343 = vrot.slane %v3172, 4
      %v3344 = vsel %vm2548, %v3341, %v3343
      %v3345 = vrot.slane %v3173, 4
      %v3346 = vsel %vm2548, %v3343, %v3345
      %v3347 = vrot.slane %v3174, 4
      %v3348 = vsel %vm2548, %v3345, %v3347
      %v3349 = vrot.slane %v3175, 4
      %v3350 = vsel %vm2548, %v3347, %v3349
      %v3351 = vrot.slane %v3176, 4
      %v3352 = vsel %vm2548, %v3349, %v3351
      %v3353 = vrot.slane %v3177, 4
      %v3354 = vsel %vm2548, %v3351, %v3353
      %v3355 = vrot.slane %v3178, 4
      %v3356 = vsel %vm2548, %v3353, %v3355
      %v3357 = vrot.slane %v3179, 4
      %v3358 = vsel %vm2548, %v3355, %v3357
      %v3359 = vrot.slane %v3180, 4
      %v3360 = vsel %vm2548, %v3357, %v3359
      %v3361 = vrot.slane %v3181, 4
      %v3362 = vsel %vm2548, %v3359, %v3361
      %v3363 = vrot.slane %v3182, 4
      %v3364 = vsel %vm2548, %v3361, %v3363
      %v3365 = vrot.slane %v3183, 4
      %v3366 = vsel %vm2548, %v3363, %v3365
      %v3367 = vrot.slane %v3184, 4
      %v3368 = vsel %vm2548, %v3365, %v3367
      %v3369 = vrot.slane %v3185, 4
      %v3370 = vsel %vm2548, %v3367, %v3369
      %v3371 = vrot.slane %v3186, 4
      %v3372 = vsel %vm2548, %v3369, %v3371
      %v3373 = vrot.slane %v3187, 4
      %v3374 = vsel %vm2548, %v3371, %v3373
      %v3375 = vrot.slane %v3188, 4
      %v3376 = vsel %vm2548, %v3373, %v3375
      %v3377 = vrot.slane %v3189, 4
      %v3378 = vsel %vm2548, %v3375, %v3377
      %v3379 = vrot.slane %v3190, 4
      %v3380 = vsel %vm2548, %v3377, %v3379
      %v3381 = vrot.slane %v3191, 4
      %v3382 = vsel %vm2548, %v3379, %v3381
      %v3383 = vrot.slane %v3192, 4
      %v3384 = vsel %vm2548, %v3381, %v3383
      %v3385 = vrot.slane %v3193, 4
      %v3386 = vsel %vm2548, %v3383, %v3385
      %v3387 = vrot.slane %v3194, 4
      %v3388 = vsel %vm2548, %v3385, %v3387
      %v3389 = vrot.slane %v3195, 4
      %v3390 = vsel %vm2548, %v3387, %v3389
      %v3391 = vrot.slane %v3196, 4
      %v3392 = vsel %vm2548, %v3389, %v3391
      %v3393 = vrot.slane %v3197, 4
      %v3394 = vsel %vm2548, %v3391, %v3393
      %v3395 = vrot.slane %v3198, 4
      %v3396 = vsel %vm2548, %v3393, %v3395
      %v3397 = vrot.slane %v3199, 4
      %v3398 = vsel %vm2548, %v3395, %v3397
      %v3399 = vrot.slane %v3200, 4
      %v3400 = vsel %vm2548, %v3397, %v3399
      %v3401 = vrot.slane %v3201, 4
      %v3402 = vsel %vm2548, %v3399, %v3401
      %v3403 = vrot.slane %v3202, 4
      %v3404 = vsel %vm2548, %v3401, %v3403
      %v3405 = vrot.slane %v3203, 4
      %v3406 = vsel %vm2548, %v3403, %v3405
      %v3407 = vrot.slane %v3204, 4
      %v3408 = vsel %vm2548, %v3405, %v3407
      %v3409 = vrot.slane %v3205, 4
      %v3410 = vsel %vm2548, %v3407, %v3409
      %v3411 = vrot.slane %v3206, 4
      %v3412 = vsel %vm2548, %v3409, %v3411
      %v3413 = vrot.slane %v3207, 4
      %v3414 = vsel %vm2548, %v3411, %v3413
      %v3415 = vrot.slane %v3208, 4
      %v3416 = vsel %vm2548, %v3413, %v3415
      %v3417 = vrot.slane %v3209, 4
      %v3418 = vsel %vm2548, %v3415, %v3417
      %v3419 = vrot.slane %v3210, 4
      %v3420 = vsel %vm2548, %v3417, %v3419
      %v3421 = vrot.slane %v3211, 4
      %v3422 = vsel %vm2548, %v3419, %v3421
      %v3423 = vrot.slane %v3212, 4
      %v3424 = vsel %vm2548, %v3421, %v3423
      %v3425 = vrot.slane %v3213, 4
      %v3426 = vsel %vm2548, %v3423, %v3425
      %v3427 = vrot.slane %v3214, 4
      %v3428 = vsel %vm2548, %v3425, %v3427
      %v3429 = vrot.slane %v3215, 4
      %v3430 = vsel %vm2548, %v3427, %v3429
      %v3431 = vrot.slane %v3216, 4
      %v3432 = vsel %vm2548, %v3429, %v3431
      %v3433 = vrot.slane %v3217, 4
      %v3434 = vsel %vm2548, %v3431, %v3433
      %v3435 = vrot.slane %v3218, 4
      %v3436 = vsel %vm2548, %v3433, %v3435
      %v3437 = vrot.slane %v3219, 4
      %v3438 = vsel %vm2548, %v3435, %v3437
      %v3439 = vrot.slane %v3220, 4
      %v3440 = vsel %vm2548, %v3437, %v3439
      %v3441 = vrot.slane %v3221, 4
      %v3442 = vsel %vm2548, %v3439, %v3441
      %v3443 = vrot.slane %v3222, 4
      %v3444 = vsel %vm2548, %v3441, %v3443
      %v3445 = vrot.slane %v3223, 4
      %v3446 = vsel %vm2548, %v3443, %v3445
      %v3447 = vrot.slane %v3224, 4
      %v3448 = vsel %vm2548, %v3445, %v3447
      %v3449 = vrot.slane %v3225, 4
      %v3450 = vsel %vm2548, %v3447, %v3449
      %v3451 = vrot.slane %v3226, 4
      %v3452 = vsel %vm2548, %v3449, %v3451
      %v3453 = vrot.slane %v3227, 4
      %v3454 = vsel %vm2548, %v3451, %v3453
      %v3455 = vrot.slane %v3228, 4
      %v3456 = vsel %vm2548, %v3453, %v3455
      %v3457 = vrot.slane %v3229, 4
      %v3458 = vsel %vm2548, %v3455, %v3457
      %v3459 = vrot.slane %v3230, 4
      %v3460 = vsel %vm2548, %v3457, %v3459
      %v3461 = vrot.slane %v3231, 4
      %v3462 = vsel %vm2548, %v3459, %v3461
      %v3463 = vrot.slane %v3232, 4
      %v3464 = vsel %vm2548, %v3461, %v3463
      %v3465 = vrot.slane %v3233, 4
      %v3466 = vsel %vm2548, %v3463, %v3465
      %v3467 = vrot.slane %v3234, 4
      %v3468 = vsel %vm2548, %v3465, %v3467
      %v3469 = vrot.slane %v3235, 4
      %v3470 = vsel %vm2548, %v3467, %v3469
      %v3471 = vrot.slane %v3236, 4
      %v3472 = vsel %vm2548, %v3469, %v3471
      %v3473 = vrot.slane %v3237, 4
      %v3474 = vsel %vm2548, %v3471, %v3473
      %v3475 = vrot.slane %v3238, 4
      %v3476 = vsel %vm2548, %v3473, %v3475
      %v3477 = vrot.slane %v3239, 4
      %v3478 = vsel %vm2548, %v3475, %v3477
      %3479 = vrot.lane.b32.xlu0 %v3330, 36
      %v3480 = vpop.permute.xlu0 %3479
      %3481 = vrot.lane.b32.xlu0 %v3332, 36
      %v3482 = vpop.permute.xlu0 %3481
      %3483 = vrot.lane.b32.xlu0 %v3334, 36
      %v3484 = vpop.permute.xlu0 %3483
      %3485 = vrot.lane.b32.xlu0 %v3336, 36
      %v3486 = vpop.permute.xlu0 %3485
      %3487 = vrot.lane.b32.xlu0 %v3338, 36
      %v3488 = vpop.permute.xlu0 %3487
      %3489 = vrot.lane.b32.xlu0 %v3340, 36
      %v3490 = vpop.permute.xlu0 %3489
      %3491 = vrot.lane.b32.xlu0 %v3342, 36
      %v3492 = vpop.permute.xlu0 %3491
      %3493 = vrot.lane.b32.xlu0 %v3344, 36
      %v3494 = vpop.permute.xlu0 %3493
      %3495 = vrot.lane.b32.xlu0 %v3346, 36
      %v3496 = vpop.permute.xlu0 %3495
      %3497 = vrot.lane.b32.xlu0 %v3348, 36
      %v3498 = vpop.permute.xlu0 %3497
      %3499 = vrot.lane.b32.xlu0 %v3350, 36
      %v3500 = vpop.permute.xlu0 %3499
      %3501 = vrot.lane.b32.xlu0 %v3352, 36
      %v3502 = vpop.permute.xlu0 %3501
      %3503 = vrot.lane.b32.xlu0 %v3354, 36
      %v3504 = vpop.permute.xlu0 %3503
      %3505 = vrot.lane.b32.xlu0 %v3356, 36
      %v3506 = vpop.permute.xlu0 %3505
      %3507 = vrot.lane.b32.xlu0 %v3358, 36
      %v3508 = vpop.permute.xlu0 %3507
      %3509 = vrot.lane.b32.xlu0 %v3360, 36
      %v3510 = vpop.permute.xlu0 %3509
      %3511 = vrot.lane.b32.xlu0 %v3362, 36
      %v3512 = vpop.permute.xlu0 %3511
      %3513 = vrot.lane.b32.xlu0 %v3364, 36
      %v3514 = vpop.permute.xlu0 %3513
      %3515 = vrot.lane.b32.xlu0 %v3366, 36
      %v3516 = vpop.permute.xlu0 %3515
      %3517 = vrot.lane.b32.xlu0 %v3368, 36
      %v3518 = vpop.permute.xlu0 %3517
      %3519 = vrot.lane.b32.xlu0 %v3370, 36
      %v3520 = vpop.permute.xlu0 %3519
      %3521 = vrot.lane.b32.xlu0 %v3372, 36
      %v3522 = vpop.permute.xlu0 %3521
      %3523 = vrot.lane.b32.xlu0 %v3374, 36
      %v3524 = vpop.permute.xlu0 %3523
      %3525 = vrot.lane.b32.xlu0 %v3376, 36
      %v3526 = vpop.permute.xlu0 %3525
      %3527 = vrot.lane.b32.xlu0 %v3378, 36
      %v3528 = vpop.permute.xlu0 %3527
      %3529 = vrot.lane.b32.xlu0 %v3380, 36
      %v3530 = vpop.permute.xlu0 %3529
      %3531 = vrot.lane.b32.xlu0 %v3382, 36
      %v3532 = vpop.permute.xlu0 %3531
      %3533 = vrot.lane.b32.xlu0 %v3384, 36
      %v3534 = vpop.permute.xlu0 %3533
      %3535 = vrot.lane.b32.xlu0 %v3386, 36
      %v3536 = vpop.permute.xlu0 %3535
      %3537 = vrot.lane.b32.xlu0 %v3388, 36
      %v3538 = vpop.permute.xlu0 %3537
      %3539 = vrot.lane.b32.xlu0 %v3390, 36
      %v3540 = vpop.permute.xlu0 %3539
      %3541 = vrot.lane.b32.xlu0 %v3392, 36
      %v3542 = vpop.permute.xlu0 %3541
      %3543 = vrot.lane.b32.xlu0 %v3394, 36
      %v3544 = vpop.permute.xlu0 %3543
      %3545 = vrot.lane.b32.xlu0 %v3396, 36
      %v3546 = vpop.permute.xlu0 %3545
      %3547 = vrot.lane.b32.xlu0 %v3398, 36
      %v3548 = vpop.permute.xlu0 %3547
      %3549 = vrot.lane.b32.xlu0 %v3400, 36
      %v3550 = vpop.permute.xlu0 %3549
      %3551 = vrot.lane.b32.xlu0 %v3402, 36
      %v3552 = vpop.permute.xlu0 %3551
      %3553 = vrot.lane.b32.xlu0 %v3404, 36
      %v3554 = vpop.permute.xlu0 %3553
      %3555 = vrot.lane.b32.xlu0 %v3406, 36
      %v3556 = vpop.permute.xlu0 %3555
      %3557 = vrot.lane.b32.xlu0 %v3408, 36
      %v3558 = vpop.permute.xlu0 %3557
      %3559 = vrot.lane.b32.xlu0 %v3410, 36
      %v3560 = vpop.permute.xlu0 %3559
      %3561 = vrot.lane.b32.xlu0 %v3412, 36
      %v3562 = vpop.permute.xlu0 %3561
      %3563 = vrot.lane.b32.xlu0 %v3414, 36
      %v3564 = vpop.permute.xlu0 %3563
      %3565 = vrot.lane.b32.xlu0 %v3416, 36
      %v3566 = vpop.permute.xlu0 %3565
      %3567 = vrot.lane.b32.xlu0 %v3418, 36
      %v3568 = vpop.permute.xlu0 %3567
      %3569 = vrot.lane.b32.xlu0 %v3420, 36
      %v3570 = vpop.permute.xlu0 %3569
      %3571 = vrot.lane.b32.xlu0 %v3422, 36
      %v3572 = vpop.permute.xlu0 %3571
      %3573 = vrot.lane.b32.xlu0 %v3424, 36
      %v3574 = vpop.permute.xlu0 %3573
      %3575 = vrot.lane.b32.xlu0 %v3426, 36
      %v3576 = vpop.permute.xlu0 %3575
      %3577 = vrot.lane.b32.xlu0 %v3428, 36
      %v3578 = vpop.permute.xlu0 %3577
      %3579 = vrot.lane.b32.xlu0 %v3430, 36
      %v3580 = vpop.permute.xlu0 %3579
      %3581 = vrot.lane.b32.xlu0 %v3432, 36
      %v3582 = vpop.permute.xlu0 %3581
      %3583 = vrot.lane.b32.xlu0 %v3434, 36
      %v3584 = vpop.permute.xlu0 %3583
      %3585 = vrot.lane.b32.xlu0 %v3436, 36
      %v3586 = vpop.permute.xlu0 %3585
      %3587 = vrot.lane.b32.xlu0 %v3438, 36
      %v3588 = vpop.permute.xlu0 %3587
      %3589 = vrot.lane.b32.xlu0 %v3440, 36
      %v3590 = vpop.permute.xlu0 %3589
      %3591 = vrot.lane.b32.xlu0 %v3442, 36
      %v3592 = vpop.permute.xlu0 %3591
      %3593 = vrot.lane.b32.xlu0 %v3444, 36
      %v3594 = vpop.permute.xlu0 %3593
      %3595 = vrot.lane.b32.xlu0 %v3446, 36
      %v3596 = vpop.permute.xlu0 %3595
      %3597 = vrot.lane.b32.xlu0 %v3448, 36
      %v3598 = vpop.permute.xlu0 %3597
      %3599 = vrot.lane.b32.xlu0 %v3450, 36
      %v3600 = vpop.permute.xlu0 %3599
      %3601 = vrot.lane.b32.xlu0 %v3452, 36
      %v3602 = vpop.permute.xlu0 %3601
      %3603 = vrot.lane.b32.xlu0 %v3454, 36
      %v3604 = vpop.permute.xlu0 %3603
      %3605 = vrot.lane.b32.xlu0 %v3456, 36
      %v3606 = vpop.permute.xlu0 %3605
      %3607 = vrot.lane.b32.xlu0 %v3458, 36
      %v3608 = vpop.permute.xlu0 %3607
      %3609 = vrot.lane.b32.xlu0 %v3460, 36
      %v3610 = vpop.permute.xlu0 %3609
      %3611 = vrot.lane.b32.xlu0 %v3462, 36
      %v3612 = vpop.permute.xlu0 %3611
      %3613 = vrot.lane.b32.xlu0 %v3464, 36
      %v3614 = vpop.permute.xlu0 %3613
      %3615 = vrot.lane.b32.xlu0 %v3466, 36
      %v3616 = vpop.permute.xlu0 %3615
      %3617 = vrot.lane.b32.xlu0 %v3468, 36
      %v3618 = vpop.permute.xlu0 %3617
      %3619 = vrot.lane.b32.xlu0 %v3470, 36
      %v3620 = vpop.permute.xlu0 %3619
      %3621 = vrot.lane.b32.xlu0 %v3472, 36
      %v3622 = vpop.permute.xlu0 %3621
      %3623 = vrot.lane.b32.xlu0 %v3474, 36
      %v3624 = vpop.permute.xlu0 %3623
      %3625 = vrot.lane.b32.xlu0 %v3476, 36
      %v3626 = vpop.permute.xlu0 %3625
      %3627 = vrot.lane.b32.xlu0 %v3478, 36
      %v3628 = vpop.permute.xlu0 %3627
      %3716 = vrot.lane.b32.xlu0 %v3177, 72
      %v3717 = vpop.permute.xlu0 %3716
      %3718 = vrot.lane.b32.xlu0 %v3178, 72
      %v3719 = vpop.permute.xlu0 %3718
      %3720 = vrot.lane.b32.xlu0 %v3179, 72
      %v3721 = vpop.permute.xlu0 %3720
      %3722 = vrot.lane.b32.xlu0 %v3180, 72
      %v3723 = vpop.permute.xlu0 %3722
      %3724 = vrot.lane.b32.xlu0 %v3181, 72
      %v3725 = vpop.permute.xlu0 %3724
      %3726 = vrot.lane.b32.xlu0 %v3182, 72
      %v3727 = vpop.permute.xlu0 %3726
      %3728 = vrot.lane.b32.xlu0 %v3183, 72
      %v3729 = vpop.permute.xlu0 %3728
      %3730 = vrot.lane.b32.xlu0 %v3184, 72
      %v3731 = vpop.permute.xlu0 %3730
      %3732 = vrot.lane.b32.xlu0 %v3185, 72
      %v3733 = vpop.permute.xlu0 %3732
      %3734 = vrot.lane.b32.xlu0 %v3186, 72
      %v3735 = vpop.permute.xlu0 %3734
      %3736 = vrot.lane.b32.xlu0 %v3187, 72
      %v3737 = vpop.permute.xlu0 %3736
      %3738 = vrot.lane.b32.xlu0 %v3188, 72
      %v3739 = vpop.permute.xlu0 %3738
      %3740 = vrot.lane.b32.xlu0 %v3189, 72
      %v3741 = vpop.permute.xlu0 %3740
      %3742 = vrot.lane.b32.xlu0 %v3190, 72
      %v3743 = vpop.permute.xlu0 %3742
      %3744 = vrot.lane.b32.xlu0 %v3191, 72
      %v3745 = vpop.permute.xlu0 %3744
      %3746 = vrot.lane.b32.xlu0 %v3192, 72
      %v3747 = vpop.permute.xlu0 %3746
      %3748 = vrot.lane.b32.xlu0 %v3193, 72
      %v3749 = vpop.permute.xlu0 %3748
      %3750 = vrot.lane.b32.xlu0 %v3194, 72
      %v3751 = vpop.permute.xlu0 %3750
      %3752 = vrot.lane.b32.xlu0 %v3195, 72
      %v3753 = vpop.permute.xlu0 %3752
      %3754 = vrot.lane.b32.xlu0 %v3196, 72
      %v3755 = vpop.permute.xlu0 %3754
      %3756 = vrot.lane.b32.xlu0 %v3197, 72
      %v3757 = vpop.permute.xlu0 %3756
      %3758 = vrot.lane.b32.xlu0 %v3198, 72
      %v3759 = vpop.permute.xlu0 %3758
      %3760 = vrot.lane.b32.xlu0 %v3199, 72
      %v3761 = vpop.permute.xlu0 %3760
      %3762 = vrot.lane.b32.xlu0 %v3200, 72
      %v3763 = vpop.permute.xlu0 %3762
      %3764 = vrot.lane.b32.xlu0 %v3201, 72
      %v3765 = vpop.permute.xlu0 %3764
      %3766 = vrot.lane.b32.xlu0 %v3202, 72
      %v3767 = vpop.permute.xlu0 %3766
      %3768 = vrot.lane.b32.xlu0 %v3203, 72
      %v3769 = vpop.permute.xlu0 %3768
      %3770 = vrot.lane.b32.xlu0 %v3204, 72
      %v3771 = vpop.permute.xlu0 %3770
      %3772 = vrot.lane.b32.xlu0 %v3205, 72
      %v3773 = vpop.permute.xlu0 %3772
      %3774 = vrot.lane.b32.xlu0 %v3206, 72
      %v3775 = vpop.permute.xlu0 %3774
      %3776 = vrot.lane.b32.xlu0 %v3207, 72
      %v3777 = vpop.permute.xlu0 %3776
      %3778 = vrot.lane.b32.xlu0 %v3208, 72
      %v3779 = vpop.permute.xlu0 %3778
      %3780 = vrot.lane.b32.xlu0 %v3209, 72
      %v3781 = vpop.permute.xlu0 %3780
      %3782 = vrot.lane.b32.xlu0 %v3210, 72
      %v3783 = vpop.permute.xlu0 %3782
      %3784 = vrot.lane.b32.xlu0 %v3211, 72
      %v3785 = vpop.permute.xlu0 %3784
      %3786 = vrot.lane.b32.xlu0 %v3212, 72
      %v3787 = vpop.permute.xlu0 %3786
      %3788 = vrot.lane.b32.xlu0 %v3213, 72
      %v3789 = vpop.permute.xlu0 %3788
      %3790 = vrot.lane.b32.xlu0 %v3214, 72
      %v3791 = vpop.permute.xlu0 %3790
      %3792 = vrot.lane.b32.xlu0 %v3215, 72
      %v3793 = vpop.permute.xlu0 %3792
      %3794 = vrot.lane.b32.xlu0 %v3216, 72
      %v3795 = vpop.permute.xlu0 %3794
      %3796 = vrot.lane.b32.xlu0 %v3217, 72
      %v3797 = vpop.permute.xlu0 %3796
      %3798 = vrot.lane.b32.xlu0 %v3218, 72
      %v3799 = vpop.permute.xlu0 %3798
      %3800 = vrot.lane.b32.xlu0 %v3219, 72
      %v3801 = vpop.permute.xlu0 %3800
      %3802 = vrot.lane.b32.xlu0 %v3220, 72
      %v3803 = vpop.permute.xlu0 %3802
      %3804 = vrot.lane.b32.xlu0 %v3221, 72
      %v3805 = vpop.permute.xlu0 %3804
      %3806 = vrot.lane.b32.xlu0 %v3222, 72
      %v3807 = vpop.permute.xlu0 %3806
      %3808 = vrot.lane.b32.xlu0 %v3223, 72
      %v3809 = vpop.permute.xlu0 %3808
      %3810 = vrot.lane.b32.xlu0 %v3224, 72
      %v3811 = vpop.permute.xlu0 %3810
      %3812 = vrot.lane.b32.xlu0 %v3225, 72
      %v3813 = vpop.permute.xlu0 %3812
      %3814 = vrot.lane.b32.xlu0 %v3226, 72
      %v3815 = vpop.permute.xlu0 %3814
      %3816 = vrot.lane.b32.xlu0 %v3227, 72
      %v3817 = vpop.permute.xlu0 %3816
      %3818 = vrot.lane.b32.xlu0 %v3228, 72
      %v3819 = vpop.permute.xlu0 %3818
      %3820 = vrot.lane.b32.xlu0 %v3229, 72
      %v3821 = vpop.permute.xlu0 %3820
      %3822 = vrot.lane.b32.xlu0 %v3230, 72
      %v3823 = vpop.permute.xlu0 %3822
      %3824 = vrot.lane.b32.xlu0 %v3231, 72
      %v3825 = vpop.permute.xlu0 %3824
      %3826 = vrot.lane.b32.xlu0 %v3232, 72
      %v3827 = vpop.permute.xlu0 %3826
      %3828 = vrot.lane.b32.xlu0 %v3233, 72
      %v3829 = vpop.permute.xlu0 %3828
      %3830 = vrot.lane.b32.xlu0 %v3234, 72
      %v3831 = vpop.permute.xlu0 %3830
      %3832 = vrot.lane.b32.xlu0 %v3235, 72
      %v3833 = vpop.permute.xlu0 %3832
      %3834 = vrot.lane.b32.xlu0 %v3236, 72
      %v3835 = vpop.permute.xlu0 %3834
      %3836 = vrot.lane.b32.xlu0 %v3237, 72
      %v3837 = vpop.permute.xlu0 %3836
      %3838 = vrot.lane.b32.xlu0 %v3238, 72
      %v3839 = vpop.permute.xlu0 %3838
      %3840 = vrot.lane.b32.xlu0 %v3239, 72
      %v3841 = vpop.permute.xlu0 %3840
      %3842 = vrot.lane.b32.xlu0 %v3240, 72
      %v3843 = vpop.permute.xlu0 %3842
      %3844 = vrot.lane.b32.xlu0 %v3241, 72
      %v3845 = vpop.permute.xlu0 %3844
      %3846 = vrot.lane.b32.xlu0 %v3242, 72
      %v3847 = vpop.permute.xlu0 %3846
      %3848 = vrot.lane.b32.xlu0 %v3243, 72
      %v3849 = vpop.permute.xlu0 %3848
      %3850 = vrot.lane.b32.xlu0 %v3244, 72
      %v3851 = vpop.permute.xlu0 %3850
      %3852 = vrot.lane.b32.xlu0 %v3245, 72
      %v3853 = vpop.permute.xlu0 %3852
      %3854 = vrot.lane.b32.xlu0 %v3246, 72
      %v3855 = vpop.permute.xlu0 %3854
      %3856 = vrot.lane.b32.xlu0 %v3247, 72
      %v3857 = vpop.permute.xlu0 %3856
      %3858 = vrot.lane.b32.xlu0 %v3248, 72
      %v3859 = vpop.permute.xlu0 %3858
      %3860 = vrot.lane.b32.xlu0 %v3249, 72
      %v3861 = vpop.permute.xlu0 %3860
      %3862 = vrot.lane.b32.xlu0 %v3250, 72
      %v3863 = vpop.permute.xlu0 %3862
      %3864 = vrot.lane.b32.xlu0 %v3251, 72
      %v3865 = vpop.permute.xlu0 %3864
      %vm3941 = vcmask 293888
      %v3942 = vsel %vm3941, %v3152, %v3480
      %v3943 = vsel %vm3941, %v3153, %v3482
      %v3944 = vsel %vm3941, %v3154, %v3484
      %v3945 = vsel %vm3941, %v3155, %v3486
      %v3946 = vsel %vm3941, %v3156, %v3488
      %v3947 = vsel %vm3941, %v3157, %v3490
      %v3948 = vsel %vm3941, %v3158, %v3492
      %v3949 = vsel %vm3941, %v3159, %v3494
      %v3950 = vsel %vm3941, %v3160, %v3496
      %v3951 = vsel %vm3941, %v3161, %v3498
      %v3952 = vsel %vm3941, %v3162, %v3500
      %v3953 = vsel %vm3941, %v3163, %v3502
      %v3954 = vsel %vm3941, %v3164, %v3504
      %v3955 = vsel %vm3941, %v3165, %v3506
      %v3956 = vsel %vm3941, %v3166, %v3508
      %v3957 = vsel %vm3941, %v3167, %v3510
      %v3958 = vsel %vm3941, %v3168, %v3512
      %v3959 = vsel %vm3941, %v3169, %v3514
      %v3960 = vsel %vm3941, %v3170, %v3516
      %v3961 = vsel %vm3941, %v3171, %v3518
      %v3962 = vsel %vm3941, %v3172, %v3520
      %v3963 = vsel %vm3941, %v3173, %v3522
      %v3964 = vsel %vm3941, %v3174, %v3524
      %v3965 = vsel %vm3941, %v3175, %v3526
      %v3966 = vsel %vm3941, %v3176, %v3528
      %v3967 = vsel %vm3941, %v3177, %v3530
      %v3968 = vsel %vm3941, %v3178, %v3532
      %v3969 = vsel %vm3941, %v3179, %v3534
      %v3970 = vsel %vm3941, %v3180, %v3536
      %v3971 = vsel %vm3941, %v3181, %v3538
      %v3972 = vsel %vm3941, %v3182, %v3540
      %v3973 = vsel %vm3941, %v3183, %v3542
      %v3974 = vsel %vm3941, %v3184, %v3544
      %v3975 = vsel %vm3941, %v3185, %v3546
      %v3976 = vsel %vm3941, %v3186, %v3548
      %v3977 = vsel %vm3941, %v3187, %v3550
      %v3978 = vsel %vm3941, %v3188, %v3552
      %v3979 = vsel %vm3941, %v3189, %v3554
      %v3980 = vsel %vm3941, %v3190, %v3556
      %v3981 = vsel %vm3941, %v3191, %v3558
      %v3982 = vsel %vm3941, %v3192, %v3560
      %v3983 = vsel %vm3941, %v3193, %v3562
      %v3984 = vsel %vm3941, %v3194, %v3564
      %v3985 = vsel %vm3941, %v3195, %v3566
      %v3986 = vsel %vm3941, %v3196, %v3568
      %v3987 = vsel %vm3941, %v3197, %v3570
      %v3988 = vsel %vm3941, %v3198, %v3572
      %v3989 = vsel %vm3941, %v3199, %v3574
      %v3990 = vsel %vm3941, %v3200, %v3576
      %v3991 = vsel %vm3941, %v3201, %v3578
      %v3992 = vsel %vm3941, %v3202, %v3580
      %v3993 = vsel %vm3941, %v3203, %v3582
      %v3994 = vsel %vm3941, %v3204, %v3584
      %v3995 = vsel %vm3941, %v3205, %v3586
      %v3996 = vsel %vm3941, %v3206, %v3588
      %v3997 = vsel %vm3941, %v3207, %v3590
      %v3998 = vsel %vm3941, %v3208, %v3592
      %v3999 = vsel %vm3941, %v3209, %v3594
      %v4000 = vsel %vm3941, %v3210, %v3596
      %v4001 = vsel %vm3941, %v3211, %v3598
      %v4002 = vsel %vm3941, %v3212, %v3600
      %v4003 = vsel %vm3941, %v3213, %v3602
      %v4004 = vsel %vm3941, %v3214, %v3604
      %v4005 = vsel %vm3941, %v3215, %v3606
      %v4006 = vsel %vm3941, %v3216, %v3608
      %v4007 = vsel %vm3941, %v3217, %v3610
      %v4008 = vsel %vm3941, %v3218, %v3612
      %v4009 = vsel %vm3941, %v3219, %v3614
      %v4010 = vsel %vm3941, %v3220, %v3616
      %v4011 = vsel %vm3941, %v3221, %v3618
      %v4012 = vsel %vm3941, %v3222, %v3620
      %v4013 = vsel %vm3941, %v3223, %v3622
      %v4014 = vsel %vm3941, %v3224, %v3624
      %v4015 = vsel %vm3941, %v3225, %v3626
      %v4016 = vsel %vm3941, %v3226, %v3628
      %vm4017 = vcmask 588800
      %v4018 = vsel %vm4017, %v3942, %v3717
      %v4019 = vsel %vm4017, %v3943, %v3719
      %v4020 = vsel %vm4017, %v3944, %v3721
      %v4021 = vsel %vm4017, %v3945, %v3723
      %v4022 = vsel %vm4017, %v3946, %v3725
      %v4023 = vsel %vm4017, %v3947, %v3727
      %v4024 = vsel %vm4017, %v3948, %v3729
      %v4025 = vsel %vm4017, %v3949, %v3731
      %v4026 = vsel %vm4017, %v3950, %v3733
      %v4027 = vsel %vm4017, %v3951, %v3735
      %v4028 = vsel %vm4017, %v3952, %v3737
      %v4029 = vsel %vm4017, %v3953, %v3739
      %v4030 = vsel %vm4017, %v3954, %v3741
      %v4031 = vsel %vm4017, %v3955, %v3743
      %v4032 = vsel %vm4017, %v3956, %v3745
      %v4033 = vsel %vm4017, %v3957, %v3747
      %v4034 = vsel %vm4017, %v3958, %v3749
      %v4035 = vsel %vm4017, %v3959, %v3751
      %v4036 = vsel %vm4017, %v3960, %v3753
      %v4037 = vsel %vm4017, %v3961, %v3755
      %v4038 = vsel %vm4017, %v3962, %v3757
      %v4039 = vsel %vm4017, %v3963, %v3759
      %v4040 = vsel %vm4017, %v3964, %v3761
      %v4041 = vsel %vm4017, %v3965, %v3763
      %v4042 = vsel %vm4017, %v3966, %v3765
      %v4043 = vsel %vm4017, %v3967, %v3767
      %v4044 = vsel %vm4017, %v3968, %v3769
      %v4045 = vsel %vm4017, %v3969, %v3771
      %v4046 = vsel %vm4017, %v3970, %v3773
      %v4047 = vsel %vm4017, %v3971, %v3775
      %v4048 = vsel %vm4017, %v3972, %v3777
      %v4049 = vsel %vm4017, %v3973, %v3779
      %v4050 = vsel %vm4017, %v3974, %v3781
      %v4051 = vsel %vm4017, %v3975, %v3783
      %v4052 = vsel %vm4017, %v3976, %v3785
      %v4053 = vsel %vm4017, %v3977, %v3787
      %v4054 = vsel %vm4017, %v3978, %v3789
      %v4055 = vsel %vm4017, %v3979, %v3791
      %v4056 = vsel %vm4017, %v3980, %v3793
      %v4057 = vsel %vm4017, %v3981, %v3795
      %v4058 = vsel %vm4017, %v3982, %v3797
      %v4059 = vsel %vm4017, %v3983, %v3799
      %v4060 = vsel %vm4017, %v3984, %v3801
      %v4061 = vsel %vm4017, %v3985, %v3803
      %v4062 = vsel %vm4017, %v3986, %v3805
      %v4063 = vsel %vm4017, %v3987, %v3807
      %v4064 = vsel %vm4017, %v3988, %v3809
      %v4065 = vsel %vm4017, %v3989, %v3811
      %v4066 = vsel %vm4017, %v3990, %v3813
      %v4067 = vsel %vm4017, %v3991, %v3815
      %v4068 = vsel %vm4017, %v3992, %v3817
      %v4069 = vsel %vm4017, %v3993, %v3819
      %v4070 = vsel %vm4017, %v3994, %v3821
      %v4071 = vsel %vm4017, %v3995, %v3823
      %v4072 = vsel %vm4017, %v3996, %v3825
      %v4073 = vsel %vm4017, %v3997, %v3827
      %v4074 = vsel %vm4017, %v3998, %v3829
      %v4075 = vsel %vm4017, %v3999, %v3831
      %v4076 = vsel %vm4017, %v4000, %v3833
      %v4077 = vsel %vm4017, %v4001, %v3835
      %v4078 = vsel %vm4017, %v4002, %v3837
      %v4079 = vsel %vm4017, %v4003, %v3839
      %v4080 = vsel %vm4017, %v4004, %v3841
      %v4081 = vsel %vm4017, %v4005, %v3843
      %v4082 = vsel %vm4017, %v4006, %v3845
      %v4083 = vsel %vm4017, %v4007, %v3847
      %v4084 = vsel %vm4017, %v4008, %v3849
      %v4085 = vsel %vm4017, %v4009, %v3851
      %v4086 = vsel %vm4017, %v4010, %v3853
      %v4087 = vsel %vm4017, %v4011, %v3855
      %v4088 = vsel %vm4017, %v4012, %v3857
      %v4089 = vsel %vm4017, %v4013, %v3859
      %v4090 = vsel %vm4017, %v4014, %v3861
      %v4091 = vsel %vm4017, %v4015, %v3863
      %v4092 = vsel %vm4017, %v4016, %v3865
      %v4093 = vpack.c.bf16 %v4019, %v4018
      %v4094 = vpack.c.bf16 %v4021, %v4020
      %v4095 = vpack.c.bf16 %v4023, %v4022
      %v4096 = vpack.c.bf16 %v4025, %v4024
      %v4097 = vpack.c.bf16 %v4027, %v4026
      %v4098 = vpack.c.bf16 %v4029, %v4028
      %v4099 = vpack.c.bf16 %v4031, %v4030
      %v4100 = vpack.c.bf16 %v4033, %v4032
      %v4101 = vpack.c.bf16 %v4035, %v4034
      %v4102 = vpack.c.bf16 %v4037, %v4036
      %v4103 = vpack.c.bf16 %v4039, %v4038
      %v4104 = vpack.c.bf16 %v4041, %v4040
      %v4105 = vpack.c.bf16 %v4043, %v4042
      %v4106 = vpack.c.bf16 %v4045, %v4044
      %v4107 = vpack.c.bf16 %v4047, %v4046
      %v4108 = vpack.c.bf16 %v4049, %v4048
      %v4109 = vpack.c.bf16 %v4051, %v4050
      %v4110 = vpack.c.bf16 %v4053, %v4052
      %v4111 = vpack.c.bf16 %v4055, %v4054
      %v4112 = vpack.c.bf16 %v4057, %v4056
      %v4113 = vpack.c.bf16 %v4059, %v4058
      %v4114 = vpack.c.bf16 %v4061, %v4060
      %v4115 = vpack.c.bf16 %v4063, %v4062
      %v4116 = vpack.c.bf16 %v4065, %v4064
      %v4117 = vpack.c.bf16 %v4067, %v4066
      %v4118 = vpack.c.bf16 %v4069, %v4068
      %v4119 = vpack.c.bf16 %v4071, %v4070
      %v4120 = vpack.c.bf16 %v4073, %v4072
      %v4121 = vpack.c.bf16 %v4075, %v4074
      %v4122 = vpack.c.bf16 %v4077, %v4076
      %v4123 = vpack.c.bf16 %v4079, %v4078
      %v4124 = vpack.c.bf16 %v4081, %v4080
      %v4125 = vpack.c.bf16 %v4083, %v4082
      %v4126 = vpack.c.bf16 %v4085, %v4084
      %v4127 = vpack.c.bf16 %v4087, %v4086
      %v4128 = vpack.c.bf16 %v4089, %v4088
      %v4129 = vpack.c.bf16 %v4091, %v4090
      %v4130 = vpack.c.bf16 %v4092, %v4092
      %v4131 = vld [vmem:[%s2] sm:$0xf]
      %v4132 = vld [vmem:[%s2 + $0x4] sm:$0xf]
      %v4133 = vld [vmem:[%s2 + $0x8] sm:$0xf]
      %v4134 = vld [vmem:[%s2 + $0xc] sm:$0xf]
      %v4135 = vld [vmem:[%s2 + $0x10] sm:$0xf]
      %v4136 = vld [vmem:[%s2 + $0x14] sm:$0xf]
      %v4137 = vld [vmem:[%s2 + $0x18] sm:$0xf]
      %v4138 = vld [vmem:[%s2 + $0x1c] sm:$0xf]
      %v4139 = vld [vmem:[%s2 + $0x20] sm:$0xf]
      %v4140 = vld [vmem:[%s2 + $0x24] sm:$0xf]
      %v4141 = vld [vmem:[%s2 + $0x28] sm:$0xf]
      %v4142 = vld [vmem:[%s2 + $0x2c] sm:$0xf]
      %v4143 = vld [vmem:[%s2 + $0x30] sm:$0xf]
      %v4144 = vld [vmem:[%s2 + $0x34] sm:$0x3]
      %v4159 = vunpack.c.l.b16 %v4131
      %v4160 = vunpack.c.l.b16 %v4132
      %v4161 = vunpack.c.l.b16 %v4133
      %v4162 = vunpack.c.l.b16 %v4134
      %v4163 = vunpack.c.l.b16 %v4135
      %v4164 = vunpack.c.l.b16 %v4136
      %v4165 = vunpack.c.l.b16 %v4137
      %v4166 = vunpack.c.l.b16 %v4138
      %v4167 = vunpack.c.l.b16 %v4139
      %v4168 = vunpack.c.l.b16 %v4140
      %v4169 = vunpack.c.l.b16 %v4141
      %v4170 = vunpack.c.l.b16 %v4142
      %v4171 = vunpack.c.l.b16 %v4143
      %v4172 = vunpack.c.l.b16 %v4144
      %v4173 = vpack.c.b16 %v4160, %v4159
      %v4174 = vpack.c.b16 %v4162, %v4161
      %v4175 = vpack.c.b16 %v4164, %v4163
      %v4176 = vpack.c.b16 %v4166, %v4165
      %v4177 = vpack.c.b16 %v4168, %v4167
      %v4178 = vpack.c.b16 %v4170, %v4169
      %v4179 = vpack.c.b16 %v4172, %v4171
      %vm4186 = vcmask 883712
      %v4188 = vsel %vm4186, %v4093, 0
      %v4191 = vsel %vm4186, %v4094, 0
      %v4194 = vsel %vm4186, %v4095, 0
      %v4197 = vsel %vm4186, %v4096, 0
      %v4200 = vsel %vm4186, %v4097, 0
      %v4203 = vsel %vm4186, %v4098, 0
      %v4206 = vsel %vm4186, %v4099, 0
      %v4209 = vsel %vm4186, %v4100, 0
      %v4212 = vsel %vm4186, %v4101, 0
      %v4215 = vsel %vm4186, %v4102, 0
      %v4218 = vsel %vm4186, %v4103, 0
      %v4221 = vsel %vm4186, %v4104, 0
      %v4224 = vsel %vm4186, %v4105, 0
      %v4227 = vsel %vm4186, %v4106, 0
      %v4230 = vsel %vm4186, %v4107, 0
      %v4233 = vsel %vm4186, %v4108, 0
      %v4236 = vsel %vm4186, %v4109, 0
      %v4239 = vsel %vm4186, %v4110, 0
      %v4242 = vsel %vm4186, %v4111, 0
      %v4245 = vsel %vm4186, %v4112, 0
      %v4248 = vsel %vm4186, %v4113, 0
      %v4251 = vsel %vm4186, %v4114, 0
      %v4254 = vsel %vm4186, %v4115, 0
      %v4257 = vsel %vm4186, %v4116, 0
      %v4260 = vsel %vm4186, %v4117, 0
      %v4263 = vsel %vm4186, %v4118, 0
      %v4266 = vsel %vm4186, %v4119, 0
      %v4269 = vsel %vm4186, %v4120, 0
      %v4272 = vsel %vm4186, %v4121, 0
      %v4275 = vsel %vm4186, %v4122, 0
      %v4278 = vsel %vm4186, %v4123, 0
      %v4281 = vsel %vm4186, %v4124, 0
      %v4284 = vsel %vm4186, %v4125, 0
      %v4287 = vsel %vm4186, %v4126, 0
      %v4290 = vsel %vm4186, %v4127, 0
      %v4293 = vsel %vm4186, %v4128, 0
      %v4296 = vsel %vm4186, %v4129, 0
      %v4299 = vsel %vm4186, %v4130, 0
      %v4302 = vsel %vm1222, %v4179, 0
      %4304 = vmatprep.subr.bf16.mxu0 0
      %4305 = vmatpush1.bf16.msra.mxu0 0
      %4306 = vmatprep.subr.bf16.mxu0 0
      %4307 = vmatpush1.bf16.msra.mxu0 %v4302
      %4308 = vmatprep.subr.bf16.mxu0 0
      %4309 = vmatpush1.bf16.msra.mxu0 %v4178
      %4310 = vmatprep.subr.bf16.mxu0 0
      %4311 = vmatpush1.bf16.msra.mxu0 %v4177
      %4312 = vmatprep.subr.bf16.mxu0 0
      %4313 = vmatpush1.bf16.msra.mxu0 %v4176
      %4314 = vmatprep.subr.bf16.mxu0 0
      %4315 = vmatpush1.bf16.msra.mxu0 %v4175
      %4316 = vmatprep.subr.bf16.mxu0 0
      %4317 = vmatpush1.bf16.msra.mxu0 %v4174
      %4318 = vmatprep.subr.bf16.mxu0 0
      %4319 = vmatpush1.bf16.msra.mxu0 %v4173
      %4320 = vmatprep.subr.bf16.mxu0 0
      %4321 = vmatpush2.bf16.msra.mxu0 0
      %4322 = vmatprep.subr.bf16.mxu0 0
      %4323 = vmatpush2.bf16.msra.mxu0 0
      %4324 = vmatprep.subr.bf16.mxu0 0
      %4325 = vmatpush2.bf16.msra.mxu0 0
      %4326 = vmatprep.subr.bf16.mxu0 0
      %4327 = vmatpush2.bf16.msra.mxu0 0
      %4328 = vmatprep.subr.bf16.mxu0 0
      %4329 = vmatpush2.bf16.msra.mxu0 0
      %4330 = vmatprep.subr.bf16.mxu0 0
      %4331 = vmatpush2.bf16.msra.mxu0 0
      %4332 = vmatprep.subr.bf16.mxu0 0
      %4333 = vmatpush2.bf16.msra.mxu0 0
      %4334 = vmatprep.subr.bf16.mxu0 0
      %4335 = vmatpush2.bf16.msra.mxu0 0
      %4336 = vmatprep.mubr.bf16.mxu0 0
      %4337 = vmatmul.mubr.bf16.gmra.mxu0 %v4188
      %v4338 = vpop.f32.mrf.mxu0
      %v4339 = vadd.f32 0.0, %v4338
      %v4340 = vpop.f32.mrf.mxu0
      %v4341 = vpop.f32.mrf.mxu0
      %v4342 = vadd.f32 0.0, %v4341
      %v4343 = vpop.f32.mrf.mxu0
      %4344 = vmatprep.mubr.bf16.mxu0 0
      %4345 = vmatmul.mubr.bf16.gmra.mxu0 %v4191
      %v4346 = vpop.f32.mrf.mxu0
      %v4347 = vadd.f32 0.0, %v4346
      %v4348 = vpop.f32.mrf.mxu0
      %v4349 = vpop.f32.mrf.mxu0
      %v4350 = vadd.f32 0.0, %v4349
      %v4351 = vpop.f32.mrf.mxu0
      %4352 = vmatprep.mubr.bf16.mxu0 0
      %4353 = vmatmul.mubr.bf16.gmra.mxu0 %v4194
      %v4354 = vpop.f32.mrf.mxu0
      %v4355 = vadd.f32 0.0, %v4354
      %v4356 = vpop.f32.mrf.mxu0
      %v4357 = vpop.f32.mrf.mxu0
      %v4358 = vadd.f32 0.0, %v4357
      %v4359 = vpop.f32.mrf.mxu0
      %4360 = vmatprep.mubr.bf16.mxu0 0
      %4361 = vmatmul.mubr.bf16.gmra.mxu0 %v4197
      %v4362 = vpop.f32.mrf.mxu0
      %v4363 = vadd.f32 0.0, %v4362
      %v4364 = vpop.f32.mrf.mxu0
      %v4365 = vpop.f32.mrf.mxu0
      %v4366 = vadd.f32 0.0, %v4365
      %v4367 = vpop.f32.mrf.mxu0
      %4368 = vmatprep.mubr.bf16.mxu0 0
      %4369 = vmatmul.mubr.bf16.gmra.mxu0 %v4200
      %v4370 = vpop.f32.mrf.mxu0
      %v4371 = vadd.f32 0.0, %v4370
      %v4372 = vpop.f32.mrf.mxu0
      %v4373 = vpop.f32.mrf.mxu0
      %v4374 = vadd.f32 0.0, %v4373
      %v4375 = vpop.f32.mrf.mxu0
      %4376 = vmatprep.mubr.bf16.mxu0 0
      %4377 = vmatmul.mubr.bf16.gmra.mxu0 %v4203
      %v4378 = vpop.f32.mrf.mxu0
      %v4379 = vadd.f32 0.0, %v4378
      %v4380 = vpop.f32.mrf.mxu0
      %v4381 = vpop.f32.mrf.mxu0
      %v4382 = vadd.f32 0.0, %v4381
      %v4383 = vpop.f32.mrf.mxu0
      %4384 = vmatprep.mubr.bf16.mxu0 0
      %4385 = vmatmul.mubr.bf16.gmra.mxu0 %v4206
      %v4386 = vpop.f32.mrf.mxu0
      %v4387 = vadd.f32 0.0, %v4386
      %v4388 = vpop.f32.mrf.mxu0
      %v4389 = vpop.f32.mrf.mxu0
      %v4390 = vadd.f32 0.0, %v4389
      %v4391 = vpop.f32.mrf.mxu0
      %4392 = vmatprep.mubr.bf16.mxu0 0
      %4393 = vmatmul.mubr.bf16.gmra.mxu0 %v4209
      %v4394 = vpop.f32.mrf.mxu0
      %v4395 = vadd.f32 0.0, %v4394
      %v4396 = vpop.f32.mrf.mxu0
      %v4397 = vpop.f32.mrf.mxu0
      %v4398 = vadd.f32 0.0, %v4397
      %v4399 = vpop.f32.mrf.mxu0
      %4400 = vmatprep.mubr.bf16.mxu0 0
      %4401 = vmatmul.mubr.bf16.gmra.mxu0 %v4212
      %v4402 = vpop.f32.mrf.mxu0
      %v4403 = vadd.f32 0.0, %v4402
      %v4404 = vpop.f32.mrf.mxu0
      %v4405 = vpop.f32.mrf.mxu0
      %v4406 = vadd.f32 0.0, %v4405
      %v4407 = vpop.f32.mrf.mxu0
      %4408 = vmatprep.mubr.bf16.mxu0 0
      %4409 = vmatmul.mubr.bf16.gmra.mxu0 %v4215
      %v4410 = vpop.f32.mrf.mxu0
      %v4411 = vadd.f32 0.0, %v4410
      %v4412 = vpop.f32.mrf.mxu0
      %v4413 = vpop.f32.mrf.mxu0
      %v4414 = vadd.f32 0.0, %v4413
      %v4415 = vpop.f32.mrf.mxu0
      %4416 = vmatprep.mubr.bf16.mxu0 0
      %4417 = vmatmul.mubr.bf16.gmra.mxu0 %v4218
      %v4418 = vpop.f32.mrf.mxu0
      %v4419 = vadd.f32 0.0, %v4418
      %v4420 = vpop.f32.mrf.mxu0
      %v4421 = vpop.f32.mrf.mxu0
      %v4422 = vadd.f32 0.0, %v4421
      %v4423 = vpop.f32.mrf.mxu0
      %4424 = vmatprep.mubr.bf16.mxu0 0
      %4425 = vmatmul.mubr.bf16.gmra.mxu0 %v4221
      %v4426 = vpop.f32.mrf.mxu0
      %v4427 = vadd.f32 0.0, %v4426
      %v4428 = vpop.f32.mrf.mxu0
      %v4429 = vpop.f32.mrf.mxu0
      %v4430 = vadd.f32 0.0, %v4429
      %v4431 = vpop.f32.mrf.mxu0
      %4432 = vmatprep.mubr.bf16.mxu0 0
      %4433 = vmatmul.mubr.bf16.gmra.mxu0 %v4224
      %v4434 = vpop.f32.mrf.mxu0
      %v4435 = vadd.f32 0.0, %v4434
      %v4436 = vpop.f32.mrf.mxu0
      %v4437 = vpop.f32.mrf.mxu0
      %v4438 = vadd.f32 0.0, %v4437
      %v4439 = vpop.f32.mrf.mxu0
      %4440 = vmatprep.mubr.bf16.mxu0 0
      %4441 = vmatmul.mubr.bf16.gmra.mxu0 %v4227
      %v4442 = vpop.f32.mrf.mxu0
      %v4443 = vadd.f32 0.0, %v4442
      %v4444 = vpop.f32.mrf.mxu0
      %v4445 = vpop.f32.mrf.mxu0
      %v4446 = vadd.f32 0.0, %v4445
      %v4447 = vpop.f32.mrf.mxu0
      %4448 = vmatprep.mubr.bf16.mxu0 0
      %4449 = vmatmul.mubr.bf16.gmra.mxu0 %v4230
      %v4450 = vpop.f32.mrf.mxu0
      %v4451 = vadd.f32 0.0, %v4450
      %v4452 = vpop.f32.mrf.mxu0
      %v4453 = vpop.f32.mrf.mxu0
      %v4454 = vadd.f32 0.0, %v4453
      %v4455 = vpop.f32.mrf.mxu0
      %4456 = vmatprep.mubr.bf16.mxu0 0
      %4457 = vmatmul.mubr.bf16.gmra.mxu0 %v4233
      %v4458 = vpop.f32.mrf.mxu0
      %v4459 = vadd.f32 0.0, %v4458
      %v4460 = vpop.f32.mrf.mxu0
      %v4461 = vpop.f32.mrf.mxu0
      %v4462 = vadd.f32 0.0, %v4461
      %v4463 = vpop.f32.mrf.mxu0
      %4464 = vmatprep.mubr.bf16.mxu0 0
      %4465 = vmatmul.mubr.bf16.gmra.mxu0 %v4236
      %v4466 = vpop.f32.mrf.mxu0
      %v4467 = vadd.f32 0.0, %v4466
      %v4468 = vpop.f32.mrf.mxu0
      %v4469 = vpop.f32.mrf.mxu0
      %v4470 = vadd.f32 0.0, %v4469
      %v4471 = vpop.f32.mrf.mxu0
      %4472 = vmatprep.mubr.bf16.mxu0 0
      %4473 = vmatmul.mubr.bf16.gmra.mxu0 %v4239
      %v4474 = vpop.f32.mrf.mxu0
      %v4475 = vadd.f32 0.0, %v4474
      %v4476 = vpop.f32.mrf.mxu0
      %v4477 = vpop.f32.mrf.mxu0
      %v4478 = vadd.f32 0.0, %v4477
      %v4479 = vpop.f32.mrf.mxu0
      %4480 = vmatprep.mubr.bf16.mxu0 0
      %4481 = vmatmul.mubr.bf16.gmra.mxu0 %v4242
      %v4482 = vpop.f32.mrf.mxu0
      %v4483 = vadd.f32 0.0, %v4482
      %v4484 = vpop.f32.mrf.mxu0
      %v4485 = vpop.f32.mrf.mxu0
      %v4486 = vadd.f32 0.0, %v4485
      %v4487 = vpop.f32.mrf.mxu0
      %4488 = vmatprep.mubr.bf16.mxu0 0
      %4489 = vmatmul.mubr.bf16.gmra.mxu0 %v4245
      %v4490 = vpop.f32.mrf.mxu0
      %v4491 = vadd.f32 0.0, %v4490
      %v4492 = vpop.f32.mrf.mxu0
      %v4493 = vpop.f32.mrf.mxu0
      %v4494 = vadd.f32 0.0, %v4493
      %v4495 = vpop.f32.mrf.mxu0
      %4496 = vmatprep.mubr.bf16.mxu0 0
      %4497 = vmatmul.mubr.bf16.gmra.mxu0 %v4248
      %v4498 = vpop.f32.mrf.mxu0
      %v4499 = vadd.f32 0.0, %v4498
      %v4500 = vpop.f32.mrf.mxu0
      %v4501 = vpop.f32.mrf.mxu0
      %v4502 = vadd.f32 0.0, %v4501
      %v4503 = vpop.f32.mrf.mxu0
      %4504 = vmatprep.mubr.bf16.mxu0 0
      %4505 = vmatmul.mubr.bf16.gmra.mxu0 %v4251
      %v4506 = vpop.f32.mrf.mxu0
      %v4507 = vadd.f32 0.0, %v4506
      %v4508 = vpop.f32.mrf.mxu0
      %v4509 = vpop.f32.mrf.mxu0
      %v4510 = vadd.f32 0.0, %v4509
      %v4511 = vpop.f32.mrf.mxu0
      %4512 = vmatprep.mubr.bf16.mxu0 0
      %4513 = vmatmul.mubr.bf16.gmra.mxu0 %v4254
      %v4514 = vpop.f32.mrf.mxu0
      %v4515 = vadd.f32 0.0, %v4514
      %v4516 = vpop.f32.mrf.mxu0
      %v4517 = vpop.f32.mrf.mxu0
      %v4518 = vadd.f32 0.0, %v4517
      %v4519 = vpop.f32.mrf.mxu0
      %4520 = vmatprep.mubr.bf16.mxu0 0
      %4521 = vmatmul.mubr.bf16.gmra.mxu0 %v4257
      %v4522 = vpop.f32.mrf.mxu0
      %v4523 = vadd.f32 0.0, %v4522
      %v4524 = vpop.f32.mrf.mxu0
      %v4525 = vpop.f32.mrf.mxu0
      %v4526 = vadd.f32 0.0, %v4525
      %v4527 = vpop.f32.mrf.mxu0
      %4528 = vmatprep.mubr.bf16.mxu0 0
      %4529 = vmatmul.mubr.bf16.gmra.mxu0 %v4260
      %v4530 = vpop.f32.mrf.mxu0
      %v4531 = vadd.f32 0.0, %v4530
      %v4532 = vpop.f32.mrf.mxu0
      %v4533 = vpop.f32.mrf.mxu0
      %v4534 = vadd.f32 0.0, %v4533
      %v4535 = vpop.f32.mrf.mxu0
      %4536 = vmatprep.mubr.bf16.mxu0 0
      %4537 = vmatmul.mubr.bf16.gmra.mxu0 %v4263
      %v4538 = vpop.f32.mrf.mxu0
      %v4539 = vadd.f32 0.0, %v4538
      %v4540 = vpop.f32.mrf.mxu0
      %v4541 = vpop.f32.mrf.mxu0
      %v4542 = vadd.f32 0.0, %v4541
      %v4543 = vpop.f32.mrf.mxu0
      %4544 = vmatprep.mubr.bf16.mxu0 0
      %4545 = vmatmul.mubr.bf16.gmra.mxu0 %v4266
      %v4546 = vpop.f32.mrf.mxu0
      %v4547 = vadd.f32 0.0, %v4546
      %v4548 = vpop.f32.mrf.mxu0
      %v4549 = vpop.f32.mrf.mxu0
      %v4550 = vadd.f32 0.0, %v4549
      %v4551 = vpop.f32.mrf.mxu0
      %4552 = vmatprep.mubr.bf16.mxu0 0
      %4553 = vmatmul.mubr.bf16.gmra.mxu0 %v4269
      %v4554 = vpop.f32.mrf.mxu0
      %v4555 = vadd.f32 0.0, %v4554
      %v4556 = vpop.f32.mrf.mxu0
      %v4557 = vpop.f32.mrf.mxu0
      %v4558 = vadd.f32 0.0, %v4557
      %v4559 = vpop.f32.mrf.mxu0
      %4560 = vmatprep.mubr.bf16.mxu0 0
      %4561 = vmatmul.mubr.bf16.gmra.mxu0 %v4272
      %v4562 = vpop.f32.mrf.mxu0
      %v4563 = vadd.f32 0.0, %v4562
      %v4564 = vpop.f32.mrf.mxu0
      %v4565 = vpop.f32.mrf.mxu0
      %v4566 = vadd.f32 0.0, %v4565
      %v4567 = vpop.f32.mrf.mxu0
      %4568 = vmatprep.mubr.bf16.mxu0 0
      %4569 = vmatmul.mubr.bf16.gmra.mxu0 %v4275
      %v4570 = vpop.f32.mrf.mxu0
      %v4571 = vadd.f32 0.0, %v4570
      %v4572 = vpop.f32.mrf.mxu0
      %v4573 = vpop.f32.mrf.mxu0
      %v4574 = vadd.f32 0.0, %v4573
      %v4575 = vpop.f32.mrf.mxu0
      %4576 = vmatprep.mubr.bf16.mxu0 0
      %4577 = vmatmul.mubr.bf16.gmra.mxu0 %v4278
      %v4578 = vpop.f32.mrf.mxu0
      %v4579 = vadd.f32 0.0, %v4578
      %v4580 = vpop.f32.mrf.mxu0
      %v4581 = vpop.f32.mrf.mxu0
      %v4582 = vadd.f32 0.0, %v4581
      %v4583 = vpop.f32.mrf.mxu0
      %4584 = vmatprep.mubr.bf16.mxu0 0
      %4585 = vmatmul.mubr.bf16.gmra.mxu0 %v4281
      %v4586 = vpop.f32.mrf.mxu0
      %v4587 = vadd.f32 0.0, %v4586
      %v4588 = vpop.f32.mrf.mxu0
      %v4589 = vpop.f32.mrf.mxu0
      %v4590 = vadd.f32 0.0, %v4589
      %v4591 = vpop.f32.mrf.mxu0
      %4592 = vmatprep.mubr.bf16.mxu0 0
      %4593 = vmatmul.mubr.bf16.gmra.mxu0 %v4284
      %v4594 = vpop.f32.mrf.mxu0
      %v4595 = vadd.f32 0.0, %v4594
      %v4596 = vpop.f32.mrf.mxu0
      %v4597 = vpop.f32.mrf.mxu0
      %v4598 = vadd.f32 0.0, %v4597
      %v4599 = vpop.f32.mrf.mxu0
      %4600 = vmatprep.mubr.bf16.mxu0 0
      %4601 = vmatmul.mubr.bf16.gmra.mxu0 %v4287
      %v4602 = vpop.f32.mrf.mxu0
      %v4603 = vadd.f32 0.0, %v4602
      %v4604 = vpop.f32.mrf.mxu0
      %v4605 = vpop.f32.mrf.mxu0
      %v4606 = vadd.f32 0.0, %v4605
      %v4607 = vpop.f32.mrf.mxu0
      %4608 = vmatprep.mubr.bf16.mxu0 0
      %4609 = vmatmul.mubr.bf16.gmra.mxu0 %v4290
      %v4610 = vpop.f32.mrf.mxu0
      %v4611 = vadd.f32 0.0, %v4610
      %v4612 = vpop.f32.mrf.mxu0
      %v4613 = vpop.f32.mrf.mxu0
      %v4614 = vadd.f32 0.0, %v4613
      %v4615 = vpop.f32.mrf.mxu0
      %4616 = vmatprep.mubr.bf16.mxu0 0
      %4617 = vmatmul.mubr.bf16.gmra.mxu0 %v4293
      %v4618 = vpop.f32.mrf.mxu0
      %v4619 = vadd.f32 0.0, %v4618
      %v4620 = vpop.f32.mrf.mxu0
      %v4621 = vpop.f32.mrf.mxu0
      %v4622 = vadd.f32 0.0, %v4621
      %v4623 = vpop.f32.mrf.mxu0
      %4624 = vmatprep.mubr.bf16.mxu0 0
      %4625 = vmatmul.mubr.bf16.gmra.mxu0 %v4296
      %v4626 = vpop.f32.mrf.mxu0
      %v4627 = vadd.f32 0.0, %v4626
      %v4628 = vpop.f32.mrf.mxu0
      %v4629 = vpop.f32.mrf.mxu0
      %v4630 = vadd.f32 0.0, %v4629
      %v4631 = vpop.f32.mrf.mxu0
      %4632 = vmatprep.mubr.bf16.mxu0 0
      %4633 = vmatmul.mubr.bf16.gmra.mxu0 %v4299
      %v4634 = vpop.f32.mrf.mxu0
      %v4635 = vadd.f32 0.0, %v4634
      %v4636 = vpop.f32.mrf.mxu0
      %v4637 = vpop.f32.mrf.mxu0
      %v4638 = vpop.f32.mrf.mxu0
      %4639 = vdwg.mxu0
      %v4640 = vpack.c.bf16 %v4342, %v4339
      %v4641 = vpack.c.bf16 %v4350, %v4347
      %v4642 = vpack.c.bf16 %v4358, %v4355
      %v4643 = vpack.c.bf16 %v4366, %v4363
      %v4644 = vpack.c.bf16 %v4374, %v4371
      %v4645 = vpack.c.bf16 %v4382, %v4379
      %v4646 = vpack.c.bf16 %v4390, %v4387
      %v4647 = vpack.c.bf16 %v4398, %v4395
      %v4648 = vpack.c.bf16 %v4406, %v4403
      %v4649 = vpack.c.bf16 %v4414, %v4411
      %v4650 = vpack.c.bf16 %v4422, %v4419
      %v4651 = vpack.c.bf16 %v4430, %v4427
      %v4652 = vpack.c.bf16 %v4438, %v4435
      %v4653 = vpack.c.bf16 %v4446, %v4443
      %v4654 = vpack.c.bf16 %v4454, %v4451
      %v4655 = vpack.c.bf16 %v4462, %v4459
      %v4656 = vpack.c.bf16 %v4470, %v4467
      %v4657 = vpack.c.bf16 %v4478, %v4475
      %v4658 = vpack.c.bf16 %v4486, %v4483
      %v4659 = vpack.c.bf16 %v4494, %v4491
      %v4660 = vpack.c.bf16 %v4502, %v4499
      %v4661 = vpack.c.bf16 %v4510, %v4507
      %v4662 = vpack.c.bf16 %v4518, %v4515
      %v4663 = vpack.c.bf16 %v4526, %v4523
      %v4664 = vpack.c.bf16 %v4534, %v4531
      %v4665 = vpack.c.bf16 %v4542, %v4539
      %v4666 = vpack.c.bf16 %v4550, %v4547
      %v4667 = vpack.c.bf16 %v4558, %v4555
      %v4668 = vpack.c.bf16 %v4566, %v4563
      %v4669 = vpack.c.bf16 %v4574, %v4571
      %v4670 = vpack.c.bf16 %v4582, %v4579
      %v4671 = vpack.c.bf16 %v4590, %v4587
      %v4672 = vpack.c.bf16 %v4598, %v4595
      %v4673 = vpack.c.bf16 %v4606, %v4603
      %v4674 = vpack.c.bf16 %v4614, %v4611
      %v4675 = vpack.c.bf16 %v4622, %v4619
      %v4676 = vpack.c.bf16 %v4630, %v4627
      %v4677 = vpack.c.bf16 %v4635, %v4635
      %v4716 = vunpack.c.l.b16 %v4640
      %v4717 = vunpack.c.h.b16 %v4640
      %v4718 = vunpack.c.l.b16 %v4641
      %v4719 = vunpack.c.h.b16 %v4641
      %v4720 = vunpack.c.l.b16 %v4642
      %v4721 = vunpack.c.h.b16 %v4642
      %v4722 = vunpack.c.l.b16 %v4643
      %v4723 = vunpack.c.h.b16 %v4643
      %v4724 = vunpack.c.l.b16 %v4644
      %v4725 = vunpack.c.h.b16 %v4644
      %v4726 = vunpack.c.l.b16 %v4645
      %v4727 = vunpack.c.h.b16 %v4645
      %v4728 = vunpack.c.l.b16 %v4646
      %v4729 = vunpack.c.h.b16 %v4646
      %v4730 = vunpack.c.l.b16 %v4647
      %v4731 = vunpack.c.h.b16 %v4647
      %v4732 = vunpack.c.l.b16 %v4648
      %v4733 = vunpack.c.h.b16 %v4648
      %v4734 = vunpack.c.l.b16 %v4649
      %v4735 = vunpack.c.h.b16 %v4649
      %v4736 = vunpack.c.l.b16 %v4650
      %v4737 = vunpack.c.h.b16 %v4650
      %v4738 = vunpack.c.l.b16 %v4651
      %v4739 = vunpack.c.h.b16 %v4651
      %v4740 = vunpack.c.l.b16 %v4652
      %v4741 = vunpack.c.h.b16 %v4652
      %v4742 = vunpack.c.l.b16 %v4653
      %v4743 = vunpack.c.h.b16 %v4653
      %v4744 = vunpack.c.l.b16 %v4654
      %v4745 = vunpack.c.h.b16 %v4654
      %v4746 = vunpack.c.l.b16 %v4655
      %v4747 = vunpack.c.h.b16 %v4655
      %v4748 = vunpack.c.l.b16 %v4656
      %v4749 = vunpack.c.h.b16 %v4656
      %v4750 = vunpack.c.l.b16 %v4657
      %v4751 = vunpack.c.h.b16 %v4657
      %v4752 = vunpack.c.l.b16 %v4658
      %v4753 = vunpack.c.h.b16 %v4658
      %v4754 = vunpack.c.l.b16 %v4659
      %v4755 = vunpack.c.h.b16 %v4659
      %v4756 = vunpack.c.l.b16 %v4660
      %v4757 = vunpack.c.h.b16 %v4660
      %v4758 = vunpack.c.l.b16 %v4661
      %v4759 = vunpack.c.h.b16 %v4661
      %v4760 = vunpack.c.l.b16 %v4662
      %v4761 = vunpack.c.h.b16 %v4662
      %v4762 = vunpack.c.l.b16 %v4663
      %v4763 = vunpack.c.h.b16 %v4663
      %v4764 = vunpack.c.l.b16 %v4664
      %v4765 = vunpack.c.h.b16 %v4664
      %v4766 = vunpack.c.l.b16 %v4665
      %v4767 = vunpack.c.h.b16 %v4665
      %v4768 = vunpack.c.l.b16 %v4666
      %v4769 = vunpack.c.h.b16 %v4666
      %v4770 = vunpack.c.l.b16 %v4667
      %v4771 = vunpack.c.h.b16 %v4667
      %v4772 = vunpack.c.l.b16 %v4668
      %v4773 = vunpack.c.h.b16 %v4668
      %v4774 = vunpack.c.l.b16 %v4669
      %v4775 = vunpack.c.h.b16 %v4669
      %v4776 = vunpack.c.l.b16 %v4670
      %v4777 = vunpack.c.h.b16 %v4670
      %v4778 = vunpack.c.l.b16 %v4671
      %v4779 = vunpack.c.h.b16 %v4671
      %v4780 = vunpack.c.l.b16 %v4672
      %v4781 = vunpack.c.h.b16 %v4672
      %v4782 = vunpack.c.l.b16 %v4673
      %v4783 = vunpack.c.h.b16 %v4673
      %v4784 = vunpack.c.l.b16 %v4674
      %v4785 = vunpack.c.h.b16 %v4674
      %v4786 = vunpack.c.l.b16 %v4675
      %v4787 = vunpack.c.h.b16 %v4675
      %v4788 = vunpack.c.l.b16 %v4676
      %v4789 = vunpack.c.h.b16 %v4676
      %v4790 = vunpack.c.l.b16 %v4677
      %v4791 = vpack.c.b16 %v4716, %v4716
      %v4792 = vpack.c.b16 %v4717, %v4717
      %v4793 = vpack.c.b16 %v4718, %v4718
      %v4794 = vpack.c.b16 %v4719, %v4719
      %v4795 = vpack.c.b16 %v4720, %v4720
      %v4796 = vpack.c.b16 %v4721, %v4721
      %v4797 = vpack.c.b16 %v4722, %v4722
      %v4798 = vpack.c.b16 %v4723, %v4723
      %v4799 = vpack.c.b16 %v4724, %v4724
      %v4800 = vpack.c.b16 %v4725, %v4725
      %v4801 = vpack.c.b16 %v4726, %v4726
      %v4802 = vpack.c.b16 %v4727, %v4727
      %v4803 = vpack.c.b16 %v4728, %v4728
      %v4804 = vpack.c.b16 %v4729, %v4729
      %v4805 = vpack.c.b16 %v4730, %v4730
      %v4806 = vpack.c.b16 %v4731, %v4731
      %v4807 = vpack.c.b16 %v4732, %v4732
      %v4808 = vpack.c.b16 %v4733, %v4733
      %v4809 = vpack.c.b16 %v4734, %v4734
      %v4810 = vpack.c.b16 %v4735, %v4735
      %v4811 = vpack.c.b16 %v4736, %v4736
      %v4812 = vpack.c.b16 %v4737, %v4737
      %v4813 = vpack.c.b16 %v4738, %v4738
      %v4814 = vpack.c.b16 %v4739, %v4739
      %v4815 = vpack.c.b16 %v4740, %v4740
      %v4816 = vpack.c.b16 %v4741, %v4741
      %v4817 = vpack.c.b16 %v4742, %v4742
      %v4818 = vpack.c.b16 %v4743, %v4743
      %v4819 = vpack.c.b16 %v4744, %v4744
      %v4820 = vpack.c.b16 %v4745, %v4745
      %v4821 = vpack.c.b16 %v4746, %v4746
      %v4822 = vpack.c.b16 %v4747, %v4747
      %v4823 = vpack.c.b16 %v4748, %v4748
      %v4824 = vpack.c.b16 %v4749, %v4749
      %v4825 = vpack.c.b16 %v4750, %v4750
      %v4826 = vpack.c.b16 %v4751, %v4751
      %v4827 = vpack.c.b16 %v4752, %v4752
      %v4828 = vpack.c.b16 %v4753, %v4753
      %v4829 = vpack.c.b16 %v4754, %v4754
      %v4830 = vpack.c.b16 %v4755, %v4755
      %v4831 = vpack.c.b16 %v4756, %v4756
      %v4832 = vpack.c.b16 %v4757, %v4757
      %v4833 = vpack.c.b16 %v4758, %v4758
      %v4834 = vpack.c.b16 %v4759, %v4759
      %v4835 = vpack.c.b16 %v4760, %v4760
      %v4836 = vpack.c.b16 %v4761, %v4761
      %v4837 = vpack.c.b16 %v4762, %v4762
      %v4838 = vpack.c.b16 %v4763, %v4763
      %v4839 = vpack.c.b16 %v4764, %v4764
      %v4840 = vpack.c.b16 %v4765, %v4765
      %v4841 = vpack.c.b16 %v4766, %v4766
      %v4842 = vpack.c.b16 %v4767, %v4767
      %v4843 = vpack.c.b16 %v4768, %v4768
      %v4844 = vpack.c.b16 %v4769, %v4769
      %v4845 = vpack.c.b16 %v4770, %v4770
      %v4846 = vpack.c.b16 %v4771, %v4771
      %v4847 = vpack.c.b16 %v4772, %v4772
      %v4848 = vpack.c.b16 %v4773, %v4773
      %v4849 = vpack.c.b16 %v4774, %v4774
      %v4850 = vpack.c.b16 %v4775, %v4775
      %v4851 = vpack.c.b16 %v4776, %v4776
      %v4852 = vpack.c.b16 %v4777, %v4777
      %v4853 = vpack.c.b16 %v4778, %v4778
      %v4854 = vpack.c.b16 %v4779, %v4779
      %v4855 = vpack.c.b16 %v4780, %v4780
      %v4856 = vpack.c.b16 %v4781, %v4781
      %v4857 = vpack.c.b16 %v4782, %v4782
      %v4858 = vpack.c.b16 %v4783, %v4783
      %v4859 = vpack.c.b16 %v4784, %v4784
      %v4860 = vpack.c.b16 %v4785, %v4785
      %v4861 = vpack.c.b16 %v4786, %v4786
      %v4862 = vpack.c.b16 %v4787, %v4787
      %v4863 = vpack.c.b16 %v4788, %v4788
      %v4864 = vpack.c.b16 %v4789, %v4789
      %v4865 = vpack.c.b16 %v4790, %v4790
      %vm4941 = vcmask 60416
      %4942 = vst.msk [vmem:[%s379] sm:$0xf] %vm4941, %v4791
      %4943 = vst.msk [vmem:[%s379 + $0x4] sm:$0xf] %vm4941, %v4792
      %4944 = vst.msk [vmem:[%s379 + $0x8] sm:$0xf] %vm4941, %v4793
      %4945 = vst.msk [vmem:[%s379 + $0xc] sm:$0xf] %vm4941, %v4794
      %4946 = vst.msk [vmem:[%s379 + $0x10] sm:$0xf] %vm4941, %v4795
      %4947 = vst.msk [vmem:[%s379 + $0x14] sm:$0xf] %vm4941, %v4796
      %4948 = vst.msk [vmem:[%s379 + $0x18] sm:$0xf] %vm4941, %v4797
      %4949 = vst.msk [vmem:[%s379 + $0x1c] sm:$0xf] %vm4941, %v4798
      %4950 = vst.msk [vmem:[%s379 + $0x20] sm:$0xf] %vm4941, %v4799
      %4951 = vst.msk [vmem:[%s379 + $0x24] sm:$0xf] %vm4941, %v4800
      %4952 = vst.msk [vmem:[%s379 + $0x28] sm:$0xf] %vm4941, %v4801
      %4953 = vst.msk [vmem:[%s379 + $0x2c] sm:$0xf] %vm4941, %v4802
      %4954 = vst.msk [vmem:[%s379 + $0x30] sm:$0xf] %vm4941, %v4803
      %4955 = vst.msk [vmem:[%s379 + $0x34] sm:$0xf] %vm4941, %v4804
      %4956 = vst.msk [vmem:[%s379 + $0x38] sm:$0xf] %vm4941, %v4805
      %4957 = vst.msk [vmem:[%s379 + $0x3c] sm:$0xf] %vm4941, %v4806
      %4958 = vst.msk [vmem:[%s379 + $0x40] sm:$0xf] %vm4941, %v4807
      %4959 = vst.msk [vmem:[%s379 + $0x44] sm:$0xf] %vm4941, %v4808
      %4960 = vst.msk [vmem:[%s379 + $0x48] sm:$0xf] %vm4941, %v4809
      %4961 = vst.msk [vmem:[%s379 + $0x4c] sm:$0xf] %vm4941, %v4810
      %4962 = vst.msk [vmem:[%s379 + $0x50] sm:$0xf] %vm4941, %v4811
      %4963 = vst.msk [vmem:[%s379 + $0x54] sm:$0xf] %vm4941, %v4812
      %4964 = vst.msk [vmem:[%s379 + $0x58] sm:$0xf] %vm4941, %v4813
      %4965 = vst.msk [vmem:[%s379 + $0x5c] sm:$0xf] %vm4941, %v4814
      %4966 = vst.msk [vmem:[%s379 + $0x60] sm:$0xf] %vm4941, %v4815
      %4967 = vst.msk [vmem:[%s379 + $0x64] sm:$0xf] %vm4941, %v4816
      %4968 = vst.msk [vmem:[%s379 + $0x68] sm:$0xf] %vm4941, %v4817
      %4969 = vst.msk [vmem:[%s379 + $0x6c] sm:$0xf] %vm4941, %v4818
      %4970 = vst.msk [vmem:[%s379 + $0x70] sm:$0xf] %vm4941, %v4819
      %4971 = vst.msk [vmem:[%s379 + $0x74] sm:$0xf] %vm4941, %v4820
      %4972 = vst.msk [vmem:[%s379 + $0x78] sm:$0xf] %vm4941, %v4821
      %4973 = vst.msk [vmem:[%s379 + $0x7c] sm:$0xf] %vm4941, %v4822
      %4974 = vst.msk [vmem:[%s379 + $0x80] sm:$0xf] %vm4941, %v4823
      %4975 = vst.msk [vmem:[%s379 + $0x84] sm:$0xf] %vm4941, %v4824
      %4976 = vst.msk [vmem:[%s379 + $0x88] sm:$0xf] %vm4941, %v4825
      %4977 = vst.msk [vmem:[%s379 + $0x8c] sm:$0xf] %vm4941, %v4826
      %4978 = vst.msk [vmem:[%s379 + $0x90] sm:$0xf] %vm4941, %v4827
      %4979 = vst.msk [vmem:[%s379 + $0x94] sm:$0xf] %vm4941, %v4828
      %4980 = vst.msk [vmem:[%s379 + $0x98] sm:$0xf] %vm4941, %v4829
      %4981 = vst.msk [vmem:[%s379 + $0x9c] sm:$0xf] %vm4941, %v4830
      %4982 = vst.msk [vmem:[%s379 + $0xa0] sm:$0xf] %vm4941, %v4831
      %4983 = vst.msk [vmem:[%s379 + $0xa4] sm:$0xf] %vm4941, %v4832
      %4984 = vst.msk [vmem:[%s379 + $0xa8] sm:$0xf] %vm4941, %v4833
      %4985 = vst.msk [vmem:[%s379 + $0xac] sm:$0xf] %vm4941, %v4834
      %4986 = vst.msk [vmem:[%s379 + $0xb0] sm:$0xf] %vm4941, %v4835
      %4987 = vst.msk [vmem:[%s379 + $0xb4] sm:$0xf] %vm4941, %v4836
      %4988 = vst.msk [vmem:[%s379 + $0xb8] sm:$0xf] %vm4941, %v4837
      %4989 = vst.msk [vmem:[%s379 + $0xbc] sm:$0xf] %vm4941, %v4838
      %4990 = vst.msk [vmem:[%s379 + $0xc0] sm:$0xf] %vm4941, %v4839
      %4991 = vst.msk [vmem:[%s379 + $0xc4] sm:$0xf] %vm4941, %v4840
      %4992 = vst.msk [vmem:[%s379 + $0xc8] sm:$0xf] %vm4941, %v4841
      %4993 = vst.msk [vmem:[%s379 + $0xcc] sm:$0xf] %vm4941, %v4842
      %4994 = vst.msk [vmem:[%s379 + $0xd0] sm:$0xf] %vm4941, %v4843
      %4995 = vst.msk [vmem:[%s379 + $0xd4] sm:$0xf] %vm4941, %v4844
      %4996 = vst.msk [vmem:[%s379 + $0xd8] sm:$0xf] %vm4941, %v4845
      %4997 = vst.msk [vmem:[%s379 + $0xdc] sm:$0xf] %vm4941, %v4846
      %4998 = vst.msk [vmem:[%s379 + $0xe0] sm:$0xf] %vm4941, %v4847
      %4999 = vst.msk [vmem:[%s379 + $0xe4] sm:$0xf] %vm4941, %v4848
      %5000 = vst.msk [vmem:[%s379 + $0xe8] sm:$0xf] %vm4941, %v4849
      %5001 = vst.msk [vmem:[%s379 + $0xec] sm:$0xf] %vm4941, %v4850
      %5002 = vst.msk [vmem:[%s379 + $0xf0] sm:$0xf] %vm4941, %v4851
      %5003 = vst.msk [vmem:[%s379 + $0xf4] sm:$0xf] %vm4941, %v4852
      %5004 = vst.msk [vmem:[%s379 + $0xf8] sm:$0xf] %vm4941, %v4853
      %5005 = vst.msk [vmem:[%s379 + $0xfc] sm:$0xf] %vm4941, %v4854
      %5006 = vst.msk [vmem:[%s379 + $0x100] sm:$0xf] %vm4941, %v4855
      %5007 = vst.msk [vmem:[%s379 + $0x104] sm:$0xf] %vm4941, %v4856
      %5008 = vst.msk [vmem:[%s379 + $0x108] sm:$0xf] %vm4941, %v4857
      %5009 = vst.msk [vmem:[%s379 + $0x10c] sm:$0xf] %vm4941, %v4858
      %5010 = vst.msk [vmem:[%s379 + $0x110] sm:$0xf] %vm4941, %v4859
      %5011 = vst.msk [vmem:[%s379 + $0x114] sm:$0xf] %vm4941, %v4860
      %5012 = vst.msk [vmem:[%s379 + $0x118] sm:$0xf] %vm4941, %v4861
      %5013 = vst.msk [vmem:[%s379 + $0x11c] sm:$0xf] %vm4941, %v4862
      %5014 = vst.msk [vmem:[%s379 + $0x120] sm:$0xf] %vm4941, %v4863
      %5015 = vst.msk [vmem:[%s379 + $0x124] sm:$0xf] %vm4941, %v4864
      %5016 = vst.msk [vmem:[%s379 + $0x128] sm:$0xf] %vm4941, %v4865
      %v5017 = vld [vmem:[%s369] sm:$0xff]
      %v5018 = vld [vmem:[%s369 + $0x8] sm:$0xff]
      %v5019 = vld [vmem:[%s369 + $0x10] sm:$0xff]
      %v5020 = vld [vmem:[%s369 + $0x18] sm:$0xff]
      %v5021 = vld [vmem:[%s369 + $0x20] sm:$0xff]
      %v5022 = vld [vmem:[%s369 + $0x28] sm:$0xff]
      %v5023 = vld [vmem:[%s369 + $0x30] sm:$0xff]
      %v5024 = vld [vmem:[%s369 + $0x38] sm:$0xff]
      %v5025 = vld [vmem:[%s369 + $0x40] sm:$0xff]
      %v5026 = vld [vmem:[%s369 + $0x48] sm:$0xff]
      %v5027 = vld [vmem:[%s369 + $0x50] sm:$0xff]
      %v5028 = vld [vmem:[%s369 + $0x58] sm:$0xff]
      %v5029 = vld [vmem:[%s369 + $0x60] sm:$0xff]
      %v5030 = vld [vmem:[%s369 + $0x68] sm:$0xff]
      %v5031 = vld [vmem:[%s369 + $0x70] sm:$0xff]
      %v5032 = vld [vmem:[%s369 + $0x78] sm:$0xff]
      %v5033 = vld [vmem:[%s369 + $0x80] sm:$0xff]
      %v5034 = vld [vmem:[%s369 + $0x88] sm:$0xff]
      %v5035 = vld [vmem:[%s369 + $0x90] sm:$0xff]
      %v5036 = vld [vmem:[%s369 + $0x98] sm:$0xff]
      %v5037 = vld [vmem:[%s369 + $0xa0] sm:$0xff]
      %v5038 = vld [vmem:[%s369 + $0xa8] sm:$0xff]
      %v5039 = vld [vmem:[%s369 + $0xb0] sm:$0xff]
      %v5040 = vld [vmem:[%s369 + $0xb8] sm:$0xff]
      %v5041 = vld [vmem:[%s369 + $0xc0] sm:$0xff]
      %v5042 = vld [vmem:[%s369 + $0xc8] sm:$0xff]
      %v5043 = vld [vmem:[%s369 + $0xd0] sm:$0xff]
      %v5044 = vld [vmem:[%s369 + $0xd8] sm:$0xff]
      %v5045 = vld [vmem:[%s369 + $0xe0] sm:$0xff]
      %v5046 = vld [vmem:[%s369 + $0xe8] sm:$0xff]
      %v5047 = vld [vmem:[%s369 + $0xf0] sm:$0xff]
      %v5048 = vld [vmem:[%s369 + $0xf8] sm:$0xff]
      %v5049 = vld [vmem:[%s369 + $0x100] sm:$0xff]
      %v5050 = vld [vmem:[%s369 + $0x108] sm:$0xff]
      %v5051 = vld [vmem:[%s369 + $0x110] sm:$0xff]
      %v5052 = vld [vmem:[%s369 + $0x118] sm:$0xff]
      %v5053 = vld [vmem:[%s369 + $0x120] sm:$0xff]
      %v5054 = vld [vmem:[%s369 + $0x128] sm:$0xff]
      %v5055 = vld [vmem:[%s369 + $0x130] sm:$0xff]
      %v5056 = vld [vmem:[%s369 + $0x138] sm:$0xff]
      %v5057 = vld [vmem:[%s369 + $0x140] sm:$0xff]
      %v5058 = vld [vmem:[%s369 + $0x148] sm:$0xff]
      %v5059 = vld [vmem:[%s369 + $0x150] sm:$0xff]
      %v5060 = vld [vmem:[%s369 + $0x158] sm:$0xff]
      %v5061 = vld [vmem:[%s369 + $0x160] sm:$0xff]
      %v5062 = vld [vmem:[%s369 + $0x168] sm:$0xff]
      %v5063 = vld [vmem:[%s369 + $0x170] sm:$0xff]
      %v5064 = vld [vmem:[%s369 + $0x178] sm:$0xff]
      %v5065 = vld [vmem:[%s369 + $0x180] sm:$0xff]
      %v5066 = vld [vmem:[%s369 + $0x188] sm:$0xff]
      %v5067 = vld [vmem:[%s369 + $0x190] sm:$0xff]
      %v5068 = vld [vmem:[%s369 + $0x198] sm:$0xff]
      %v5069 = vld [vmem:[%s369 + $0x1a0] sm:$0xff]
      %v5070 = vld [vmem:[%s369 + $0x1a8] sm:$0xff]
      %v5071 = vld [vmem:[%s369 + $0x1b0] sm:$0xff]
      %v5072 = vld [vmem:[%s369 + $0x1b8] sm:$0xff]
      %v5073 = vld [vmem:[%s369 + $0x1c0] sm:$0xff]
      %v5074 = vld [vmem:[%s369 + $0x1c8] sm:$0xff]
      %v5075 = vld [vmem:[%s369 + $0x1d0] sm:$0xff]
      %v5076 = vld [vmem:[%s369 + $0x1d8] sm:$0xff]
      %v5077 = vld [vmem:[%s369 + $0x1e0] sm:$0xff]
      %v5078 = vld [vmem:[%s369 + $0x1e8] sm:$0xff]
      %v5079 = vld [vmem:[%s369 + $0x1f0] sm:$0xff]
      %v5080 = vld [vmem:[%s369 + $0x1f8] sm:$0xff]
      %v5081 = vld [vmem:[%s369 + $0x200] sm:$0xff]
      %v5082 = vld [vmem:[%s369 + $0x208] sm:$0xff]
      %v5083 = vld [vmem:[%s369 + $0x210] sm:$0xff]
      %v5084 = vld [vmem:[%s369 + $0x218] sm:$0xff]
      %v5085 = vld [vmem:[%s369 + $0x220] sm:$0xff]
      %v5086 = vld [vmem:[%s369 + $0x228] sm:$0xff]
      %v5087 = vld [vmem:[%s369 + $0x230] sm:$0xff]
      %v5088 = vld [vmem:[%s369 + $0x238] sm:$0xff]
      %v5089 = vld [vmem:[%s369 + $0x240] sm:$0xff]
      %v5090 = vld [vmem:[%s369 + $0x248] sm:$0xff]
      %v5091 = vld [vmem:[%s369 + $0x250] sm:$0xff]
      %5093 = vset.pattern.permute.xlu0 0
      %5094 = vperm.xlu0 %5093, %v5017
      %v5095 = vpop.permute.xlu0 %5094
      %5098 = vset.pattern.permute.xlu0 0
      %5099 = vperm.xlu0 %5098, %v5018
      %v5100 = vpop.permute.xlu0 %5099
      %5103 = vset.pattern.permute.xlu0 0
      %5104 = vperm.xlu0 %5103, %v5019
      %v5105 = vpop.permute.xlu0 %5104
      %5108 = vset.pattern.permute.xlu0 0
      %5109 = vperm.xlu0 %5108, %v5020
      %v5110 = vpop.permute.xlu0 %5109
      %5113 = vset.pattern.permute.xlu0 0
      %5114 = vperm.xlu0 %5113, %v5021
      %v5115 = vpop.permute.xlu0 %5114
      %5118 = vset.pattern.permute.xlu0 0
      %5119 = vperm.xlu0 %5118, %v5022
      %v5120 = vpop.permute.xlu0 %5119
      %5123 = vset.pattern.permute.xlu0 0
      %5124 = vperm.xlu0 %5123, %v5023
      %v5125 = vpop.permute.xlu0 %5124
      %5128 = vset.pattern.permute.xlu0 0
      %5129 = vperm.xlu0 %5128, %v5024
      %v5130 = vpop.permute.xlu0 %5129
      %5133 = vset.pattern.permute.xlu0 0
      %5134 = vperm.xlu0 %5133, %v5025
      %v5135 = vpop.permute.xlu0 %5134
      %5138 = vset.pattern.permute.xlu0 0
      %5139 = vperm.xlu0 %5138, %v5026
      %v5140 = vpop.permute.xlu0 %5139
      %5143 = vset.pattern.permute.xlu0 0
      %5144 = vperm.xlu0 %5143, %v5027
      %v5145 = vpop.permute.xlu0 %5144
      %5148 = vset.pattern.permute.xlu0 0
      %5149 = vperm.xlu0 %5148, %v5028
      %v5150 = vpop.permute.xlu0 %5149
      %5153 = vset.pattern.permute.xlu0 0
      %5154 = vperm.xlu0 %5153, %v5029
      %v5155 = vpop.permute.xlu0 %5154
      %5158 = vset.pattern.permute.xlu0 0
      %5159 = vperm.xlu0 %5158, %v5030
      %v5160 = vpop.permute.xlu0 %5159
      %5163 = vset.pattern.permute.xlu0 0
      %5164 = vperm.xlu0 %5163, %v5031
      %v5165 = vpop.permute.xlu0 %5164
      %5168 = vset.pattern.permute.xlu0 0
      %5169 = vperm.xlu0 %5168, %v5032
      %v5170 = vpop.permute.xlu0 %5169
      %5173 = vset.pattern.permute.xlu0 0
      %5174 = vperm.xlu0 %5173, %v5033
      %v5175 = vpop.permute.xlu0 %5174
      %5178 = vset.pattern.permute.xlu0 0
      %5179 = vperm.xlu0 %5178, %v5034
      %v5180 = vpop.permute.xlu0 %5179
      %5183 = vset.pattern.permute.xlu0 0
      %5184 = vperm.xlu0 %5183, %v5035
      %v5185 = vpop.permute.xlu0 %5184
      %5188 = vset.pattern.permute.xlu0 0
      %5189 = vperm.xlu0 %5188, %v5036
      %v5190 = vpop.permute.xlu0 %5189
      %5193 = vset.pattern.permute.xlu0 0
      %5194 = vperm.xlu0 %5193, %v5037
      %v5195 = vpop.permute.xlu0 %5194
      %5198 = vset.pattern.permute.xlu0 0
      %5199 = vperm.xlu0 %5198, %v5038
      %v5200 = vpop.permute.xlu0 %5199
      %5203 = vset.pattern.permute.xlu0 0
      %5204 = vperm.xlu0 %5203, %v5039
      %v5205 = vpop.permute.xlu0 %5204
      %5208 = vset.pattern.permute.xlu0 0
      %5209 = vperm.xlu0 %5208, %v5040
      %v5210 = vpop.permute.xlu0 %5209
      %5213 = vset.pattern.permute.xlu0 0
      %5214 = vperm.xlu0 %5213, %v5041
      %v5215 = vpop.permute.xlu0 %5214
      %5218 = vset.pattern.permute.xlu0 0
      %5219 = vperm.xlu0 %5218, %v5042
      %v5220 = vpop.permute.xlu0 %5219
      %5223 = vset.pattern.permute.xlu0 0
      %5224 = vperm.xlu0 %5223, %v5043
      %v5225 = vpop.permute.xlu0 %5224
      %5228 = vset.pattern.permute.xlu0 0
      %5229 = vperm.xlu0 %5228, %v5044
      %v5230 = vpop.permute.xlu0 %5229
      %5233 = vset.pattern.permute.xlu0 0
      %5234 = vperm.xlu0 %5233, %v5045
      %v5235 = vpop.permute.xlu0 %5234
      %5238 = vset.pattern.permute.xlu0 0
      %5239 = vperm.xlu0 %5238, %v5046
      %v5240 = vpop.permute.xlu0 %5239
      %5243 = vset.pattern.permute.xlu0 0
      %5244 = vperm.xlu0 %5243, %v5047
      %v5245 = vpop.permute.xlu0 %5244
      %5248 = vset.pattern.permute.xlu0 0
      %5249 = vperm.xlu0 %5248, %v5048
      %v5250 = vpop.permute.xlu0 %5249
      %5253 = vset.pattern.permute.xlu0 0
      %5254 = vperm.xlu0 %5253, %v5049
      %v5255 = vpop.permute.xlu0 %5254
      %5258 = vset.pattern.permute.xlu0 0
      %5259 = vperm.xlu0 %5258, %v5050
      %v5260 = vpop.permute.xlu0 %5259
      %5263 = vset.pattern.permute.xlu0 0
      %5264 = vperm.xlu0 %5263, %v5051
      %v5265 = vpop.permute.xlu0 %5264
      %5268 = vset.pattern.permute.xlu0 0
      %5269 = vperm.xlu0 %5268, %v5052
      %v5270 = vpop.permute.xlu0 %5269
      %5273 = vset.pattern.permute.xlu0 0
      %5274 = vperm.xlu0 %5273, %v5053
      %v5275 = vpop.permute.xlu0 %5274
      %5278 = vset.pattern.permute.xlu0 0
      %5279 = vperm.xlu0 %5278, %v5054
      %v5280 = vpop.permute.xlu0 %5279
      %5283 = vset.pattern.permute.xlu0 0
      %5284 = vperm.xlu0 %5283, %v5055
      %v5285 = vpop.permute.xlu0 %5284
      %5288 = vset.pattern.permute.xlu0 0
      %5289 = vperm.xlu0 %5288, %v5056
      %v5290 = vpop.permute.xlu0 %5289
      %5293 = vset.pattern.permute.xlu0 0
      %5294 = vperm.xlu0 %5293, %v5057
      %v5295 = vpop.permute.xlu0 %5294
      %5298 = vset.pattern.permute.xlu0 0
      %5299 = vperm.xlu0 %5298, %v5058
      %v5300 = vpop.permute.xlu0 %5299
      %5303 = vset.pattern.permute.xlu0 0
      %5304 = vperm.xlu0 %5303, %v5059
      %v5305 = vpop.permute.xlu0 %5304
      %5308 = vset.pattern.permute.xlu0 0
      %5309 = vperm.xlu0 %5308, %v5060
      %v5310 = vpop.permute.xlu0 %5309
      %5313 = vset.pattern.permute.xlu0 0
      %5314 = vperm.xlu0 %5313, %v5061
      %v5315 = vpop.permute.xlu0 %5314
      %5318 = vset.pattern.permute.xlu0 0
      %5319 = vperm.xlu0 %5318, %v5062
      %v5320 = vpop.permute.xlu0 %5319
      %5323 = vset.pattern.permute.xlu0 0
      %5324 = vperm.xlu0 %5323, %v5063
      %v5325 = vpop.permute.xlu0 %5324
      %5328 = vset.pattern.permute.xlu0 0
      %5329 = vperm.xlu0 %5328, %v5064
      %v5330 = vpop.permute.xlu0 %5329
      %5333 = vset.pattern.permute.xlu0 0
      %5334 = vperm.xlu0 %5333, %v5065
      %v5335 = vpop.permute.xlu0 %5334
      %5338 = vset.pattern.permute.xlu0 0
      %5339 = vperm.xlu0 %5338, %v5066
      %v5340 = vpop.permute.xlu0 %5339
      %5343 = vset.pattern.permute.xlu0 0
      %5344 = vperm.xlu0 %5343, %v5067
      %v5345 = vpop.permute.xlu0 %5344
      %5348 = vset.pattern.permute.xlu0 0
      %5349 = vperm.xlu0 %5348, %v5068
      %v5350 = vpop.permute.xlu0 %5349
      %5353 = vset.pattern.permute.xlu0 0
      %5354 = vperm.xlu0 %5353, %v5069
      %v5355 = vpop.permute.xlu0 %5354
      %5358 = vset.pattern.permute.xlu0 0
      %5359 = vperm.xlu0 %5358, %v5070
      %v5360 = vpop.permute.xlu0 %5359
      %5363 = vset.pattern.permute.xlu0 0
      %5364 = vperm.xlu0 %5363, %v5071
      %v5365 = vpop.permute.xlu0 %5364
      %5368 = vset.pattern.permute.xlu0 0
      %5369 = vperm.xlu0 %5368, %v5072
      %v5370 = vpop.permute.xlu0 %5369
      %5373 = vset.pattern.permute.xlu0 0
      %5374 = vperm.xlu0 %5373, %v5073
      %v5375 = vpop.permute.xlu0 %5374
      %5378 = vset.pattern.permute.xlu0 0
      %5379 = vperm.xlu0 %5378, %v5074
      %v5380 = vpop.permute.xlu0 %5379
      %5383 = vset.pattern.permute.xlu0 0
      %5384 = vperm.xlu0 %5383, %v5075
      %v5385 = vpop.permute.xlu0 %5384
      %5388 = vset.pattern.permute.xlu0 0
      %5389 = vperm.xlu0 %5388, %v5076
      %v5390 = vpop.permute.xlu0 %5389
      %5393 = vset.pattern.permute.xlu0 0
      %5394 = vperm.xlu0 %5393, %v5077
      %v5395 = vpop.permute.xlu0 %5394
      %5398 = vset.pattern.permute.xlu0 0
      %5399 = vperm.xlu0 %5398, %v5078
      %v5400 = vpop.permute.xlu0 %5399
      %5403 = vset.pattern.permute.xlu0 0
      %5404 = vperm.xlu0 %5403, %v5079
      %v5405 = vpop.permute.xlu0 %5404
      %5408 = vset.pattern.permute.xlu0 0
      %5409 = vperm.xlu0 %5408, %v5080
      %v5410 = vpop.permute.xlu0 %5409
      %5413 = vset.pattern.permute.xlu0 0
      %5414 = vperm.xlu0 %5413, %v5081
      %v5415 = vpop.permute.xlu0 %5414
      %5418 = vset.pattern.permute.xlu0 0
      %5419 = vperm.xlu0 %5418, %v5082
      %v5420 = vpop.permute.xlu0 %5419
      %5423 = vset.pattern.permute.xlu0 0
      %5424 = vperm.xlu0 %5423, %v5083
      %v5425 = vpop.permute.xlu0 %5424
      %5428 = vset.pattern.permute.xlu0 0
      %5429 = vperm.xlu0 %5428, %v5084
      %v5430 = vpop.permute.xlu0 %5429
      %5433 = vset.pattern.permute.xlu0 0
      %5434 = vperm.xlu0 %5433, %v5085
      %v5435 = vpop.permute.xlu0 %5434
      %5438 = vset.pattern.permute.xlu0 0
      %5439 = vperm.xlu0 %5438, %v5086
      %v5440 = vpop.permute.xlu0 %5439
      %5443 = vset.pattern.permute.xlu0 0
      %5444 = vperm.xlu0 %5443, %v5087
      %v5445 = vpop.permute.xlu0 %5444
      %5448 = vset.pattern.permute.xlu0 0
      %5449 = vperm.xlu0 %5448, %v5088
      %v5450 = vpop.permute.xlu0 %5449
      %5453 = vset.pattern.permute.xlu0 0
      %5454 = vperm.xlu0 %5453, %v5089
      %v5455 = vpop.permute.xlu0 %5454
      %5458 = vset.pattern.permute.xlu0 0
      %5459 = vperm.xlu0 %5458, %v5090
      %v5460 = vpop.permute.xlu0 %5459
      %5463 = vset.pattern.permute.xlu0 0
      %5464 = vperm.xlu0 %5463, %v5091
      %v5465 = vpop.permute.xlu0 %5464
      %v5467 = vmul.f32 %v4339, %v5095
      %v5468 = vmul.f32 %v4342, %v5100
      %v5469 = vmul.f32 %v4347, %v5105
      %v5470 = vmul.f32 %v4350, %v5110
      %v5471 = vmul.f32 %v4355, %v5115
      %v5472 = vmul.f32 %v4358, %v5120
      %v5473 = vmul.f32 %v4363, %v5125
      %v5474 = vmul.f32 %v4366, %v5130
      %v5475 = vmul.f32 %v4371, %v5135
      %v5476 = vmul.f32 %v4374, %v5140
      %v5477 = vmul.f32 %v4379, %v5145
      %v5478 = vmul.f32 %v4382, %v5150
      %v5479 = vmul.f32 %v4387, %v5155
      %v5480 = vmul.f32 %v4390, %v5160
      %v5481 = vmul.f32 %v4395, %v5165
      %v5482 = vmul.f32 %v4398, %v5170
      %v5483 = vmul.f32 %v4403, %v5175
      %v5484 = vmul.f32 %v4406, %v5180
      %v5485 = vmul.f32 %v4411, %v5185
      %v5486 = vmul.f32 %v4414, %v5190
      %v5487 = vmul.f32 %v4419, %v5195
      %v5488 = vmul.f32 %v4422, %v5200
      %v5489 = vmul.f32 %v4427, %v5205
      %v5490 = vmul.f32 %v4430, %v5210
      %v5491 = vmul.f32 %v4435, %v5215
      %v5492 = vmul.f32 %v4438, %v5220
      %v5493 = vmul.f32 %v4443, %v5225
      %v5494 = vmul.f32 %v4446, %v5230
      %v5495 = vmul.f32 %v4451, %v5235
      %v5496 = vmul.f32 %v4454, %v5240
      %v5497 = vmul.f32 %v4459, %v5245
      %v5498 = vmul.f32 %v4462, %v5250
      %v5499 = vmul.f32 %v4467, %v5255
      %v5500 = vmul.f32 %v4470, %v5260
      %v5501 = vmul.f32 %v4475, %v5265
      %v5502 = vmul.f32 %v4478, %v5270
      %v5503 = vmul.f32 %v4483, %v5275
      %v5504 = vmul.f32 %v4486, %v5280
      %v5505 = vmul.f32 %v4491, %v5285
      %v5506 = vmul.f32 %v4494, %v5290
      %v5507 = vmul.f32 %v4499, %v5295
      %v5508 = vmul.f32 %v4502, %v5300
      %v5509 = vmul.f32 %v4507, %v5305
      %v5510 = vmul.f32 %v4510, %v5310
      %v5511 = vmul.f32 %v4515, %v5315
      %v5512 = vmul.f32 %v4518, %v5320
      %v5513 = vmul.f32 %v4523, %v5325
      %v5514 = vmul.f32 %v4526, %v5330
      %v5515 = vmul.f32 %v4531, %v5335
      %v5516 = vmul.f32 %v4534, %v5340
      %v5517 = vmul.f32 %v4539, %v5345
      %v5518 = vmul.f32 %v4542, %v5350
      %v5519 = vmul.f32 %v4547, %v5355
      %v5520 = vmul.f32 %v4550, %v5360
      %v5521 = vmul.f32 %v4555, %v5365
      %v5522 = vmul.f32 %v4558, %v5370
      %v5523 = vmul.f32 %v4563, %v5375
      %v5524 = vmul.f32 %v4566, %v5380
      %v5525 = vmul.f32 %v4571, %v5385
      %v5526 = vmul.f32 %v4574, %v5390
      %v5527 = vmul.f32 %v4579, %v5395
      %v5528 = vmul.f32 %v4582, %v5400
      %v5529 = vmul.f32 %v4587, %v5405
      %v5530 = vmul.f32 %v4590, %v5410
      %v5531 = vmul.f32 %v4595, %v5415
      %v5532 = vmul.f32 %v4598, %v5420
      %v5533 = vmul.f32 %v4603, %v5425
      %v5534 = vmul.f32 %v4606, %v5430
      %v5535 = vmul.f32 %v4611, %v5435
      %v5536 = vmul.f32 %v4614, %v5440
      %v5537 = vmul.f32 %v4619, %v5445
      %v5538 = vmul.f32 %v4622, %v5450
      %v5539 = vmul.f32 %v4627, %v5455
      %v5540 = vmul.f32 %v4630, %v5460
      %v5541 = vmul.f32 %v4635, %v5465
      %v5542 = vsel %vm1841, %v5467, 0.0
      %v5543 = vsel %vm1841, %v5468, 0.0
      %v5544 = vadd.f32 %v5542, %v5543
      %v5545 = vsel %vm1841, %v5469, 0.0
      %v5546 = vadd.f32 %v5544, %v5545
      %v5547 = vsel %vm1841, %v5470, 0.0
      %v5548 = vadd.f32 %v5546, %v5547
      %v5549 = vsel %vm1841, %v5471, 0.0
      %v5550 = vadd.f32 %v5548, %v5549
      %v5551 = vsel %vm1841, %v5472, 0.0
      %v5552 = vadd.f32 %v5550, %v5551
      %v5553 = vsel %vm1841, %v5473, 0.0
      %v5554 = vadd.f32 %v5552, %v5553
      %v5555 = vsel %vm1841, %v5474, 0.0
      %v5556 = vadd.f32 %v5554, %v5555
      %v5557 = vsel %vm1841, %v5475, 0.0
      %v5558 = vadd.f32 %v5556, %v5557
      %v5559 = vsel %vm1841, %v5476, 0.0
      %v5560 = vadd.f32 %v5558, %v5559
      %v5561 = vsel %vm1841, %v5477, 0.0
      %v5562 = vadd.f32 %v5560, %v5561
      %v5563 = vsel %vm1841, %v5478, 0.0
      %v5564 = vadd.f32 %v5562, %v5563
      %v5565 = vsel %vm1841, %v5479, 0.0
      %v5566 = vadd.f32 %v5564, %v5565
      %v5567 = vsel %vm1841, %v5480, 0.0
      %v5568 = vadd.f32 %v5566, %v5567
      %v5569 = vsel %vm1841, %v5481, 0.0
      %v5570 = vadd.f32 %v5568, %v5569
      %v5571 = vsel %vm1841, %v5482, 0.0
      %v5572 = vadd.f32 %v5570, %v5571
      %v5573 = vsel %vm1841, %v5483, 0.0
      %v5574 = vadd.f32 %v5572, %v5573
      %v5575 = vsel %vm1841, %v5484, 0.0
      %v5576 = vadd.f32 %v5574, %v5575
      %v5577 = vsel %vm1841, %v5485, 0.0
      %v5578 = vadd.f32 %v5576, %v5577
      %v5579 = vsel %vm1841, %v5486, 0.0
      %v5580 = vadd.f32 %v5578, %v5579
      %v5581 = vsel %vm1841, %v5487, 0.0
      %v5582 = vadd.f32 %v5580, %v5581
      %v5583 = vsel %vm1841, %v5488, 0.0
      %v5584 = vadd.f32 %v5582, %v5583
      %v5585 = vsel %vm1841, %v5489, 0.0
      %v5586 = vadd.f32 %v5584, %v5585
      %v5587 = vsel %vm1841, %v5490, 0.0
      %v5588 = vadd.f32 %v5586, %v5587
      %v5589 = vsel %vm1841, %v5491, 0.0
      %v5590 = vadd.f32 %v5588, %v5589
      %v5591 = vsel %vm1841, %v5492, 0.0
      %v5592 = vadd.f32 %v5590, %v5591
      %v5593 = vsel %vm1841, %v5493, 0.0
      %v5594 = vadd.f32 %v5592, %v5593
      %v5595 = vsel %vm1841, %v5494, 0.0
      %v5596 = vadd.f32 %v5594, %v5595
      %v5597 = vsel %vm1841, %v5495, 0.0
      %v5598 = vadd.f32 %v5596, %v5597
      %v5599 = vsel %vm1841, %v5496, 0.0
      %v5600 = vadd.f32 %v5598, %v5599
      %v5601 = vsel %vm1841, %v5497, 0.0
      %v5602 = vadd.f32 %v5600, %v5601
      %v5603 = vsel %vm1841, %v5498, 0.0
      %v5604 = vadd.f32 %v5602, %v5603
      %v5605 = vsel %vm1841, %v5499, 0.0
      %v5606 = vadd.f32 %v5604, %v5605
      %v5607 = vsel %vm1841, %v5500, 0.0
      %v5608 = vadd.f32 %v5606, %v5607
      %v5609 = vsel %vm1841, %v5501, 0.0
      %v5610 = vadd.f32 %v5608, %v5609
      %v5611 = vsel %vm1841, %v5502, 0.0
      %v5612 = vadd.f32 %v5610, %v5611
      %v5613 = vsel %vm1841, %v5503, 0.0
      %v5614 = vadd.f32 %v5612, %v5613
      %v5615 = vsel %vm1841, %v5504, 0.0
      %v5616 = vadd.f32 %v5614, %v5615
      %v5617 = vsel %vm1841, %v5505, 0.0
      %v5618 = vadd.f32 %v5616, %v5617
      %v5619 = vsel %vm1841, %v5506, 0.0
      %v5620 = vadd.f32 %v5618, %v5619
      %v5621 = vsel %vm1841, %v5507, 0.0
      %v5622 = vadd.f32 %v5620, %v5621
      %v5623 = vsel %vm1841, %v5508, 0.0
      %v5624 = vadd.f32 %v5622, %v5623
      %v5625 = vsel %vm1841, %v5509, 0.0
      %v5626 = vadd.f32 %v5624, %v5625
      %v5627 = vsel %vm1841, %v5510, 0.0
      %v5628 = vadd.f32 %v5626, %v5627
      %v5629 = vsel %vm1841, %v5511, 0.0
      %v5630 = vadd.f32 %v5628, %v5629
      %v5631 = vsel %vm1841, %v5512, 0.0
      %v5632 = vadd.f32 %v5630, %v5631
      %v5633 = vsel %vm1841, %v5513, 0.0
      %v5634 = vadd.f32 %v5632, %v5633
      %v5635 = vsel %vm1841, %v5514, 0.0
      %v5636 = vadd.f32 %v5634, %v5635
      %v5637 = vsel %vm1841, %v5515, 0.0
      %v5638 = vadd.f32 %v5636, %v5637
      %v5639 = vsel %vm1841, %v5516, 0.0
      %v5640 = vadd.f32 %v5638, %v5639
      %v5641 = vsel %vm1841, %v5517, 0.0
      %v5642 = vadd.f32 %v5640, %v5641
      %v5643 = vsel %vm1841, %v5518, 0.0
      %v5644 = vadd.f32 %v5642, %v5643
      %v5645 = vsel %vm1841, %v5519, 0.0
      %v5646 = vadd.f32 %v5644, %v5645
      %v5647 = vsel %vm1841, %v5520, 0.0
      %v5648 = vadd.f32 %v5646, %v5647
      %v5649 = vsel %vm1841, %v5521, 0.0
      %v5650 = vadd.f32 %v5648, %v5649
      %v5651 = vsel %vm1841, %v5522, 0.0
      %v5652 = vadd.f32 %v5650, %v5651
      %v5653 = vsel %vm1841, %v5523, 0.0
      %v5654 = vadd.f32 %v5652, %v5653
      %v5655 = vsel %vm1841, %v5524, 0.0
      %v5656 = vadd.f32 %v5654, %v5655
      %v5657 = vsel %vm1841, %v5525, 0.0
      %v5658 = vadd.f32 %v5656, %v5657
      %v5659 = vsel %vm1841, %v5526, 0.0
      %v5660 = vadd.f32 %v5658, %v5659
      %v5661 = vsel %vm1841, %v5527, 0.0
      %v5662 = vadd.f32 %v5660, %v5661
      %v5663 = vsel %vm1841, %v5528, 0.0
      %v5664 = vadd.f32 %v5662, %v5663
      %v5665 = vsel %vm1841, %v5529, 0.0
      %v5666 = vadd.f32 %v5664, %v5665
      %v5667 = vsel %vm1841, %v5530, 0.0
      %v5668 = vadd.f32 %v5666, %v5667
      %v5669 = vsel %vm1841, %v5531, 0.0
      %v5670 = vadd.f32 %v5668, %v5669
      %v5671 = vsel %vm1841, %v5532, 0.0
      %v5672 = vadd.f32 %v5670, %v5671
      %v5673 = vsel %vm1841, %v5533, 0.0
      %v5674 = vadd.f32 %v5672, %v5673
      %v5675 = vsel %vm1841, %v5534, 0.0
      %v5676 = vadd.f32 %v5674, %v5675
      %v5677 = vsel %vm1841, %v5535, 0.0
      %v5678 = vadd.f32 %v5676, %v5677
      %v5679 = vsel %vm1841, %v5536, 0.0
      %v5680 = vadd.f32 %v5678, %v5679
      %v5681 = vsel %vm1841, %v5537, 0.0
      %v5682 = vadd.f32 %v5680, %v5681
      %v5683 = vsel %vm1841, %v5538, 0.0
      %v5684 = vadd.f32 %v5682, %v5683
      %v5685 = vsel %vm1841, %v5539, 0.0
      %v5686 = vadd.f32 %v5684, %v5685
      %v5687 = vsel %vm1841, %v5540, 0.0
      %v5688 = vadd.f32 %v5686, %v5687
      %v5689 = vsel %vm1841, %v5541, 0.0
      %v5690 = vadd.f32 %v5688, %v5689
      %v5691 = vrot.slane %v5690, 4
      %v5692 = vadd.f32 %v5690, %v5691
      %v5693 = vrot.slane %v5692, 2
      %v5694 = vadd.f32 %v5692, %v5693
      %v5695 = vrot.slane %v5694, 1
      %v5696 = vadd.f32 %v5694, %v5695
      %v5697 = vmul.f32 %v5467, %v4339
      %v5698 = vmul.f32 %v5468, %v4342
      %v5699 = vmul.f32 %v5469, %v4347
      %v5700 = vmul.f32 %v5470, %v4350
      %v5701 = vmul.f32 %v5471, %v4355
      %v5702 = vmul.f32 %v5472, %v4358
      %v5703 = vmul.f32 %v5473, %v4363
      %v5704 = vmul.f32 %v5474, %v4366
      %v5705 = vmul.f32 %v5475, %v4371
      %v5706 = vmul.f32 %v5476, %v4374
      %v5707 = vmul.f32 %v5477, %v4379
      %v5708 = vmul.f32 %v5478, %v4382
      %v5709 = vmul.f32 %v5479, %v4387
      %v5710 = vmul.f32 %v5480, %v4390
      %v5711 = vmul.f32 %v5481, %v4395
      %v5712 = vmul.f32 %v5482, %v4398
      %v5713 = vmul.f32 %v5483, %v4403
      %v5714 = vmul.f32 %v5484, %v4406
      %v5715 = vmul.f32 %v5485, %v4411
      %v5716 = vmul.f32 %v5486, %v4414
      %v5717 = vmul.f32 %v5487, %v4419
      %v5718 = vmul.f32 %v5488, %v4422
      %v5719 = vmul.f32 %v5489, %v4427
      %v5720 = vmul.f32 %v5490, %v4430
      %v5721 = vmul.f32 %v5491, %v4435
      %v5722 = vmul.f32 %v5492, %v4438
      %v5723 = vmul.f32 %v5493, %v4443
      %v5724 = vmul.f32 %v5494, %v4446
      %v5725 = vmul.f32 %v5495, %v4451
      %v5726 = vmul.f32 %v5496, %v4454
      %v5727 = vmul.f32 %v5497, %v4459
      %v5728 = vmul.f32 %v5498, %v4462
      %v5729 = vmul.f32 %v5499, %v4467
      %v5730 = vmul.f32 %v5500, %v4470
      %v5731 = vmul.f32 %v5501, %v4475
      %v5732 = vmul.f32 %v5502, %v4478
      %v5733 = vmul.f32 %v5503, %v4483
      %v5734 = vmul.f32 %v5504, %v4486
      %v5735 = vmul.f32 %v5505, %v4491
      %v5736 = vmul.f32 %v5506, %v4494
      %v5737 = vmul.f32 %v5507, %v4499
      %v5738 = vmul.f32 %v5508, %v4502
      %v5739 = vmul.f32 %v5509, %v4507
      %v5740 = vmul.f32 %v5510, %v4510
      %v5741 = vmul.f32 %v5511, %v4515
      %v5742 = vmul.f32 %v5512, %v4518
      %v5743 = vmul.f32 %v5513, %v4523
      %v5744 = vmul.f32 %v5514, %v4526
      %v5745 = vmul.f32 %v5515, %v4531
      %v5746 = vmul.f32 %v5516, %v4534
      %v5747 = vmul.f32 %v5517, %v4539
      %v5748 = vmul.f32 %v5518, %v4542
      %v5749 = vmul.f32 %v5519, %v4547
      %v5750 = vmul.f32 %v5520, %v4550
      %v5751 = vmul.f32 %v5521, %v4555
      %v5752 = vmul.f32 %v5522, %v4558
      %v5753 = vmul.f32 %v5523, %v4563
      %v5754 = vmul.f32 %v5524, %v4566
      %v5755 = vmul.f32 %v5525, %v4571
      %v5756 = vmul.f32 %v5526, %v4574
      %v5757 = vmul.f32 %v5527, %v4579
      %v5758 = vmul.f32 %v5528, %v4582
      %v5759 = vmul.f32 %v5529, %v4587
      %v5760 = vmul.f32 %v5530, %v4590
      %v5761 = vmul.f32 %v5531, %v4595
      %v5762 = vmul.f32 %v5532, %v4598
      %v5763 = vmul.f32 %v5533, %v4603
      %v5764 = vmul.f32 %v5534, %v4606
      %v5765 = vmul.f32 %v5535, %v4611
      %v5766 = vmul.f32 %v5536, %v4614
      %v5767 = vmul.f32 %v5537, %v4619
      %v5768 = vmul.f32 %v5538, %v4622
      %v5769 = vmul.f32 %v5539, %v4627
      %v5770 = vmul.f32 %v5540, %v4630
      %v5771 = vmul.f32 %v5541, %v4635
      %v5772 = vsel %vm1841, %v5697, 0.0
      %v5773 = vsel %vm1841, %v5698, 0.0
      %v5774 = vadd.f32 %v5772, %v5773
      %v5775 = vsel %vm1841, %v5699, 0.0
      %v5776 = vadd.f32 %v5774, %v5775
      %v5777 = vsel %vm1841, %v5700, 0.0
      %v5778 = vadd.f32 %v5776, %v5777
      %v5779 = vsel %vm1841, %v5701, 0.0
      %v5780 = vadd.f32 %v5778, %v5779
      %v5781 = vsel %vm1841, %v5702, 0.0
      %v5782 = vadd.f32 %v5780, %v5781
      %v5783 = vsel %vm1841, %v5703, 0.0
      %v5784 = vadd.f32 %v5782, %v5783
      %v5785 = vsel %vm1841, %v5704, 0.0
      %v5786 = vadd.f32 %v5784, %v5785
      %v5787 = vsel %vm1841, %v5705, 0.0
      %v5788 = vadd.f32 %v5786, %v5787
      %v5789 = vsel %vm1841, %v5706, 0.0
      %v5790 = vadd.f32 %v5788, %v5789
      %v5791 = vsel %vm1841, %v5707, 0.0
      %v5792 = vadd.f32 %v5790, %v5791
      %v5793 = vsel %vm1841, %v5708, 0.0
      %v5794 = vadd.f32 %v5792, %v5793
      %v5795 = vsel %vm1841, %v5709, 0.0
      %v5796 = vadd.f32 %v5794, %v5795
      %v5797 = vsel %vm1841, %v5710, 0.0
      %v5798 = vadd.f32 %v5796, %v5797
      %v5799 = vsel %vm1841, %v5711, 0.0
      %v5800 = vadd.f32 %v5798, %v5799
      %v5801 = vsel %vm1841, %v5712, 0.0
      %v5802 = vadd.f32 %v5800, %v5801
      %v5803 = vsel %vm1841, %v5713, 0.0
      %v5804 = vadd.f32 %v5802, %v5803
      %v5805 = vsel %vm1841, %v5714, 0.0
      %v5806 = vadd.f32 %v5804, %v5805
      %v5807 = vsel %vm1841, %v5715, 0.0
      %v5808 = vadd.f32 %v5806, %v5807
      %v5809 = vsel %vm1841, %v5716, 0.0
      %v5810 = vadd.f32 %v5808, %v5809
      %v5811 = vsel %vm1841, %v5717, 0.0
      %v5812 = vadd.f32 %v5810, %v5811
      %v5813 = vsel %vm1841, %v5718, 0.0
      %v5814 = vadd.f32 %v5812, %v5813
      %v5815 = vsel %vm1841, %v5719, 0.0
      %v5816 = vadd.f32 %v5814, %v5815
      %v5817 = vsel %vm1841, %v5720, 0.0
      %v5818 = vadd.f32 %v5816, %v5817
      %v5819 = vsel %vm1841, %v5721, 0.0
      %v5820 = vadd.f32 %v5818, %v5819
      %v5821 = vsel %vm1841, %v5722, 0.0
      %v5822 = vadd.f32 %v5820, %v5821
      %v5823 = vsel %vm1841, %v5723, 0.0
      %v5824 = vadd.f32 %v5822, %v5823
      %v5825 = vsel %vm1841, %v5724, 0.0
      %v5826 = vadd.f32 %v5824, %v5825
      %v5827 = vsel %vm1841, %v5725, 0.0
      %v5828 = vadd.f32 %v5826, %v5827
      %v5829 = vsel %vm1841, %v5726, 0.0
      %v5830 = vadd.f32 %v5828, %v5829
      %v5831 = vsel %vm1841, %v5727, 0.0
      %v5832 = vadd.f32 %v5830, %v5831
      %v5833 = vsel %vm1841, %v5728, 0.0
      %v5834 = vadd.f32 %v5832, %v5833
      %v5835 = vsel %vm1841, %v5729, 0.0
      %v5836 = vadd.f32 %v5834, %v5835
      %v5837 = vsel %vm1841, %v5730, 0.0
      %v5838 = vadd.f32 %v5836, %v5837
      %v5839 = vsel %vm1841, %v5731, 0.0
      %v5840 = vadd.f32 %v5838, %v5839
      %v5841 = vsel %vm1841, %v5732, 0.0
      %v5842 = vadd.f32 %v5840, %v5841
      %v5843 = vsel %vm1841, %v5733, 0.0
      %v5844 = vadd.f32 %v5842, %v5843
      %v5845 = vsel %vm1841, %v5734, 0.0
      %v5846 = vadd.f32 %v5844, %v5845
      %v5847 = vsel %vm1841, %v5735, 0.0
      %v5848 = vadd.f32 %v5846, %v5847
      %v5849 = vsel %vm1841, %v5736, 0.0
      %v5850 = vadd.f32 %v5848, %v5849
      %v5851 = vsel %vm1841, %v5737, 0.0
      %v5852 = vadd.f32 %v5850, %v5851
      %v5853 = vsel %vm1841, %v5738, 0.0
      %v5854 = vadd.f32 %v5852, %v5853
      %v5855 = vsel %vm1841, %v5739, 0.0
      %v5856 = vadd.f32 %v5854, %v5855
      %v5857 = vsel %vm1841, %v5740, 0.0
      %v5858 = vadd.f32 %v5856, %v5857
      %v5859 = vsel %vm1841, %v5741, 0.0
      %v5860 = vadd.f32 %v5858, %v5859
      %v5861 = vsel %vm1841, %v5742, 0.0
      %v5862 = vadd.f32 %v5860, %v5861
      %v5863 = vsel %vm1841, %v5743, 0.0
      %v5864 = vadd.f32 %v5862, %v5863
      %v5865 = vsel %vm1841, %v5744, 0.0
      %v5866 = vadd.f32 %v5864, %v5865
      %v5867 = vsel %vm1841, %v5745, 0.0
      %v5868 = vadd.f32 %v5866, %v5867
      %v5869 = vsel %vm1841, %v5746, 0.0
      %v5870 = vadd.f32 %v5868, %v5869
      %v5871 = vsel %vm1841, %v5747, 0.0
      %v5872 = vadd.f32 %v5870, %v5871
      %v5873 = vsel %vm1841, %v5748, 0.0
      %v5874 = vadd.f32 %v5872, %v5873
      %v5875 = vsel %vm1841, %v5749, 0.0
      %v5876 = vadd.f32 %v5874, %v5875
      %v5877 = vsel %vm1841, %v5750, 0.0
      %v5878 = vadd.f32 %v5876, %v5877
      %v5879 = vsel %vm1841, %v5751, 0.0
      %v5880 = vadd.f32 %v5878, %v5879
      %v5881 = vsel %vm1841, %v5752, 0.0
      %v5882 = vadd.f32 %v5880, %v5881
      %v5883 = vsel %vm1841, %v5753, 0.0
      %v5884 = vadd.f32 %v5882, %v5883
      %v5885 = vsel %vm1841, %v5754, 0.0
      %v5886 = vadd.f32 %v5884, %v5885
      %v5887 = vsel %vm1841, %v5755, 0.0
      %v5888 = vadd.f32 %v5886, %v5887
      %v5889 = vsel %vm1841, %v5756, 0.0
      %v5890 = vadd.f32 %v5888, %v5889
      %v5891 = vsel %vm1841, %v5757, 0.0
      %v5892 = vadd.f32 %v5890, %v5891
      %v5893 = vsel %vm1841, %v5758, 0.0
      %v5894 = vadd.f32 %v5892, %v5893
      %v5895 = vsel %vm1841, %v5759, 0.0
      %v5896 = vadd.f32 %v5894, %v5895
      %v5897 = vsel %vm1841, %v5760, 0.0
      %v5898 = vadd.f32 %v5896, %v5897
      %v5899 = vsel %vm1841, %v5761, 0.0
      %v5900 = vadd.f32 %v5898, %v5899
      %v5901 = vsel %vm1841, %v5762, 0.0
      %v5902 = vadd.f32 %v5900, %v5901
      %v5903 = vsel %vm1841, %v5763, 0.0
      %v5904 = vadd.f32 %v5902, %v5903
      %v5905 = vsel %vm1841, %v5764, 0.0
      %v5906 = vadd.f32 %v5904, %v5905
      %v5907 = vsel %vm1841, %v5765, 0.0
      %v5908 = vadd.f32 %v5906, %v5907
      %v5909 = vsel %vm1841, %v5766, 0.0
      %v5910 = vadd.f32 %v5908, %v5909
      %v5911 = vsel %vm1841, %v5767, 0.0
      %v5912 = vadd.f32 %v5910, %v5911
      %v5913 = vsel %vm1841, %v5768, 0.0
      %v5914 = vadd.f32 %v5912, %v5913
      %v5915 = vsel %vm1841, %v5769, 0.0
      %v5916 = vadd.f32 %v5914, %v5915
      %v5917 = vsel %vm1841, %v5770, 0.0
      %v5918 = vadd.f32 %v5916, %v5917
      %v5919 = vsel %vm1841, %v5771, 0.0
      %v5920 = vadd.f32 %v5918, %v5919
      %v5921 = vrot.slane %v5920, 4
      %v5922 = vadd.f32 %v5920, %v5921
      %v5923 = vrot.slane %v5922, 2
      %v5924 = vadd.f32 %v5922, %v5923
      %v5925 = vrot.slane %v5924, 1
      %v5926 = vadd.f32 %v5924, %v5925
      %5927 = vst.msk [vmem:[%s388] sm:$0xff] %vm1841, %v5696
      %5928 = vst.msk [vmem:[%s396] sm:$0xff] %vm1841, %v5926
      %s5929 = smul.u32 75, %s23
      %p5930 = scmp.lt.s32.totalorder %s22, 1
      %s5931 = scalar_select %p5930, %s22, 1
      %p5932 = scmp.lt.s32.totalorder %s5929, 149
      %s5933 = scalar_select %p5932, %s5929, 149
      %s5934 = smul.addr %s5931, 150
      %s5935 = sadd.s32 %s5933, %s5934
      %s5936 = smul.addr %s5935, 4
      %s5937 = scalar_lea.vmem %s4, %s5936
      %p5938 = scmp.lt.s32.totalorder %s22, 1
      %s5939 = scalar_select %p5938, %s22, 1
      %p5940 = scmp.lt.s32.totalorder %s23, 1
      %s5941 = scalar_select %p5940, %s23, 1
      %s5942 = smul.addr %s5939, 2
      %s5943 = sadd.s32 %s5941, %s5942
      %s5944 = smul.addr %s5943, 8
      %s5945 = scalar_lea.vmem %s5, %s5944
      %p5946 = scmp.lt.s32.totalorder %s22, 1
      %s5947 = scalar_select %p5946, %s22, 1
      %p5948 = scmp.lt.s32.totalorder %s23, 1
      %s5949 = scalar_select %p5948, %s23, 1
      %s5950 = smul.addr %s5947, 2
      %s5951 = sadd.s32 %s5949, %s5950
      %s5952 = smul.addr %s5951, 8
      %s5953 = scalar_lea.vmem %s6, %s5952
      // Predicated region
      $region37: #{double_conv_forward.4} parent=35 // pred_check
        %p5954 = pneg %p155
      $region38: #{double_conv_forward.4} parent=35 // pred_check_branch
        %5956 = sbr.rel (%p5954) target = $region40
      $region39: #{double_conv_forward.4} parent=35 // pred_region
        %s5957 = smul.u32 75, %s23
      $region40: #{double_conv_forward.4} parent=35 // pred_fallthru
        _
      // Predicated region
      $region41: #{double_conv_forward.4} parent=35 // pred_check
        %p5958 = pneg %p183
      $region42: #{double_conv_forward.4} parent=35 // pred_check_branch
        %5960 = sbr.rel (%p5958) target = $region44
      $region43: #{double_conv_forward.4} parent=35 // pred_region
        _
      $region44: #{double_conv_forward.4} parent=35 // pred_fallthru
        _
      // Predicated region
      $region45: #{double_conv_forward.4} parent=35 // pred_check
        %p5961 = pneg %p211
      $region46: #{double_conv_forward.4} parent=35 // pred_check_branch
        %5963 = sbr.rel (%p5961) target = $region48
      $region47: #{double_conv_forward.4} parent=35 // pred_region
        _
      $region48: #{double_conv_forward.4} parent=35 // pred_fallthru
        _
    $region36: #{double_conv_forward.4} parent=5 // pred_fallthru
      _
    %p5964 = scmp.le.s32.totalorder 2, %s13
    // Predicated region
    $region49: #{double_conv_forward.4} parent=5 // pred_check
      %p5965 = pneg %p5964
    $region50: #{double_conv_forward.4} parent=5 // pred_check_branch
      %5967 = sbr.rel (%p5965) target = $region52
    $region51: #{double_conv_forward.4} parent=5 // pred_region
      %s5968 = ssub.s32 %s13, 2
      // Predicated region
      $region53: #{double_conv_forward.4} parent=51 // pred_check
        %p5969 = pneg %p161
      $region54: #{double_conv_forward.4} parent=51 // pred_check_branch
        %5971 = sbr.rel (%p5969) target = $region56
      $region55: #{double_conv_forward.4} parent=51 // pred_region
        %s5972 = smul.u32 75, %s25
        %p5973 = scmp.lt.s32.totalorder %s24, 1
        %s5974 = scalar_select %p5973, %s24, 1
        %p5975 = scmp.lt.s32.totalorder %s5972, 149
        %s5976 = scalar_select %p5975, %s5972, 149
        %s5977 = smul.addr %s5974, 150
        %s5978 = sadd.s32 %s5976, %s5977
        %s5979 = smul.addr %s5978, 4
        %s5980 = scalar_lea.vmem %s4, %s5979
      $region56: #{double_conv_forward.4} parent=51 // pred_fallthru
        _
      // Predicated region
      $region57: #{double_conv_forward.4} parent=51 // pred_check
        %p5981 = pneg %p189
      $region58: #{double_conv_forward.4} parent=51 // pred_check_branch
        %5983 = sbr.rel (%p5981) target = $region60
      $region59: #{double_conv_forward.4} parent=51 // pred_region
        %p5984 = scmp.lt.s32.totalorder %s24, 1
        %s5985 = scalar_select %p5984, %s24, 1
        %p5986 = scmp.lt.s32.totalorder %s25, 1
        %s5987 = scalar_select %p5986, %s25, 1
        %s5988 = smul.addr %s5985, 2
        %s5989 = sadd.s32 %s5987, %s5988
        %s5990 = smul.addr %s5989, 8
        %s5991 = scalar_lea.vmem %s5, %s5990
      $region60: #{double_conv_forward.4} parent=51 // pred_fallthru
        _
      // Predicated region
      $region61: #{double_conv_forward.4} parent=51 // pred_check
        %p5992 = pneg %p217
      $region62: #{double_conv_forward.4} parent=51 // pred_check_branch
        %5994 = sbr.rel (%p5992) target = $region64
      $region63: #{double_conv_forward.4} parent=51 // pred_region
        %p5995 = scmp.lt.s32.totalorder %s24, 1
        %s5996 = scalar_select %p5995, %s24, 1
        %p5997 = scmp.lt.s32.totalorder %s25, 1
        %s5998 = scalar_select %p5997, %s25, 1
        %s5999 = smul.addr %s5996, 2
        %s6000 = sadd.s32 %s5998, %s5999
        %s6001 = smul.addr %s6000, 8
        %s6002 = scalar_lea.vmem %s6, %s6001
      $region64: #{double_conv_forward.4} parent=51 // pred_fallthru
        _
    $region52: #{double_conv_forward.4} parent=5 // pred_fallthru
      _
  $region6: #{double_conv_forward.4} parent=0 // loop_footer
    %s17 = sadd.s32 1, %s13
  $region7: #{double_conv_forward.4} parent=0 // loop_footer_branch
    %12 = sbr.rel target = $region3
  $region8: #{double_conv_forward.4} parent=0 // loop_exit
    _

// kernel: double_conv_forward.7
$region0: #{double_conv_forward.7}
  #allocation0 [shape = 'u32[]', space=smem, size = 0x4, offset = 0x4, fixed_abs, tag = 'smem constant byte address 0x4 - core index']
  #allocation1 [shape = 'u32[144,128]{1,0:T(1,128)}', space=vmem, size = 0x12000, scoped, tag = 'internal scratch']
  %s0 = inlined_call_operand.vmem [shape: bf16[150,128], index: 0, kind: input, shape index: {}]
  %s1 = inlined_call_operand.vmem [shape: f32[1,128], index: 1, kind: input, shape index: {}]
  %s2 = inlined_call_operand.vmem [shape: f32[1,128], index: 2, kind: input, shape index: {}]
  %s3 = inlined_call_operand.vmem [shape: f32[150,128], index: 3, kind: output, shape index: {}]
  %s4 = sld [smem:[#allocation0]]
  $region22: #{double_conv_forward.7} parent=0
    _
  %s6 = ssub.s32 1, %s4
  %s7 = scalar_select 0, %s6, %s4
  // Predicated region
  $region2: #{double_conv_forward.7} parent=0 // pred_check
    _
  $region3: #{double_conv_forward.7} parent=0 // pred_check_branch
    %9 = sbr.rel (0) target = $region5
  $region4: #{double_conv_forward.7} parent=0 // pred_region
    _
  $region5: #{double_conv_forward.7} parent=0 // pred_fallthru
    _
  // Predicated region
  $region6: #{double_conv_forward.7} parent=0 // pred_check
    _
  $region7: #{double_conv_forward.7} parent=0 // pred_check_branch
    %11 = sbr.rel (0) target = $region9
  $region8: #{double_conv_forward.7} parent=0 // pred_region
    _
  $region9: #{double_conv_forward.7} parent=0 // pred_fallthru
    _
  // Predicated region
  $region10: #{double_conv_forward.7} parent=0 // pred_check
    _
  $region11: #{double_conv_forward.7} parent=0 // pred_check_branch
    %13 = sbr.rel (0) target = $region13
  $region12: #{double_conv_forward.7} parent=0 // pred_region
    _
  $region13: #{double_conv_forward.7} parent=0 // pred_fallthru
    _
  %v14 = vld [vmem:[%s0] sm:$0xf]
  %v15 = vld [vmem:[%s0 + $0x4] sm:$0xf]
  %v16 = vld [vmem:[%s0 + $0x8] sm:$0xf]
  %v17 = vld [vmem:[%s0 + $0xc] sm:$0xf]
  %v18 = vld [vmem:[%s0 + $0x10] sm:$0xf]
  %v19 = vld [vmem:[%s0 + $0x14] sm:$0xf]
  %v20 = vld [vmem:[%s0 + $0x18] sm:$0xf]
  %v21 = vld [vmem:[%s0 + $0x1c] sm:$0xf]
  %v22 = vld [vmem:[%s0 + $0x20] sm:$0xf]
  %v23 = vld [vmem:[%s0 + $0x24] sm:$0xf]
  %v24 = vld [vmem:[%s0 + $0x28] sm:$0xf]
  %v25 = vld [vmem:[%s0 + $0x2c] sm:$0xf]
  %v26 = vld [vmem:[%s0 + $0x30] sm:$0xf]
  %v27 = vld [vmem:[%s0 + $0x34] sm:$0xf]
  %v28 = vld [vmem:[%s0 + $0x38] sm:$0xf]
  %v29 = vld [vmem:[%s0 + $0x3c] sm:$0xf]
  %v30 = vld [vmem:[%s0 + $0x40] sm:$0xf]
  %v31 = vld [vmem:[%s0 + $0x44] sm:$0xf]
  %v32 = vld [vmem:[%s0 + $0x48] sm:$0x7]
  %v33 = vunpack.c.l.bf16 %v14
  %v34 = vunpack.c.l.bf16 %v15
  %v35 = vunpack.c.l.bf16 %v16
  %v36 = vunpack.c.l.bf16 %v17
  %v37 = vunpack.c.l.bf16 %v18
  %v38 = vunpack.c.l.bf16 %v19
  %v39 = vunpack.c.l.bf16 %v20
  %v40 = vunpack.c.l.bf16 %v21
  %v41 = vunpack.c.l.bf16 %v22
  %v42 = vunpack.c.l.bf16 %v23
  %v43 = vunpack.c.l.bf16 %v24
  %v44 = vunpack.c.l.bf16 %v25
  %v45 = vunpack.c.l.bf16 %v26
  %v46 = vunpack.c.l.bf16 %v27
  %v47 = vunpack.c.l.bf16 %v28
  %v48 = vunpack.c.l.bf16 %v29
  %v49 = vunpack.c.l.bf16 %v30
  %v50 = vunpack.c.l.bf16 %v31
  %v51 = vunpack.c.l.bf16 %v32
  %v52 = vld [vmem:[%s1] sm:$0x1]
  %v54 = vlaneseq
  %v55 = vshrl.u32 %v54, 7
  %v56 = vsub.s32 0, %v55
  %v57 = vrot.slane %v52, %v56
  %v59 = vmul.f32 %v33, %v57
  %v60 = vmul.f32 %v34, %v57
  %v61 = vmul.f32 %v35, %v57
  %v62 = vmul.f32 %v36, %v57
  %v63 = vmul.f32 %v37, %v57
  %v64 = vmul.f32 %v38, %v57
  %v65 = vmul.f32 %v39, %v57
  %v66 = vmul.f32 %v40, %v57
  %v67 = vmul.f32 %v41, %v57
  %v68 = vmul.f32 %v42, %v57
  %v69 = vmul.f32 %v43, %v57
  %v70 = vmul.f32 %v44, %v57
  %v71 = vmul.f32 %v45, %v57
  %v72 = vmul.f32 %v46, %v57
  %v73 = vmul.f32 %v47, %v57
  %v74 = vmul.f32 %v48, %v57
  %v75 = vmul.f32 %v49, %v57
  %v76 = vmul.f32 %v50, %v57
  %v77 = vmul.f32 %v51, %v57
  %v78 = vld [vmem:[%s2] sm:$0x1]
  %v80 = vlaneseq
  %v81 = vshrl.u32 %v80, 7
  %v82 = vsub.s32 0, %v81
  %v83 = vrot.slane %v78, %v82
  %v85 = vadd.f32 %v59, %v83
  %v86 = vadd.f32 %v60, %v83
  %v87 = vadd.f32 %v61, %v83
  %v88 = vadd.f32 %v62, %v83
  %v89 = vadd.f32 %v63, %v83
  %v90 = vadd.f32 %v64, %v83
  %v91 = vadd.f32 %v65, %v83
  %v92 = vadd.f32 %v66, %v83
  %v93 = vadd.f32 %v67, %v83
  %v94 = vadd.f32 %v68, %v83
  %v95 = vadd.f32 %v69, %v83
  %v96 = vadd.f32 %v70, %v83
  %v97 = vadd.f32 %v71, %v83
  %v98 = vadd.f32 %v72, %v83
  %v99 = vadd.f32 %v73, %v83
  %v100 = vadd.f32 %v74, %v83
  %v101 = vadd.f32 %v75, %v83
  %v102 = vadd.f32 %v76, %v83
  %v103 = vadd.f32 %v77, %v83
  %v104 = vmax.f32 %v85, 0.0
  %v105 = vmax.f32 %v86, 0.0
  %v106 = vmax.f32 %v87, 0.0
  %v107 = vmax.f32 %v88, 0.0
  %v108 = vmax.f32 %v89, 0.0
  %v109 = vmax.f32 %v90, 0.0
  %v110 = vmax.f32 %v91, 0.0
  %v111 = vmax.f32 %v92, 0.0
  %v112 = vmax.f32 %v93, 0.0
  %v113 = vmax.f32 %v94, 0.0
  %v114 = vmax.f32 %v95, 0.0
  %v115 = vmax.f32 %v96, 0.0
  %v116 = vmax.f32 %v97, 0.0
  %v117 = vmax.f32 %v98, 0.0
  %v118 = vmax.f32 %v99, 0.0
  %v119 = vmax.f32 %v100, 0.0
  %v120 = vmax.f32 %v101, 0.0
  %v121 = vmax.f32 %v102, 0.0
  %v122 = vmax.f32 %v103, 0.0
  %123 = vst [vmem:[%s3] sm:$0xff] %v104
  %124 = vst [vmem:[%s3 + $0x8] sm:$0xff] %v105
  %125 = vst [vmem:[%s3 + $0x10] sm:$0xff] %v106
  %126 = vst [vmem:[%s3 + $0x18] sm:$0xff] %v107
  %127 = vst [vmem:[%s3 + $0x20] sm:$0xff] %v108
  %128 = vst [vmem:[%s3 + $0x28] sm:$0xff] %v109
  %129 = vst [vmem:[%s3 + $0x30] sm:$0xff] %v110
  %130 = vst [vmem:[%s3 + $0x38] sm:$0xff] %v111
  %131 = vst [vmem:[%s3 + $0x40] sm:$0xff] %v112
  %132 = vst [vmem:[%s3 + $0x48] sm:$0xff] %v113
  %133 = vst [vmem:[%s3 + $0x50] sm:$0xff] %v114
  %134 = vst [vmem:[%s3 + $0x58] sm:$0xff] %v115
  %135 = vst [vmem:[%s3 + $0x60] sm:$0xff] %v116
  %136 = vst [vmem:[%s3 + $0x68] sm:$0xff] %v117
  %137 = vst [vmem:[%s3 + $0x70] sm:$0xff] %v118
  %138 = vst [vmem:[%s3 + $0x78] sm:$0xff] %v119
  %139 = vst [vmem:[%s3 + $0x80] sm:$0xff] %v120
  %140 = vst [vmem:[%s3 + $0x88] sm:$0xff] %v121
  %141 = vst [vmem:[%s3 + $0x90] sm:$0x3f] %v122
  // Predicated region
  $region14: #{double_conv_forward.7} parent=0 // pred_check
    _
  $region15: #{double_conv_forward.7} parent=0 // pred_check_branch
    %143 = sbr.rel (0) target = $region17
  $region16: #{double_conv_forward.7} parent=0 // pred_region
    _
  $region17: #{double_conv_forward.7} parent=0 // pred_fallthru
    _
  // Predicated region
  $region18: #{double_conv_forward.7} parent=0 // pred_check
    _
  $region19: #{double_conv_forward.7} parent=0 // pred_check_branch
    %145 = sbr.rel (0) target = $region21
  $region20: #{double_conv_forward.7} parent=0 // pred_region
    _
  $region21: #{double_conv_forward.7} parent=0 // pred_fallthru
    _

// kernel: double_conv_forward.6
$region0: #{double_conv_forward.6}
  #allocation0 [shape = 'u32[]', space=smem, size = 0x4, offset = 0x4, fixed_abs, tag = 'smem constant byte address 0x4 - core index']
  #allocation1 [shape = 'u32[144,128]{1,0:T(1,128)}', space=vmem, size = 0x12000, scoped, tag = 'internal scratch']
  %s0 = inlined_call_operand.vmem [shape: bf16[2,1800,8], index: 0, kind: input, shape index: {}, may-alias: {0,1}]
  %s1 = inlined_call_operand.vmem [shape: bf16[2,1800,8], index: 1, kind: input, shape index: {}, may-alias: {0,1}]
  %s2 = inlined_call_operand.vmem [shape: bf16[216,8], index: 2, kind: input, shape index: {}]
  %s3 = inlined_call_operand.vmem [shape: f32[1200,1], index: 3, kind: input, shape index: {}]
  %s4 = inlined_call_operand.vmem [shape: bf16[2,1200,8], index: 4, kind: output, shape index: {0}]
  %s5 = inlined_call_operand.vmem [shape: f32[2,16,8], index: 5, kind: output, shape index: {1}]
  %s6 = inlined_call_operand.vmem [shape: f32[2,16,8], index: 6, kind: output, shape index: {2}]
  %7 = xla_tuple %s4, %s5, %s6
  %s8 = sld [smem:[#allocation0]]
  $region65: #{double_conv_forward.6} parent=0
    _
  %s10 = ssub.s32 1, %s8
  %s11 = scalar_select 0, %s10, %s8
  loop: start=0, step=1, limit=6
  $region2: #{double_conv_forward.6} parent=0 // loop_pre_header
    _
  $region3: #{double_conv_forward.6} parent=0 // loop_header
    %s13 = sphi 0, %s17
    %p14 = scmp.ge.s32.totalorder %s13, 6
    %s20 = sphi 0, %s32
    %s21 = sphi 0, %s28
    %s22 = sphi 0, %s20
    %s23 = sphi 0, %s21
    %s24 = sphi 0, %s22
    %s25 = sphi 0, %s23
    %s37 = sphi 0, %s39
    %s40 = sphi 0, %s37
    %s41 = sphi 0, %s40
    %s57 = sphi 0, %s41
    %s67 = sphi 0, %s69
    %s70 = sphi 0, %s67
    %s71 = sphi 0, %s70
    %s87 = sphi 0, %s71
    %s91 = sphi 0, %s91
    %s93 = sphi 0, %s91
    %s94 = sphi 0, %s93
    %s108 = sphi 0, %s94
    %s114 = sphi 0, %s116
    %s117 = sphi 0, %s114
    %s118 = sphi 0, %s117
    %s134 = sphi 0, %s118
    %s142 = sphi 0, %s144
    %s145 = sphi 0, %s142
    %s146 = sphi 0, %s145
    %s162 = sphi 0, %s146
    %s170 = sphi 0, %s172
    %s173 = sphi 0, %s170
    %s174 = sphi 0, %s173
    %s190 = sphi 0, %s174
    %s198 = sphi 0, %s200
    %s201 = sphi 0, %s198
    %s202 = sphi 0, %s201
    %s218 = sphi 0, %s202
  $region4: #{double_conv_forward.6} parent=0 // loop_header_branch
    %16 = sbr.rel (%p14) target = $region8
  $region5: #{double_conv_forward.6} parent=0 // loop_body
    %s18 = ssub.s32 %s13, 1
    %s19 = ssub.s32 %s13, 2
    %s26 = sadd.s32 1, %s21
    %p27 = scmp.ge.s32.totalorder %s26, 2
    %s28 = scalar_select %p27, 0, %s26
    %s29 = sadd.s32 1, %s20
    %s30 = scalar_select %p27, %s29, %s20
    %p31 = scmp.ge.s32.totalorder %s30, 2
    %s32 = scalar_select %p31, 0, %s30
    %s33 = ssub.s32 %s20, %s32
    %s34 = ssub.s32 %s21, %s28
    %s35 = sor.u32 %s33, %s34
    %p36 = scmp.eq.s32.totalorder %s35, 0
    %s38 = sadd.s32 %s37, 1
    %s39 = scalar_select %p36, %s37, %s38
    %p42 = pneg %p36
    %p43 = scmp.eq.s32.totalorder %s13, 3
    %p44 = por %p42, %p43
    %p45 = scmp.ne.s32.totalorder %s37, %s40
    %p46 = scmp.eq.s32.totalorder %s13, 0
    %p47 = por %p45, %p46
    %p48 = scmp.ne.s32.totalorder %s37, %s40
    %p49 = scmp.eq.s32.totalorder %s18, 3
    %p50 = por %p48, %p49
    %p51 = scmp.ne.s32.totalorder %s40, %s41
    %p52 = scmp.eq.s32.totalorder %s18, 0
    %p53 = por %p51, %p52
    %p54 = scmp.ne.s32.totalorder %s40, %s41
    %p55 = scmp.eq.s32.totalorder %s19, 3
    %p56 = por %p54, %p55
    %p58 = scmp.ne.s32.totalorder %s41, %s57
    %p59 = scmp.eq.s32.totalorder %s19, 0
    %p60 = por %p58, %p59
    %s61 = sadd.s32 %s21, 1
    %s62 = sadd.s32 %s28, 1
    %s63 = ssub.s32 %s20, %s32
    %s64 = ssub.s32 %s61, %s62
    %s65 = sor.u32 %s63, %s64
    %p66 = scmp.eq.s32.totalorder %s65, 0
    %s68 = sadd.s32 %s67, 1
    %s69 = scalar_select %p66, %s67, %s68
    %p72 = pneg %p66
    %p73 = scmp.eq.s32.totalorder %s13, 3
    %p74 = por %p72, %p73
    %p75 = scmp.ne.s32.totalorder %s67, %s70
    %p76 = scmp.eq.s32.totalorder %s13, 0
    %p77 = por %p75, %p76
    %p78 = scmp.ne.s32.totalorder %s67, %s70
    %p79 = scmp.eq.s32.totalorder %s18, 3
    %p80 = por %p78, %p79
    %p81 = scmp.ne.s32.totalorder %s70, %s71
    %p82 = scmp.eq.s32.totalorder %s18, 0
    %p83 = por %p81, %p82
    %p84 = scmp.ne.s32.totalorder %s70, %s71
    %p85 = scmp.eq.s32.totalorder %s19, 3
    %p86 = por %p84, %p85
    %p88 = scmp.ne.s32.totalorder %s71, %s87
    %p89 = scmp.eq.s32.totalorder %s19, 0
    %p90 = por %p88, %p89
    %s92 = sadd.s32 %s91, 1
    %p95 = scmp.eq.s32.totalorder %s13, 3
    %p96 = scmp.ne.s32.totalorder %s91, %s93
    %p97 = scmp.eq.s32.totalorder %s13, 0
    %p98 = por %p96, %p97
    %p99 = scmp.ne.s32.totalorder %s91, %s93
    %p100 = scmp.eq.s32.totalorder %s18, 3
    %p101 = por %p99, %p100
    %p102 = scmp.ne.s32.totalorder %s93, %s94
    %p103 = scmp.eq.s32.totalorder %s18, 0
    %p104 = por %p102, %p103
    %p105 = scmp.ne.s32.totalorder %s93, %s94
    %p106 = scmp.eq.s32.totalorder %s19, 3
    %p107 = por %p105, %p106
    %p109 = scmp.ne.s32.totalorder %s94, %s108
    %p110 = scmp.eq.s32.totalorder %s19, 0
    %p111 = por %p109, %p110
    %s112 = ssub.s32 %s21, %s28
    %p113 = scmp.eq.s32.totalorder %s112, 0
    %s115 = sadd.s32 %s114, 1
    %s116 = scalar_select %p113, %s114, %s115
    %p119 = pneg %p113
    %p120 = scmp.eq.s32.totalorder %s13, 3
    %p121 = por %p119, %p120
    %p122 = scmp.ne.s32.totalorder %s114, %s117
    %p123 = scmp.eq.s32.totalorder %s13, 0
    %p124 = por %p122, %p123
    %p125 = scmp.ne.s32.totalorder %s114, %s117
    %p126 = scmp.eq.s32.totalorder %s18, 3
    %p127 = por %p125, %p126
    %p128 = scmp.ne.s32.totalorder %s117, %s118
    %p129 = scmp.eq.s32.totalorder %s18, 0
    %p130 = por %p128, %p129
    %p131 = scmp.ne.s32.totalorder %s117, %s118
    %p132 = scmp.eq.s32.totalorder %s19, 3
    %p133 = por %p131, %p132
    %p135 = scmp.ne.s32.totalorder %s118, %s134
    %p136 = scmp.eq.s32.totalorder %s19, 0
    %p137 = por %p135, %p136
    %s138 = ssub.s32 %s20, %s32
    %s139 = ssub.s32 %s21, %s28
    %s140 = sor.u32 %s138, %s139
    %p141 = scmp.eq.s32.totalorder %s140, 0
    %s143 = sadd.s32 %s142, 1
    %s144 = scalar_select %p141, %s142, %s143
    %p147 = pneg %p141
    %p148 = scmp.eq.s32.totalorder %s13, 3
    %p149 = por %p147, %p148
    %p150 = scmp.ne.s32.totalorder %s142, %s145
    %p151 = scmp.eq.s32.totalorder %s13, 0
    %p152 = por %p150, %p151
    %p153 = scmp.ne.s32.totalorder %s142, %s145
    %p154 = scmp.eq.s32.totalorder %s18, 3
    %p155 = por %p153, %p154
    %p156 = scmp.ne.s32.totalorder %s145, %s146
    %p157 = scmp.eq.s32.totalorder %s18, 0
    %p158 = por %p156, %p157
    %p159 = scmp.ne.s32.totalorder %s145, %s146
    %p160 = scmp.eq.s32.totalorder %s19, 3
    %p161 = por %p159, %p160
    %p163 = scmp.ne.s32.totalorder %s146, %s162
    %p164 = scmp.eq.s32.totalorder %s19, 0
    %p165 = por %p163, %p164
    %s166 = ssub.s32 %s20, %s32
    %s167 = ssub.s32 %s21, %s28
    %s168 = sor.u32 %s166, %s167
    %p169 = scmp.eq.s32.totalorder %s168, 0
    %s171 = sadd.s32 %s170, 1
    %s172 = scalar_select %p169, %s170, %s171
    %p175 = pneg %p169
    %p176 = scmp.eq.s32.totalorder %s13, 3
    %p177 = por %p175, %p176
    %p178 = scmp.ne.s32.totalorder %s170, %s173
    %p179 = scmp.eq.s32.totalorder %s13, 0
    %p180 = por %p178, %p179
    %p181 = scmp.ne.s32.totalorder %s170, %s173
    %p182 = scmp.eq.s32.totalorder %s18, 3
    %p183 = por %p181, %p182
    %p184 = scmp.ne.s32.totalorder %s173, %s174
    %p185 = scmp.eq.s32.totalorder %s18, 0
    %p186 = por %p184, %p185
    %p187 = scmp.ne.s32.totalorder %s173, %s174
    %p188 = scmp.eq.s32.totalorder %s19, 3
    %p189 = por %p187, %p188
    %p191 = scmp.ne.s32.totalorder %s174, %s190
    %p192 = scmp.eq.s32.totalorder %s19, 0
    %p193 = por %p191, %p192
    %s194 = ssub.s32 %s20, %s32
    %s195 = ssub.s32 %s21, %s28
    %s196 = sor.u32 %s194, %s195
    %p197 = scmp.eq.s32.totalorder %s196, 0
    %s199 = sadd.s32 %s198, 1
    %s200 = scalar_select %p197, %s198, %s199
    %p203 = pneg %p197
    %p204 = scmp.eq.s32.totalorder %s13, 3
    %p205 = por %p203, %p204
    %p206 = scmp.ne.s32.totalorder %s198, %s201
    %p207 = scmp.eq.s32.totalorder %s13, 0
    %p208 = por %p206, %p207
    %p209 = scmp.ne.s32.totalorder %s198, %s201
    %p210 = scmp.eq.s32.totalorder %s18, 3
    %p211 = por %p209, %p210
    %p212 = scmp.ne.s32.totalorder %s201, %s202
    %p213 = scmp.eq.s32.totalorder %s18, 0
    %p214 = por %p212, %p213
    %p215 = scmp.ne.s32.totalorder %s201, %s202
    %p216 = scmp.eq.s32.totalorder %s19, 3
    %p217 = por %p215, %p216
    %p219 = scmp.ne.s32.totalorder %s202, %s218
    %p220 = scmp.eq.s32.totalorder %s19, 0
    %p221 = por %p219, %p220
    %p222 = scmp.le.s32.totalorder 1, %s13
    %p223 = scmp.lt.s32.totalorder %s13, 5
    %p224 = pnand %p222, %p223
    %p225 = pneg %p224
    // Predicated region
    $region9: #{double_conv_forward.6} parent=5 // pred_check
      _
    $region10: #{double_conv_forward.6} parent=5 // pred_check_branch
      %227 = sbr.rel (%p224) target = $region12
    $region11: #{double_conv_forward.6} parent=5 // pred_region
      %s228 = ssub.s32 %s13, 1
      // Predicated region
      $region13: #{double_conv_forward.6} parent=11 // pred_check
        %p229 = pneg %p104
      $region14: #{double_conv_forward.6} parent=11 // pred_check_branch
        %231 = sbr.rel (%p229) target = $region16
      $region15: #{double_conv_forward.6} parent=11 // pred_region
        _
      $region16: #{double_conv_forward.6} parent=11 // pred_fallthru
        _
    $region12: #{double_conv_forward.6} parent=5 // pred_fallthru
      _
    %p232 = scmp.lt.s32.totalorder %s13, 4
    // Predicated region
    $region17: #{double_conv_forward.6} parent=5 // pred_check
      %p233 = pneg %p232
    $region18: #{double_conv_forward.6} parent=5 // pred_check_branch
      %235 = sbr.rel (%p233) target = $region20
    $region19: #{double_conv_forward.6} parent=5 // pred_region
      // Predicated region
      $region21: #{double_conv_forward.6} parent=19 // pred_check
        %p236 = pneg %p47
      $region22: #{double_conv_forward.6} parent=19 // pred_check_branch
        %238 = sbr.rel (%p236) target = $region24
      $region23: #{double_conv_forward.6} parent=19 // pred_region
        %s239 = smul.u32 75, %s21
        %p240 = scmp.lt.s32.totalorder %s20, 1
        %s241 = scalar_select %p240, %s20, 1
        %p242 = scmp.lt.s32.totalorder %s239, 224
        %s243 = scalar_select %p242, %s239, 224
        %s244 = smul.addr %s241, 225
        %s245 = sadd.s32 %s243, %s244
        %s246 = smul.addr %s245, 4
        %s247 = scalar_lea.vmem %s0, %s246
        %s248 = smul.u32 75, %s21
      $region24: #{double_conv_forward.6} parent=19 // pred_fallthru
        _
      // Predicated region
      $region25: #{double_conv_forward.6} parent=19 // pred_check
        %p249 = pneg %p77
      $region26: #{double_conv_forward.6} parent=19 // pred_check_branch
        %251 = sbr.rel (%p249) target = $region28
      $region27: #{double_conv_forward.6} parent=19 // pred_region
        %s252 = sadd.s32 %s21, 1
        %s253 = smul.u32 75, %s252
        %p254 = scmp.lt.s32.totalorder %s20, 1
        %s255 = scalar_select %p254, %s20, 1
        %p256 = scmp.lt.s32.totalorder %s253, 224
        %s257 = scalar_select %p256, %s253, 224
        %s258 = smul.addr %s255, 225
        %s259 = sadd.s32 %s257, %s258
        %s260 = smul.addr %s259, 4
        %s261 = scalar_lea.vmem %s1, %s260
        %s262 = sadd.s32 %s21, 1
        %s263 = smul.u32 75, %s262
      $region28: #{double_conv_forward.6} parent=19 // pred_fallthru
        _
      // Predicated region
      $region29: #{double_conv_forward.6} parent=19 // pred_check
        %p264 = pneg %p124
      $region30: #{double_conv_forward.6} parent=19 // pred_check_branch
        %266 = sbr.rel (%p264) target = $region32
      $region31: #{double_conv_forward.6} parent=19 // pred_region
        %s267 = smul.u32 75, %s21
        %p268 = scmp.lt.s32.totalorder %s267, 149
        %s269 = scalar_select %p268, %s267, 149
        %s270 = smul.addr %s269, 8
        %s271 = scalar_lea.vmem %s3, %s270
        %s272 = smul.u32 75, %s21
      $region32: #{double_conv_forward.6} parent=19 // pred_fallthru
        _
    $region20: #{double_conv_forward.6} parent=5 // pred_fallthru
      _
    %p273 = scmp.le.s32.totalorder 1, %s13
    %p274 = scmp.lt.s32.totalorder %s13, 5
    %p275 = pnand %p273, %p274
    %p276 = pneg %p275
    // Predicated region
    $region33: #{double_conv_forward.6} parent=5 // pred_check
      _
    $region34: #{double_conv_forward.6} parent=5 // pred_check_branch
      %278 = sbr.rel (%p275) target = $region36
    $region35: #{double_conv_forward.6} parent=5 // pred_region
      %s279 = ssub.s32 %s13, 1
      %s280 = smul.u32 75, %s23
      %p281 = scmp.lt.s32.totalorder %s22, 1
      %s282 = scalar_select %p281, %s22, 1
      %p283 = scmp.lt.s32.totalorder %s280, 224
      %s284 = scalar_select %p283, %s280, 224
      %s285 = smul.addr %s282, 225
      %s286 = sadd.s32 %s284, %s285
      %s287 = smul.addr %s286, 4
      %s288 = scalar_lea.vmem %s0, %s287
      %p289 = pneg %p53
      %p290 = pneg %p50
      %s291 = sadd.s32 %s23, 1
      %s292 = smul.u32 75, %s291
      %p293 = scmp.lt.s32.totalorder %s22, 1
      %s294 = scalar_select %p293, %s22, 1
      %p295 = scmp.lt.s32.totalorder %s292, 224
      %s296 = scalar_select %p295, %s292, 224
      %s297 = smul.addr %s294, 225
      %s298 = sadd.s32 %s296, %s297
      %s299 = smul.addr %s298, 4
      %s300 = scalar_lea.vmem %s1, %s299
      %p301 = pneg %p83
      %p302 = pneg %p80
      %p303 = pneg %p104
      %p304 = pneg %p101
      %s305 = smul.u32 75, %s23
      %p306 = scmp.lt.s32.totalorder %s305, 149
      %s307 = scalar_select %p306, %s305, 149
      %s308 = smul.addr %s307, 8
      %s309 = scalar_lea.vmem %s3, %s308
      %p310 = pneg %p130
      %p311 = pneg %p127
      %p312 = pneg %p158
      %p313 = pneg %p155
      %s314 = smul.u32 75, %s23
      %p315 = scmp.lt.s32.totalorder %s22, 1
      %s316 = scalar_select %p315, %s22, 1
      %p317 = scmp.lt.s32.totalorder %s314, 149
      %s318 = scalar_select %p317, %s314, 149
      %s319 = smul.addr %s316, 150
      %s320 = sadd.s32 %s318, %s319
      %s321 = smul.addr %s320, 4
      %s322 = scalar_lea.vmem %s4, %s321
      %p323 = pneg %p186
      %p324 = pneg %p183
      %p325 = scmp.lt.s32.totalorder %s22, 1
      %s326 = scalar_select %p325, %s22, 1
      %p327 = scmp.lt.s32.totalorder %s23, 1
      %s328 = scalar_select %p327, %s23, 1
      %s329 = smul.addr %s326, 2
      %s330 = sadd.s32 %s328, %s329
      %s331 = smul.addr %s330, 8
      %s332 = scalar_lea.vmem %s5, %s331
      %p333 = pneg %p214
      %p334 = pneg %p211
      %p335 = scmp.lt.s32.totalorder %s22, 1
      %s336 = scalar_select %p335, %s22, 1
      %p337 = scmp.lt.s32.totalorder %s23, 1
      %s338 = scalar_select %p337, %s23, 1
      %s339 = smul.addr %s336, 2
      %s340 = sadd.s32 %s338, %s339
      %s341 = smul.addr %s340, 8
      %s342 = scalar_lea.vmem %s6, %s341
      %s343 = smul.u32 75, %s23
      %p344 = scmp.lt.s32.totalorder %s22, 1
      %s345 = scalar_select %p344, %s22, 1
      %p346 = scmp.lt.s32.totalorder %s343, 224
      %s347 = scalar_select %p346, %s343, 224
      %s348 = smul.addr %s345, 225
      %s349 = sadd.s32 %s347, %s348
      %s350 = smul.addr %s349, 4
      %s351 = scalar_lea.vmem %s0, %s350
      %s352 = smul.u32 75, %s23
      %s353 = sadd.s32 %s23, 1
      %s354 = smul.u32 75, %s353
      %p355 = scmp.lt.s32.totalorder %s22, 1
      %s356 = scalar_select %p355, %s22, 1
      %p357 = scmp.lt.s32.totalorder %s354, 224
      %s358 = scalar_select %p357, %s354, 224
      %s359 = smul.addr %s356, 225
      %s360 = sadd.s32 %s358, %s359
      %s361 = smul.addr %s360, 4
      %s362 = scalar_lea.vmem %s1, %s361
      %s363 = sadd.s32 %s23, 1
      %s364 = smul.u32 75, %s363
      %s365 = smul.u32 75, %s23
      %p366 = scmp.lt.s32.totalorder %s365, 149
      %s367 = scalar_select %p366, %s365, 149
      %s368 = smul.addr %s367, 8
      %s369 = scalar_lea.vmem %s3, %s368
      %s370 = smul.u32 75, %s23
      %s371 = smul.u32 75, %s23
      %p372 = scmp.lt.s32.totalorder %s22, 1
      %s373 = scalar_select %p372, %s22, 1
      %p374 = scmp.lt.s32.totalorder %s371, 149
      %s375 = scalar_select %p374, %s371, 149
      %s376 = smul.addr %s373, 150
      %s377 = sadd.s32 %s375, %s376
      %s378 = smul.addr %s377, 4
      %s379 = scalar_lea.vmem %s4, %s378
      %s380 = smul.u32 75, %s23
      %p381 = scmp.lt.s32.totalorder %s22, 1
      %s382 = scalar_select %p381, %s22, 1
      %p383 = scmp.lt.s32.totalorder %s23, 1
      %s384 = scalar_select %p383, %s23, 1
      %s385 = smul.addr %s382, 2
      %s386 = sadd.s32 %s384, %s385
      %s387 = smul.addr %s386, 8
      %s388 = scalar_lea.vmem %s5, %s387
      %p389 = scmp.lt.s32.totalorder %s22, 1
      %s390 = scalar_select %p389, %s22, 1
      %p391 = scmp.lt.s32.totalorder %s23, 1
      %s392 = scalar_select %p391, %s23, 1
      %s393 = smul.addr %s390, 2
      %s394 = sadd.s32 %s392, %s393
      %s395 = smul.addr %s394, 8
      %s396 = scalar_lea.vmem %s6, %s395
      %v398 = vld [vmem:[%s351] sm:$0xf]
      %v399 = vld [vmem:[%s351 + $0x4] sm:$0xf]
      %v400 = vld [vmem:[%s351 + $0x8] sm:$0xf]
      %v401 = vld [vmem:[%s351 + $0xc] sm:$0xf]
      %v402 = vld [vmem:[%s351 + $0x10] sm:$0xf]
      %v403 = vld [vmem:[%s351 + $0x14] sm:$0xf]
      %v404 = vld [vmem:[%s351 + $0x18] sm:$0xf]
      %v405 = vld [vmem:[%s351 + $0x1c] sm:$0xf]
      %v406 = vld [vmem:[%s351 + $0x20] sm:$0xf]
      %v407 = vld [vmem:[%s351 + $0x24] sm:$0xf]
      %v408 = vld [vmem:[%s351 + $0x28] sm:$0xf]
      %v409 = vld [vmem:[%s351 + $0x2c] sm:$0xf]
      %v410 = vld [vmem:[%s351 + $0x30] sm:$0xf]
      %v411 = vld [vmem:[%s351 + $0x34] sm:$0xf]
      %v412 = vld [vmem:[%s351 + $0x38] sm:$0xf]
      %v413 = vld [vmem:[%s351 + $0x3c] sm:$0xf]
      %v414 = vld [vmem:[%s351 + $0x40] sm:$0xf]
      %v415 = vld [vmem:[%s351 + $0x44] sm:$0xf]
      %v416 = vld [vmem:[%s351 + $0x48] sm:$0xf]
      %v417 = vld [vmem:[%s351 + $0x4c] sm:$0xf]
      %v418 = vld [vmem:[%s351 + $0x50] sm:$0xf]
      %v419 = vld [vmem:[%s351 + $0x54] sm:$0xf]
      %v420 = vld [vmem:[%s351 + $0x58] sm:$0xf]
      %v421 = vld [vmem:[%s351 + $0x5c] sm:$0xf]
      %v422 = vld [vmem:[%s351 + $0x60] sm:$0xf]
      %v423 = vld [vmem:[%s351 + $0x64] sm:$0xf]
      %v424 = vld [vmem:[%s351 + $0x68] sm:$0xf]
      %v425 = vld [vmem:[%s351 + $0x6c] sm:$0xf]
      %v426 = vld [vmem:[%s351 + $0x70] sm:$0xf]
      %v427 = vld [vmem:[%s351 + $0x74] sm:$0xf]
      %v428 = vld [vmem:[%s351 + $0x78] sm:$0xf]
      %v429 = vld [vmem:[%s351 + $0x7c] sm:$0xf]
      %v430 = vld [vmem:[%s351 + $0x80] sm:$0xf]
      %v431 = vld [vmem:[%s351 + $0x84] sm:$0xf]
      %v432 = vld [vmem:[%s351 + $0x88] sm:$0xf]
      %v433 = vld [vmem:[%s351 + $0x8c] sm:$0xf]
      %v434 = vld [vmem:[%s351 + $0x90] sm:$0xf]
      %v435 = vld [vmem:[%s351 + $0x94] sm:$0xf]
      %v436 = vld [vmem:[%s351 + $0x98] sm:$0xf]
      %v437 = vld [vmem:[%s351 + $0x9c] sm:$0xf]
      %v438 = vld [vmem:[%s351 + $0xa0] sm:$0xf]
      %v439 = vld [vmem:[%s351 + $0xa4] sm:$0xf]
      %v440 = vld [vmem:[%s351 + $0xa8] sm:$0xf]
      %v441 = vld [vmem:[%s351 + $0xac] sm:$0xf]
      %v442 = vld [vmem:[%s351 + $0xb0] sm:$0xf]
      %v443 = vld [vmem:[%s351 + $0xb4] sm:$0xf]
      %v444 = vld [vmem:[%s351 + $0xb8] sm:$0xf]
      %v445 = vld [vmem:[%s351 + $0xbc] sm:$0xf]
      %v446 = vld [vmem:[%s351 + $0xc0] sm:$0xf]
      %v447 = vld [vmem:[%s351 + $0xc4] sm:$0xf]
      %v448 = vld [vmem:[%s351 + $0xc8] sm:$0xf]
      %v449 = vld [vmem:[%s351 + $0xcc] sm:$0xf]
      %v450 = vld [vmem:[%s351 + $0xd0] sm:$0xf]
      %v451 = vld [vmem:[%s351 + $0xd4] sm:$0xf]
      %v452 = vld [vmem:[%s351 + $0xd8] sm:$0xf]
      %v453 = vld [vmem:[%s351 + $0xdc] sm:$0xf]
      %v454 = vld [vmem:[%s351 + $0xe0] sm:$0xf]
      %v455 = vld [vmem:[%s351 + $0xe4] sm:$0xf]
      %v456 = vld [vmem:[%s351 + $0xe8] sm:$0xf]
      %v457 = vld [vmem:[%s351 + $0xec] sm:$0xf]
      %v458 = vld [vmem:[%s351 + $0xf0] sm:$0xf]
      %v459 = vld [vmem:[%s351 + $0xf4] sm:$0xf]
      %v460 = vld [vmem:[%s351 + $0xf8] sm:$0xf]
      %v461 = vld [vmem:[%s351 + $0xfc] sm:$0xf]
      %v462 = vld [vmem:[%s351 + $0x100] sm:$0xf]
      %v463 = vld [vmem:[%s351 + $0x104] sm:$0xf]
      %v464 = vld [vmem:[%s351 + $0x108] sm:$0xf]
      %v465 = vld [vmem:[%s351 + $0x10c] sm:$0xf]
      %v466 = vld [vmem:[%s351 + $0x110] sm:$0xf]
      %v467 = vld [vmem:[%s351 + $0x114] sm:$0xf]
      %v468 = vld [vmem:[%s351 + $0x118] sm:$0xf]
      %v469 = vld [vmem:[%s351 + $0x11c] sm:$0xf]
      %v470 = vld [vmem:[%s351 + $0x120] sm:$0xf]
      %v471 = vld [vmem:[%s351 + $0x124] sm:$0xf]
      %v472 = vld [vmem:[%s351 + $0x128] sm:$0xf]
      %v473 = vunpack.c.l.bf16 %v398
      %v474 = vunpack.c.l.bf16 %v399
      %v475 = vunpack.c.l.bf16 %v400
      %v476 = vunpack.c.l.bf16 %v401
      %v477 = vunpack.c.l.bf16 %v402
      %v478 = vunpack.c.l.bf16 %v403
      %v479 = vunpack.c.l.bf16 %v404
      %v480 = vunpack.c.l.bf16 %v405
      %v481 = vunpack.c.l.bf16 %v406
      %v482 = vunpack.c.l.bf16 %v407
      %v483 = vunpack.c.l.bf16 %v408
      %v484 = vunpack.c.l.bf16 %v409
      %v485 = vunpack.c.l.bf16 %v410
      %v486 = vunpack.c.l.bf16 %v411
      %v487 = vunpack.c.l.bf16 %v412
      %v488 = vunpack.c.l.bf16 %v413
      %v489 = vunpack.c.l.bf16 %v414
      %v490 = vunpack.c.l.bf16 %v415
      %v491 = vunpack.c.l.bf16 %v416
      %v492 = vunpack.c.l.bf16 %v417
      %v493 = vunpack.c.l.bf16 %v418
      %v494 = vunpack.c.l.bf16 %v419
      %v495 = vunpack.c.l.bf16 %v420
      %v496 = vunpack.c.l.bf16 %v421
      %v497 = vunpack.c.l.bf16 %v422
      %v498 = vunpack.c.l.bf16 %v423
      %v499 = vunpack.c.l.bf16 %v424
      %v500 = vunpack.c.l.bf16 %v425
      %v501 = vunpack.c.l.bf16 %v426
      %v502 = vunpack.c.l.bf16 %v427
      %v503 = vunpack.c.l.bf16 %v428
      %v504 = vunpack.c.l.bf16 %v429
      %v505 = vunpack.c.l.bf16 %v430
      %v506 = vunpack.c.l.bf16 %v431
      %v507 = vunpack.c.l.bf16 %v432
      %v508 = vunpack.c.l.bf16 %v433
      %v509 = vunpack.c.l.bf16 %v434
      %v510 = vunpack.c.l.bf16 %v435
      %v511 = vunpack.c.l.bf16 %v436
      %v512 = vunpack.c.l.bf16 %v437
      %v513 = vunpack.c.l.bf16 %v438
      %v514 = vunpack.c.l.bf16 %v439
      %v515 = vunpack.c.l.bf16 %v440
      %v516 = vunpack.c.l.bf16 %v441
      %v517 = vunpack.c.l.bf16 %v442
      %v518 = vunpack.c.l.bf16 %v443
      %v519 = vunpack.c.l.bf16 %v444
      %v520 = vunpack.c.l.bf16 %v445
      %v521 = vunpack.c.l.bf16 %v446
      %v522 = vunpack.c.l.bf16 %v447
      %v523 = vunpack.c.l.bf16 %v448
      %v524 = vunpack.c.l.bf16 %v449
      %v525 = vunpack.c.l.bf16 %v450
      %v526 = vunpack.c.l.bf16 %v451
      %v527 = vunpack.c.l.bf16 %v452
      %v528 = vunpack.c.l.bf16 %v453
      %v529 = vunpack.c.l.bf16 %v454
      %v530 = vunpack.c.l.bf16 %v455
      %v531 = vunpack.c.l.bf16 %v456
      %v532 = vunpack.c.l.bf16 %v457
      %v533 = vunpack.c.l.bf16 %v458
      %v534 = vunpack.c.l.bf16 %v459
      %v535 = vunpack.c.l.bf16 %v460
      %v536 = vunpack.c.l.bf16 %v461
      %v537 = vunpack.c.l.bf16 %v462
      %v538 = vunpack.c.l.bf16 %v463
      %v539 = vunpack.c.l.bf16 %v464
      %v540 = vunpack.c.l.bf16 %v465
      %v541 = vunpack.c.l.bf16 %v466
      %v542 = vunpack.c.l.bf16 %v467
      %v543 = vunpack.c.l.bf16 %v468
      %v544 = vunpack.c.l.bf16 %v469
      %v545 = vunpack.c.l.bf16 %v470
      %v546 = vunpack.c.l.bf16 %v471
      %v547 = vunpack.c.l.bf16 %v472
      %v548 = vld [vmem:[%s362] sm:$0xf]
      %v549 = vld [vmem:[%s362 + $0x4] sm:$0xf]
      %v550 = vld [vmem:[%s362 + $0x8] sm:$0xf]
      %v551 = vld [vmem:[%s362 + $0xc] sm:$0xf]
      %v552 = vld [vmem:[%s362 + $0x10] sm:$0xf]
      %v553 = vld [vmem:[%s362 + $0x14] sm:$0xf]
      %v554 = vld [vmem:[%s362 + $0x18] sm:$0xf]
      %v555 = vld [vmem:[%s362 + $0x1c] sm:$0xf]
      %v556 = vld [vmem:[%s362 + $0x20] sm:$0xf]
      %v557 = vld [vmem:[%s362 + $0x24] sm:$0xf]
      %v558 = vld [vmem:[%s362 + $0x28] sm:$0xf]
      %v559 = vld [vmem:[%s362 + $0x2c] sm:$0xf]
      %v560 = vld [vmem:[%s362 + $0x30] sm:$0xf]
      %v561 = vld [vmem:[%s362 + $0x34] sm:$0xf]
      %v562 = vld [vmem:[%s362 + $0x38] sm:$0xf]
      %v563 = vld [vmem:[%s362 + $0x3c] sm:$0xf]
      %v564 = vld [vmem:[%s362 + $0x40] sm:$0xf]
      %v565 = vld [vmem:[%s362 + $0x44] sm:$0xf]
      %v566 = vld [vmem:[%s362 + $0x48] sm:$0xf]
      %v567 = vld [vmem:[%s362 + $0x4c] sm:$0xf]
      %v568 = vld [vmem:[%s362 + $0x50] sm:$0xf]
      %v569 = vld [vmem:[%s362 + $0x54] sm:$0xf]
      %v570 = vld [vmem:[%s362 + $0x58] sm:$0xf]
      %v571 = vld [vmem:[%s362 + $0x5c] sm:$0xf]
      %v572 = vld [vmem:[%s362 + $0x60] sm:$0xf]
      %v573 = vld [vmem:[%s362 + $0x64] sm:$0xf]
      %v574 = vld [vmem:[%s362 + $0x68] sm:$0xf]
      %v575 = vld [vmem:[%s362 + $0x6c] sm:$0xf]
      %v576 = vunpack.c.l.bf16 %v548
      %v577 = vunpack.c.l.bf16 %v549
      %v578 = vunpack.c.l.bf16 %v550
      %v579 = vunpack.c.l.bf16 %v551
      %v580 = vunpack.c.l.bf16 %v552
      %v581 = vunpack.c.l.bf16 %v553
      %v582 = vunpack.c.l.bf16 %v554
      %v583 = vunpack.c.l.bf16 %v555
      %v584 = vunpack.c.l.bf16 %v556
      %v585 = vunpack.c.l.bf16 %v557
      %v586 = vunpack.c.l.bf16 %v558
      %v587 = vunpack.c.l.bf16 %v559
      %v588 = vunpack.c.l.bf16 %v560
      %v589 = vunpack.c.l.bf16 %v561
      %v590 = vunpack.c.l.bf16 %v562
      %v591 = vunpack.c.l.bf16 %v563
      %v592 = vunpack.c.l.bf16 %v564
      %v593 = vunpack.c.l.bf16 %v565
      %v594 = vunpack.c.l.bf16 %v566
      %v595 = vunpack.c.l.bf16 %v567
      %v596 = vunpack.c.l.bf16 %v568
      %v597 = vunpack.c.l.bf16 %v569
      %v598 = vunpack.c.l.bf16 %v570
      %v599 = vunpack.c.l.bf16 %v571
      %v600 = vunpack.c.l.bf16 %v572
      %v601 = vunpack.c.l.bf16 %v573
      %v602 = vunpack.c.l.bf16 %v574
      %v603 = vunpack.c.l.bf16 %v575
      %vm707 = vcmask 1046528
      %v708 = vrot.slane %v473, 1
      %v709 = vrot.slane %v474, 1
      %v710 = vsel %vm707, %v708, %v709
      %v711 = vrot.slane %v475, 1
      %v712 = vsel %vm707, %v709, %v711
      %v713 = vrot.slane %v476, 1
      %v714 = vsel %vm707, %v711, %v713
      %v715 = vrot.slane %v477, 1
      %v716 = vsel %vm707, %v713, %v715
      %v717 = vrot.slane %v478, 1
      %v718 = vsel %vm707, %v715, %v717
      %v719 = vrot.slane %v479, 1
      %v720 = vsel %vm707, %v717, %v719
      %v721 = vrot.slane %v480, 1
      %v722 = vsel %vm707, %v719, %v721
      %v723 = vrot.slane %v481, 1
      %v724 = vsel %vm707, %v721, %v723
      %v725 = vrot.slane %v482, 1
      %v726 = vsel %vm707, %v723, %v725
      %v727 = vrot.slane %v483, 1
      %v728 = vsel %vm707, %v725, %v727
      %v729 = vrot.slane %v484, 1
      %v730 = vsel %vm707, %v727, %v729
      %v731 = vrot.slane %v485, 1
      %v732 = vsel %vm707, %v729, %v731
      %v733 = vrot.slane %v486, 1
      %v734 = vsel %vm707, %v731, %v733
      %v735 = vrot.slane %v487, 1
      %v736 = vsel %vm707, %v733, %v735
      %v737 = vrot.slane %v488, 1
      %v738 = vsel %vm707, %v735, %v737
      %v739 = vrot.slane %v489, 1
      %v740 = vsel %vm707, %v737, %v739
      %v741 = vrot.slane %v490, 1
      %v742 = vsel %vm707, %v739, %v741
      %v743 = vrot.slane %v491, 1
      %v744 = vsel %vm707, %v741, %v743
      %v745 = vrot.slane %v492, 1
      %v746 = vsel %vm707, %v743, %v745
      %v747 = vrot.slane %v493, 1
      %v748 = vsel %vm707, %v745, %v747
      %v749 = vrot.slane %v494, 1
      %v750 = vsel %vm707, %v747, %v749
      %v751 = vrot.slane %v495, 1
      %v752 = vsel %vm707, %v749, %v751
      %v753 = vrot.slane %v496, 1
      %v754 = vsel %vm707, %v751, %v753
      %v755 = vrot.slane %v497, 1
      %v756 = vsel %vm707, %v753, %v755
      %v757 = vrot.slane %v498, 1
      %v758 = vsel %vm707, %v755, %v757
      %v759 = vrot.slane %v499, 1
      %v760 = vsel %vm707, %v757, %v759
      %v761 = vrot.slane %v500, 1
      %v762 = vsel %vm707, %v759, %v761
      %v763 = vrot.slane %v501, 1
      %v764 = vsel %vm707, %v761, %v763
      %v765 = vrot.slane %v502, 1
      %v766 = vsel %vm707, %v763, %v765
      %v767 = vrot.slane %v503, 1
      %v768 = vsel %vm707, %v765, %v767
      %v769 = vrot.slane %v504, 1
      %v770 = vsel %vm707, %v767, %v769
      %v771 = vrot.slane %v505, 1
      %v772 = vsel %vm707, %v769, %v771
      %v773 = vrot.slane %v506, 1
      %v774 = vsel %vm707, %v771, %v773
      %v775 = vrot.slane %v507, 1
      %v776 = vsel %vm707, %v773, %v775
      %v777 = vrot.slane %v508, 1
      %v778 = vsel %vm707, %v775, %v777
      %v779 = vrot.slane %v509, 1
      %v780 = vsel %vm707, %v777, %v779
      %v781 = vrot.slane %v510, 1
      %v782 = vsel %vm707, %v779, %v781
      %v783 = vrot.slane %v511, 1
      %v784 = vsel %vm707, %v781, %v783
      %v785 = vrot.slane %v512, 1
      %v786 = vsel %vm707, %v783, %v785
      %v787 = vrot.slane %v513, 1
      %v788 = vsel %vm707, %v785, %v787
      %v789 = vrot.slane %v514, 1
      %v790 = vsel %vm707, %v787, %v789
      %v791 = vrot.slane %v515, 1
      %v792 = vsel %vm707, %v789, %v791
      %v793 = vrot.slane %v516, 1
      %v794 = vsel %vm707, %v791, %v793
      %v795 = vrot.slane %v517, 1
      %v796 = vsel %vm707, %v793, %v795
      %v797 = vrot.slane %v518, 1
      %v798 = vsel %vm707, %v795, %v797
      %v799 = vrot.slane %v519, 1
      %v800 = vsel %vm707, %v797, %v799
      %v801 = vrot.slane %v520, 1
      %v802 = vsel %vm707, %v799, %v801
      %v803 = vrot.slane %v521, 1
      %v804 = vsel %vm707, %v801, %v803
      %v805 = vrot.slane %v522, 1
      %v806 = vsel %vm707, %v803, %v805
      %v807 = vrot.slane %v523, 1
      %v808 = vsel %vm707, %v805, %v807
      %v809 = vrot.slane %v524, 1
      %v810 = vsel %vm707, %v807, %v809
      %v811 = vrot.slane %v525, 1
      %v812 = vsel %vm707, %v809, %v811
      %v813 = vrot.slane %v526, 1
      %v814 = vsel %vm707, %v811, %v813
      %v815 = vrot.slane %v527, 1
      %v816 = vsel %vm707, %v813, %v815
      %v817 = vrot.slane %v528, 1
      %v818 = vsel %vm707, %v815, %v817
      %v819 = vrot.slane %v529, 1
      %v820 = vsel %vm707, %v817, %v819
      %v821 = vrot.slane %v530, 1
      %v822 = vsel %vm707, %v819, %v821
      %v823 = vrot.slane %v531, 1
      %v824 = vsel %vm707, %v821, %v823
      %v825 = vrot.slane %v532, 1
      %v826 = vsel %vm707, %v823, %v825
      %v827 = vrot.slane %v533, 1
      %v828 = vsel %vm707, %v825, %v827
      %v829 = vrot.slane %v534, 1
      %v830 = vsel %vm707, %v827, %v829
      %v831 = vrot.slane %v535, 1
      %v832 = vsel %vm707, %v829, %v831
      %v833 = vrot.slane %v536, 1
      %v834 = vsel %vm707, %v831, %v833
      %v835 = vrot.slane %v537, 1
      %v836 = vsel %vm707, %v833, %v835
      %v837 = vrot.slane %v538, 1
      %v838 = vsel %vm707, %v835, %v837
      %v839 = vrot.slane %v539, 1
      %v840 = vsel %vm707, %v837, %v839
      %v841 = vrot.slane %v540, 1
      %v842 = vsel %vm707, %v839, %v841
      %v843 = vrot.slane %v541, 1
      %v844 = vsel %vm707, %v841, %v843
      %v845 = vrot.slane %v542, 1
      %v846 = vsel %vm707, %v843, %v845
      %v847 = vrot.slane %v543, 1
      %v848 = vsel %vm707, %v845, %v847
      %v849 = vrot.slane %v544, 1
      %v850 = vsel %vm707, %v847, %v849
      %v851 = vrot.slane %v545, 1
      %v852 = vsel %vm707, %v849, %v851
      %v853 = vrot.slane %v546, 1
      %v854 = vsel %vm707, %v851, %v853
      %v855 = vrot.slane %v547, 1
      %v856 = vsel %vm707, %v853, %v855
      %v857 = vrot.slane %v576, 1
      %v858 = vsel %vm707, %v855, %v857
      %v859 = vrot.slane %v577, 1
      %v860 = vsel %vm707, %v857, %v859
      %v861 = vrot.slane %v578, 1
      %v862 = vsel %vm707, %v859, %v861
      %v863 = vrot.slane %v579, 1
      %v864 = vsel %vm707, %v861, %v863
      %v865 = vrot.slane %v580, 1
      %v866 = vsel %vm707, %v863, %v865
      %v867 = vrot.slane %v581, 1
      %v868 = vsel %vm707, %v865, %v867
      %v869 = vrot.slane %v582, 1
      %v870 = vsel %vm707, %v867, %v869
      %v871 = vrot.slane %v583, 1
      %v872 = vsel %vm707, %v869, %v871
      %v873 = vrot.slane %v584, 1
      %v874 = vsel %vm707, %v871, %v873
      %v875 = vrot.slane %v585, 1
      %v876 = vsel %vm707, %v873, %v875
      %v877 = vrot.slane %v586, 1
      %v878 = vsel %vm707, %v875, %v877
      %v879 = vrot.slane %v587, 1
      %v880 = vsel %vm707, %v877, %v879
      %v881 = vrot.slane %v588, 1
      %v882 = vsel %vm707, %v879, %v881
      %v883 = vrot.slane %v589, 1
      %v884 = vsel %vm707, %v881, %v883
      %v885 = vrot.slane %v590, 1
      %v886 = vsel %vm707, %v883, %v885
      %v887 = vrot.slane %v591, 1
      %v888 = vsel %vm707, %v885, %v887
      %v889 = vrot.slane %v592, 1
      %v890 = vsel %vm707, %v887, %v889
      %v891 = vrot.slane %v593, 1
      %v892 = vsel %vm707, %v889, %v891
      %v893 = vrot.slane %v594, 1
      %v894 = vsel %vm707, %v891, %v893
      %v895 = vrot.slane %v595, 1
      %v896 = vsel %vm707, %v893, %v895
      %v897 = vrot.slane %v596, 1
      %v898 = vsel %vm707, %v895, %v897
      %v899 = vrot.slane %v597, 1
      %v900 = vsel %vm707, %v897, %v899
      %v901 = vrot.slane %v598, 1
      %v902 = vsel %vm707, %v899, %v901
      %v903 = vrot.slane %v599, 1
      %v904 = vsel %vm707, %v901, %v903
      %v905 = vrot.slane %v600, 1
      %v906 = vsel %vm707, %v903, %v905
      %v907 = vrot.slane %v601, 1
      %v908 = vsel %vm707, %v905, %v907
      %v909 = vrot.slane %v602, 1
      %v910 = vsel %vm707, %v907, %v909
      %v911 = vrot.slane %v603, 1
      %v912 = vsel %vm707, %v909, %v911
      %913 = vrot.lane.b32.xlu0 %v710, 8
      %v914 = vpop.permute.xlu0 %913
      %915 = vrot.lane.b32.xlu0 %v712, 8
      %v916 = vpop.permute.xlu0 %915
      %917 = vrot.lane.b32.xlu0 %v714, 8
      %v918 = vpop.permute.xlu0 %917
      %919 = vrot.lane.b32.xlu0 %v716, 8
      %v920 = vpop.permute.xlu0 %919
      %921 = vrot.lane.b32.xlu0 %v718, 8
      %v922 = vpop.permute.xlu0 %921
      %923 = vrot.lane.b32.xlu0 %v720, 8
      %v924 = vpop.permute.xlu0 %923
      %925 = vrot.lane.b32.xlu0 %v722, 8
      %v926 = vpop.permute.xlu0 %925
      %927 = vrot.lane.b32.xlu0 %v724, 8
      %v928 = vpop.permute.xlu0 %927
      %929 = vrot.lane.b32.xlu0 %v726, 8
      %v930 = vpop.permute.xlu0 %929
      %931 = vrot.lane.b32.xlu0 %v728, 8
      %v932 = vpop.permute.xlu0 %931
      %933 = vrot.lane.b32.xlu0 %v730, 8
      %v934 = vpop.permute.xlu0 %933
      %935 = vrot.lane.b32.xlu0 %v732, 8
      %v936 = vpop.permute.xlu0 %935
      %937 = vrot.lane.b32.xlu0 %v734, 8
      %v938 = vpop.permute.xlu0 %937
      %939 = vrot.lane.b32.xlu0 %v736, 8
      %v940 = vpop.permute.xlu0 %939
      %941 = vrot.lane.b32.xlu0 %v738, 8
      %v942 = vpop.permute.xlu0 %941
      %943 = vrot.lane.b32.xlu0 %v740, 8
      %v944 = vpop.permute.xlu0 %943
      %945 = vrot.lane.b32.xlu0 %v742, 8
      %v946 = vpop.permute.xlu0 %945
      %947 = vrot.lane.b32.xlu0 %v744, 8
      %v948 = vpop.permute.xlu0 %947
      %949 = vrot.lane.b32.xlu0 %v746, 8
      %v950 = vpop.permute.xlu0 %949
      %951 = vrot.lane.b32.xlu0 %v748, 8
      %v952 = vpop.permute.xlu0 %951
      %953 = vrot.lane.b32.xlu0 %v750, 8
      %v954 = vpop.permute.xlu0 %953
      %955 = vrot.lane.b32.xlu0 %v752, 8
      %v956 = vpop.permute.xlu0 %955
      %957 = vrot.lane.b32.xlu0 %v754, 8
      %v958 = vpop.permute.xlu0 %957
      %959 = vrot.lane.b32.xlu0 %v756, 8
      %v960 = vpop.permute.xlu0 %959
      %961 = vrot.lane.b32.xlu0 %v758, 8
      %v962 = vpop.permute.xlu0 %961
      %963 = vrot.lane.b32.xlu0 %v760, 8
      %v964 = vpop.permute.xlu0 %963
      %965 = vrot.lane.b32.xlu0 %v762, 8
      %v966 = vpop.permute.xlu0 %965
      %967 = vrot.lane.b32.xlu0 %v764, 8
      %v968 = vpop.permute.xlu0 %967
      %969 = vrot.lane.b32.xlu0 %v766, 8
      %v970 = vpop.permute.xlu0 %969
      %971 = vrot.lane.b32.xlu0 %v768, 8
      %v972 = vpop.permute.xlu0 %971
      %973 = vrot.lane.b32.xlu0 %v770, 8
      %v974 = vpop.permute.xlu0 %973
      %975 = vrot.lane.b32.xlu0 %v772, 8
      %v976 = vpop.permute.xlu0 %975
      %977 = vrot.lane.b32.xlu0 %v774, 8
      %v978 = vpop.permute.xlu0 %977
      %979 = vrot.lane.b32.xlu0 %v776, 8
      %v980 = vpop.permute.xlu0 %979
      %981 = vrot.lane.b32.xlu0 %v778, 8
      %v982 = vpop.permute.xlu0 %981
      %983 = vrot.lane.b32.xlu0 %v780, 8
      %v984 = vpop.permute.xlu0 %983
      %985 = vrot.lane.b32.xlu0 %v782, 8
      %v986 = vpop.permute.xlu0 %985
      %987 = vrot.lane.b32.xlu0 %v784, 8
      %v988 = vpop.permute.xlu0 %987
      %989 = vrot.lane.b32.xlu0 %v786, 8
      %v990 = vpop.permute.xlu0 %989
      %991 = vrot.lane.b32.xlu0 %v788, 8
      %v992 = vpop.permute.xlu0 %991
      %993 = vrot.lane.b32.xlu0 %v790, 8
      %v994 = vpop.permute.xlu0 %993
      %995 = vrot.lane.b32.xlu0 %v792, 8
      %v996 = vpop.permute.xlu0 %995
      %997 = vrot.lane.b32.xlu0 %v794, 8
      %v998 = vpop.permute.xlu0 %997
      %999 = vrot.lane.b32.xlu0 %v796, 8
      %v1000 = vpop.permute.xlu0 %999
      %1001 = vrot.lane.b32.xlu0 %v798, 8
      %v1002 = vpop.permute.xlu0 %1001
      %1003 = vrot.lane.b32.xlu0 %v800, 8
      %v1004 = vpop.permute.xlu0 %1003
      %1005 = vrot.lane.b32.xlu0 %v802, 8
      %v1006 = vpop.permute.xlu0 %1005
      %1007 = vrot.lane.b32.xlu0 %v804, 8
      %v1008 = vpop.permute.xlu0 %1007
      %1009 = vrot.lane.b32.xlu0 %v806, 8
      %v1010 = vpop.permute.xlu0 %1009
      %1011 = vrot.lane.b32.xlu0 %v808, 8
      %v1012 = vpop.permute.xlu0 %1011
      %1013 = vrot.lane.b32.xlu0 %v810, 8
      %v1014 = vpop.permute.xlu0 %1013
      %1015 = vrot.lane.b32.xlu0 %v812, 8
      %v1016 = vpop.permute.xlu0 %1015
      %1017 = vrot.lane.b32.xlu0 %v814, 8
      %v1018 = vpop.permute.xlu0 %1017
      %1019 = vrot.lane.b32.xlu0 %v816, 8
      %v1020 = vpop.permute.xlu0 %1019
      %1021 = vrot.lane.b32.xlu0 %v818, 8
      %v1022 = vpop.permute.xlu0 %1021
      %1023 = vrot.lane.b32.xlu0 %v820, 8
      %v1024 = vpop.permute.xlu0 %1023
      %1025 = vrot.lane.b32.xlu0 %v822, 8
      %v1026 = vpop.permute.xlu0 %1025
      %1027 = vrot.lane.b32.xlu0 %v824, 8
      %v1028 = vpop.permute.xlu0 %1027
      %1029 = vrot.lane.b32.xlu0 %v826, 8
      %v1030 = vpop.permute.xlu0 %1029
      %1031 = vrot.lane.b32.xlu0 %v828, 8
      %v1032 = vpop.permute.xlu0 %1031
      %1033 = vrot.lane.b32.xlu0 %v830, 8
      %v1034 = vpop.permute.xlu0 %1033
      %1035 = vrot.lane.b32.xlu0 %v832, 8
      %v1036 = vpop.permute.xlu0 %1035
      %1037 = vrot.lane.b32.xlu0 %v834, 8
      %v1038 = vpop.permute.xlu0 %1037
      %1039 = vrot.lane.b32.xlu0 %v836, 8
      %v1040 = vpop.permute.xlu0 %1039
      %1041 = vrot.lane.b32.xlu0 %v838, 8
      %v1042 = vpop.permute.xlu0 %1041
      %1043 = vrot.lane.b32.xlu0 %v840, 8
      %v1044 = vpop.permute.xlu0 %1043
      %1045 = vrot.lane.b32.xlu0 %v842, 8
      %v1046 = vpop.permute.xlu0 %1045
      %1047 = vrot.lane.b32.xlu0 %v844, 8
      %v1048 = vpop.permute.xlu0 %1047
      %1049 = vrot.lane.b32.xlu0 %v846, 8
      %v1050 = vpop.permute.xlu0 %1049
      %1051 = vrot.lane.b32.xlu0 %v848, 8
      %v1052 = vpop.permute.xlu0 %1051
      %1053 = vrot.lane.b32.xlu0 %v850, 8
      %v1054 = vpop.permute.xlu0 %1053
      %1055 = vrot.lane.b32.xlu0 %v852, 8
      %v1056 = vpop.permute.xlu0 %1055
      %1057 = vrot.lane.b32.xlu0 %v854, 8
      %v1058 = vpop.permute.xlu0 %1057
      %1059 = vrot.lane.b32.xlu0 %v856, 8
      %v1060 = vpop.permute.xlu0 %1059
      %1061 = vrot.lane.b32.xlu0 %v858, 8
      %v1062 = vpop.permute.xlu0 %1061
      %1063 = vrot.lane.b32.xlu0 %v860, 8
      %v1064 = vpop.permute.xlu0 %1063
      %1065 = vrot.lane.b32.xlu0 %v862, 8
      %v1066 = vpop.permute.xlu0 %1065
      %1067 = vrot.lane.b32.xlu0 %v864, 8
      %v1068 = vpop.permute.xlu0 %1067
      %1069 = vrot.lane.b32.xlu0 %v866, 8
      %v1070 = vpop.permute.xlu0 %1069
      %1071 = vrot.lane.b32.xlu0 %v868, 8
      %v1072 = vpop.permute.xlu0 %1071
      %1073 = vrot.lane.b32.xlu0 %v870, 8
      %v1074 = vpop.permute.xlu0 %1073
      %1075 = vrot.lane.b32.xlu0 %v872, 8
      %v1076 = vpop.permute.xlu0 %1075
      %1077 = vrot.lane.b32.xlu0 %v874, 8
      %v1078 = vpop.permute.xlu0 %1077
      %1079 = vrot.lane.b32.xlu0 %v876, 8
      %v1080 = vpop.permute.xlu0 %1079
      %1081 = vrot.lane.b32.xlu0 %v878, 8
      %v1082 = vpop.permute.xlu0 %1081
      %1083 = vrot.lane.b32.xlu0 %v880, 8
      %v1084 = vpop.permute.xlu0 %1083
      %1085 = vrot.lane.b32.xlu0 %v882, 8
      %v1086 = vpop.permute.xlu0 %1085
      %1087 = vrot.lane.b32.xlu0 %v884, 8
      %v1088 = vpop.permute.xlu0 %1087
      %1089 = vrot.lane.b32.xlu0 %v886, 8
      %v1090 = vpop.permute.xlu0 %1089
      %1091 = vrot.lane.b32.xlu0 %v888, 8
      %v1092 = vpop.permute.xlu0 %1091
      %1093 = vrot.lane.b32.xlu0 %v890, 8
      %v1094 = vpop.permute.xlu0 %1093
      %1095 = vrot.lane.b32.xlu0 %v892, 8
      %v1096 = vpop.permute.xlu0 %1095
      %1097 = vrot.lane.b32.xlu0 %v894, 8
      %v1098 = vpop.permute.xlu0 %1097
      %1099 = vrot.lane.b32.xlu0 %v896, 8
      %v1100 = vpop.permute.xlu0 %1099
      %1101 = vrot.lane.b32.xlu0 %v898, 8
      %v1102 = vpop.permute.xlu0 %1101
      %1103 = vrot.lane.b32.xlu0 %v900, 8
      %v1104 = vpop.permute.xlu0 %1103
      %1105 = vrot.lane.b32.xlu0 %v902, 8
      %v1106 = vpop.permute.xlu0 %1105
      %1107 = vrot.lane.b32.xlu0 %v904, 8
      %v1108 = vpop.permute.xlu0 %1107
      %1109 = vrot.lane.b32.xlu0 %v906, 8
      %v1110 = vpop.permute.xlu0 %1109
      %1111 = vrot.lane.b32.xlu0 %v908, 8
      %v1112 = vpop.permute.xlu0 %1111
      %1113 = vrot.lane.b32.xlu0 %v910, 8
      %v1114 = vpop.permute.xlu0 %1113
      %1115 = vrot.lane.b32.xlu0 %v912, 8
      %v1116 = vpop.permute.xlu0 %1115
      %1117 = vrot.lane.b32.xlu0 %v911, 8
      %v1118 = vpop.permute.xlu0 %1117
      %vm1222 = vcmask 1045504
      %v1223 = vrot.slane %v473, 2
      %v1224 = vrot.slane %v474, 2
      %v1225 = vsel %vm1222, %v1223, %v1224
      %v1226 = vrot.slane %v475, 2
      %v1227 = vsel %vm1222, %v1224, %v1226
      %v1228 = vrot.slane %v476, 2
      %v1229 = vsel %vm1222, %v1226, %v1228
      %v1230 = vrot.slane %v477, 2
      %v1231 = vsel %vm1222, %v1228, %v1230
      %v1232 = vrot.slane %v478, 2
      %v1233 = vsel %vm1222, %v1230, %v1232
      %v1234 = vrot.slane %v479, 2
      %v1235 = vsel %vm1222, %v1232, %v1234
      %v1236 = vrot.slane %v480, 2
      %v1237 = vsel %vm1222, %v1234, %v1236
      %v1238 = vrot.slane %v481, 2
      %v1239 = vsel %vm1222, %v1236, %v1238
      %v1240 = vrot.slane %v482, 2
      %v1241 = vsel %vm1222, %v1238, %v1240
      %v1242 = vrot.slane %v483, 2
      %v1243 = vsel %vm1222, %v1240, %v1242
      %v1244 = vrot.slane %v484, 2
      %v1245 = vsel %vm1222, %v1242, %v1244
      %v1246 = vrot.slane %v485, 2
      %v1247 = vsel %vm1222, %v1244, %v1246
      %v1248 = vrot.slane %v486, 2
      %v1249 = vsel %vm1222, %v1246, %v1248
      %v1250 = vrot.slane %v487, 2
      %v1251 = vsel %vm1222, %v1248, %v1250
      %v1252 = vrot.slane %v488, 2
      %v1253 = vsel %vm1222, %v1250, %v1252
      %v1254 = vrot.slane %v489, 2
      %v1255 = vsel %vm1222, %v1252, %v1254
      %v1256 = vrot.slane %v490, 2
      %v1257 = vsel %vm1222, %v1254, %v1256
      %v1258 = vrot.slane %v491, 2
      %v1259 = vsel %vm1222, %v1256, %v1258
      %v1260 = vrot.slane %v492, 2
      %v1261 = vsel %vm1222, %v1258, %v1260
      %v1262 = vrot.slane %v493, 2
      %v1263 = vsel %vm1222, %v1260, %v1262
      %v1264 = vrot.slane %v494, 2
      %v1265 = vsel %vm1222, %v1262, %v1264
      %v1266 = vrot.slane %v495, 2
      %v1267 = vsel %vm1222, %v1264, %v1266
      %v1268 = vrot.slane %v496, 2
      %v1269 = vsel %vm1222, %v1266, %v1268
      %v1270 = vrot.slane %v497, 2
      %v1271 = vsel %vm1222, %v1268, %v1270
      %v1272 = vrot.slane %v498, 2
      %v1273 = vsel %vm1222, %v1270, %v1272
      %v1274 = vrot.slane %v499, 2
      %v1275 = vsel %vm1222, %v1272, %v1274
      %v1276 = vrot.slane %v500, 2
      %v1277 = vsel %vm1222, %v1274, %v1276
      %v1278 = vrot.slane %v501, 2
      %v1279 = vsel %vm1222, %v1276, %v1278
      %v1280 = vrot.slane %v502, 2
      %v1281 = vsel %vm1222, %v1278, %v1280
      %v1282 = vrot.slane %v503, 2
      %v1283 = vsel %vm1222, %v1280, %v1282
      %v1284 = vrot.slane %v504, 2
      %v1285 = vsel %vm1222, %v1282, %v1284
      %v1286 = vrot.slane %v505, 2
      %v1287 = vsel %vm1222, %v1284, %v1286
      %v1288 = vrot.slane %v506, 2
      %v1289 = vsel %vm1222, %v1286, %v1288
      %v1290 = vrot.slane %v507, 2
      %v1291 = vsel %vm1222, %v1288, %v1290
      %v1292 = vrot.slane %v508, 2
      %v1293 = vsel %vm1222, %v1290, %v1292
      %v1294 = vrot.slane %v509, 2
      %v1295 = vsel %vm1222, %v1292, %v1294
      %v1296 = vrot.slane %v510, 2
      %v1297 = vsel %vm1222, %v1294, %v1296
      %v1298 = vrot.slane %v511, 2
      %v1299 = vsel %vm1222, %v1296, %v1298
      %v1300 = vrot.slane %v512, 2
      %v1301 = vsel %vm1222, %v1298, %v1300
      %v1302 = vrot.slane %v513, 2
      %v1303 = vsel %vm1222, %v1300, %v1302
      %v1304 = vrot.slane %v514, 2
      %v1305 = vsel %vm1222, %v1302, %v1304
      %v1306 = vrot.slane %v515, 2
      %v1307 = vsel %vm1222, %v1304, %v1306
      %v1308 = vrot.slane %v516, 2
      %v1309 = vsel %vm1222, %v1306, %v1308
      %v1310 = vrot.slane %v517, 2
      %v1311 = vsel %vm1222, %v1308, %v1310
      %v1312 = vrot.slane %v518, 2
      %v1313 = vsel %vm1222, %v1310, %v1312
      %v1314 = vrot.slane %v519, 2
      %v1315 = vsel %vm1222, %v1312, %v1314
      %v1316 = vrot.slane %v520, 2
      %v1317 = vsel %vm1222, %v1314, %v1316
      %v1318 = vrot.slane %v521, 2
      %v1319 = vsel %vm1222, %v1316, %v1318
      %v1320 = vrot.slane %v522, 2
      %v1321 = vsel %vm1222, %v1318, %v1320
      %v1322 = vrot.slane %v523, 2
      %v1323 = vsel %vm1222, %v1320, %v1322
      %v1324 = vrot.slane %v524, 2
      %v1325 = vsel %vm1222, %v1322, %v1324
      %v1326 = vrot.slane %v525, 2
      %v1327 = vsel %vm1222, %v1324, %v1326
      %v1328 = vrot.slane %v526, 2
      %v1329 = vsel %vm1222, %v1326, %v1328
      %v1330 = vrot.slane %v527, 2
      %v1331 = vsel %vm1222, %v1328, %v1330
      %v1332 = vrot.slane %v528, 2
      %v1333 = vsel %vm1222, %v1330, %v1332
      %v1334 = vrot.slane %v529, 2
      %v1335 = vsel %vm1222, %v1332, %v1334
      %v1336 = vrot.slane %v530, 2
      %v1337 = vsel %vm1222, %v1334, %v1336
      %v1338 = vrot.slane %v531, 2
      %v1339 = vsel %vm1222, %v1336, %v1338
      %v1340 = vrot.slane %v532, 2
      %v1341 = vsel %vm1222, %v1338, %v1340
      %v1342 = vrot.slane %v533, 2
      %v1343 = vsel %vm1222, %v1340, %v1342
      %v1344 = vrot.slane %v534, 2
      %v1345 = vsel %vm1222, %v1342, %v1344
      %v1346 = vrot.slane %v535, 2
      %v1347 = vsel %vm1222, %v1344, %v1346
      %v1348 = vrot.slane %v536, 2
      %v1349 = vsel %vm1222, %v1346, %v1348
      %v1350 = vrot.slane %v537, 2
      %v1351 = vsel %vm1222, %v1348, %v1350
      %v1352 = vrot.slane %v538, 2
      %v1353 = vsel %vm1222, %v1350, %v1352
      %v1354 = vrot.slane %v539, 2
      %v1355 = vsel %vm1222, %v1352, %v1354
      %v1356 = vrot.slane %v540, 2
      %v1357 = vsel %vm1222, %v1354, %v1356
      %v1358 = vrot.slane %v541, 2
      %v1359 = vsel %vm1222, %v1356, %v1358
      %v1360 = vrot.slane %v542, 2
      %v1361 = vsel %vm1222, %v1358, %v1360
      %v1362 = vrot.slane %v543, 2
      %v1363 = vsel %vm1222, %v1360, %v1362
      %v1364 = vrot.slane %v544, 2
      %v1365 = vsel %vm1222, %v1362, %v1364
      %v1366 = vrot.slane %v545, 2
      %v1367 = vsel %vm1222, %v1364, %v1366
      %v1368 = vrot.slane %v546, 2
      %v1369 = vsel %vm1222, %v1366, %v1368
      %v1370 = vrot.slane %v547, 2
      %v1371 = vsel %vm1222, %v1368, %v1370
      %v1372 = vrot.slane %v576, 2
      %v1373 = vsel %vm1222, %v1370, %v1372
      %v1374 = vrot.slane %v577, 2
      %v1375 = vsel %vm1222, %v1372, %v1374
      %v1376 = vrot.slane %v578, 2
      %v1377 = vsel %vm1222, %v1374, %v1376
      %v1378 = vrot.slane %v579, 2
      %v1379 = vsel %vm1222, %v1376, %v1378
      %v1380 = vrot.slane %v580, 2
      %v1381 = vsel %vm1222, %v1378, %v1380
      %v1382 = vrot.slane %v581, 2
      %v1383 = vsel %vm1222, %v1380, %v1382
      %v1384 = vrot.slane %v582, 2
      %v1385 = vsel %vm1222, %v1382, %v1384
      %v1386 = vrot.slane %v583, 2
      %v1387 = vsel %vm1222, %v1384, %v1386
      %v1388 = vrot.slane %v584, 2
      %v1389 = vsel %vm1222, %v1386, %v1388
      %v1390 = vrot.slane %v585, 2
      %v1391 = vsel %vm1222, %v1388, %v1390
      %v1392 = vrot.slane %v586, 2
      %v1393 = vsel %vm1222, %v1390, %v1392
      %v1394 = vrot.slane %v587, 2
      %v1395 = vsel %vm1222, %v1392, %v1394
      %v1396 = vrot.slane %v588, 2
      %v1397 = vsel %vm1222, %v1394, %v1396
      %v1398 = vrot.slane %v589, 2
      %v1399 = vsel %vm1222, %v1396, %v1398
      %v1400 = vrot.slane %v590, 2
      %v1401 = vsel %vm1222, %v1398, %v1400
      %v1402 = vrot.slane %v591, 2
      %v1403 = vsel %vm1222, %v1400, %v1402
      %v1404 = vrot.slane %v592, 2
      %v1405 = vsel %vm1222, %v1402, %v1404
      %v1406 = vrot.slane %v593, 2
      %v1407 = vsel %vm1222, %v1404, %v1406
      %v1408 = vrot.slane %v594, 2
      %v1409 = vsel %vm1222, %v1406, %v1408
      %v1410 = vrot.slane %v595, 2
      %v1411 = vsel %vm1222, %v1408, %v1410
      %v1412 = vrot.slane %v596, 2
      %v1413 = vsel %vm1222, %v1410, %v1412
      %v1414 = vrot.slane %v597, 2
      %v1415 = vsel %vm1222, %v1412, %v1414
      %v1416 = vrot.slane %v598, 2
      %v1417 = vsel %vm1222, %v1414, %v1416
      %v1418 = vrot.slane %v599, 2
      %v1419 = vsel %vm1222, %v1416, %v1418
      %v1420 = vrot.slane %v600, 2
      %v1421 = vsel %vm1222, %v1418, %v1420
      %v1422 = vrot.slane %v601, 2
      %v1423 = vsel %vm1222, %v1420, %v1422
      %v1424 = vrot.slane %v602, 2
      %v1425 = vsel %vm1222, %v1422, %v1424
      %v1426 = vrot.slane %v603, 2
      %v1427 = vsel %vm1222, %v1424, %v1426
      %1428 = vrot.lane.b32.xlu0 %v1225, 16
      %v1429 = vpop.permute.xlu0 %1428
      %1430 = vrot.lane.b32.xlu0 %v1227, 16
      %v1431 = vpop.permute.xlu0 %1430
      %1432 = vrot.lane.b32.xlu0 %v1229, 16
      %v1433 = vpop.permute.xlu0 %1432
      %1434 = vrot.lane.b32.xlu0 %v1231, 16
      %v1435 = vpop.permute.xlu0 %1434
      %1436 = vrot.lane.b32.xlu0 %v1233, 16
      %v1437 = vpop.permute.xlu0 %1436
      %1438 = vrot.lane.b32.xlu0 %v1235, 16
      %v1439 = vpop.permute.xlu0 %1438
      %1440 = vrot.lane.b32.xlu0 %v1237, 16
      %v1441 = vpop.permute.xlu0 %1440
      %1442 = vrot.lane.b32.xlu0 %v1239, 16
      %v1443 = vpop.permute.xlu0 %1442
      %1444 = vrot.lane.b32.xlu0 %v1241, 16
      %v1445 = vpop.permute.xlu0 %1444
      %1446 = vrot.lane.b32.xlu0 %v1243, 16
      %v1447 = vpop.permute.xlu0 %1446
      %1448 = vrot.lane.b32.xlu0 %v1245, 16
      %v1449 = vpop.permute.xlu0 %1448
      %1450 = vrot.lane.b32.xlu0 %v1247, 16
      %v1451 = vpop.permute.xlu0 %1450
      %1452 = vrot.lane.b32.xlu0 %v1249, 16
      %v1453 = vpop.permute.xlu0 %1452
      %1454 = vrot.lane.b32.xlu0 %v1251, 16
      %v1455 = vpop.permute.xlu0 %1454
      %1456 = vrot.lane.b32.xlu0 %v1253, 16
      %v1457 = vpop.permute.xlu0 %1456
      %1458 = vrot.lane.b32.xlu0 %v1255, 16
      %v1459 = vpop.permute.xlu0 %1458
      %1460 = vrot.lane.b32.xlu0 %v1257, 16
      %v1461 = vpop.permute.xlu0 %1460
      %1462 = vrot.lane.b32.xlu0 %v1259, 16
      %v1463 = vpop.permute.xlu0 %1462
      %1464 = vrot.lane.b32.xlu0 %v1261, 16
      %v1465 = vpop.permute.xlu0 %1464
      %1466 = vrot.lane.b32.xlu0 %v1263, 16
      %v1467 = vpop.permute.xlu0 %1466
      %1468 = vrot.lane.b32.xlu0 %v1265, 16
      %v1469 = vpop.permute.xlu0 %1468
      %1470 = vrot.lane.b32.xlu0 %v1267, 16
      %v1471 = vpop.permute.xlu0 %1470
      %1472 = vrot.lane.b32.xlu0 %v1269, 16
      %v1473 = vpop.permute.xlu0 %1472
      %1474 = vrot.lane.b32.xlu0 %v1271, 16
      %v1475 = vpop.permute.xlu0 %1474
      %1476 = vrot.lane.b32.xlu0 %v1273, 16
      %v1477 = vpop.permute.xlu0 %1476
      %1478 = vrot.lane.b32.xlu0 %v1275, 16
      %v1479 = vpop.permute.xlu0 %1478
      %1480 = vrot.lane.b32.xlu0 %v1277, 16
      %v1481 = vpop.permute.xlu0 %1480
      %1482 = vrot.lane.b32.xlu0 %v1279, 16
      %v1483 = vpop.permute.xlu0 %1482
      %1484 = vrot.lane.b32.xlu0 %v1281, 16
      %v1485 = vpop.permute.xlu0 %1484
      %1486 = vrot.lane.b32.xlu0 %v1283, 16
      %v1487 = vpop.permute.xlu0 %1486
      %1488 = vrot.lane.b32.xlu0 %v1285, 16
      %v1489 = vpop.permute.xlu0 %1488
      %1490 = vrot.lane.b32.xlu0 %v1287, 16
      %v1491 = vpop.permute.xlu0 %1490
      %1492 = vrot.lane.b32.xlu0 %v1289, 16
      %v1493 = vpop.permute.xlu0 %1492
      %1494 = vrot.lane.b32.xlu0 %v1291, 16
      %v1495 = vpop.permute.xlu0 %1494
      %1496 = vrot.lane.b32.xlu0 %v1293, 16
      %v1497 = vpop.permute.xlu0 %1496
      %1498 = vrot.lane.b32.xlu0 %v1295, 16
      %v1499 = vpop.permute.xlu0 %1498
      %1500 = vrot.lane.b32.xlu0 %v1297, 16
      %v1501 = vpop.permute.xlu0 %1500
      %1502 = vrot.lane.b32.xlu0 %v1299, 16
      %v1503 = vpop.permute.xlu0 %1502
      %1504 = vrot.lane.b32.xlu0 %v1301, 16
      %v1505 = vpop.permute.xlu0 %1504
      %1506 = vrot.lane.b32.xlu0 %v1303, 16
      %v1507 = vpop.permute.xlu0 %1506
      %1508 = vrot.lane.b32.xlu0 %v1305, 16
      %v1509 = vpop.permute.xlu0 %1508
      %1510 = vrot.lane.b32.xlu0 %v1307, 16
      %v1511 = vpop.permute.xlu0 %1510
      %1512 = vrot.lane.b32.xlu0 %v1309, 16
      %v1513 = vpop.permute.xlu0 %1512
      %1514 = vrot.lane.b32.xlu0 %v1311, 16
      %v1515 = vpop.permute.xlu0 %1514
      %1516 = vrot.lane.b32.xlu0 %v1313, 16
      %v1517 = vpop.permute.xlu0 %1516
      %1518 = vrot.lane.b32.xlu0 %v1315, 16
      %v1519 = vpop.permute.xlu0 %1518
      %1520 = vrot.lane.b32.xlu0 %v1317, 16
      %v1521 = vpop.permute.xlu0 %1520
      %1522 = vrot.lane.b32.xlu0 %v1319, 16
      %v1523 = vpop.permute.xlu0 %1522
      %1524 = vrot.lane.b32.xlu0 %v1321, 16
      %v1525 = vpop.permute.xlu0 %1524
      %1526 = vrot.lane.b32.xlu0 %v1323, 16
      %v1527 = vpop.permute.xlu0 %1526
      %1528 = vrot.lane.b32.xlu0 %v1325, 16
      %v1529 = vpop.permute.xlu0 %1528
      %1530 = vrot.lane.b32.xlu0 %v1327, 16
      %v1531 = vpop.permute.xlu0 %1530
      %1532 = vrot.lane.b32.xlu0 %v1329, 16
      %v1533 = vpop.permute.xlu0 %1532
      %1534 = vrot.lane.b32.xlu0 %v1331, 16
      %v1535 = vpop.permute.xlu0 %1534
      %1536 = vrot.lane.b32.xlu0 %v1333, 16
      %v1537 = vpop.permute.xlu0 %1536
      %1538 = vrot.lane.b32.xlu0 %v1335, 16
      %v1539 = vpop.permute.xlu0 %1538
      %1540 = vrot.lane.b32.xlu0 %v1337, 16
      %v1541 = vpop.permute.xlu0 %1540
      %1542 = vrot.lane.b32.xlu0 %v1339, 16
      %v1543 = vpop.permute.xlu0 %1542
      %1544 = vrot.lane.b32.xlu0 %v1341, 16
      %v1545 = vpop.permute.xlu0 %1544
      %1546 = vrot.lane.b32.xlu0 %v1343, 16
      %v1547 = vpop.permute.xlu0 %1546
      %1548 = vrot.lane.b32.xlu0 %v1345, 16
      %v1549 = vpop.permute.xlu0 %1548
      %1550 = vrot.lane.b32.xlu0 %v1347, 16
      %v1551 = vpop.permute.xlu0 %1550
      %1552 = vrot.lane.b32.xlu0 %v1349, 16
      %v1553 = vpop.permute.xlu0 %1552
      %1554 = vrot.lane.b32.xlu0 %v1351, 16
      %v1555 = vpop.permute.xlu0 %1554
      %1556 = vrot.lane.b32.xlu0 %v1353, 16
      %v1557 = vpop.permute.xlu0 %1556
      %1558 = vrot.lane.b32.xlu0 %v1355, 16
      %v1559 = vpop.permute.xlu0 %1558
      %1560 = vrot.lane.b32.xlu0 %v1357, 16
      %v1561 = vpop.permute.xlu0 %1560
      %1562 = vrot.lane.b32.xlu0 %v1359, 16
      %v1563 = vpop.permute.xlu0 %1562
      %1564 = vrot.lane.b32.xlu0 %v1361, 16
      %v1565 = vpop.permute.xlu0 %1564
      %1566 = vrot.lane.b32.xlu0 %v1363, 16
      %v1567 = vpop.permute.xlu0 %1566
      %1568 = vrot.lane.b32.xlu0 %v1365, 16
      %v1569 = vpop.permute.xlu0 %1568
      %1570 = vrot.lane.b32.xlu0 %v1367, 16
      %v1571 = vpop.permute.xlu0 %1570
      %1572 = vrot.lane.b32.xlu0 %v1369, 16
      %v1573 = vpop.permute.xlu0 %1572
      %1574 = vrot.lane.b32.xlu0 %v1371, 16
      %v1575 = vpop.permute.xlu0 %1574
      %1576 = vrot.lane.b32.xlu0 %v1373, 16
      %v1577 = vpop.permute.xlu0 %1576
      %1578 = vrot.lane.b32.xlu0 %v1375, 16
      %v1579 = vpop.permute.xlu0 %1578
      %1580 = vrot.lane.b32.xlu0 %v1377, 16
      %v1581 = vpop.permute.xlu0 %1580
      %1582 = vrot.lane.b32.xlu0 %v1379, 16
      %v1583 = vpop.permute.xlu0 %1582
      %1584 = vrot.lane.b32.xlu0 %v1381, 16
      %v1585 = vpop.permute.xlu0 %1584
      %1586 = vrot.lane.b32.xlu0 %v1383, 16
      %v1587 = vpop.permute.xlu0 %1586
      %1588 = vrot.lane.b32.xlu0 %v1385, 16
      %v1589 = vpop.permute.xlu0 %1588
      %1590 = vrot.lane.b32.xlu0 %v1387, 16
      %v1591 = vpop.permute.xlu0 %1590
      %1592 = vrot.lane.b32.xlu0 %v1389, 16
      %v1593 = vpop.permute.xlu0 %1592
      %1594 = vrot.lane.b32.xlu0 %v1391, 16
      %v1595 = vpop.permute.xlu0 %1594
      %1596 = vrot.lane.b32.xlu0 %v1393, 16
      %v1597 = vpop.permute.xlu0 %1596
      %1598 = vrot.lane.b32.xlu0 %v1395, 16
      %v1599 = vpop.permute.xlu0 %1598
      %1600 = vrot.lane.b32.xlu0 %v1397, 16
      %v1601 = vpop.permute.xlu0 %1600
      %1602 = vrot.lane.b32.xlu0 %v1399, 16
      %v1603 = vpop.permute.xlu0 %1602
      %1604 = vrot.lane.b32.xlu0 %v1401, 16
      %v1605 = vpop.permute.xlu0 %1604
      %1606 = vrot.lane.b32.xlu0 %v1403, 16
      %v1607 = vpop.permute.xlu0 %1606
      %1608 = vrot.lane.b32.xlu0 %v1405, 16
      %v1609 = vpop.permute.xlu0 %1608
      %1610 = vrot.lane.b32.xlu0 %v1407, 16
      %v1611 = vpop.permute.xlu0 %1610
      %1612 = vrot.lane.b32.xlu0 %v1409, 16
      %v1613 = vpop.permute.xlu0 %1612
      %1614 = vrot.lane.b32.xlu0 %v1411, 16
      %v1615 = vpop.permute.xlu0 %1614
      %1616 = vrot.lane.b32.xlu0 %v1413, 16
      %v1617 = vpop.permute.xlu0 %1616
      %1618 = vrot.lane.b32.xlu0 %v1415, 16
      %v1619 = vpop.permute.xlu0 %1618
      %1620 = vrot.lane.b32.xlu0 %v1417, 16
      %v1621 = vpop.permute.xlu0 %1620
      %1622 = vrot.lane.b32.xlu0 %v1419, 16
      %v1623 = vpop.permute.xlu0 %1622
      %1624 = vrot.lane.b32.xlu0 %v1421, 16
      %v1625 = vpop.permute.xlu0 %1624
      %1626 = vrot.lane.b32.xlu0 %v1423, 16
      %v1627 = vpop.permute.xlu0 %1626
      %1628 = vrot.lane.b32.xlu0 %v1425, 16
      %v1629 = vpop.permute.xlu0 %1628
      %1630 = vrot.lane.b32.xlu0 %v1427, 16
      %v1631 = vpop.permute.xlu0 %1630
      %1632 = vrot.lane.b32.xlu0 %v1426, 16
      %v1633 = vpop.permute.xlu0 %1632
      %vm1737 = vcmask 64512
      %v1738 = vsel %vm1737, %v473, %v914
      %v1739 = vsel %vm1737, %v474, %v916
      %v1740 = vsel %vm1737, %v475, %v918
      %v1741 = vsel %vm1737, %v476, %v920
      %v1742 = vsel %vm1737, %v477, %v922
      %v1743 = vsel %vm1737, %v478, %v924
      %v1744 = vsel %vm1737, %v479, %v926
      %v1745 = vsel %vm1737, %v480, %v928
      %v1746 = vsel %vm1737, %v481, %v930
      %v1747 = vsel %vm1737, %v482, %v932
      %v1748 = vsel %vm1737, %v483, %v934
      %v1749 = vsel %vm1737, %v484, %v936
      %v1750 = vsel %vm1737, %v485, %v938
      %v1751 = vsel %vm1737, %v486, %v940
      %v1752 = vsel %vm1737, %v487, %v942
      %v1753 = vsel %vm1737, %v488, %v944
      %v1754 = vsel %vm1737, %v489, %v946
      %v1755 = vsel %vm1737, %v490, %v948
      %v1756 = vsel %vm1737, %v491, %v950
      %v1757 = vsel %vm1737, %v492, %v952
      %v1758 = vsel %vm1737, %v493, %v954
      %v1759 = vsel %vm1737, %v494, %v956
      %v1760 = vsel %vm1737, %v495, %v958
      %v1761 = vsel %vm1737, %v496, %v960
      %v1762 = vsel %vm1737, %v497, %v962
      %v1763 = vsel %vm1737, %v498, %v964
      %v1764 = vsel %vm1737, %v499, %v966
      %v1765 = vsel %vm1737, %v500, %v968
      %v1766 = vsel %vm1737, %v501, %v970
      %v1767 = vsel %vm1737, %v502, %v972
      %v1768 = vsel %vm1737, %v503, %v974
      %v1769 = vsel %vm1737, %v504, %v976
      %v1770 = vsel %vm1737, %v505, %v978
      %v1771 = vsel %vm1737, %v506, %v980
      %v1772 = vsel %vm1737, %v507, %v982
      %v1773 = vsel %vm1737, %v508, %v984
      %v1774 = vsel %vm1737, %v509, %v986
      %v1775 = vsel %vm1737, %v510, %v988
      %v1776 = vsel %vm1737, %v511, %v990
      %v1777 = vsel %vm1737, %v512, %v992
      %v1778 = vsel %vm1737, %v513, %v994
      %v1779 = vsel %vm1737, %v514, %v996
      %v1780 = vsel %vm1737, %v515, %v998
      %v1781 = vsel %vm1737, %v516, %v1000
      %v1782 = vsel %vm1737, %v517, %v1002
      %v1783 = vsel %vm1737, %v518, %v1004
      %v1784 = vsel %vm1737, %v519, %v1006
      %v1785 = vsel %vm1737, %v520, %v1008
      %v1786 = vsel %vm1737, %v521, %v1010
      %v1787 = vsel %vm1737, %v522, %v1012
      %v1788 = vsel %vm1737, %v523, %v1014
      %v1789 = vsel %vm1737, %v524, %v1016
      %v1790 = vsel %vm1737, %v525, %v1018
      %v1791 = vsel %vm1737, %v526, %v1020
      %v1792 = vsel %vm1737, %v527, %v1022
      %v1793 = vsel %vm1737, %v528, %v1024
      %v1794 = vsel %vm1737, %v529, %v1026
      %v1795 = vsel %vm1737, %v530, %v1028
      %v1796 = vsel %vm1737, %v531, %v1030
      %v1797 = vsel %vm1737, %v532, %v1032
      %v1798 = vsel %vm1737, %v533, %v1034
      %v1799 = vsel %vm1737, %v534, %v1036
      %v1800 = vsel %vm1737, %v535, %v1038
      %v1801 = vsel %vm1737, %v536, %v1040
      %v1802 = vsel %vm1737, %v537, %v1042
      %v1803 = vsel %vm1737, %v538, %v1044
      %v1804 = vsel %vm1737, %v539, %v1046
      %v1805 = vsel %vm1737, %v540, %v1048
      %v1806 = vsel %vm1737, %v541, %v1050
      %v1807 = vsel %vm1737, %v542, %v1052
      %v1808 = vsel %vm1737, %v543, %v1054
      %v1809 = vsel %vm1737, %v544, %v1056
      %v1810 = vsel %vm1737, %v545, %v1058
      %v1811 = vsel %vm1737, %v546, %v1060
      %v1812 = vsel %vm1737, %v547, %v1062
      %v1813 = vsel %vm1737, %v576, %v1064
      %v1814 = vsel %vm1737, %v577, %v1066
      %v1815 = vsel %vm1737, %v578, %v1068
      %v1816 = vsel %vm1737, %v579, %v1070
      %v1817 = vsel %vm1737, %v580, %v1072
      %v1818 = vsel %vm1737, %v581, %v1074
      %v1819 = vsel %vm1737, %v582, %v1076
      %v1820 = vsel %vm1737, %v583, %v1078
      %v1821 = vsel %vm1737, %v584, %v1080
      %v1822 = vsel %vm1737, %v585, %v1082
      %v1823 = vsel %vm1737, %v586, %v1084
      %v1824 = vsel %vm1737, %v587, %v1086
      %v1825 = vsel %vm1737, %v588, %v1088
      %v1826 = vsel %vm1737, %v589, %v1090
      %v1827 = vsel %vm1737, %v590, %v1092
      %v1828 = vsel %vm1737, %v591, %v1094
      %v1829 = vsel %vm1737, %v592, %v1096
      %v1830 = vsel %vm1737, %v593, %v1098
      %v1831 = vsel %vm1737, %v594, %v1100
      %v1832 = vsel %vm1737, %v595, %v1102
      %v1833 = vsel %vm1737, %v596, %v1104
      %v1834 = vsel %vm1737, %v597, %v1106
      %v1835 = vsel %vm1737, %v598, %v1108
      %v1836 = vsel %vm1737, %v599, %v1110
      %v1837 = vsel %vm1737, %v600, %v1112
      %v1838 = vsel %vm1737, %v601, %v1114
      %v1839 = vsel %vm1737, %v602, %v1116
      %v1840 = vsel %vm1737, %v603, %v1118
      %vm1841 = vcmask 130048
      %v1842 = vsel %vm1841, %v1738, %v1429
      %v1843 = vsel %vm1841, %v1739, %v1431
      %v1844 = vsel %vm1841, %v1740, %v1433
      %v1845 = vsel %vm1841, %v1741, %v1435
      %v1846 = vsel %vm1841, %v1742, %v1437
      %v1847 = vsel %vm1841, %v1743, %v1439
      %v1848 = vsel %vm1841, %v1744, %v1441
      %v1849 = vsel %vm1841, %v1745, %v1443
      %v1850 = vsel %vm1841, %v1746, %v1445
      %v1851 = vsel %vm1841, %v1747, %v1447
      %v1852 = vsel %vm1841, %v1748, %v1449
      %v1853 = vsel %vm1841, %v1749, %v1451
      %v1854 = vsel %vm1841, %v1750, %v1453
      %v1855 = vsel %vm1841, %v1751, %v1455
      %v1856 = vsel %vm1841, %v1752, %v1457
      %v1857 = vsel %vm1841, %v1753, %v1459
      %v1858 = vsel %vm1841, %v1754, %v1461
      %v1859 = vsel %vm1841, %v1755, %v1463
      %v1860 = vsel %vm1841, %v1756, %v1465
      %v1861 = vsel %vm1841, %v1757, %v1467
      %v1862 = vsel %vm1841, %v1758, %v1469
      %v1863 = vsel %vm1841, %v1759, %v1471
      %v1864 = vsel %vm1841, %v1760, %v1473
      %v1865 = vsel %vm1841, %v1761, %v1475
      %v1866 = vsel %vm1841, %v1762, %v1477
      %v1867 = vsel %vm1841, %v1763, %v1479
      %v1868 = vsel %vm1841, %v1764, %v1481
      %v1869 = vsel %vm1841, %v1765, %v1483
      %v1870 = vsel %vm1841, %v1766, %v1485
      %v1871 = vsel %vm1841, %v1767, %v1487
      %v1872 = vsel %vm1841, %v1768, %v1489
      %v1873 = vsel %vm1841, %v1769, %v1491
      %v1874 = vsel %vm1841, %v1770, %v1493
      %v1875 = vsel %vm1841, %v1771, %v1495
      %v1876 = vsel %vm1841, %v1772, %v1497
      %v1877 = vsel %vm1841, %v1773, %v1499
      %v1878 = vsel %vm1841, %v1774, %v1501
      %v1879 = vsel %vm1841, %v1775, %v1503
      %v1880 = vsel %vm1841, %v1776, %v1505
      %v1881 = vsel %vm1841, %v1777, %v1507
      %v1882 = vsel %vm1841, %v1778, %v1509
      %v1883 = vsel %vm1841, %v1779, %v1511
      %v1884 = vsel %vm1841, %v1780, %v1513
      %v1885 = vsel %vm1841, %v1781, %v1515
      %v1886 = vsel %vm1841, %v1782, %v1517
      %v1887 = vsel %vm1841, %v1783, %v1519
      %v1888 = vsel %vm1841, %v1784, %v1521
      %v1889 = vsel %vm1841, %v1785, %v1523
      %v1890 = vsel %vm1841, %v1786, %v1525
      %v1891 = vsel %vm1841, %v1787, %v1527
      %v1892 = vsel %vm1841, %v1788, %v1529
      %v1893 = vsel %vm1841, %v1789, %v1531
      %v1894 = vsel %vm1841, %v1790, %v1533
      %v1895 = vsel %vm1841, %v1791, %v1535
      %v1896 = vsel %vm1841, %v1792, %v1537
      %v1897 = vsel %vm1841, %v1793, %v1539
      %v1898 = vsel %vm1841, %v1794, %v1541
      %v1899 = vsel %vm1841, %v1795, %v1543
      %v1900 = vsel %vm1841, %v1796, %v1545
      %v1901 = vsel %vm1841, %v1797, %v1547
      %v1902 = vsel %vm1841, %v1798, %v1549
      %v1903 = vsel %vm1841, %v1799, %v1551
      %v1904 = vsel %vm1841, %v1800, %v1553
      %v1905 = vsel %vm1841, %v1801, %v1555
      %v1906 = vsel %vm1841, %v1802, %v1557
      %v1907 = vsel %vm1841, %v1803, %v1559
      %v1908 = vsel %vm1841, %v1804, %v1561
      %v1909 = vsel %vm1841, %v1805, %v1563
      %v1910 = vsel %vm1841, %v1806, %v1565
      %v1911 = vsel %vm1841, %v1807, %v1567
      %v1912 = vsel %vm1841, %v1808, %v1569
      %v1913 = vsel %vm1841, %v1809, %v1571
      %v1914 = vsel %vm1841, %v1810, %v1573
      %v1915 = vsel %vm1841, %v1811, %v1575
      %v1916 = vsel %vm1841, %v1812, %v1577
      %v1917 = vsel %vm1841, %v1813, %v1579
      %v1918 = vsel %vm1841, %v1814, %v1581
      %v1919 = vsel %vm1841, %v1815, %v1583
      %v1920 = vsel %vm1841, %v1816, %v1585
      %v1921 = vsel %vm1841, %v1817, %v1587
      %v1922 = vsel %vm1841, %v1818, %v1589
      %v1923 = vsel %vm1841, %v1819, %v1591
      %v1924 = vsel %vm1841, %v1820, %v1593
      %v1925 = vsel %vm1841, %v1821, %v1595
      %v1926 = vsel %vm1841, %v1822, %v1597
      %v1927 = vsel %vm1841, %v1823, %v1599
      %v1928 = vsel %vm1841, %v1824, %v1601
      %v1929 = vsel %vm1841, %v1825, %v1603
      %v1930 = vsel %vm1841, %v1826, %v1605
      %v1931 = vsel %vm1841, %v1827, %v1607
      %v1932 = vsel %vm1841, %v1828, %v1609
      %v1933 = vsel %vm1841, %v1829, %v1611
      %v1934 = vsel %vm1841, %v1830, %v1613
      %v1935 = vsel %vm1841, %v1831, %v1615
      %v1936 = vsel %vm1841, %v1832, %v1617
      %v1937 = vsel %vm1841, %v1833, %v1619
      %v1938 = vsel %vm1841, %v1834, %v1621
      %v1939 = vsel %vm1841, %v1835, %v1623
      %v1940 = vsel %vm1841, %v1836, %v1625
      %v1941 = vsel %vm1841, %v1837, %v1627
      %v1942 = vsel %vm1841, %v1838, %v1629
      %v1943 = vsel %vm1841, %v1839, %v1631
      %v1944 = vsel %vm1841, %v1840, %v1633
      %v2046 = vrot.slane %v1843, 2
      %v2047 = vrot.slane %v1844, 2
      %v2048 = vsel %vm1222, %v2046, %v2047
      %v2049 = vrot.slane %v1845, 2
      %v2050 = vsel %vm1222, %v2047, %v2049
      %v2051 = vrot.slane %v1846, 2
      %v2052 = vsel %vm1222, %v2049, %v2051
      %v2053 = vrot.slane %v1847, 2
      %v2054 = vsel %vm1222, %v2051, %v2053
      %v2055 = vrot.slane %v1848, 2
      %v2056 = vsel %vm1222, %v2053, %v2055
      %v2057 = vrot.slane %v1849, 2
      %v2058 = vsel %vm1222, %v2055, %v2057
      %v2059 = vrot.slane %v1850, 2
      %v2060 = vsel %vm1222, %v2057, %v2059
      %v2061 = vrot.slane %v1851, 2
      %v2062 = vsel %vm1222, %v2059, %v2061
      %v2063 = vrot.slane %v1852, 2
      %v2064 = vsel %vm1222, %v2061, %v2063
      %v2065 = vrot.slane %v1853, 2
      %v2066 = vsel %vm1222, %v2063, %v2065
      %v2067 = vrot.slane %v1854, 2
      %v2068 = vsel %vm1222, %v2065, %v2067
      %v2069 = vrot.slane %v1855, 2
      %v2070 = vsel %vm1222, %v2067, %v2069
      %v2071 = vrot.slane %v1856, 2
      %v2072 = vsel %vm1222, %v2069, %v2071
      %v2073 = vrot.slane %v1857, 2
      %v2074 = vsel %vm1222, %v2071, %v2073
      %v2075 = vrot.slane %v1858, 2
      %v2076 = vsel %vm1222, %v2073, %v2075
      %v2077 = vrot.slane %v1859, 2
      %v2078 = vsel %vm1222, %v2075, %v2077
      %v2079 = vrot.slane %v1860, 2
      %v2080 = vsel %vm1222, %v2077, %v2079
      %v2081 = vrot.slane %v1861, 2
      %v2082 = vsel %vm1222, %v2079, %v2081
      %v2083 = vrot.slane %v1862, 2
      %v2084 = vsel %vm1222, %v2081, %v2083
      %v2085 = vrot.slane %v1863, 2
      %v2086 = vsel %vm1222, %v2083, %v2085
      %v2087 = vrot.slane %v1864, 2
      %v2088 = vsel %vm1222, %v2085, %v2087
      %v2089 = vrot.slane %v1865, 2
      %v2090 = vsel %vm1222, %v2087, %v2089
      %v2091 = vrot.slane %v1866, 2
      %v2092 = vsel %vm1222, %v2089, %v2091
      %v2093 = vrot.slane %v1867, 2
      %v2094 = vsel %vm1222, %v2091, %v2093
      %v2095 = vrot.slane %v1868, 2
      %v2096 = vsel %vm1222, %v2093, %v2095
      %v2097 = vrot.slane %v1869, 2
      %v2098 = vsel %vm1222, %v2095, %v2097
      %v2099 = vrot.slane %v1870, 2
      %v2100 = vsel %vm1222, %v2097, %v2099
      %v2101 = vrot.slane %v1871, 2
      %v2102 = vsel %vm1222, %v2099, %v2101
      %v2103 = vrot.slane %v1872, 2
      %v2104 = vsel %vm1222, %v2101, %v2103
      %v2105 = vrot.slane %v1873, 2
      %v2106 = vsel %vm1222, %v2103, %v2105
      %v2107 = vrot.slane %v1874, 2
      %v2108 = vsel %vm1222, %v2105, %v2107
      %v2109 = vrot.slane %v1875, 2
      %v2110 = vsel %vm1222, %v2107, %v2109
      %v2111 = vrot.slane %v1876, 2
      %v2112 = vsel %vm1222, %v2109, %v2111
      %v2113 = vrot.slane %v1877, 2
      %v2114 = vsel %vm1222, %v2111, %v2113
      %v2115 = vrot.slane %v1878, 2
      %v2116 = vsel %vm1222, %v2113, %v2115
      %v2117 = vrot.slane %v1879, 2
      %v2118 = vsel %vm1222, %v2115, %v2117
      %v2119 = vrot.slane %v1880, 2
      %v2120 = vsel %vm1222, %v2117, %v2119
      %v2121 = vrot.slane %v1881, 2
      %v2122 = vsel %vm1222, %v2119, %v2121
      %v2123 = vrot.slane %v1882, 2
      %v2124 = vsel %vm1222, %v2121, %v2123
      %v2125 = vrot.slane %v1883, 2
      %v2126 = vsel %vm1222, %v2123, %v2125
      %v2127 = vrot.slane %v1884, 2
      %v2128 = vsel %vm1222, %v2125, %v2127
      %v2129 = vrot.slane %v1885, 2
      %v2130 = vsel %vm1222, %v2127, %v2129
      %v2131 = vrot.slane %v1886, 2
      %v2132 = vsel %vm1222, %v2129, %v2131
      %v2133 = vrot.slane %v1887, 2
      %v2134 = vsel %vm1222, %v2131, %v2133
      %v2135 = vrot.slane %v1888, 2
      %v2136 = vsel %vm1222, %v2133, %v2135
      %v2137 = vrot.slane %v1889, 2
      %v2138 = vsel %vm1222, %v2135, %v2137
      %v2139 = vrot.slane %v1890, 2
      %v2140 = vsel %vm1222, %v2137, %v2139
      %v2141 = vrot.slane %v1891, 2
      %v2142 = vsel %vm1222, %v2139, %v2141
      %v2143 = vrot.slane %v1892, 2
      %v2144 = vsel %vm1222, %v2141, %v2143
      %v2145 = vrot.slane %v1893, 2
      %v2146 = vsel %vm1222, %v2143, %v2145
      %v2147 = vrot.slane %v1894, 2
      %v2148 = vsel %vm1222, %v2145, %v2147
      %v2149 = vrot.slane %v1895, 2
      %v2150 = vsel %vm1222, %v2147, %v2149
      %v2151 = vrot.slane %v1896, 2
      %v2152 = vsel %vm1222, %v2149, %v2151
      %v2153 = vrot.slane %v1897, 2
      %v2154 = vsel %vm1222, %v2151, %v2153
      %v2155 = vrot.slane %v1898, 2
      %v2156 = vsel %vm1222, %v2153, %v2155
      %v2157 = vrot.slane %v1899, 2
      %v2158 = vsel %vm1222, %v2155, %v2157
      %v2159 = vrot.slane %v1900, 2
      %v2160 = vsel %vm1222, %v2157, %v2159
      %v2161 = vrot.slane %v1901, 2
      %v2162 = vsel %vm1222, %v2159, %v2161
      %v2163 = vrot.slane %v1902, 2
      %v2164 = vsel %vm1222, %v2161, %v2163
      %v2165 = vrot.slane %v1903, 2
      %v2166 = vsel %vm1222, %v2163, %v2165
      %v2167 = vrot.slane %v1904, 2
      %v2168 = vsel %vm1222, %v2165, %v2167
      %v2169 = vrot.slane %v1905, 2
      %v2170 = vsel %vm1222, %v2167, %v2169
      %v2171 = vrot.slane %v1906, 2
      %v2172 = vsel %vm1222, %v2169, %v2171
      %v2173 = vrot.slane %v1907, 2
      %v2174 = vsel %vm1222, %v2171, %v2173
      %v2175 = vrot.slane %v1908, 2
      %v2176 = vsel %vm1222, %v2173, %v2175
      %v2177 = vrot.slane %v1909, 2
      %v2178 = vsel %vm1222, %v2175, %v2177
      %v2179 = vrot.slane %v1910, 2
      %v2180 = vsel %vm1222, %v2177, %v2179
      %v2181 = vrot.slane %v1911, 2
      %v2182 = vsel %vm1222, %v2179, %v2181
      %v2183 = vrot.slane %v1912, 2
      %v2184 = vsel %vm1222, %v2181, %v2183
      %v2185 = vrot.slane %v1913, 2
      %v2186 = vsel %vm1222, %v2183, %v2185
      %v2187 = vrot.slane %v1914, 2
      %v2188 = vsel %vm1222, %v2185, %v2187
      %v2189 = vrot.slane %v1915, 2
      %v2190 = vsel %vm1222, %v2187, %v2189
      %v2191 = vrot.slane %v1916, 2
      %v2192 = vsel %vm1222, %v2189, %v2191
      %v2193 = vrot.slane %v1917, 2
      %v2194 = vsel %vm1222, %v2191, %v2193
      %v2195 = vrot.slane %v1918, 2
      %v2196 = vsel %vm1222, %v2193, %v2195
      %v2197 = vrot.slane %v1919, 2
      %v2198 = vsel %vm1222, %v2195, %v2197
      %v2199 = vrot.slane %v1920, 2
      %v2200 = vsel %vm1222, %v2197, %v2199
      %v2201 = vrot.slane %v1921, 2
      %v2202 = vsel %vm1222, %v2199, %v2201
      %v2203 = vrot.slane %v1922, 2
      %v2204 = vsel %vm1222, %v2201, %v2203
      %v2205 = vrot.slane %v1923, 2
      %v2206 = vsel %vm1222, %v2203, %v2205
      %v2207 = vrot.slane %v1924, 2
      %v2208 = vsel %vm1222, %v2205, %v2207
      %v2209 = vrot.slane %v1925, 2
      %v2210 = vsel %vm1222, %v2207, %v2209
      %v2211 = vrot.slane %v1926, 2
      %v2212 = vsel %vm1222, %v2209, %v2211
      %v2213 = vrot.slane %v1927, 2
      %v2214 = vsel %vm1222, %v2211, %v2213
      %v2215 = vrot.slane %v1928, 2
      %v2216 = vsel %vm1222, %v2213, %v2215
      %v2217 = vrot.slane %v1929, 2
      %v2218 = vsel %vm1222, %v2215, %v2217
      %v2219 = vrot.slane %v1930, 2
      %v2220 = vsel %vm1222, %v2217, %v2219
      %v2221 = vrot.slane %v1931, 2
      %v2222 = vsel %vm1222, %v2219, %v2221
      %v2223 = vrot.slane %v1932, 2
      %v2224 = vsel %vm1222, %v2221, %v2223
      %v2225 = vrot.slane %v1933, 2
      %v2226 = vsel %vm1222, %v2223, %v2225
      %v2227 = vrot.slane %v1934, 2
      %v2228 = vsel %vm1222, %v2225, %v2227
      %v2229 = vrot.slane %v1935, 2
      %v2230 = vsel %vm1222, %v2227, %v2229
      %v2231 = vrot.slane %v1936, 2
      %v2232 = vsel %vm1222, %v2229, %v2231
      %v2233 = vrot.slane %v1937, 2
      %v2234 = vsel %vm1222, %v2231, %v2233
      %v2235 = vrot.slane %v1938, 2
      %v2236 = vsel %vm1222, %v2233, %v2235
      %v2237 = vrot.slane %v1939, 2
      %v2238 = vsel %vm1222, %v2235, %v2237
      %v2239 = vrot.slane %v1940, 2
      %v2240 = vsel %vm1222, %v2237, %v2239
      %v2241 = vrot.slane %v1941, 2
      %v2242 = vsel %vm1222, %v2239, %v2241
      %v2243 = vrot.slane %v1942, 2
      %v2244 = vsel %vm1222, %v2241, %v2243
      %v2245 = vrot.slane %v1943, 2
      %v2246 = vsel %vm1222, %v2243, %v2245
      %2247 = vrot.lane.b32.xlu0 %v2048, 24
      %v2248 = vpop.permute.xlu0 %2247
      %2249 = vrot.lane.b32.xlu0 %v2050, 24
      %v2250 = vpop.permute.xlu0 %2249
      %2251 = vrot.lane.b32.xlu0 %v2052, 24
      %v2252 = vpop.permute.xlu0 %2251
      %2253 = vrot.lane.b32.xlu0 %v2054, 24
      %v2254 = vpop.permute.xlu0 %2253
      %2255 = vrot.lane.b32.xlu0 %v2056, 24
      %v2256 = vpop.permute.xlu0 %2255
      %2257 = vrot.lane.b32.xlu0 %v2058, 24
      %v2258 = vpop.permute.xlu0 %2257
      %2259 = vrot.lane.b32.xlu0 %v2060, 24
      %v2260 = vpop.permute.xlu0 %2259
      %2261 = vrot.lane.b32.xlu0 %v2062, 24
      %v2262 = vpop.permute.xlu0 %2261
      %2263 = vrot.lane.b32.xlu0 %v2064, 24
      %v2264 = vpop.permute.xlu0 %2263
      %2265 = vrot.lane.b32.xlu0 %v2066, 24
      %v2266 = vpop.permute.xlu0 %2265
      %2267 = vrot.lane.b32.xlu0 %v2068, 24
      %v2268 = vpop.permute.xlu0 %2267
      %2269 = vrot.lane.b32.xlu0 %v2070, 24
      %v2270 = vpop.permute.xlu0 %2269
      %2271 = vrot.lane.b32.xlu0 %v2072, 24
      %v2272 = vpop.permute.xlu0 %2271
      %2273 = vrot.lane.b32.xlu0 %v2074, 24
      %v2274 = vpop.permute.xlu0 %2273
      %2275 = vrot.lane.b32.xlu0 %v2076, 24
      %v2276 = vpop.permute.xlu0 %2275
      %2277 = vrot.lane.b32.xlu0 %v2078, 24
      %v2278 = vpop.permute.xlu0 %2277
      %2279 = vrot.lane.b32.xlu0 %v2080, 24
      %v2280 = vpop.permute.xlu0 %2279
      %2281 = vrot.lane.b32.xlu0 %v2082, 24
      %v2282 = vpop.permute.xlu0 %2281
      %2283 = vrot.lane.b32.xlu0 %v2084, 24
      %v2284 = vpop.permute.xlu0 %2283
      %2285 = vrot.lane.b32.xlu0 %v2086, 24
      %v2286 = vpop.permute.xlu0 %2285
      %2287 = vrot.lane.b32.xlu0 %v2088, 24
      %v2288 = vpop.permute.xlu0 %2287
      %2289 = vrot.lane.b32.xlu0 %v2090, 24
      %v2290 = vpop.permute.xlu0 %2289
      %2291 = vrot.lane.b32.xlu0 %v2092, 24
      %v2292 = vpop.permute.xlu0 %2291
      %2293 = vrot.lane.b32.xlu0 %v2094, 24
      %v2294 = vpop.permute.xlu0 %2293
      %2295 = vrot.lane.b32.xlu0 %v2096, 24
      %v2296 = vpop.permute.xlu0 %2295
      %2297 = vrot.lane.b32.xlu0 %v2098, 24
      %v2298 = vpop.permute.xlu0 %2297
      %2299 = vrot.lane.b32.xlu0 %v2100, 24
      %v2300 = vpop.permute.xlu0 %2299
      %2301 = vrot.lane.b32.xlu0 %v2102, 24
      %v2302 = vpop.permute.xlu0 %2301
      %2303 = vrot.lane.b32.xlu0 %v2104, 24
      %v2304 = vpop.permute.xlu0 %2303
      %2305 = vrot.lane.b32.xlu0 %v2106, 24
      %v2306 = vpop.permute.xlu0 %2305
      %2307 = vrot.lane.b32.xlu0 %v2108, 24
      %v2308 = vpop.permute.xlu0 %2307
      %2309 = vrot.lane.b32.xlu0 %v2110, 24
      %v2310 = vpop.permute.xlu0 %2309
      %2311 = vrot.lane.b32.xlu0 %v2112, 24
      %v2312 = vpop.permute.xlu0 %2311
      %2313 = vrot.lane.b32.xlu0 %v2114, 24
      %v2314 = vpop.permute.xlu0 %2313
      %2315 = vrot.lane.b32.xlu0 %v2116, 24
      %v2316 = vpop.permute.xlu0 %2315
      %2317 = vrot.lane.b32.xlu0 %v2118, 24
      %v2318 = vpop.permute.xlu0 %2317
      %2319 = vrot.lane.b32.xlu0 %v2120, 24
      %v2320 = vpop.permute.xlu0 %2319
      %2321 = vrot.lane.b32.xlu0 %v2122, 24
      %v2322 = vpop.permute.xlu0 %2321
      %2323 = vrot.lane.b32.xlu0 %v2124, 24
      %v2324 = vpop.permute.xlu0 %2323
      %2325 = vrot.lane.b32.xlu0 %v2126, 24
      %v2326 = vpop.permute.xlu0 %2325
      %2327 = vrot.lane.b32.xlu0 %v2128, 24
      %v2328 = vpop.permute.xlu0 %2327
      %2329 = vrot.lane.b32.xlu0 %v2130, 24
      %v2330 = vpop.permute.xlu0 %2329
      %2331 = vrot.lane.b32.xlu0 %v2132, 24
      %v2332 = vpop.permute.xlu0 %2331
      %2333 = vrot.lane.b32.xlu0 %v2134, 24
      %v2334 = vpop.permute.xlu0 %2333
      %2335 = vrot.lane.b32.xlu0 %v2136, 24
      %v2336 = vpop.permute.xlu0 %2335
      %2337 = vrot.lane.b32.xlu0 %v2138, 24
      %v2338 = vpop.permute.xlu0 %2337
      %2339 = vrot.lane.b32.xlu0 %v2140, 24
      %v2340 = vpop.permute.xlu0 %2339
      %2341 = vrot.lane.b32.xlu0 %v2142, 24
      %v2342 = vpop.permute.xlu0 %2341
      %2343 = vrot.lane.b32.xlu0 %v2144, 24
      %v2344 = vpop.permute.xlu0 %2343
      %2345 = vrot.lane.b32.xlu0 %v2146, 24
      %v2346 = vpop.permute.xlu0 %2345
      %2347 = vrot.lane.b32.xlu0 %v2148, 24
      %v2348 = vpop.permute.xlu0 %2347
      %2349 = vrot.lane.b32.xlu0 %v2150, 24
      %v2350 = vpop.permute.xlu0 %2349
      %2351 = vrot.lane.b32.xlu0 %v2152, 24
      %v2352 = vpop.permute.xlu0 %2351
      %2353 = vrot.lane.b32.xlu0 %v2154, 24
      %v2354 = vpop.permute.xlu0 %2353
      %2355 = vrot.lane.b32.xlu0 %v2156, 24
      %v2356 = vpop.permute.xlu0 %2355
      %2357 = vrot.lane.b32.xlu0 %v2158, 24
      %v2358 = vpop.permute.xlu0 %2357
      %2359 = vrot.lane.b32.xlu0 %v2160, 24
      %v2360 = vpop.permute.xlu0 %2359
      %2361 = vrot.lane.b32.xlu0 %v2162, 24
      %v2362 = vpop.permute.xlu0 %2361
      %2363 = vrot.lane.b32.xlu0 %v2164, 24
      %v2364 = vpop.permute.xlu0 %2363
      %2365 = vrot.lane.b32.xlu0 %v2166, 24
      %v2366 = vpop.permute.xlu0 %2365
      %2367 = vrot.lane.b32.xlu0 %v2168, 24
      %v2368 = vpop.permute.xlu0 %2367
      %2369 = vrot.lane.b32.xlu0 %v2170, 24
      %v2370 = vpop.permute.xlu0 %2369
      %2371 = vrot.lane.b32.xlu0 %v2172, 24
      %v2372 = vpop.permute.xlu0 %2371
      %2373 = vrot.lane.b32.xlu0 %v2174, 24
      %v2374 = vpop.permute.xlu0 %2373
      %2375 = vrot.lane.b32.xlu0 %v2176, 24
      %v2376 = vpop.permute.xlu0 %2375
      %2377 = vrot.lane.b32.xlu0 %v2178, 24
      %v2378 = vpop.permute.xlu0 %2377
      %2379 = vrot.lane.b32.xlu0 %v2180, 24
      %v2380 = vpop.permute.xlu0 %2379
      %2381 = vrot.lane.b32.xlu0 %v2182, 24
      %v2382 = vpop.permute.xlu0 %2381
      %2383 = vrot.lane.b32.xlu0 %v2184, 24
      %v2384 = vpop.permute.xlu0 %2383
      %2385 = vrot.lane.b32.xlu0 %v2186, 24
      %v2386 = vpop.permute.xlu0 %2385
      %2387 = vrot.lane.b32.xlu0 %v2188, 24
      %v2388 = vpop.permute.xlu0 %2387
      %2389 = vrot.lane.b32.xlu0 %v2190, 24
      %v2390 = vpop.permute.xlu0 %2389
      %2391 = vrot.lane.b32.xlu0 %v2192, 24
      %v2392 = vpop.permute.xlu0 %2391
      %2393 = vrot.lane.b32.xlu0 %v2194, 24
      %v2394 = vpop.permute.xlu0 %2393
      %2395 = vrot.lane.b32.xlu0 %v2196, 24
      %v2396 = vpop.permute.xlu0 %2395
      %2397 = vrot.lane.b32.xlu0 %v2198, 24
      %v2398 = vpop.permute.xlu0 %2397
      %2399 = vrot.lane.b32.xlu0 %v2200, 24
      %v2400 = vpop.permute.xlu0 %2399
      %2401 = vrot.lane.b32.xlu0 %v2202, 24
      %v2402 = vpop.permute.xlu0 %2401
      %2403 = vrot.lane.b32.xlu0 %v2204, 24
      %v2404 = vpop.permute.xlu0 %2403
      %2405 = vrot.lane.b32.xlu0 %v2206, 24
      %v2406 = vpop.permute.xlu0 %2405
      %2407 = vrot.lane.b32.xlu0 %v2208, 24
      %v2408 = vpop.permute.xlu0 %2407
      %2409 = vrot.lane.b32.xlu0 %v2210, 24
      %v2410 = vpop.permute.xlu0 %2409
      %2411 = vrot.lane.b32.xlu0 %v2212, 24
      %v2412 = vpop.permute.xlu0 %2411
      %2413 = vrot.lane.b32.xlu0 %v2214, 24
      %v2414 = vpop.permute.xlu0 %2413
      %2415 = vrot.lane.b32.xlu0 %v2216, 24
      %v2416 = vpop.permute.xlu0 %2415
      %2417 = vrot.lane.b32.xlu0 %v2218, 24
      %v2418 = vpop.permute.xlu0 %2417
      %2419 = vrot.lane.b32.xlu0 %v2220, 24
      %v2420 = vpop.permute.xlu0 %2419
      %2421 = vrot.lane.b32.xlu0 %v2222, 24
      %v2422 = vpop.permute.xlu0 %2421
      %2423 = vrot.lane.b32.xlu0 %v2224, 24
      %v2424 = vpop.permute.xlu0 %2423
      %2425 = vrot.lane.b32.xlu0 %v2226, 24
      %v2426 = vpop.permute.xlu0 %2425
      %2427 = vrot.lane.b32.xlu0 %v2228, 24
      %v2428 = vpop.permute.xlu0 %2427
      %2429 = vrot.lane.b32.xlu0 %v2230, 24
      %v2430 = vpop.permute.xlu0 %2429
      %2431 = vrot.lane.b32.xlu0 %v2232, 24
      %v2432 = vpop.permute.xlu0 %2431
      %2433 = vrot.lane.b32.xlu0 %v2234, 24
      %v2434 = vpop.permute.xlu0 %2433
      %2435 = vrot.lane.b32.xlu0 %v2236, 24
      %v2436 = vpop.permute.xlu0 %2435
      %2437 = vrot.lane.b32.xlu0 %v2238, 24
      %v2438 = vpop.permute.xlu0 %2437
      %2439 = vrot.lane.b32.xlu0 %v2240, 24
      %v2440 = vpop.permute.xlu0 %2439
      %2441 = vrot.lane.b32.xlu0 %v2242, 24
      %v2442 = vpop.permute.xlu0 %2441
      %2443 = vrot.lane.b32.xlu0 %v2244, 24
      %v2444 = vpop.permute.xlu0 %2443
      %2445 = vrot.lane.b32.xlu0 %v2246, 24
      %v2446 = vpop.permute.xlu0 %2445
      %vm2548 = vcmask 1043456
      %v2549 = vrot.slane %v1844, 4
      %v2550 = vrot.slane %v1845, 4
      %v2551 = vsel %vm2548, %v2549, %v2550
      %v2552 = vrot.slane %v1846, 4
      %v2553 = vsel %vm2548, %v2550, %v2552
      %v2554 = vrot.slane %v1847, 4
      %v2555 = vsel %vm2548, %v2552, %v2554
      %v2556 = vrot.slane %v1848, 4
      %v2557 = vsel %vm2548, %v2554, %v2556
      %v2558 = vrot.slane %v1849, 4
      %v2559 = vsel %vm2548, %v2556, %v2558
      %v2560 = vrot.slane %v1850, 4
      %v2561 = vsel %vm2548, %v2558, %v2560
      %v2562 = vrot.slane %v1851, 4
      %v2563 = vsel %vm2548, %v2560, %v2562
      %v2564 = vrot.slane %v1852, 4
      %v2565 = vsel %vm2548, %v2562, %v2564
      %v2566 = vrot.slane %v1853, 4
      %v2567 = vsel %vm2548, %v2564, %v2566
      %v2568 = vrot.slane %v1854, 4
      %v2569 = vsel %vm2548, %v2566, %v2568
      %v2570 = vrot.slane %v1855, 4
      %v2571 = vsel %vm2548, %v2568, %v2570
      %v2572 = vrot.slane %v1856, 4
      %v2573 = vsel %vm2548, %v2570, %v2572
      %v2574 = vrot.slane %v1857, 4
      %v2575 = vsel %vm2548, %v2572, %v2574
      %v2576 = vrot.slane %v1858, 4
      %v2577 = vsel %vm2548, %v2574, %v2576
      %v2578 = vrot.slane %v1859, 4
      %v2579 = vsel %vm2548, %v2576, %v2578
      %v2580 = vrot.slane %v1860, 4
      %v2581 = vsel %vm2548, %v2578, %v2580
      %v2582 = vrot.slane %v1861, 4
      %v2583 = vsel %vm2548, %v2580, %v2582
      %v2584 = vrot.slane %v1862, 4
      %v2585 = vsel %vm2548, %v2582, %v2584
      %v2586 = vrot.slane %v1863, 4
      %v2587 = vsel %vm2548, %v2584, %v2586
      %v2588 = vrot.slane %v1864, 4
      %v2589 = vsel %vm2548, %v2586, %v2588
      %v2590 = vrot.slane %v1865, 4
      %v2591 = vsel %vm2548, %v2588, %v2590
      %v2592 = vrot.slane %v1866, 4
      %v2593 = vsel %vm2548, %v2590, %v2592
      %v2594 = vrot.slane %v1867, 4
      %v2595 = vsel %vm2548, %v2592, %v2594
      %v2596 = vrot.slane %v1868, 4
      %v2597 = vsel %vm2548, %v2594, %v2596
      %v2598 = vrot.slane %v1869, 4
      %v2599 = vsel %vm2548, %v2596, %v2598
      %v2600 = vrot.slane %v1870, 4
      %v2601 = vsel %vm2548, %v2598, %v2600
      %v2602 = vrot.slane %v1871, 4
      %v2603 = vsel %vm2548, %v2600, %v2602
      %v2604 = vrot.slane %v1872, 4
      %v2605 = vsel %vm2548, %v2602, %v2604
      %v2606 = vrot.slane %v1873, 4
      %v2607 = vsel %vm2548, %v2604, %v2606
      %v2608 = vrot.slane %v1874, 4
      %v2609 = vsel %vm2548, %v2606, %v2608
      %v2610 = vrot.slane %v1875, 4
      %v2611 = vsel %vm2548, %v2608, %v2610
      %v2612 = vrot.slane %v1876, 4
      %v2613 = vsel %vm2548, %v2610, %v2612
      %v2614 = vrot.slane %v1877, 4
      %v2615 = vsel %vm2548, %v2612, %v2614
      %v2616 = vrot.slane %v1878, 4
      %v2617 = vsel %vm2548, %v2614, %v2616
      %v2618 = vrot.slane %v1879, 4
      %v2619 = vsel %vm2548, %v2616, %v2618
      %v2620 = vrot.slane %v1880, 4
      %v2621 = vsel %vm2548, %v2618, %v2620
      %v2622 = vrot.slane %v1881, 4
      %v2623 = vsel %vm2548, %v2620, %v2622
      %v2624 = vrot.slane %v1882, 4
      %v2625 = vsel %vm2548, %v2622, %v2624
      %v2626 = vrot.slane %v1883, 4
      %v2627 = vsel %vm2548, %v2624, %v2626
      %v2628 = vrot.slane %v1884, 4
      %v2629 = vsel %vm2548, %v2626, %v2628
      %v2630 = vrot.slane %v1885, 4
      %v2631 = vsel %vm2548, %v2628, %v2630
      %v2632 = vrot.slane %v1886, 4
      %v2633 = vsel %vm2548, %v2630, %v2632
      %v2634 = vrot.slane %v1887, 4
      %v2635 = vsel %vm2548, %v2632, %v2634
      %v2636 = vrot.slane %v1888, 4
      %v2637 = vsel %vm2548, %v2634, %v2636
      %v2638 = vrot.slane %v1889, 4
      %v2639 = vsel %vm2548, %v2636, %v2638
      %v2640 = vrot.slane %v1890, 4
      %v2641 = vsel %vm2548, %v2638, %v2640
      %v2642 = vrot.slane %v1891, 4
      %v2643 = vsel %vm2548, %v2640, %v2642
      %v2644 = vrot.slane %v1892, 4
      %v2645 = vsel %vm2548, %v2642, %v2644
      %v2646 = vrot.slane %v1893, 4
      %v2647 = vsel %vm2548, %v2644, %v2646
      %v2648 = vrot.slane %v1894, 4
      %v2649 = vsel %vm2548, %v2646, %v2648
      %v2650 = vrot.slane %v1895, 4
      %v2651 = vsel %vm2548, %v2648, %v2650
      %v2652 = vrot.slane %v1896, 4
      %v2653 = vsel %vm2548, %v2650, %v2652
      %v2654 = vrot.slane %v1897, 4
      %v2655 = vsel %vm2548, %v2652, %v2654
      %v2656 = vrot.slane %v1898, 4
      %v2657 = vsel %vm2548, %v2654, %v2656
      %v2658 = vrot.slane %v1899, 4
      %v2659 = vsel %vm2548, %v2656, %v2658
      %v2660 = vrot.slane %v1900, 4
      %v2661 = vsel %vm2548, %v2658, %v2660
      %v2662 = vrot.slane %v1901, 4
      %v2663 = vsel %vm2548, %v2660, %v2662
      %v2664 = vrot.slane %v1902, 4
      %v2665 = vsel %vm2548, %v2662, %v2664
      %v2666 = vrot.slane %v1903, 4
      %v2667 = vsel %vm2548, %v2664, %v2666
      %v2668 = vrot.slane %v1904, 4
      %v2669 = vsel %vm2548, %v2666, %v2668
      %v2670 = vrot.slane %v1905, 4
      %v2671 = vsel %vm2548, %v2668, %v2670
      %v2672 = vrot.slane %v1906, 4
      %v2673 = vsel %vm2548, %v2670, %v2672
      %v2674 = vrot.slane %v1907, 4
      %v2675 = vsel %vm2548, %v2672, %v2674
      %v2676 = vrot.slane %v1908, 4
      %v2677 = vsel %vm2548, %v2674, %v2676
      %v2678 = vrot.slane %v1909, 4
      %v2679 = vsel %vm2548, %v2676, %v2678
      %v2680 = vrot.slane %v1910, 4
      %v2681 = vsel %vm2548, %v2678, %v2680
      %v2682 = vrot.slane %v1911, 4
      %v2683 = vsel %vm2548, %v2680, %v2682
      %v2684 = vrot.slane %v1912, 4
      %v2685 = vsel %vm2548, %v2682, %v2684
      %v2686 = vrot.slane %v1913, 4
      %v2687 = vsel %vm2548, %v2684, %v2686
      %v2688 = vrot.slane %v1914, 4
      %v2689 = vsel %vm2548, %v2686, %v2688
      %v2690 = vrot.slane %v1915, 4
      %v2691 = vsel %vm2548, %v2688, %v2690
      %v2692 = vrot.slane %v1916, 4
      %v2693 = vsel %vm2548, %v2690, %v2692
      %v2694 = vrot.slane %v1917, 4
      %v2695 = vsel %vm2548, %v2692, %v2694
      %v2696 = vrot.slane %v1918, 4
      %v2697 = vsel %vm2548, %v2694, %v2696
      %v2698 = vrot.slane %v1919, 4
      %v2699 = vsel %vm2548, %v2696, %v2698
      %v2700 = vrot.slane %v1920, 4
      %v2701 = vsel %vm2548, %v2698, %v2700
      %v2702 = vrot.slane %v1921, 4
      %v2703 = vsel %vm2548, %v2700, %v2702
      %v2704 = vrot.slane %v1922, 4
      %v2705 = vsel %vm2548, %v2702, %v2704
      %v2706 = vrot.slane %v1923, 4
      %v2707 = vsel %vm2548, %v2704, %v2706
      %v2708 = vrot.slane %v1924, 4
      %v2709 = vsel %vm2548, %v2706, %v2708
      %v2710 = vrot.slane %v1925, 4
      %v2711 = vsel %vm2548, %v2708, %v2710
      %v2712 = vrot.slane %v1926, 4
      %v2713 = vsel %vm2548, %v2710, %v2712
      %v2714 = vrot.slane %v1927, 4
      %v2715 = vsel %vm2548, %v2712, %v2714
      %v2716 = vrot.slane %v1928, 4
      %v2717 = vsel %vm2548, %v2714, %v2716
      %v2718 = vrot.slane %v1929, 4
      %v2719 = vsel %vm2548, %v2716, %v2718
      %v2720 = vrot.slane %v1930, 4
      %v2721 = vsel %vm2548, %v2718, %v2720
      %v2722 = vrot.slane %v1931, 4
      %v2723 = vsel %vm2548, %v2720, %v2722
      %v2724 = vrot.slane %v1932, 4
      %v2725 = vsel %vm2548, %v2722, %v2724
      %v2726 = vrot.slane %v1933, 4
      %v2727 = vsel %vm2548, %v2724, %v2726
      %v2728 = vrot.slane %v1934, 4
      %v2729 = vsel %vm2548, %v2726, %v2728
      %v2730 = vrot.slane %v1935, 4
      %v2731 = vsel %vm2548, %v2728, %v2730
      %v2732 = vrot.slane %v1936, 4
      %v2733 = vsel %vm2548, %v2730, %v2732
      %v2734 = vrot.slane %v1937, 4
      %v2735 = vsel %vm2548, %v2732, %v2734
      %v2736 = vrot.slane %v1938, 4
      %v2737 = vsel %vm2548, %v2734, %v2736
      %v2738 = vrot.slane %v1939, 4
      %v2739 = vsel %vm2548, %v2736, %v2738
      %v2740 = vrot.slane %v1940, 4
      %v2741 = vsel %vm2548, %v2738, %v2740
      %v2742 = vrot.slane %v1941, 4
      %v2743 = vsel %vm2548, %v2740, %v2742
      %v2744 = vrot.slane %v1942, 4
      %v2745 = vsel %vm2548, %v2742, %v2744
      %v2746 = vrot.slane %v1943, 4
      %v2747 = vsel %vm2548, %v2744, %v2746
      %v2748 = vrot.slane %v1944, 4
      %v2749 = vsel %vm2548, %v2746, %v2748
      %2750 = vrot.lane.b32.xlu0 %v2551, 48
      %v2751 = vpop.permute.xlu0 %2750
      %2752 = vrot.lane.b32.xlu0 %v2553, 48
      %v2753 = vpop.permute.xlu0 %2752
      %2754 = vrot.lane.b32.xlu0 %v2555, 48
      %v2755 = vpop.permute.xlu0 %2754
      %2756 = vrot.lane.b32.xlu0 %v2557, 48
      %v2757 = vpop.permute.xlu0 %2756
      %2758 = vrot.lane.b32.xlu0 %v2559, 48
      %v2759 = vpop.permute.xlu0 %2758
      %2760 = vrot.lane.b32.xlu0 %v2561, 48
      %v2761 = vpop.permute.xlu0 %2760
      %2762 = vrot.lane.b32.xlu0 %v2563, 48
      %v2763 = vpop.permute.xlu0 %2762
      %2764 = vrot.lane.b32.xlu0 %v2565, 48
      %v2765 = vpop.permute.xlu0 %2764
      %2766 = vrot.lane.b32.xlu0 %v2567, 48
      %v2767 = vpop.permute.xlu0 %2766
      %2768 = vrot.lane.b32.xlu0 %v2569, 48
      %v2769 = vpop.permute.xlu0 %2768
      %2770 = vrot.lane.b32.xlu0 %v2571, 48
      %v2771 = vpop.permute.xlu0 %2770
      %2772 = vrot.lane.b32.xlu0 %v2573, 48
      %v2773 = vpop.permute.xlu0 %2772
      %2774 = vrot.lane.b32.xlu0 %v2575, 48
      %v2775 = vpop.permute.xlu0 %2774
      %2776 = vrot.lane.b32.xlu0 %v2577, 48
      %v2777 = vpop.permute.xlu0 %2776
      %2778 = vrot.lane.b32.xlu0 %v2579, 48
      %v2779 = vpop.permute.xlu0 %2778
      %2780 = vrot.lane.b32.xlu0 %v2581, 48
      %v2781 = vpop.permute.xlu0 %2780
      %2782 = vrot.lane.b32.xlu0 %v2583, 48
      %v2783 = vpop.permute.xlu0 %2782
      %2784 = vrot.lane.b32.xlu0 %v2585, 48
      %v2785 = vpop.permute.xlu0 %2784
      %2786 = vrot.lane.b32.xlu0 %v2587, 48
      %v2787 = vpop.permute.xlu0 %2786
      %2788 = vrot.lane.b32.xlu0 %v2589, 48
      %v2789 = vpop.permute.xlu0 %2788
      %2790 = vrot.lane.b32.xlu0 %v2591, 48
      %v2791 = vpop.permute.xlu0 %2790
      %2792 = vrot.lane.b32.xlu0 %v2593, 48
      %v2793 = vpop.permute.xlu0 %2792
      %2794 = vrot.lane.b32.xlu0 %v2595, 48
      %v2795 = vpop.permute.xlu0 %2794
      %2796 = vrot.lane.b32.xlu0 %v2597, 48
      %v2797 = vpop.permute.xlu0 %2796
      %2798 = vrot.lane.b32.xlu0 %v2599, 48
      %v2799 = vpop.permute.xlu0 %2798
      %2800 = vrot.lane.b32.xlu0 %v2601, 48
      %v2801 = vpop.permute.xlu0 %2800
      %2802 = vrot.lane.b32.xlu0 %v2603, 48
      %v2803 = vpop.permute.xlu0 %2802
      %2804 = vrot.lane.b32.xlu0 %v2605, 48
      %v2805 = vpop.permute.xlu0 %2804
      %2806 = vrot.lane.b32.xlu0 %v2607, 48
      %v2807 = vpop.permute.xlu0 %2806
      %2808 = vrot.lane.b32.xlu0 %v2609, 48
      %v2809 = vpop.permute.xlu0 %2808
      %2810 = vrot.lane.b32.xlu0 %v2611, 48
      %v2811 = vpop.permute.xlu0 %2810
      %2812 = vrot.lane.b32.xlu0 %v2613, 48
      %v2813 = vpop.permute.xlu0 %2812
      %2814 = vrot.lane.b32.xlu0 %v2615, 48
      %v2815 = vpop.permute.xlu0 %2814
      %2816 = vrot.lane.b32.xlu0 %v2617, 48
      %v2817 = vpop.permute.xlu0 %2816
      %2818 = vrot.lane.b32.xlu0 %v2619, 48
      %v2819 = vpop.permute.xlu0 %2818
      %2820 = vrot.lane.b32.xlu0 %v2621, 48
      %v2821 = vpop.permute.xlu0 %2820
      %2822 = vrot.lane.b32.xlu0 %v2623, 48
      %v2823 = vpop.permute.xlu0 %2822
      %2824 = vrot.lane.b32.xlu0 %v2625, 48
      %v2825 = vpop.permute.xlu0 %2824
      %2826 = vrot.lane.b32.xlu0 %v2627, 48
      %v2827 = vpop.permute.xlu0 %2826
      %2828 = vrot.lane.b32.xlu0 %v2629, 48
      %v2829 = vpop.permute.xlu0 %2828
      %2830 = vrot.lane.b32.xlu0 %v2631, 48
      %v2831 = vpop.permute.xlu0 %2830
      %2832 = vrot.lane.b32.xlu0 %v2633, 48
      %v2833 = vpop.permute.xlu0 %2832
      %2834 = vrot.lane.b32.xlu0 %v2635, 48
      %v2835 = vpop.permute.xlu0 %2834
      %2836 = vrot.lane.b32.xlu0 %v2637, 48
      %v2837 = vpop.permute.xlu0 %2836
      %2838 = vrot.lane.b32.xlu0 %v2639, 48
      %v2839 = vpop.permute.xlu0 %2838
      %2840 = vrot.lane.b32.xlu0 %v2641, 48
      %v2841 = vpop.permute.xlu0 %2840
      %2842 = vrot.lane.b32.xlu0 %v2643, 48
      %v2843 = vpop.permute.xlu0 %2842
      %2844 = vrot.lane.b32.xlu0 %v2645, 48
      %v2845 = vpop.permute.xlu0 %2844
      %2846 = vrot.lane.b32.xlu0 %v2647, 48
      %v2847 = vpop.permute.xlu0 %2846
      %2848 = vrot.lane.b32.xlu0 %v2649, 48
      %v2849 = vpop.permute.xlu0 %2848
      %2850 = vrot.lane.b32.xlu0 %v2651, 48
      %v2851 = vpop.permute.xlu0 %2850
      %2852 = vrot.lane.b32.xlu0 %v2653, 48
      %v2853 = vpop.permute.xlu0 %2852
      %2854 = vrot.lane.b32.xlu0 %v2655, 48
      %v2855 = vpop.permute.xlu0 %2854
      %2856 = vrot.lane.b32.xlu0 %v2657, 48
      %v2857 = vpop.permute.xlu0 %2856
      %2858 = vrot.lane.b32.xlu0 %v2659, 48
      %v2859 = vpop.permute.xlu0 %2858
      %2860 = vrot.lane.b32.xlu0 %v2661, 48
      %v2861 = vpop.permute.xlu0 %2860
      %2862 = vrot.lane.b32.xlu0 %v2663, 48
      %v2863 = vpop.permute.xlu0 %2862
      %2864 = vrot.lane.b32.xlu0 %v2665, 48
      %v2865 = vpop.permute.xlu0 %2864
      %2866 = vrot.lane.b32.xlu0 %v2667, 48
      %v2867 = vpop.permute.xlu0 %2866
      %2868 = vrot.lane.b32.xlu0 %v2669, 48
      %v2869 = vpop.permute.xlu0 %2868
      %2870 = vrot.lane.b32.xlu0 %v2671, 48
      %v2871 = vpop.permute.xlu0 %2870
      %2872 = vrot.lane.b32.xlu0 %v2673, 48
      %v2873 = vpop.permute.xlu0 %2872
      %2874 = vrot.lane.b32.xlu0 %v2675, 48
      %v2875 = vpop.permute.xlu0 %2874
      %2876 = vrot.lane.b32.xlu0 %v2677, 48
      %v2877 = vpop.permute.xlu0 %2876
      %2878 = vrot.lane.b32.xlu0 %v2679, 48
      %v2879 = vpop.permute.xlu0 %2878
      %2880 = vrot.lane.b32.xlu0 %v2681, 48
      %v2881 = vpop.permute.xlu0 %2880
      %2882 = vrot.lane.b32.xlu0 %v2683, 48
      %v2883 = vpop.permute.xlu0 %2882
      %2884 = vrot.lane.b32.xlu0 %v2685, 48
      %v2885 = vpop.permute.xlu0 %2884
      %2886 = vrot.lane.b32.xlu0 %v2687, 48
      %v2887 = vpop.permute.xlu0 %2886
      %2888 = vrot.lane.b32.xlu0 %v2689, 48
      %v2889 = vpop.permute.xlu0 %2888
      %2890 = vrot.lane.b32.xlu0 %v2691, 48
      %v2891 = vpop.permute.xlu0 %2890
      %2892 = vrot.lane.b32.xlu0 %v2693, 48
      %v2893 = vpop.permute.xlu0 %2892
      %2894 = vrot.lane.b32.xlu0 %v2695, 48
      %v2895 = vpop.permute.xlu0 %2894
      %2896 = vrot.lane.b32.xlu0 %v2697, 48
      %v2897 = vpop.permute.xlu0 %2896
      %2898 = vrot.lane.b32.xlu0 %v2699, 48
      %v2899 = vpop.permute.xlu0 %2898
      %2900 = vrot.lane.b32.xlu0 %v2701, 48
      %v2901 = vpop.permute.xlu0 %2900
      %2902 = vrot.lane.b32.xlu0 %v2703, 48
      %v2903 = vpop.permute.xlu0 %2902
      %2904 = vrot.lane.b32.xlu0 %v2705, 48
      %v2905 = vpop.permute.xlu0 %2904
      %2906 = vrot.lane.b32.xlu0 %v2707, 48
      %v2907 = vpop.permute.xlu0 %2906
      %2908 = vrot.lane.b32.xlu0 %v2709, 48
      %v2909 = vpop.permute.xlu0 %2908
      %2910 = vrot.lane.b32.xlu0 %v2711, 48
      %v2911 = vpop.permute.xlu0 %2910
      %2912 = vrot.lane.b32.xlu0 %v2713, 48
      %v2913 = vpop.permute.xlu0 %2912
      %2914 = vrot.lane.b32.xlu0 %v2715, 48
      %v2915 = vpop.permute.xlu0 %2914
      %2916 = vrot.lane.b32.xlu0 %v2717, 48
      %v2917 = vpop.permute.xlu0 %2916
      %2918 = vrot.lane.b32.xlu0 %v2719, 48
      %v2919 = vpop.permute.xlu0 %2918
      %2920 = vrot.lane.b32.xlu0 %v2721, 48
      %v2921 = vpop.permute.xlu0 %2920
      %2922 = vrot.lane.b32.xlu0 %v2723, 48
      %v2923 = vpop.permute.xlu0 %2922
      %2924 = vrot.lane.b32.xlu0 %v2725, 48
      %v2925 = vpop.permute.xlu0 %2924
      %2926 = vrot.lane.b32.xlu0 %v2727, 48
      %v2927 = vpop.permute.xlu0 %2926
      %2928 = vrot.lane.b32.xlu0 %v2729, 48
      %v2929 = vpop.permute.xlu0 %2928
      %2930 = vrot.lane.b32.xlu0 %v2731, 48
      %v2931 = vpop.permute.xlu0 %2930
      %2932 = vrot.lane.b32.xlu0 %v2733, 48
      %v2933 = vpop.permute.xlu0 %2932
      %2934 = vrot.lane.b32.xlu0 %v2735, 48
      %v2935 = vpop.permute.xlu0 %2934
      %2936 = vrot.lane.b32.xlu0 %v2737, 48
      %v2937 = vpop.permute.xlu0 %2936
      %2938 = vrot.lane.b32.xlu0 %v2739, 48
      %v2939 = vpop.permute.xlu0 %2938
      %2940 = vrot.lane.b32.xlu0 %v2741, 48
      %v2941 = vpop.permute.xlu0 %2940
      %2942 = vrot.lane.b32.xlu0 %v2743, 48
      %v2943 = vpop.permute.xlu0 %2942
      %2944 = vrot.lane.b32.xlu0 %v2745, 48
      %v2945 = vpop.permute.xlu0 %2944
      %2946 = vrot.lane.b32.xlu0 %v2747, 48
      %v2947 = vpop.permute.xlu0 %2946
      %2948 = vrot.lane.b32.xlu0 %v2749, 48
      %v2949 = vpop.permute.xlu0 %2948
      %vm3050 = vcmask 195584
      %v3051 = vsel %vm3050, %v1842, %v2248
      %v3052 = vsel %vm3050, %v1843, %v2250
      %v3053 = vsel %vm3050, %v1844, %v2252
      %v3054 = vsel %vm3050, %v1845, %v2254
      %v3055 = vsel %vm3050, %v1846, %v2256
      %v3056 = vsel %vm3050, %v1847, %v2258
      %v3057 = vsel %vm3050, %v1848, %v2260
      %v3058 = vsel %vm3050, %v1849, %v2262
      %v3059 = vsel %vm3050, %v1850, %v2264
      %v3060 = vsel %vm3050, %v1851, %v2266
      %v3061 = vsel %vm3050, %v1852, %v2268
      %v3062 = vsel %vm3050, %v1853, %v2270
      %v3063 = vsel %vm3050, %v1854, %v2272
      %v3064 = vsel %vm3050, %v1855, %v2274
      %v3065 = vsel %vm3050, %v1856, %v2276
      %v3066 = vsel %vm3050, %v1857, %v2278
      %v3067 = vsel %vm3050, %v1858, %v2280
      %v3068 = vsel %vm3050, %v1859, %v2282
      %v3069 = vsel %vm3050, %v1860, %v2284
      %v3070 = vsel %vm3050, %v1861, %v2286
      %v3071 = vsel %vm3050, %v1862, %v2288
      %v3072 = vsel %vm3050, %v1863, %v2290
      %v3073 = vsel %vm3050, %v1864, %v2292
      %v3074 = vsel %vm3050, %v1865, %v2294
      %v3075 = vsel %vm3050, %v1866, %v2296
      %v3076 = vsel %vm3050, %v1867, %v2298
      %v3077 = vsel %vm3050, %v1868, %v2300
      %v3078 = vsel %vm3050, %v1869, %v2302
      %v3079 = vsel %vm3050, %v1870, %v2304
      %v3080 = vsel %vm3050, %v1871, %v2306
      %v3081 = vsel %vm3050, %v1872, %v2308
      %v3082 = vsel %vm3050, %v1873, %v2310
      %v3083 = vsel %vm3050, %v1874, %v2312
      %v3084 = vsel %vm3050, %v1875, %v2314
      %v3085 = vsel %vm3050, %v1876, %v2316
      %v3086 = vsel %vm3050, %v1877, %v2318
      %v3087 = vsel %vm3050, %v1878, %v2320
      %v3088 = vsel %vm3050, %v1879, %v2322
      %v3089 = vsel %vm3050, %v1880, %v2324
      %v3090 = vsel %vm3050, %v1881, %v2326
      %v3091 = vsel %vm3050, %v1882, %v2328
      %v3092 = vsel %vm3050, %v1883, %v2330
      %v3093 = vsel %vm3050, %v1884, %v2332
      %v3094 = vsel %vm3050, %v1885, %v2334
      %v3095 = vsel %vm3050, %v1886, %v2336
      %v3096 = vsel %vm3050, %v1887, %v2338
      %v3097 = vsel %vm3050, %v1888, %v2340
      %v3098 = vsel %vm3050, %v1889, %v2342
      %v3099 = vsel %vm3050, %v1890, %v2344
      %v3100 = vsel %vm3050, %v1891, %v2346
      %v3101 = vsel %vm3050, %v1892, %v2348
      %v3102 = vsel %vm3050, %v1893, %v2350
      %v3103 = vsel %vm3050, %v1894, %v2352
      %v3104 = vsel %vm3050, %v1895, %v2354
      %v3105 = vsel %vm3050, %v1896, %v2356
      %v3106 = vsel %vm3050, %v1897, %v2358
      %v3107 = vsel %vm3050, %v1898, %v2360
      %v3108 = vsel %vm3050, %v1899, %v2362
      %v3109 = vsel %vm3050, %v1900, %v2364
      %v3110 = vsel %vm3050, %v1901, %v2366
      %v3111 = vsel %vm3050, %v1902, %v2368
      %v3112 = vsel %vm3050, %v1903, %v2370
      %v3113 = vsel %vm3050, %v1904, %v2372
      %v3114 = vsel %vm3050, %v1905, %v2374
      %v3115 = vsel %vm3050, %v1906, %v2376
      %v3116 = vsel %vm3050, %v1907, %v2378
      %v3117 = vsel %vm3050, %v1908, %v2380
      %v3118 = vsel %vm3050, %v1909, %v2382
      %v3119 = vsel %vm3050, %v1910, %v2384
      %v3120 = vsel %vm3050, %v1911, %v2386
      %v3121 = vsel %vm3050, %v1912, %v2388
      %v3122 = vsel %vm3050, %v1913, %v2390
      %v3123 = vsel %vm3050, %v1914, %v2392
      %v3124 = vsel %vm3050, %v1915, %v2394
      %v3125 = vsel %vm3050, %v1916, %v2396
      %v3126 = vsel %vm3050, %v1917, %v2398
      %v3127 = vsel %vm3050, %v1918, %v2400
      %v3128 = vsel %vm3050, %v1919, %v2402
      %v3129 = vsel %vm3050, %v1920, %v2404
      %v3130 = vsel %vm3050, %v1921, %v2406
      %v3131 = vsel %vm3050, %v1922, %v2408
      %v3132 = vsel %vm3050, %v1923, %v2410
      %v3133 = vsel %vm3050, %v1924, %v2412
      %v3134 = vsel %vm3050, %v1925, %v2414
      %v3135 = vsel %vm3050, %v1926, %v2416
      %v3136 = vsel %vm3050, %v1927, %v2418
      %v3137 = vsel %vm3050, %v1928, %v2420
      %v3138 = vsel %vm3050, %v1929, %v2422
      %v3139 = vsel %vm3050, %v1930, %v2424
      %v3140 = vsel %vm3050, %v1931, %v2426
      %v3141 = vsel %vm3050, %v1932, %v2428
      %v3142 = vsel %vm3050, %v1933, %v2430
      %v3143 = vsel %vm3050, %v1934, %v2432
      %v3144 = vsel %vm3050, %v1935, %v2434
      %v3145 = vsel %vm3050, %v1936, %v2436
      %v3146 = vsel %vm3050, %v1937, %v2438
      %v3147 = vsel %vm3050, %v1938, %v2440
      %v3148 = vsel %vm3050, %v1939, %v2442
      %v3149 = vsel %vm3050, %v1940, %v2444
      %v3150 = vsel %vm3050, %v1941, %v2446
      %vm3151 = vcmask 392192
      %v3152 = vsel %vm3151, %v3051, %v2751
      %v3153 = vsel %vm3151, %v3052, %v2753
      %v3154 = vsel %vm3151, %v3053, %v2755
      %v3155 = vsel %vm3151, %v3054, %v2757
      %v3156 = vsel %vm3151, %v3055, %v2759
      %v3157 = vsel %vm3151, %v3056, %v2761
      %v3158 = vsel %vm3151, %v3057, %v2763
      %v3159 = vsel %vm3151, %v3058, %v2765
      %v3160 = vsel %vm3151, %v3059, %v2767
      %v3161 = vsel %vm3151, %v3060, %v2769
      %v3162 = vsel %vm3151, %v3061, %v2771
      %v3163 = vsel %vm3151, %v3062, %v2773
      %v3164 = vsel %vm3151, %v3063, %v2775
      %v3165 = vsel %vm3151, %v3064, %v2777
      %v3166 = vsel %vm3151, %v3065, %v2779
      %v3167 = vsel %vm3151, %v3066, %v2781
      %v3168 = vsel %vm3151, %v3067, %v2783
      %v3169 = vsel %vm3151, %v3068, %v2785
      %v3170 = vsel %vm3151, %v3069, %v2787
      %v3171 = vsel %vm3151, %v3070, %v2789
      %v3172 = vsel %vm3151, %v3071, %v2791
      %v3173 = vsel %vm3151, %v3072, %v2793
      %v3174 = vsel %vm3151, %v3073, %v2795
      %v3175 = vsel %vm3151, %v3074, %v2797
      %v3176 = vsel %vm3151, %v3075, %v2799
      %v3177 = vsel %vm3151, %v3076, %v2801
      %v3178 = vsel %vm3151, %v3077, %v2803
      %v3179 = vsel %vm3151, %v3078, %v2805
      %v3180 = vsel %vm3151, %v3079, %v2807
      %v3181 = vsel %vm3151, %v3080, %v2809
      %v3182 = vsel %vm3151, %v3081, %v2811
      %v3183 = vsel %vm3151, %v3082, %v2813
      %v3184 = vsel %vm3151, %v3083, %v2815
      %v3185 = vsel %vm3151, %v3084, %v2817
      %v3186 = vsel %vm3151, %v3085, %v2819
      %v3187 = vsel %vm3151, %v3086, %v2821
      %v3188 = vsel %vm3151, %v3087, %v2823
      %v3189 = vsel %vm3151, %v3088, %v2825
      %v3190 = vsel %vm3151, %v3089, %v2827
      %v3191 = vsel %vm3151, %v3090, %v2829
      %v3192 = vsel %vm3151, %v3091, %v2831
      %v3193 = vsel %vm3151, %v3092, %v2833
      %v3194 = vsel %vm3151, %v3093, %v2835
      %v3195 = vsel %vm3151, %v3094, %v2837
      %v3196 = vsel %vm3151, %v3095, %v2839
      %v3197 = vsel %vm3151, %v3096, %v2841
      %v3198 = vsel %vm3151, %v3097, %v2843
      %v3199 = vsel %vm3151, %v3098, %v2845
      %v3200 = vsel %vm3151, %v3099, %v2847
      %v3201 = vsel %vm3151, %v3100, %v2849
      %v3202 = vsel %vm3151, %v3101, %v2851
      %v3203 = vsel %vm3151, %v3102, %v2853
      %v3204 = vsel %vm3151, %v3103, %v2855
      %v3205 = vsel %vm3151, %v3104, %v2857
      %v3206 = vsel %vm3151, %v3105, %v2859
      %v3207 = vsel %vm3151, %v3106, %v2861
      %v3208 = vsel %vm3151, %v3107, %v2863
      %v3209 = vsel %vm3151, %v3108, %v2865
      %v3210 = vsel %vm3151, %v3109, %v2867
      %v3211 = vsel %vm3151, %v3110, %v2869
      %v3212 = vsel %vm3151, %v3111, %v2871
      %v3213 = vsel %vm3151, %v3112, %v2873
      %v3214 = vsel %vm3151, %v3113, %v2875
      %v3215 = vsel %vm3151, %v3114, %v2877
      %v3216 = vsel %vm3151, %v3115, %v2879
      %v3217 = vsel %vm3151, %v3116, %v2881
      %v3218 = vsel %vm3151, %v3117, %v2883
      %v3219 = vsel %vm3151, %v3118, %v2885
      %v3220 = vsel %vm3151, %v3119, %v2887
      %v3221 = vsel %vm3151, %v3120, %v2889
      %v3222 = vsel %vm3151, %v3121, %v2891
      %v3223 = vsel %vm3151, %v3122, %v2893
      %v3224 = vsel %vm3151, %v3123, %v2895
      %v3225 = vsel %vm3151, %v3124, %v2897
      %v3226 = vsel %vm3151, %v3125, %v2899
      %v3227 = vsel %vm3151, %v3126, %v2901
      %v3228 = vsel %vm3151, %v3127, %v2903
      %v3229 = vsel %vm3151, %v3128, %v2905
      %v3230 = vsel %vm3151, %v3129, %v2907
      %v3231 = vsel %vm3151, %v3130, %v2909
      %v3232 = vsel %vm3151, %v3131, %v2911
      %v3233 = vsel %vm3151, %v3132, %v2913
      %v3234 = vsel %vm3151, %v3133, %v2915
      %v3235 = vsel %vm3151, %v3134, %v2917
      %v3236 = vsel %vm3151, %v3135, %v2919
      %v3237 = vsel %vm3151, %v3136, %v2921
      %v3238 = vsel %vm3151, %v3137, %v2923
      %v3239 = vsel %vm3151, %v3138, %v2925
      %v3240 = vsel %vm3151, %v3139, %v2927
      %v3241 = vsel %vm3151, %v3140, %v2929
      %v3242 = vsel %vm3151, %v3141, %v2931
      %v3243 = vsel %vm3151, %v3142, %v2933
      %v3244 = vsel %vm3151, %v3143, %v2935
      %v3245 = vsel %vm3151, %v3144, %v2937
      %v3246 = vsel %vm3151, %v3145, %v2939
      %v3247 = vsel %vm3151, %v3146, %v2941
      %v3248 = vsel %vm3151, %v3147, %v2943
      %v3249 = vsel %vm3151, %v3148, %v2945
      %v3250 = vsel %vm3151, %v3149, %v2947
      %v3251 = vsel %vm3151, %v3150, %v2949
      %v3328 = vrot.slane %v3164, 4
      %v3329 = vrot.slane %v3165, 4
      %v3330 = vsel %vm2548, %v3328, %v3329
      %v3331 = vrot.slane %v3166, 4
      %v3332 = vsel %vm2548, %v3329, %v3331
      %v3333 = vrot.slane %v3167, 4
      %v3334 = vsel %vm2548, %v3331, %v3333
      %v3335 = vrot.slane %v3168, 4
      %v3336 = vsel %vm2548, %v3333, %v3335
      %v3337 = vrot.slane %v3169, 4
      %v3338 = vsel %vm2548, %v3335, %v3337
      %v3339 = vrot.slane %v3170, 4
      %v3340 = vsel %vm2548, %v3337, %v3339
      %v3341 = vrot.slane %v3171, 4
      %v3342 = vsel %vm2548, %v3339, %v3341
      %v3343 = vrot.slane %v3172, 4
      %v3344 = vsel %vm2548, %v3341, %v3343
      %v3345 = vrot.slane %v3173, 4
      %v3346 = vsel %vm2548, %v3343, %v3345
      %v3347 = vrot.slane %v3174, 4
      %v3348 = vsel %vm2548, %v3345, %v3347
      %v3349 = vrot.slane %v3175, 4
      %v3350 = vsel %vm2548, %v3347, %v3349
      %v3351 = vrot.slane %v3176, 4
      %v3352 = vsel %vm2548, %v3349, %v3351
      %v3353 = vrot.slane %v3177, 4
      %v3354 = vsel %vm2548, %v3351, %v3353
      %v3355 = vrot.slane %v3178, 4
      %v3356 = vsel %vm2548, %v3353, %v3355
      %v3357 = vrot.slane %v3179, 4
      %v3358 = vsel %vm2548, %v3355, %v3357
      %v3359 = vrot.slane %v3180, 4
      %v3360 = vsel %vm2548, %v3357, %v3359
      %v3361 = vrot.slane %v3181, 4
      %v3362 = vsel %vm2548, %v3359, %v3361
      %v3363 = vrot.slane %v3182, 4
      %v3364 = vsel %vm2548, %v3361, %v3363
      %v3365 = vrot.slane %v3183, 4
      %v3366 = vsel %vm2548, %v3363, %v3365
      %v3367 = vrot.slane %v3184, 4
      %v3368 = vsel %vm2548, %v3365, %v3367
      %v3369 = vrot.slane %v3185, 4
      %v3370 = vsel %vm2548, %v3367, %v3369
      %v3371 = vrot.slane %v3186, 4
      %v3372 = vsel %vm2548, %v3369, %v3371
      %v3373 = vrot.slane %v3187, 4
      %v3374 = vsel %vm2548, %v3371, %v3373
      %v3375 = vrot.slane %v3188, 4
      %v3376 = vsel %vm2548, %v3373, %v3375
      %v3377 = vrot.slane %v3189, 4
      %v3378 = vsel %vm2548, %v3375, %v3377
      %v3379 = vrot.slane %v3190, 4
      %v3380 = vsel %vm2548, %v3377, %v3379
      %v3381 = vrot.slane %v3191, 4
      %v3382 = vsel %vm2548, %v3379, %v3381
      %v3383 = vrot.slane %v3192, 4
      %v3384 = vsel %vm2548, %v3381, %v3383
      %v3385 = vrot.slane %v3193, 4
      %v3386 = vsel %vm2548, %v3383, %v3385
      %v3387 = vrot.slane %v3194, 4
      %v3388 = vsel %vm2548, %v3385, %v3387
      %v3389 = vrot.slane %v3195, 4
      %v3390 = vsel %vm2548, %v3387, %v3389
      %v3391 = vrot.slane %v3196, 4
      %v3392 = vsel %vm2548, %v3389, %v3391
      %v3393 = vrot.slane %v3197, 4
      %v3394 = vsel %vm2548, %v3391, %v3393
      %v3395 = vrot.slane %v3198, 4
      %v3396 = vsel %vm2548, %v3393, %v3395
      %v3397 = vrot.slane %v3199, 4
      %v3398 = vsel %vm2548, %v3395, %v3397
      %v3399 = vrot.slane %v3200, 4
      %v3400 = vsel %vm2548, %v3397, %v3399
      %v3401 = vrot.slane %v3201, 4
      %v3402 = vsel %vm2548, %v3399, %v3401
      %v3403 = vrot.slane %v3202, 4
      %v3404 = vsel %vm2548, %v3401, %v3403
      %v3405 = vrot.slane %v3203, 4
      %v3406 = vsel %vm2548, %v3403, %v3405
      %v3407 = vrot.slane %v3204, 4
      %v3408 = vsel %vm2548, %v3405, %v3407
      %v3409 = vrot.slane %v3205, 4
      %v3410 = vsel %vm2548, %v3407, %v3409
      %v3411 = vrot.slane %v3206, 4
      %v3412 = vsel %vm2548, %v3409, %v3411
      %v3413 = vrot.slane %v3207, 4
      %v3414 = vsel %vm2548, %v3411, %v3413
      %v3415 = vrot.slane %v3208, 4
      %v3416 = vsel %vm2548, %v3413, %v3415
      %v3417 = vrot.slane %v3209, 4
      %v3418 = vsel %vm2548, %v3415, %v3417
      %v3419 = vrot.slane %v3210, 4
      %v3420 = vsel %vm2548, %v3417, %v3419
      %v3421 = vrot.slane %v3211, 4
      %v3422 = vsel %vm2548, %v3419, %v3421
      %v3423 = vrot.slane %v3212, 4
      %v3424 = vsel %vm2548, %v3421, %v3423
      %v3425 = vrot.slane %v3213, 4
      %v3426 = vsel %vm2548, %v3423, %v3425
      %v3427 = vrot.slane %v3214, 4
      %v3428 = vsel %vm2548, %v3425, %v3427
      %v3429 = vrot.slane %v3215, 4
      %v3430 = vsel %vm2548, %v3427, %v3429
      %v3431 = vrot.slane %v3216, 4
      %v3432 = vsel %vm2548, %v3429, %v3431
      %v3433 = vrot.slane %v3217, 4
      %v3434 = vsel %vm2548, %v3431, %v3433
      %v3435 = vrot.slane %v3218, 4
      %v3436 = vsel %vm2548, %v3433, %v3435
      %v3437 = vrot.slane %v3219, 4
      %v3438 = vsel %vm2548, %v3435, %v3437
      %v3439 = vrot.slane %v3220, 4
      %v3440 = vsel %vm2548, %v3437, %v3439
      %v3441 = vrot.slane %v3221, 4
      %v3442 = vsel %vm2548, %v3439, %v3441
      %v3443 = vrot.slane %v3222, 4
      %v3444 = vsel %vm2548, %v3441, %v3443
      %v3445 = vrot.slane %v3223, 4
      %v3446 = vsel %vm2548, %v3443, %v3445
      %v3447 = vrot.slane %v3224, 4
      %v3448 = vsel %vm2548, %v3445, %v3447
      %v3449 = vrot.slane %v3225, 4
      %v3450 = vsel %vm2548, %v3447, %v3449
      %v3451 = vrot.slane %v3226, 4
      %v3452 = vsel %vm2548, %v3449, %v3451
      %v3453 = vrot.slane %v3227, 4
      %v3454 = vsel %vm2548, %v3451, %v3453
      %v3455 = vrot.slane %v3228, 4
      %v3456 = vsel %vm2548, %v3453, %v3455
      %v3457 = vrot.slane %v3229, 4
      %v3458 = vsel %vm2548, %v3455, %v3457
      %v3459 = vrot.slane %v3230, 4
      %v3460 = vsel %vm2548, %v3457, %v3459
      %v3461 = vrot.slane %v3231, 4
      %v3462 = vsel %vm2548, %v3459, %v3461
      %v3463 = vrot.slane %v3232, 4
      %v3464 = vsel %vm2548, %v3461, %v3463
      %v3465 = vrot.slane %v3233, 4
      %v3466 = vsel %vm2548, %v3463, %v3465
      %v3467 = vrot.slane %v3234, 4
      %v3468 = vsel %vm2548, %v3465, %v3467
      %v3469 = vrot.slane %v3235, 4
      %v3470 = vsel %vm2548, %v3467, %v3469
      %v3471 = vrot.slane %v3236, 4
      %v3472 = vsel %vm2548, %v3469, %v3471
      %v3473 = vrot.slane %v3237, 4
      %v3474 = vsel %vm2548, %v3471, %v3473
      %v3475 = vrot.slane %v3238, 4
      %v3476 = vsel %vm2548, %v3473, %v3475
      %v3477 = vrot.slane %v3239, 4
      %v3478 = vsel %vm2548, %v3475, %v3477
      %3479 = vrot.lane.b32.xlu0 %v3330, 72
      %v3480 = vpop.permute.xlu0 %3479
      %3481 = vrot.lane.b32.xlu0 %v3332, 72
      %v3482 = vpop.permute.xlu0 %3481
      %3483 = vrot.lane.b32.xlu0 %v3334, 72
      %v3484 = vpop.permute.xlu0 %3483
      %3485 = vrot.lane.b32.xlu0 %v3336, 72
      %v3486 = vpop.permute.xlu0 %3485
      %3487 = vrot.lane.b32.xlu0 %v3338, 72
      %v3488 = vpop.permute.xlu0 %3487
      %3489 = vrot.lane.b32.xlu0 %v3340, 72
      %v3490 = vpop.permute.xlu0 %3489
      %3491 = vrot.lane.b32.xlu0 %v3342, 72
      %v3492 = vpop.permute.xlu0 %3491
      %3493 = vrot.lane.b32.xlu0 %v3344, 72
      %v3494 = vpop.permute.xlu0 %3493
      %3495 = vrot.lane.b32.xlu0 %v3346, 72
      %v3496 = vpop.permute.xlu0 %3495
      %3497 = vrot.lane.b32.xlu0 %v3348, 72
      %v3498 = vpop.permute.xlu0 %3497
      %3499 = vrot.lane.b32.xlu0 %v3350, 72
      %v3500 = vpop.permute.xlu0 %3499
      %3501 = vrot.lane.b32.xlu0 %v3352, 72
      %v3502 = vpop.permute.xlu0 %3501
      %3503 = vrot.lane.b32.xlu0 %v3354, 72
      %v3504 = vpop.permute.xlu0 %3503
      %3505 = vrot.lane.b32.xlu0 %v3356, 72
      %v3506 = vpop.permute.xlu0 %3505
      %3507 = vrot.lane.b32.xlu0 %v3358, 72
      %v3508 = vpop.permute.xlu0 %3507
      %3509 = vrot.lane.b32.xlu0 %v3360, 72
      %v3510 = vpop.permute.xlu0 %3509
      %3511 = vrot.lane.b32.xlu0 %v3362, 72
      %v3512 = vpop.permute.xlu0 %3511
      %3513 = vrot.lane.b32.xlu0 %v3364, 72
      %v3514 = vpop.permute.xlu0 %3513
      %3515 = vrot.lane.b32.xlu0 %v3366, 72
      %v3516 = vpop.permute.xlu0 %3515
      %3517 = vrot.lane.b32.xlu0 %v3368, 72
      %v3518 = vpop.permute.xlu0 %3517
      %3519 = vrot.lane.b32.xlu0 %v3370, 72
      %v3520 = vpop.permute.xlu0 %3519
      %3521 = vrot.lane.b32.xlu0 %v3372, 72
      %v3522 = vpop.permute.xlu0 %3521
      %3523 = vrot.lane.b32.xlu0 %v3374, 72
      %v3524 = vpop.permute.xlu0 %3523
      %3525 = vrot.lane.b32.xlu0 %v3376, 72
      %v3526 = vpop.permute.xlu0 %3525
      %3527 = vrot.lane.b32.xlu0 %v3378, 72
      %v3528 = vpop.permute.xlu0 %3527
      %3529 = vrot.lane.b32.xlu0 %v3380, 72
      %v3530 = vpop.permute.xlu0 %3529
      %3531 = vrot.lane.b32.xlu0 %v3382, 72
      %v3532 = vpop.permute.xlu0 %3531
      %3533 = vrot.lane.b32.xlu0 %v3384, 72
      %v3534 = vpop.permute.xlu0 %3533
      %3535 = vrot.lane.b32.xlu0 %v3386, 72
      %v3536 = vpop.permute.xlu0 %3535
      %3537 = vrot.lane.b32.xlu0 %v3388, 72
      %v3538 = vpop.permute.xlu0 %3537
      %3539 = vrot.lane.b32.xlu0 %v3390, 72
      %v3540 = vpop.permute.xlu0 %3539
      %3541 = vrot.lane.b32.xlu0 %v3392, 72
      %v3542 = vpop.permute.xlu0 %3541
      %3543 = vrot.lane.b32.xlu0 %v3394, 72
      %v3544 = vpop.permute.xlu0 %3543
      %3545 = vrot.lane.b32.xlu0 %v3396, 72
      %v3546 = vpop.permute.xlu0 %3545
      %3547 = vrot.lane.b32.xlu0 %v3398, 72
      %v3548 = vpop.permute.xlu0 %3547
      %3549 = vrot.lane.b32.xlu0 %v3400, 72
      %v3550 = vpop.permute.xlu0 %3549
      %3551 = vrot.lane.b32.xlu0 %v3402, 72
      %v3552 = vpop.permute.xlu0 %3551
      %3553 = vrot.lane.b32.xlu0 %v3404, 72
      %v3554 = vpop.permute.xlu0 %3553
      %3555 = vrot.lane.b32.xlu0 %v3406, 72
      %v3556 = vpop.permute.xlu0 %3555
      %3557 = vrot.lane.b32.xlu0 %v3408, 72
      %v3558 = vpop.permute.xlu0 %3557
      %3559 = vrot.lane.b32.xlu0 %v3410, 72
      %v3560 = vpop.permute.xlu0 %3559
      %3561 = vrot.lane.b32.xlu0 %v3412, 72
      %v3562 = vpop.permute.xlu0 %3561
      %3563 = vrot.lane.b32.xlu0 %v3414, 72
      %v3564 = vpop.permute.xlu0 %3563
      %3565 = vrot.lane.b32.xlu0 %v3416, 72
      %v3566 = vpop.permute.xlu0 %3565
      %3567 = vrot.lane.b32.xlu0 %v3418, 72
      %v3568 = vpop.permute.xlu0 %3567
      %3569 = vrot.lane.b32.xlu0 %v3420, 72
      %v3570 = vpop.permute.xlu0 %3569
      %3571 = vrot.lane.b32.xlu0 %v3422, 72
      %v3572 = vpop.permute.xlu0 %3571
      %3573 = vrot.lane.b32.xlu0 %v3424, 72
      %v3574 = vpop.permute.xlu0 %3573
      %3575 = vrot.lane.b32.xlu0 %v3426, 72
      %v3576 = vpop.permute.xlu0 %3575
      %3577 = vrot.lane.b32.xlu0 %v3428, 72
      %v3578 = vpop.permute.xlu0 %3577
      %3579 = vrot.lane.b32.xlu0 %v3430, 72
      %v3580 = vpop.permute.xlu0 %3579
      %3581 = vrot.lane.b32.xlu0 %v3432, 72
      %v3582 = vpop.permute.xlu0 %3581
      %3583 = vrot.lane.b32.xlu0 %v3434, 72
      %v3584 = vpop.permute.xlu0 %3583
      %3585 = vrot.lane.b32.xlu0 %v3436, 72
      %v3586 = vpop.permute.xlu0 %3585
      %3587 = vrot.lane.b32.xlu0 %v3438, 72
      %v3588 = vpop.permute.xlu0 %3587
      %3589 = vrot.lane.b32.xlu0 %v3440, 72
      %v3590 = vpop.permute.xlu0 %3589
      %3591 = vrot.lane.b32.xlu0 %v3442, 72
      %v3592 = vpop.permute.xlu0 %3591
      %3593 = vrot.lane.b32.xlu0 %v3444, 72
      %v3594 = vpop.permute.xlu0 %3593
      %3595 = vrot.lane.b32.xlu0 %v3446, 72
      %v3596 = vpop.permute.xlu0 %3595
      %3597 = vrot.lane.b32.xlu0 %v3448, 72
      %v3598 = vpop.permute.xlu0 %3597
      %3599 = vrot.lane.b32.xlu0 %v3450, 72
      %v3600 = vpop.permute.xlu0 %3599
      %3601 = vrot.lane.b32.xlu0 %v3452, 72
      %v3602 = vpop.permute.xlu0 %3601
      %3603 = vrot.lane.b32.xlu0 %v3454, 72
      %v3604 = vpop.permute.xlu0 %3603
      %3605 = vrot.lane.b32.xlu0 %v3456, 72
      %v3606 = vpop.permute.xlu0 %3605
      %3607 = vrot.lane.b32.xlu0 %v3458, 72
      %v3608 = vpop.permute.xlu0 %3607
      %3609 = vrot.lane.b32.xlu0 %v3460, 72
      %v3610 = vpop.permute.xlu0 %3609
      %3611 = vrot.lane.b32.xlu0 %v3462, 72
      %v3612 = vpop.permute.xlu0 %3611
      %3613 = vrot.lane.b32.xlu0 %v3464, 72
      %v3614 = vpop.permute.xlu0 %3613
      %3615 = vrot.lane.b32.xlu0 %v3466, 72
      %v3616 = vpop.permute.xlu0 %3615
      %3617 = vrot.lane.b32.xlu0 %v3468, 72
      %v3618 = vpop.permute.xlu0 %3617
      %3619 = vrot.lane.b32.xlu0 %v3470, 72
      %v3620 = vpop.permute.xlu0 %3619
      %3621 = vrot.lane.b32.xlu0 %v3472, 72
      %v3622 = vpop.permute.xlu0 %3621
      %3623 = vrot.lane.b32.xlu0 %v3474, 72
      %v3624 = vpop.permute.xlu0 %3623
      %3625 = vrot.lane.b32.xlu0 %v3476, 72
      %v3626 = vpop.permute.xlu0 %3625
      %3627 = vrot.lane.b32.xlu0 %v3478, 72
      %v3628 = vpop.permute.xlu0 %3627
      %3716 = vrot.lane.b32.xlu0 %v3177, 16
      %v3717 = vpop.permute.xlu0 %3716
      %3718 = vrot.lane.b32.xlu0 %v3178, 16
      %v3719 = vpop.permute.xlu0 %3718
      %3720 = vrot.lane.b32.xlu0 %v3179, 16
      %v3721 = vpop.permute.xlu0 %3720
      %3722 = vrot.lane.b32.xlu0 %v3180, 16
      %v3723 = vpop.permute.xlu0 %3722
      %3724 = vrot.lane.b32.xlu0 %v3181, 16
      %v3725 = vpop.permute.xlu0 %3724
      %3726 = vrot.lane.b32.xlu0 %v3182, 16
      %v3727 = vpop.permute.xlu0 %3726
      %3728 = vrot.lane.b32.xlu0 %v3183, 16
      %v3729 = vpop.permute.xlu0 %3728
      %3730 = vrot.lane.b32.xlu0 %v3184, 16
      %v3731 = vpop.permute.xlu0 %3730
      %3732 = vrot.lane.b32.xlu0 %v3185, 16
      %v3733 = vpop.permute.xlu0 %3732
      %3734 = vrot.lane.b32.xlu0 %v3186, 16
      %v3735 = vpop.permute.xlu0 %3734
      %3736 = vrot.lane.b32.xlu0 %v3187, 16
      %v3737 = vpop.permute.xlu0 %3736
      %3738 = vrot.lane.b32.xlu0 %v3188, 16
      %v3739 = vpop.permute.xlu0 %3738
      %3740 = vrot.lane.b32.xlu0 %v3189, 16
      %v3741 = vpop.permute.xlu0 %3740
      %3742 = vrot.lane.b32.xlu0 %v3190, 16
      %v3743 = vpop.permute.xlu0 %3742
      %3744 = vrot.lane.b32.xlu0 %v3191, 16
      %v3745 = vpop.permute.xlu0 %3744
      %3746 = vrot.lane.b32.xlu0 %v3192, 16
      %v3747 = vpop.permute.xlu0 %3746
      %3748 = vrot.lane.b32.xlu0 %v3193, 16
      %v3749 = vpop.permute.xlu0 %3748
      %3750 = vrot.lane.b32.xlu0 %v3194, 16
      %v3751 = vpop.permute.xlu0 %3750
      %3752 = vrot.lane.b32.xlu0 %v3195, 16
      %v3753 = vpop.permute.xlu0 %3752
      %3754 = vrot.lane.b32.xlu0 %v3196, 16
      %v3755 = vpop.permute.xlu0 %3754
      %3756 = vrot.lane.b32.xlu0 %v3197, 16
      %v3757 = vpop.permute.xlu0 %3756
      %3758 = vrot.lane.b32.xlu0 %v3198, 16
      %v3759 = vpop.permute.xlu0 %3758
      %3760 = vrot.lane.b32.xlu0 %v3199, 16
      %v3761 = vpop.permute.xlu0 %3760
      %3762 = vrot.lane.b32.xlu0 %v3200, 16
      %v3763 = vpop.permute.xlu0 %3762
      %3764 = vrot.lane.b32.xlu0 %v3201, 16
      %v3765 = vpop.permute.xlu0 %3764
      %3766 = vrot.lane.b32.xlu0 %v3202, 16
      %v3767 = vpop.permute.xlu0 %3766
      %3768 = vrot.lane.b32.xlu0 %v3203, 16
      %v3769 = vpop.permute.xlu0 %3768
      %3770 = vrot.lane.b32.xlu0 %v3204, 16
      %v3771 = vpop.permute.xlu0 %3770
      %3772 = vrot.lane.b32.xlu0 %v3205, 16
      %v3773 = vpop.permute.xlu0 %3772
      %3774 = vrot.lane.b32.xlu0 %v3206, 16
      %v3775 = vpop.permute.xlu0 %3774
      %3776 = vrot.lane.b32.xlu0 %v3207, 16
      %v3777 = vpop.permute.xlu0 %3776
      %3778 = vrot.lane.b32.xlu0 %v3208, 16
      %v3779 = vpop.permute.xlu0 %3778
      %3780 = vrot.lane.b32.xlu0 %v3209, 16
      %v3781 = vpop.permute.xlu0 %3780
      %3782 = vrot.lane.b32.xlu0 %v3210, 16
      %v3783 = vpop.permute.xlu0 %3782
      %3784 = vrot.lane.b32.xlu0 %v3211, 16
      %v3785 = vpop.permute.xlu0 %3784
      %3786 = vrot.lane.b32.xlu0 %v3212, 16
      %v3787 = vpop.permute.xlu0 %3786
      %3788 = vrot.lane.b32.xlu0 %v3213, 16
      %v3789 = vpop.permute.xlu0 %3788
      %3790 = vrot.lane.b32.xlu0 %v3214, 16
      %v3791 = vpop.permute.xlu0 %3790
      %3792 = vrot.lane.b32.xlu0 %v3215, 16
      %v3793 = vpop.permute.xlu0 %3792
      %3794 = vrot.lane.b32.xlu0 %v3216, 16
      %v3795 = vpop.permute.xlu0 %3794
      %3796 = vrot.lane.b32.xlu0 %v3217, 16
      %v3797 = vpop.permute.xlu0 %3796
      %3798 = vrot.lane.b32.xlu0 %v3218, 16
      %v3799 = vpop.permute.xlu0 %3798
      %3800 = vrot.lane.b32.xlu0 %v3219, 16
      %v3801 = vpop.permute.xlu0 %3800
      %3802 = vrot.lane.b32.xlu0 %v3220, 16
      %v3803 = vpop.permute.xlu0 %3802
      %3804 = vrot.lane.b32.xlu0 %v3221, 16
      %v3805 = vpop.permute.xlu0 %3804
      %3806 = vrot.lane.b32.xlu0 %v3222, 16
      %v3807 = vpop.permute.xlu0 %3806
      %3808 = vrot.lane.b32.xlu0 %v3223, 16
      %v3809 = vpop.permute.xlu0 %3808
      %3810 = vrot.lane.b32.xlu0 %v3224, 16
      %v3811 = vpop.permute.xlu0 %3810
      %3812 = vrot.lane.b32.xlu0 %v3225, 16
      %v3813 = vpop.permute.xlu0 %3812
      %3814 = vrot.lane.b32.xlu0 %v3226, 16
      %v3815 = vpop.permute.xlu0 %3814
      %3816 = vrot.lane.b32.xlu0 %v3227, 16
      %v3817 = vpop.permute.xlu0 %3816
      %3818 = vrot.lane.b32.xlu0 %v3228, 16
      %v3819 = vpop.permute.xlu0 %3818
      %3820 = vrot.lane.b32.xlu0 %v3229, 16
      %v3821 = vpop.permute.xlu0 %3820
      %3822 = vrot.lane.b32.xlu0 %v3230, 16
      %v3823 = vpop.permute.xlu0 %3822
      %3824 = vrot.lane.b32.xlu0 %v3231, 16
      %v3825 = vpop.permute.xlu0 %3824
      %3826 = vrot.lane.b32.xlu0 %v3232, 16
      %v3827 = vpop.permute.xlu0 %3826
      %3828 = vrot.lane.b32.xlu0 %v3233, 16
      %v3829 = vpop.permute.xlu0 %3828
      %3830 = vrot.lane.b32.xlu0 %v3234, 16
      %v3831 = vpop.permute.xlu0 %3830
      %3832 = vrot.lane.b32.xlu0 %v3235, 16
      %v3833 = vpop.permute.xlu0 %3832
      %3834 = vrot.lane.b32.xlu0 %v3236, 16
      %v3835 = vpop.permute.xlu0 %3834
      %3836 = vrot.lane.b32.xlu0 %v3237, 16
      %v3837 = vpop.permute.xlu0 %3836
      %3838 = vrot.lane.b32.xlu0 %v3238, 16
      %v3839 = vpop.permute.xlu0 %3838
      %3840 = vrot.lane.b32.xlu0 %v3239, 16
      %v3841 = vpop.permute.xlu0 %3840
      %3842 = vrot.lane.b32.xlu0 %v3240, 16
      %v3843 = vpop.permute.xlu0 %3842
      %3844 = vrot.lane.b32.xlu0 %v3241, 16
      %v3845 = vpop.permute.xlu0 %3844
      %3846 = vrot.lane.b32.xlu0 %v3242, 16
      %v3847 = vpop.permute.xlu0 %3846
      %3848 = vrot.lane.b32.xlu0 %v3243, 16
      %v3849 = vpop.permute.xlu0 %3848
      %3850 = vrot.lane.b32.xlu0 %v3244, 16
      %v3851 = vpop.permute.xlu0 %3850
      %3852 = vrot.lane.b32.xlu0 %v3245, 16
      %v3853 = vpop.permute.xlu0 %3852
      %3854 = vrot.lane.b32.xlu0 %v3246, 16
      %v3855 = vpop.permute.xlu0 %3854
      %3856 = vrot.lane.b32.xlu0 %v3247, 16
      %v3857 = vpop.permute.xlu0 %3856
      %3858 = vrot.lane.b32.xlu0 %v3248, 16
      %v3859 = vpop.permute.xlu0 %3858
      %3860 = vrot.lane.b32.xlu0 %v3249, 16
      %v3861 = vpop.permute.xlu0 %3860
      %3862 = vrot.lane.b32.xlu0 %v3250, 16
      %v3863 = vpop.permute.xlu0 %3862
      %3864 = vrot.lane.b32.xlu0 %v3251, 16
      %v3865 = vpop.permute.xlu0 %3864
      %vm3941 = vcmask 588800
      %v3942 = vsel %vm3941, %v3152, %v3480
      %v3943 = vsel %vm3941, %v3153, %v3482
      %v3944 = vsel %vm3941, %v3154, %v3484
      %v3945 = vsel %vm3941, %v3155, %v3486
      %v3946 = vsel %vm3941, %v3156, %v3488
      %v3947 = vsel %vm3941, %v3157, %v3490
      %v3948 = vsel %vm3941, %v3158, %v3492
      %v3949 = vsel %vm3941, %v3159, %v3494
      %v3950 = vsel %vm3941, %v3160, %v3496
      %v3951 = vsel %vm3941, %v3161, %v3498
      %v3952 = vsel %vm3941, %v3162, %v3500
      %v3953 = vsel %vm3941, %v3163, %v3502
      %v3954 = vsel %vm3941, %v3164, %v3504
      %v3955 = vsel %vm3941, %v3165, %v3506
      %v3956 = vsel %vm3941, %v3166, %v3508
      %v3957 = vsel %vm3941, %v3167, %v3510
      %v3958 = vsel %vm3941, %v3168, %v3512
      %v3959 = vsel %vm3941, %v3169, %v3514
      %v3960 = vsel %vm3941, %v3170, %v3516
      %v3961 = vsel %vm3941, %v3171, %v3518
      %v3962 = vsel %vm3941, %v3172, %v3520
      %v3963 = vsel %vm3941, %v3173, %v3522
      %v3964 = vsel %vm3941, %v3174, %v3524
      %v3965 = vsel %vm3941, %v3175, %v3526
      %v3966 = vsel %vm3941, %v3176, %v3528
      %v3967 = vsel %vm3941, %v3177, %v3530
      %v3968 = vsel %vm3941, %v3178, %v3532
      %v3969 = vsel %vm3941, %v3179, %v3534
      %v3970 = vsel %vm3941, %v3180, %v3536
      %v3971 = vsel %vm3941, %v3181, %v3538
      %v3972 = vsel %vm3941, %v3182, %v3540
      %v3973 = vsel %vm3941, %v3183, %v3542
      %v3974 = vsel %vm3941, %v3184, %v3544
      %v3975 = vsel %vm3941, %v3185, %v3546
      %v3976 = vsel %vm3941, %v3186, %v3548
      %v3977 = vsel %vm3941, %v3187, %v3550
      %v3978 = vsel %vm3941, %v3188, %v3552
      %v3979 = vsel %vm3941, %v3189, %v3554
      %v3980 = vsel %vm3941, %v3190, %v3556
      %v3981 = vsel %vm3941, %v3191, %v3558
      %v3982 = vsel %vm3941, %v3192, %v3560
      %v3983 = vsel %vm3941, %v3193, %v3562
      %v3984 = vsel %vm3941, %v3194, %v3564
      %v3985 = vsel %vm3941, %v3195, %v3566
      %v3986 = vsel %vm3941, %v3196, %v3568
      %v3987 = vsel %vm3941, %v3197, %v3570
      %v3988 = vsel %vm3941, %v3198, %v3572
      %v3989 = vsel %vm3941, %v3199, %v3574
      %v3990 = vsel %vm3941, %v3200, %v3576
      %v3991 = vsel %vm3941, %v3201, %v3578
      %v3992 = vsel %vm3941, %v3202, %v3580
      %v3993 = vsel %vm3941, %v3203, %v3582
      %v3994 = vsel %vm3941, %v3204, %v3584
      %v3995 = vsel %vm3941, %v3205, %v3586
      %v3996 = vsel %vm3941, %v3206, %v3588
      %v3997 = vsel %vm3941, %v3207, %v3590
      %v3998 = vsel %vm3941, %v3208, %v3592
      %v3999 = vsel %vm3941, %v3209, %v3594
      %v4000 = vsel %vm3941, %v3210, %v3596
      %v4001 = vsel %vm3941, %v3211, %v3598
      %v4002 = vsel %vm3941, %v3212, %v3600
      %v4003 = vsel %vm3941, %v3213, %v3602
      %v4004 = vsel %vm3941, %v3214, %v3604
      %v4005 = vsel %vm3941, %v3215, %v3606
      %v4006 = vsel %vm3941, %v3216, %v3608
      %v4007 = vsel %vm3941, %v3217, %v3610
      %v4008 = vsel %vm3941, %v3218, %v3612
      %v4009 = vsel %vm3941, %v3219, %v3614
      %v4010 = vsel %vm3941, %v3220, %v3616
      %v4011 = vsel %vm3941, %v3221, %v3618
      %v4012 = vsel %vm3941, %v3222, %v3620
      %v4013 = vsel %vm3941, %v3223, %v3622
      %v4014 = vsel %vm3941, %v3224, %v3624
      %v4015 = vsel %vm3941, %v3225, %v3626
      %v4016 = vsel %vm3941, %v3226, %v3628
      %v4017 = vsel %vm1841, %v3480, %v3717
      %v4018 = vsel %vm1841, %v3482, %v3719
      %v4019 = vsel %vm1841, %v3484, %v3721
      %v4020 = vsel %vm1841, %v3486, %v3723
      %v4021 = vsel %vm1841, %v3488, %v3725
      %v4022 = vsel %vm1841, %v3490, %v3727
      %v4023 = vsel %vm1841, %v3492, %v3729
      %v4024 = vsel %vm1841, %v3494, %v3731
      %v4025 = vsel %vm1841, %v3496, %v3733
      %v4026 = vsel %vm1841, %v3498, %v3735
      %v4027 = vsel %vm1841, %v3500, %v3737
      %v4028 = vsel %vm1841, %v3502, %v3739
      %v4029 = vsel %vm1841, %v3504, %v3741
      %v4030 = vsel %vm1841, %v3506, %v3743
      %v4031 = vsel %vm1841, %v3508, %v3745
      %v4032 = vsel %vm1841, %v3510, %v3747
      %v4033 = vsel %vm1841, %v3512, %v3749
      %v4034 = vsel %vm1841, %v3514, %v3751
      %v4035 = vsel %vm1841, %v3516, %v3753
      %v4036 = vsel %vm1841, %v3518, %v3755
      %v4037 = vsel %vm1841, %v3520, %v3757
      %v4038 = vsel %vm1841, %v3522, %v3759
      %v4039 = vsel %vm1841, %v3524, %v3761
      %v4040 = vsel %vm1841, %v3526, %v3763
      %v4041 = vsel %vm1841, %v3528, %v3765
      %v4042 = vsel %vm1841, %v3530, %v3767
      %v4043 = vsel %vm1841, %v3532, %v3769
      %v4044 = vsel %vm1841, %v3534, %v3771
      %v4045 = vsel %vm1841, %v3536, %v3773
      %v4046 = vsel %vm1841, %v3538, %v3775
      %v4047 = vsel %vm1841, %v3540, %v3777
      %v4048 = vsel %vm1841, %v3542, %v3779
      %v4049 = vsel %vm1841, %v3544, %v3781
      %v4050 = vsel %vm1841, %v3546, %v3783
      %v4051 = vsel %vm1841, %v3548, %v3785
      %v4052 = vsel %vm1841, %v3550, %v3787
      %v4053 = vsel %vm1841, %v3552, %v3789
      %v4054 = vsel %vm1841, %v3554, %v3791
      %v4055 = vsel %vm1841, %v3556, %v3793
      %v4056 = vsel %vm1841, %v3558, %v3795
      %v4057 = vsel %vm1841, %v3560, %v3797
      %v4058 = vsel %vm1841, %v3562, %v3799
      %v4059 = vsel %vm1841, %v3564, %v3801
      %v4060 = vsel %vm1841, %v3566, %v3803
      %v4061 = vsel %vm1841, %v3568, %v3805
      %v4062 = vsel %vm1841, %v3570, %v3807
      %v4063 = vsel %vm1841, %v3572, %v3809
      %v4064 = vsel %vm1841, %v3574, %v3811
      %v4065 = vsel %vm1841, %v3576, %v3813
      %v4066 = vsel %vm1841, %v3578, %v3815
      %v4067 = vsel %vm1841, %v3580, %v3817
      %v4068 = vsel %vm1841, %v3582, %v3819
      %v4069 = vsel %vm1841, %v3584, %v3821
      %v4070 = vsel %vm1841, %v3586, %v3823
      %v4071 = vsel %vm1841, %v3588, %v3825
      %v4072 = vsel %vm1841, %v3590, %v3827
      %v4073 = vsel %vm1841, %v3592, %v3829
      %v4074 = vsel %vm1841, %v3594, %v3831
      %v4075 = vsel %vm1841, %v3596, %v3833
      %v4076 = vsel %vm1841, %v3598, %v3835
      %v4077 = vsel %vm1841, %v3600, %v3837
      %v4078 = vsel %vm1841, %v3602, %v3839
      %v4079 = vsel %vm1841, %v3604, %v3841
      %v4080 = vsel %vm1841, %v3606, %v3843
      %v4081 = vsel %vm1841, %v3608, %v3845
      %v4082 = vsel %vm1841, %v3610, %v3847
      %v4083 = vsel %vm1841, %v3612, %v3849
      %v4084 = vsel %vm1841, %v3614, %v3851
      %v4085 = vsel %vm1841, %v3616, %v3853
      %v4086 = vsel %vm1841, %v3618, %v3855
      %v4087 = vsel %vm1841, %v3620, %v3857
      %v4088 = vsel %vm1841, %v3622, %v3859
      %v4089 = vsel %vm1841, %v3624, %v3861
      %v4090 = vsel %vm1841, %v3626, %v3863
      %v4091 = vsel %vm1841, %v3628, %v3865
      %v4092 = vpack.c.bf16 %v3943, %v3942
      %v4093 = vpack.c.bf16 %v4018, %v4017
      %v4094 = vpack.c.bf16 %v3945, %v3944
      %v4095 = vpack.c.bf16 %v4020, %v4019
      %v4096 = vpack.c.bf16 %v3947, %v3946
      %v4097 = vpack.c.bf16 %v4022, %v4021
      %v4098 = vpack.c.bf16 %v3949, %v3948
      %v4099 = vpack.c.bf16 %v4024, %v4023
      %v4100 = vpack.c.bf16 %v3951, %v3950
      %v4101 = vpack.c.bf16 %v4026, %v4025
      %v4102 = vpack.c.bf16 %v3953, %v3952
      %v4103 = vpack.c.bf16 %v4028, %v4027
      %v4104 = vpack.c.bf16 %v3955, %v3954
      %v4105 = vpack.c.bf16 %v4030, %v4029
      %v4106 = vpack.c.bf16 %v3957, %v3956
      %v4107 = vpack.c.bf16 %v4032, %v4031
      %v4108 = vpack.c.bf16 %v3959, %v3958
      %v4109 = vpack.c.bf16 %v4034, %v4033
      %v4110 = vpack.c.bf16 %v3961, %v3960
      %v4111 = vpack.c.bf16 %v4036, %v4035
      %v4112 = vpack.c.bf16 %v3963, %v3962
      %v4113 = vpack.c.bf16 %v4038, %v4037
      %v4114 = vpack.c.bf16 %v3965, %v3964
      %v4115 = vpack.c.bf16 %v4040, %v4039
      %v4116 = vpack.c.bf16 %v3967, %v3966
      %v4117 = vpack.c.bf16 %v4042, %v4041
      %v4118 = vpack.c.bf16 %v3969, %v3968
      %v4119 = vpack.c.bf16 %v4044, %v4043
      %v4120 = vpack.c.bf16 %v3971, %v3970
      %v4121 = vpack.c.bf16 %v4046, %v4045
      %v4122 = vpack.c.bf16 %v3973, %v3972
      %v4123 = vpack.c.bf16 %v4048, %v4047
      %v4124 = vpack.c.bf16 %v3975, %v3974
      %v4125 = vpack.c.bf16 %v4050, %v4049
      %v4126 = vpack.c.bf16 %v3977, %v3976
      %v4127 = vpack.c.bf16 %v4052, %v4051
      %v4128 = vpack.c.bf16 %v3979, %v3978
      %v4129 = vpack.c.bf16 %v4054, %v4053
      %v4130 = vpack.c.bf16 %v3981, %v3980
      %v4131 = vpack.c.bf16 %v4056, %v4055
      %v4132 = vpack.c.bf16 %v3983, %v3982
      %v4133 = vpack.c.bf16 %v4058, %v4057
      %v4134 = vpack.c.bf16 %v3985, %v3984
      %v4135 = vpack.c.bf16 %v4060, %v4059
      %v4136 = vpack.c.bf16 %v3987, %v3986
      %v4137 = vpack.c.bf16 %v4062, %v4061
      %v4138 = vpack.c.bf16 %v3989, %v3988
      %v4139 = vpack.c.bf16 %v4064, %v4063
      %v4140 = vpack.c.bf16 %v3991, %v3990
      %v4141 = vpack.c.bf16 %v4066, %v4065
      %v4142 = vpack.c.bf16 %v3993, %v3992
      %v4143 = vpack.c.bf16 %v4068, %v4067
      %v4144 = vpack.c.bf16 %v3995, %v3994
      %v4145 = vpack.c.bf16 %v4070, %v4069
      %v4146 = vpack.c.bf16 %v3997, %v3996
      %v4147 = vpack.c.bf16 %v4072, %v4071
      %v4148 = vpack.c.bf16 %v3999, %v3998
      %v4149 = vpack.c.bf16 %v4074, %v4073
      %v4150 = vpack.c.bf16 %v4001, %v4000
      %v4151 = vpack.c.bf16 %v4076, %v4075
      %v4152 = vpack.c.bf16 %v4003, %v4002
      %v4153 = vpack.c.bf16 %v4078, %v4077
      %v4154 = vpack.c.bf16 %v4005, %v4004
      %v4155 = vpack.c.bf16 %v4080, %v4079
      %v4156 = vpack.c.bf16 %v4007, %v4006
      %v4157 = vpack.c.bf16 %v4082, %v4081
      %v4158 = vpack.c.bf16 %v4009, %v4008
      %v4159 = vpack.c.bf16 %v4084, %v4083
      %v4160 = vpack.c.bf16 %v4011, %v4010
      %v4161 = vpack.c.bf16 %v4086, %v4085
      %v4162 = vpack.c.bf16 %v4013, %v4012
      %v4163 = vpack.c.bf16 %v4088, %v4087
      %v4164 = vpack.c.bf16 %v4015, %v4014
      %v4165 = vpack.c.bf16 %v4090, %v4089
      %v4166 = vpack.c.bf16 %v4016, %v4016
      %v4167 = vpack.c.bf16 %v4091, %v4091
      %v4168 = vld [vmem:[%s2] sm:$0xf]
      %v4169 = vld [vmem:[%s2 + $0x4] sm:$0xf]
      %v4170 = vld [vmem:[%s2 + $0x8] sm:$0xf]
      %v4171 = vld [vmem:[%s2 + $0xc] sm:$0xf]
      %v4172 = vld [vmem:[%s2 + $0x10] sm:$0xf]
      %v4173 = vld [vmem:[%s2 + $0x14] sm:$0xf]
      %v4174 = vld [vmem:[%s2 + $0x18] sm:$0xf]
      %v4175 = vld [vmem:[%s2 + $0x1c] sm:$0xf]
      %v4176 = vld [vmem:[%s2 + $0x20] sm:$0xf]
      %v4177 = vld [vmem:[%s2 + $0x24] sm:$0xf]
      %v4178 = vld [vmem:[%s2 + $0x28] sm:$0xf]
      %v4179 = vld [vmem:[%s2 + $0x2c] sm:$0xf]
      %v4180 = vld [vmem:[%s2 + $0x30] sm:$0xf]
      %v4181 = vld [vmem:[%s2 + $0x34] sm:$0xf]
      %v4182 = vld [vmem:[%s2 + $0x38] sm:$0xf]
      %v4183 = vld [vmem:[%s2 + $0x3c] sm:$0xf]
      %v4184 = vld [vmem:[%s2 + $0x40] sm:$0xf]
      %v4185 = vld [vmem:[%s2 + $0x44] sm:$0xf]
      %v4186 = vld [vmem:[%s2 + $0x48] sm:$0xf]
      %v4187 = vld [vmem:[%s2 + $0x4c] sm:$0xf]
      %v4188 = vld [vmem:[%s2 + $0x50] sm:$0xf]
      %v4189 = vld [vmem:[%s2 + $0x54] sm:$0xf]
      %v4190 = vld [vmem:[%s2 + $0x58] sm:$0xf]
      %v4191 = vld [vmem:[%s2 + $0x5c] sm:$0xf]
      %v4192 = vld [vmem:[%s2 + $0x60] sm:$0xf]
      %v4193 = vld [vmem:[%s2 + $0x64] sm:$0xf]
      %v4194 = vld [vmem:[%s2 + $0x68] sm:$0xf]
      %v4222 = vunpack.c.l.b16 %v4168
      %v4223 = vunpack.c.l.b16 %v4169
      %v4224 = vunpack.c.l.b16 %v4170
      %v4225 = vunpack.c.l.b16 %v4171
      %v4226 = vunpack.c.l.b16 %v4172
      %v4227 = vunpack.c.l.b16 %v4173
      %v4228 = vunpack.c.l.b16 %v4174
      %v4229 = vunpack.c.l.b16 %v4175
      %v4230 = vunpack.c.l.b16 %v4176
      %v4231 = vunpack.c.l.b16 %v4177
      %v4232 = vunpack.c.l.b16 %v4178
      %v4233 = vunpack.c.l.b16 %v4179
      %v4234 = vunpack.c.l.b16 %v4180
      %v4235 = vunpack.c.l.b16 %v4181
      %v4236 = vunpack.c.l.b16 %v4182
      %v4237 = vunpack.c.l.b16 %v4183
      %v4238 = vunpack.c.l.b16 %v4184
      %v4239 = vunpack.c.l.b16 %v4185
      %v4240 = vunpack.c.l.b16 %v4186
      %v4241 = vunpack.c.l.b16 %v4187
      %v4242 = vunpack.c.l.b16 %v4188
      %v4243 = vunpack.c.l.b16 %v4189
      %v4244 = vunpack.c.l.b16 %v4190
      %v4245 = vunpack.c.l.b16 %v4191
      %v4246 = vunpack.c.l.b16 %v4192
      %v4247 = vunpack.c.l.b16 %v4193
      %v4248 = vunpack.c.l.b16 %v4194
      %v4249 = vpack.c.b16 %v4223, %v4222
      %v4250 = vpack.c.b16 %v4225, %v4224
      %v4251 = vpack.c.b16 %v4227, %v4226
      %v4252 = vpack.c.b16 %v4229, %v4228
      %v4253 = vpack.c.b16 %v4231, %v4230
      %v4254 = vpack.c.b16 %v4233, %v4232
      %v4255 = vpack.c.b16 %v4235, %v4234
      %v4256 = vpack.c.b16 %v4237, %v4236
      %v4257 = vpack.c.b16 %v4239, %v4238
      %v4258 = vpack.c.b16 %v4241, %v4240
      %v4259 = vpack.c.b16 %v4243, %v4242
      %v4260 = vpack.c.b16 %v4245, %v4244
      %v4261 = vpack.c.b16 %v4247, %v4246
      %v4262 = vpack.c.b16 %v4248, %v4248
      %vm4276 = vcmask 719872
      %v4278 = vsel %vm4276, %v4093, 0
      %v4281 = vsel %vm4276, %v4095, 0
      %v4284 = vsel %vm4276, %v4097, 0
      %v4287 = vsel %vm4276, %v4099, 0
      %v4290 = vsel %vm4276, %v4101, 0
      %v4293 = vsel %vm4276, %v4103, 0
      %v4296 = vsel %vm4276, %v4105, 0
      %v4299 = vsel %vm4276, %v4107, 0
      %v4302 = vsel %vm4276, %v4109, 0
      %v4305 = vsel %vm4276, %v4111, 0
      %v4308 = vsel %vm4276, %v4113, 0
      %v4311 = vsel %vm4276, %v4115, 0
      %v4314 = vsel %vm4276, %v4117, 0
      %v4317 = vsel %vm4276, %v4119, 0
      %v4320 = vsel %vm4276, %v4121, 0
      %v4323 = vsel %vm4276, %v4123, 0
      %v4326 = vsel %vm4276, %v4125, 0
      %v4329 = vsel %vm4276, %v4127, 0
      %v4332 = vsel %vm4276, %v4129, 0
      %v4335 = vsel %vm4276, %v4131, 0
      %v4338 = vsel %vm4276, %v4133, 0
      %v4341 = vsel %vm4276, %v4135, 0
      %v4344 = vsel %vm4276, %v4137, 0
      %v4347 = vsel %vm4276, %v4139, 0
      %v4350 = vsel %vm4276, %v4141, 0
      %v4353 = vsel %vm4276, %v4143, 0
      %v4356 = vsel %vm4276, %v4145, 0
      %v4359 = vsel %vm4276, %v4147, 0
      %v4362 = vsel %vm4276, %v4149, 0
      %v4365 = vsel %vm4276, %v4151, 0
      %v4368 = vsel %vm4276, %v4153, 0
      %v4371 = vsel %vm4276, %v4155, 0
      %v4374 = vsel %vm4276, %v4157, 0
      %v4377 = vsel %vm4276, %v4159, 0
      %v4380 = vsel %vm4276, %v4161, 0
      %v4383 = vsel %vm4276, %v4163, 0
      %v4386 = vsel %vm4276, %v4165, 0
      %v4389 = vsel %vm4276, %v4167, 0
      %v4392 = vsel %vm2548, %v4262, 0
      %4394 = vmatprep.subr.bf16.mxu0 0
      %4395 = vmatpush1.bf16.msra.mxu0 %v4256
      %4396 = vmatprep.subr.bf16.mxu0 0
      %4397 = vmatpush1.bf16.msra.mxu0 %v4255
      %4398 = vmatprep.subr.bf16.mxu0 0
      %4399 = vmatpush1.bf16.msra.mxu0 %v4254
      %4400 = vmatprep.subr.bf16.mxu0 0
      %4401 = vmatpush1.bf16.msra.mxu0 %v4253
      %4402 = vmatprep.subr.bf16.mxu0 0
      %4403 = vmatpush1.bf16.msra.mxu0 %v4252
      %4404 = vmatprep.subr.bf16.mxu0 0
      %4405 = vmatpush1.bf16.msra.mxu0 %v4251
      %4406 = vmatprep.subr.bf16.mxu0 0
      %4407 = vmatpush1.bf16.msra.mxu0 %v4250
      %4408 = vmatprep.subr.bf16.mxu0 0
      %4409 = vmatpush1.bf16.msra.mxu0 %v4249
      %4410 = vmatprep.subr.bf16.mxu0 0
      %4411 = vmatpush2.bf16.msra.mxu0 0
      %4412 = vmatprep.subr.bf16.mxu0 0
      %4413 = vmatpush2.bf16.msra.mxu0 0
      %4414 = vmatprep.subr.bf16.mxu0 0
      %4415 = vmatpush2.bf16.msra.mxu0 %v4392
      %4416 = vmatprep.subr.bf16.mxu0 0
      %4417 = vmatpush2.bf16.msra.mxu0 %v4261
      %4418 = vmatprep.subr.bf16.mxu0 0
      %4419 = vmatpush2.bf16.msra.mxu0 %v4260
      %4420 = vmatprep.subr.bf16.mxu0 0
      %4421 = vmatpush2.bf16.msra.mxu0 %v4259
      %4422 = vmatprep.subr.bf16.mxu0 0
      %4423 = vmatpush2.bf16.msra.mxu0 %v4258
      %4424 = vmatprep.subr.bf16.mxu0 0
      %4425 = vmatpush2.bf16.msra.mxu0 %v4257
      %4426 = vmatprep.mubr.bf16.mxu0 %v4278
      %4427 = vmatmul.mubr.bf16.gmra.mxu0 %v4092
      %v4428 = vpop.f32.mrf.mxu0
      %v4429 = vadd.f32 0.0, %v4428
      %v4430 = vpop.f32.mrf.mxu0
      %v4431 = vpop.f32.mrf.mxu0
      %v4432 = vadd.f32 0.0, %v4431
      %v4433 = vpop.f32.mrf.mxu0
      %4434 = vmatprep.mubr.bf16.mxu0 %v4281
      %4435 = vmatmul.mubr.bf16.gmra.mxu0 %v4094
      %v4436 = vpop.f32.mrf.mxu0
      %v4437 = vadd.f32 0.0, %v4436
      %v4438 = vpop.f32.mrf.mxu0
      %v4439 = vpop.f32.mrf.mxu0
      %v4440 = vadd.f32 0.0, %v4439
      %v4441 = vpop.f32.mrf.mxu0
      %4442 = vmatprep.mubr.bf16.mxu0 %v4284
      %4443 = vmatmul.mubr.bf16.gmra.mxu0 %v4096
      %v4444 = vpop.f32.mrf.mxu0
      %v4445 = vadd.f32 0.0, %v4444
      %v4446 = vpop.f32.mrf.mxu0
      %v4447 = vpop.f32.mrf.mxu0
      %v4448 = vadd.f32 0.0, %v4447
      %v4449 = vpop.f32.mrf.mxu0
      %4450 = vmatprep.mubr.bf16.mxu0 %v4287
      %4451 = vmatmul.mubr.bf16.gmra.mxu0 %v4098
      %v4452 = vpop.f32.mrf.mxu0
      %v4453 = vadd.f32 0.0, %v4452
      %v4454 = vpop.f32.mrf.mxu0
      %v4455 = vpop.f32.mrf.mxu0
      %v4456 = vadd.f32 0.0, %v4455
      %v4457 = vpop.f32.mrf.mxu0
      %4458 = vmatprep.mubr.bf16.mxu0 %v4290
      %4459 = vmatmul.mubr.bf16.gmra.mxu0 %v4100
      %v4460 = vpop.f32.mrf.mxu0
      %v4461 = vadd.f32 0.0, %v4460
      %v4462 = vpop.f32.mrf.mxu0
      %v4463 = vpop.f32.mrf.mxu0
      %v4464 = vadd.f32 0.0, %v4463
      %v4465 = vpop.f32.mrf.mxu0
      %4466 = vmatprep.mubr.bf16.mxu0 %v4293
      %4467 = vmatmul.mubr.bf16.gmra.mxu0 %v4102
      %v4468 = vpop.f32.mrf.mxu0
      %v4469 = vadd.f32 0.0, %v4468
      %v4470 = vpop.f32.mrf.mxu0
      %v4471 = vpop.f32.mrf.mxu0
      %v4472 = vadd.f32 0.0, %v4471
      %v4473 = vpop.f32.mrf.mxu0
      %4474 = vmatprep.mubr.bf16.mxu0 %v4296
      %4475 = vmatmul.mubr.bf16.gmra.mxu0 %v4104
      %v4476 = vpop.f32.mrf.mxu0
      %v4477 = vadd.f32 0.0, %v4476
      %v4478 = vpop.f32.mrf.mxu0
      %v4479 = vpop.f32.mrf.mxu0
      %v4480 = vadd.f32 0.0, %v4479
      %v4481 = vpop.f32.mrf.mxu0
      %4482 = vmatprep.mubr.bf16.mxu0 %v4299
      %4483 = vmatmul.mubr.bf16.gmra.mxu0 %v4106
      %v4484 = vpop.f32.mrf.mxu0
      %v4485 = vadd.f32 0.0, %v4484
      %v4486 = vpop.f32.mrf.mxu0
      %v4487 = vpop.f32.mrf.mxu0
      %v4488 = vadd.f32 0.0, %v4487
      %v4489 = vpop.f32.mrf.mxu0
      %4490 = vmatprep.mubr.bf16.mxu0 %v4302
      %4491 = vmatmul.mubr.bf16.gmra.mxu0 %v4108
      %v4492 = vpop.f32.mrf.mxu0
      %v4493 = vadd.f32 0.0, %v4492
      %v4494 = vpop.f32.mrf.mxu0
      %v4495 = vpop.f32.mrf.mxu0
      %v4496 = vadd.f32 0.0, %v4495
      %v4497 = vpop.f32.mrf.mxu0
      %4498 = vmatprep.mubr.bf16.mxu0 %v4305
      %4499 = vmatmul.mubr.bf16.gmra.mxu0 %v4110
      %v4500 = vpop.f32.mrf.mxu0
      %v4501 = vadd.f32 0.0, %v4500
      %v4502 = vpop.f32.mrf.mxu0
      %v4503 = vpop.f32.mrf.mxu0
      %v4504 = vadd.f32 0.0, %v4503
      %v4505 = vpop.f32.mrf.mxu0
      %4506 = vmatprep.mubr.bf16.mxu0 %v4308
      %4507 = vmatmul.mubr.bf16.gmra.mxu0 %v4112
      %v4508 = vpop.f32.mrf.mxu0
      %v4509 = vadd.f32 0.0, %v4508
      %v4510 = vpop.f32.mrf.mxu0
      %v4511 = vpop.f32.mrf.mxu0
      %v4512 = vadd.f32 0.0, %v4511
      %v4513 = vpop.f32.mrf.mxu0
      %4514 = vmatprep.mubr.bf16.mxu0 %v4311
      %4515 = vmatmul.mubr.bf16.gmra.mxu0 %v4114
      %v4516 = vpop.f32.mrf.mxu0
      %v4517 = vadd.f32 0.0, %v4516
      %v4518 = vpop.f32.mrf.mxu0
      %v4519 = vpop.f32.mrf.mxu0
      %v4520 = vadd.f32 0.0, %v4519
      %v4521 = vpop.f32.mrf.mxu0
      %4522 = vmatprep.mubr.bf16.mxu0 %v4314
      %4523 = vmatmul.mubr.bf16.gmra.mxu0 %v4116
      %v4524 = vpop.f32.mrf.mxu0
      %v4525 = vadd.f32 0.0, %v4524
      %v4526 = vpop.f32.mrf.mxu0
      %v4527 = vpop.f32.mrf.mxu0
      %v4528 = vadd.f32 0.0, %v4527
      %v4529 = vpop.f32.mrf.mxu0
      %4530 = vmatprep.mubr.bf16.mxu0 %v4317
      %4531 = vmatmul.mubr.bf16.gmra.mxu0 %v4118
      %v4532 = vpop.f32.mrf.mxu0
      %v4533 = vadd.f32 0.0, %v4532
      %v4534 = vpop.f32.mrf.mxu0
      %v4535 = vpop.f32.mrf.mxu0
      %v4536 = vadd.f32 0.0, %v4535
      %v4537 = vpop.f32.mrf.mxu0
      %4538 = vmatprep.mubr.bf16.mxu0 %v4320
      %4539 = vmatmul.mubr.bf16.gmra.mxu0 %v4120
      %v4540 = vpop.f32.mrf.mxu0
      %v4541 = vadd.f32 0.0, %v4540
      %v4542 = vpop.f32.mrf.mxu0
      %v4543 = vpop.f32.mrf.mxu0
      %v4544 = vadd.f32 0.0, %v4543
      %v4545 = vpop.f32.mrf.mxu0
      %4546 = vmatprep.mubr.bf16.mxu0 %v4323
      %4547 = vmatmul.mubr.bf16.gmra.mxu0 %v4122
      %v4548 = vpop.f32.mrf.mxu0
      %v4549 = vadd.f32 0.0, %v4548
      %v4550 = vpop.f32.mrf.mxu0
      %v4551 = vpop.f32.mrf.mxu0
      %v4552 = vadd.f32 0.0, %v4551
      %v4553 = vpop.f32.mrf.mxu0
      %4554 = vmatprep.mubr.bf16.mxu0 %v4326
      %4555 = vmatmul.mubr.bf16.gmra.mxu0 %v4124
      %v4556 = vpop.f32.mrf.mxu0
      %v4557 = vadd.f32 0.0, %v4556
      %v4558 = vpop.f32.mrf.mxu0
      %v4559 = vpop.f32.mrf.mxu0
      %v4560 = vadd.f32 0.0, %v4559
      %v4561 = vpop.f32.mrf.mxu0
      %4562 = vmatprep.mubr.bf16.mxu0 %v4329
      %4563 = vmatmul.mubr.bf16.gmra.mxu0 %v4126
      %v4564 = vpop.f32.mrf.mxu0
      %v4565 = vadd.f32 0.0, %v4564
      %v4566 = vpop.f32.mrf.mxu0
      %v4567 = vpop.f32.mrf.mxu0
      %v4568 = vadd.f32 0.0, %v4567
      %v4569 = vpop.f32.mrf.mxu0
      %4570 = vmatprep.mubr.bf16.mxu0 %v4332
      %4571 = vmatmul.mubr.bf16.gmra.mxu0 %v4128
      %v4572 = vpop.f32.mrf.mxu0
      %v4573 = vadd.f32 0.0, %v4572
      %v4574 = vpop.f32.mrf.mxu0
      %v4575 = vpop.f32.mrf.mxu0
      %v4576 = vadd.f32 0.0, %v4575
      %v4577 = vpop.f32.mrf.mxu0
      %4578 = vmatprep.mubr.bf16.mxu0 %v4335
      %4579 = vmatmul.mubr.bf16.gmra.mxu0 %v4130
      %v4580 = vpop.f32.mrf.mxu0
      %v4581 = vadd.f32 0.0, %v4580
      %v4582 = vpop.f32.mrf.mxu0
      %v4583 = vpop.f32.mrf.mxu0
      %v4584 = vadd.f32 0.0, %v4583
      %v4585 = vpop.f32.mrf.mxu0
      %4586 = vmatprep.mubr.bf16.mxu0 %v4338
      %4587 = vmatmul.mubr.bf16.gmra.mxu0 %v4132
      %v4588 = vpop.f32.mrf.mxu0
      %v4589 = vadd.f32 0.0, %v4588
      %v4590 = vpop.f32.mrf.mxu0
      %v4591 = vpop.f32.mrf.mxu0
      %v4592 = vadd.f32 0.0, %v4591
      %v4593 = vpop.f32.mrf.mxu0
      %4594 = vmatprep.mubr.bf16.mxu0 %v4341
      %4595 = vmatmul.mubr.bf16.gmra.mxu0 %v4134
      %v4596 = vpop.f32.mrf.mxu0
      %v4597 = vadd.f32 0.0, %v4596
      %v4598 = vpop.f32.mrf.mxu0
      %v4599 = vpop.f32.mrf.mxu0
      %v4600 = vadd.f32 0.0, %v4599
      %v4601 = vpop.f32.mrf.mxu0
      %4602 = vmatprep.mubr.bf16.mxu0 %v4344
      %4603 = vmatmul.mubr.bf16.gmra.mxu0 %v4136
      %v4604 = vpop.f32.mrf.mxu0
      %v4605 = vadd.f32 0.0, %v4604
      %v4606 = vpop.f32.mrf.mxu0
      %v4607 = vpop.f32.mrf.mxu0
      %v4608 = vadd.f32 0.0, %v4607
      %v4609 = vpop.f32.mrf.mxu0
      %4610 = vmatprep.mubr.bf16.mxu0 %v4347
      %4611 = vmatmul.mubr.bf16.gmra.mxu0 %v4138
      %v4612 = vpop.f32.mrf.mxu0
      %v4613 = vadd.f32 0.0, %v4612
      %v4614 = vpop.f32.mrf.mxu0
      %v4615 = vpop.f32.mrf.mxu0
      %v4616 = vadd.f32 0.0, %v4615
      %v4617 = vpop.f32.mrf.mxu0
      %4618 = vmatprep.mubr.bf16.mxu0 %v4350
      %4619 = vmatmul.mubr.bf16.gmra.mxu0 %v4140
      %v4620 = vpop.f32.mrf.mxu0
      %v4621 = vadd.f32 0.0, %v4620
      %v4622 = vpop.f32.mrf.mxu0
      %v4623 = vpop.f32.mrf.mxu0
      %v4624 = vadd.f32 0.0, %v4623
      %v4625 = vpop.f32.mrf.mxu0
      %4626 = vmatprep.mubr.bf16.mxu0 %v4353
      %4627 = vmatmul.mubr.bf16.gmra.mxu0 %v4142
      %v4628 = vpop.f32.mrf.mxu0
      %v4629 = vadd.f32 0.0, %v4628
      %v4630 = vpop.f32.mrf.mxu0
      %v4631 = vpop.f32.mrf.mxu0
      %v4632 = vadd.f32 0.0, %v4631
      %v4633 = vpop.f32.mrf.mxu0
      %4634 = vmatprep.mubr.bf16.mxu0 %v4356
      %4635 = vmatmul.mubr.bf16.gmra.mxu0 %v4144
      %v4636 = vpop.f32.mrf.mxu0
      %v4637 = vadd.f32 0.0, %v4636
      %v4638 = vpop.f32.mrf.mxu0
      %v4639 = vpop.f32.mrf.mxu0
      %v4640 = vadd.f32 0.0, %v4639
      %v4641 = vpop.f32.mrf.mxu0
      %4642 = vmatprep.mubr.bf16.mxu0 %v4359
      %4643 = vmatmul.mubr.bf16.gmra.mxu0 %v4146
      %v4644 = vpop.f32.mrf.mxu0
      %v4645 = vadd.f32 0.0, %v4644
      %v4646 = vpop.f32.mrf.mxu0
      %v4647 = vpop.f32.mrf.mxu0
      %v4648 = vadd.f32 0.0, %v4647
      %v4649 = vpop.f32.mrf.mxu0
      %4650 = vmatprep.mubr.bf16.mxu0 %v4362
      %4651 = vmatmul.mubr.bf16.gmra.mxu0 %v4148
      %v4652 = vpop.f32.mrf.mxu0
      %v4653 = vadd.f32 0.0, %v4652
      %v4654 = vpop.f32.mrf.mxu0
      %v4655 = vpop.f32.mrf.mxu0
      %v4656 = vadd.f32 0.0, %v4655
      %v4657 = vpop.f32.mrf.mxu0
      %4658 = vmatprep.mubr.bf16.mxu0 %v4365
      %4659 = vmatmul.mubr.bf16.gmra.mxu0 %v4150
      %v4660 = vpop.f32.mrf.mxu0
      %v4661 = vadd.f32 0.0, %v4660
      %v4662 = vpop.f32.mrf.mxu0
      %v4663 = vpop.f32.mrf.mxu0
      %v4664 = vadd.f32 0.0, %v4663
      %v4665 = vpop.f32.mrf.mxu0
      %4666 = vmatprep.mubr.bf16.mxu0 %v4368
      %4667 = vmatmul.mubr.bf16.gmra.mxu0 %v4152
      %v4668 = vpop.f32.mrf.mxu0
      %v4669 = vadd.f32 0.0, %v4668
      %v4670 = vpop.f32.mrf.mxu0
      %v4671 = vpop.f32.mrf.mxu0
      %v4672 = vadd.f32 0.0, %v4671
      %v4673 = vpop.f32.mrf.mxu0
      %4674 = vmatprep.mubr.bf16.mxu0 %v4371
      %4675 = vmatmul.mubr.bf16.gmra.mxu0 %v4154
      %v4676 = vpop.f32.mrf.mxu0
      %v4677 = vadd.f32 0.0, %v4676
      %v4678 = vpop.f32.mrf.mxu0
      %v4679 = vpop.f32.mrf.mxu0
      %v4680 = vadd.f32 0.0, %v4679
      %v4681 = vpop.f32.mrf.mxu0
      %4682 = vmatprep.mubr.bf16.mxu0 %v4374
      %4683 = vmatmul.mubr.bf16.gmra.mxu0 %v4156
      %v4684 = vpop.f32.mrf.mxu0
      %v4685 = vadd.f32 0.0, %v4684
      %v4686 = vpop.f32.mrf.mxu0
      %v4687 = vpop.f32.mrf.mxu0
      %v4688 = vadd.f32 0.0, %v4687
      %v4689 = vpop.f32.mrf.mxu0
      %4690 = vmatprep.mubr.bf16.mxu0 %v4377
      %4691 = vmatmul.mubr.bf16.gmra.mxu0 %v4158
      %v4692 = vpop.f32.mrf.mxu0
      %v4693 = vadd.f32 0.0, %v4692
      %v4694 = vpop.f32.mrf.mxu0
      %v4695 = vpop.f32.mrf.mxu0
      %v4696 = vadd.f32 0.0, %v4695
      %v4697 = vpop.f32.mrf.mxu0
      %4698 = vmatprep.mubr.bf16.mxu0 %v4380
      %4699 = vmatmul.mubr.bf16.gmra.mxu0 %v4160
      %v4700 = vpop.f32.mrf.mxu0
      %v4701 = vadd.f32 0.0, %v4700
      %v4702 = vpop.f32.mrf.mxu0
      %v4703 = vpop.f32.mrf.mxu0
      %v4704 = vadd.f32 0.0, %v4703
      %v4705 = vpop.f32.mrf.mxu0
      %4706 = vmatprep.mubr.bf16.mxu0 %v4383
      %4707 = vmatmul.mubr.bf16.gmra.mxu0 %v4162
      %v4708 = vpop.f32.mrf.mxu0
      %v4709 = vadd.f32 0.0, %v4708
      %v4710 = vpop.f32.mrf.mxu0
      %v4711 = vpop.f32.mrf.mxu0
      %v4712 = vadd.f32 0.0, %v4711
      %v4713 = vpop.f32.mrf.mxu0
      %4714 = vmatprep.mubr.bf16.mxu0 %v4386
      %4715 = vmatmul.mubr.bf16.gmra.mxu0 %v4164
      %v4716 = vpop.f32.mrf.mxu0
      %v4717 = vadd.f32 0.0, %v4716
      %v4718 = vpop.f32.mrf.mxu0
      %v4719 = vpop.f32.mrf.mxu0
      %v4720 = vadd.f32 0.0, %v4719
      %v4721 = vpop.f32.mrf.mxu0
      %4722 = vmatprep.mubr.bf16.mxu0 %v4389
      %4723 = vmatmul.mubr.bf16.gmra.mxu0 %v4166
      %v4724 = vpop.f32.mrf.mxu0
      %v4725 = vadd.f32 0.0, %v4724
      %v4726 = vpop.f32.mrf.mxu0
      %v4727 = vpop.f32.mrf.mxu0
      %v4728 = vpop.f32.mrf.mxu0
      %4729 = vdwg.mxu0
      %v4730 = vpack.c.bf16 %v4432, %v4429
      %v4731 = vpack.c.bf16 %v4440, %v4437
      %v4732 = vpack.c.bf16 %v4448, %v4445
      %v4733 = vpack.c.bf16 %v4456, %v4453
      %v4734 = vpack.c.bf16 %v4464, %v4461
      %v4735 = vpack.c.bf16 %v4472, %v4469
      %v4736 = vpack.c.bf16 %v4480, %v4477
      %v4737 = vpack.c.bf16 %v4488, %v4485
      %v4738 = vpack.c.bf16 %v4496, %v4493
      %v4739 = vpack.c.bf16 %v4504, %v4501
      %v4740 = vpack.c.bf16 %v4512, %v4509
      %v4741 = vpack.c.bf16 %v4520, %v4517
      %v4742 = vpack.c.bf16 %v4528, %v4525
      %v4743 = vpack.c.bf16 %v4536, %v4533
      %v4744 = vpack.c.bf16 %v4544, %v4541
      %v4745 = vpack.c.bf16 %v4552, %v4549
      %v4746 = vpack.c.bf16 %v4560, %v4557
      %v4747 = vpack.c.bf16 %v4568, %v4565
      %v4748 = vpack.c.bf16 %v4576, %v4573
      %v4749 = vpack.c.bf16 %v4584, %v4581
      %v4750 = vpack.c.bf16 %v4592, %v4589
      %v4751 = vpack.c.bf16 %v4600, %v4597
      %v4752 = vpack.c.bf16 %v4608, %v4605
      %v4753 = vpack.c.bf16 %v4616, %v4613
      %v4754 = vpack.c.bf16 %v4624, %v4621
      %v4755 = vpack.c.bf16 %v4632, %v4629
      %v4756 = vpack.c.bf16 %v4640, %v4637
      %v4757 = vpack.c.bf16 %v4648, %v4645
      %v4758 = vpack.c.bf16 %v4656, %v4653
      %v4759 = vpack.c.bf16 %v4664, %v4661
      %v4760 = vpack.c.bf16 %v4672, %v4669
      %v4761 = vpack.c.bf16 %v4680, %v4677
      %v4762 = vpack.c.bf16 %v4688, %v4685
      %v4763 = vpack.c.bf16 %v4696, %v4693
      %v4764 = vpack.c.bf16 %v4704, %v4701
      %v4765 = vpack.c.bf16 %v4712, %v4709
      %v4766 = vpack.c.bf16 %v4720, %v4717
      %v4767 = vpack.c.bf16 %v4725, %v4725
      %v4806 = vunpack.c.l.b16 %v4730
      %v4807 = vunpack.c.h.b16 %v4730
      %v4808 = vunpack.c.l.b16 %v4731
      %v4809 = vunpack.c.h.b16 %v4731
      %v4810 = vunpack.c.l.b16 %v4732
      %v4811 = vunpack.c.h.b16 %v4732
      %v4812 = vunpack.c.l.b16 %v4733
      %v4813 = vunpack.c.h.b16 %v4733
      %v4814 = vunpack.c.l.b16 %v4734
      %v4815 = vunpack.c.h.b16 %v4734
      %v4816 = vunpack.c.l.b16 %v4735
      %v4817 = vunpack.c.h.b16 %v4735
      %v4818 = vunpack.c.l.b16 %v4736
      %v4819 = vunpack.c.h.b16 %v4736
      %v4820 = vunpack.c.l.b16 %v4737
      %v4821 = vunpack.c.h.b16 %v4737
      %v4822 = vunpack.c.l.b16 %v4738
      %v4823 = vunpack.c.h.b16 %v4738
      %v4824 = vunpack.c.l.b16 %v4739
      %v4825 = vunpack.c.h.b16 %v4739
      %v4826 = vunpack.c.l.b16 %v4740
      %v4827 = vunpack.c.h.b16 %v4740
      %v4828 = vunpack.c.l.b16 %v4741
      %v4829 = vunpack.c.h.b16 %v4741
      %v4830 = vunpack.c.l.b16 %v4742
      %v4831 = vunpack.c.h.b16 %v4742
      %v4832 = vunpack.c.l.b16 %v4743
      %v4833 = vunpack.c.h.b16 %v4743
      %v4834 = vunpack.c.l.b16 %v4744
      %v4835 = vunpack.c.h.b16 %v4744
      %v4836 = vunpack.c.l.b16 %v4745
      %v4837 = vunpack.c.h.b16 %v4745
      %v4838 = vunpack.c.l.b16 %v4746
      %v4839 = vunpack.c.h.b16 %v4746
      %v4840 = vunpack.c.l.b16 %v4747
      %v4841 = vunpack.c.h.b16 %v4747
      %v4842 = vunpack.c.l.b16 %v4748
      %v4843 = vunpack.c.h.b16 %v4748
      %v4844 = vunpack.c.l.b16 %v4749
      %v4845 = vunpack.c.h.b16 %v4749
      %v4846 = vunpack.c.l.b16 %v4750
      %v4847 = vunpack.c.h.b16 %v4750
      %v4848 = vunpack.c.l.b16 %v4751
      %v4849 = vunpack.c.h.b16 %v4751
      %v4850 = vunpack.c.l.b16 %v4752
      %v4851 = vunpack.c.h.b16 %v4752
      %v4852 = vunpack.c.l.b16 %v4753
      %v4853 = vunpack.c.h.b16 %v4753
      %v4854 = vunpack.c.l.b16 %v4754
      %v4855 = vunpack.c.h.b16 %v4754
      %v4856 = vunpack.c.l.b16 %v4755
      %v4857 = vunpack.c.h.b16 %v4755
      %v4858 = vunpack.c.l.b16 %v4756
      %v4859 = vunpack.c.h.b16 %v4756
      %v4860 = vunpack.c.l.b16 %v4757
      %v4861 = vunpack.c.h.b16 %v4757
      %v4862 = vunpack.c.l.b16 %v4758
      %v4863 = vunpack.c.h.b16 %v4758
      %v4864 = vunpack.c.l.b16 %v4759
      %v4865 = vunpack.c.h.b16 %v4759
      %v4866 = vunpack.c.l.b16 %v4760
      %v4867 = vunpack.c.h.b16 %v4760
      %v4868 = vunpack.c.l.b16 %v4761
      %v4869 = vunpack.c.h.b16 %v4761
      %v4870 = vunpack.c.l.b16 %v4762
      %v4871 = vunpack.c.h.b16 %v4762
      %v4872 = vunpack.c.l.b16 %v4763
      %v4873 = vunpack.c.h.b16 %v4763
      %v4874 = vunpack.c.l.b16 %v4764
      %v4875 = vunpack.c.h.b16 %v4764
      %v4876 = vunpack.c.l.b16 %v4765
      %v4877 = vunpack.c.h.b16 %v4765
      %v4878 = vunpack.c.l.b16 %v4766
      %v4879 = vunpack.c.h.b16 %v4766
      %v4880 = vunpack.c.l.b16 %v4767
      %v4881 = vpack.c.b16 %v4806, %v4806
      %v4882 = vpack.c.b16 %v4807, %v4807
      %v4883 = vpack.c.b16 %v4808, %v4808
      %v4884 = vpack.c.b16 %v4809, %v4809
      %v4885 = vpack.c.b16 %v4810, %v4810
      %v4886 = vpack.c.b16 %v4811, %v4811
      %v4887 = vpack.c.b16 %v4812, %v4812
      %v4888 = vpack.c.b16 %v4813, %v4813
      %v4889 = vpack.c.b16 %v4814, %v4814
      %v4890 = vpack.c.b16 %v4815, %v4815
      %v4891 = vpack.c.b16 %v4816, %v4816
      %v4892 = vpack.c.b16 %v4817, %v4817
      %v4893 = vpack.c.b16 %v4818, %v4818
      %v4894 = vpack.c.b16 %v4819, %v4819
      %v4895 = vpack.c.b16 %v4820, %v4820
      %v4896 = vpack.c.b16 %v4821, %v4821
      %v4897 = vpack.c.b16 %v4822, %v4822
      %v4898 = vpack.c.b16 %v4823, %v4823
      %v4899 = vpack.c.b16 %v4824, %v4824
      %v4900 = vpack.c.b16 %v4825, %v4825
      %v4901 = vpack.c.b16 %v4826, %v4826
      %v4902 = vpack.c.b16 %v4827, %v4827
      %v4903 = vpack.c.b16 %v4828, %v4828
      %v4904 = vpack.c.b16 %v4829, %v4829
      %v4905 = vpack.c.b16 %v4830, %v4830
      %v4906 = vpack.c.b16 %v4831, %v4831
      %v4907 = vpack.c.b16 %v4832, %v4832
      %v4908 = vpack.c.b16 %v4833, %v4833
      %v4909 = vpack.c.b16 %v4834, %v4834
      %v4910 = vpack.c.b16 %v4835, %v4835
      %v4911 = vpack.c.b16 %v4836, %v4836
      %v4912 = vpack.c.b16 %v4837, %v4837
      %v4913 = vpack.c.b16 %v4838, %v4838
      %v4914 = vpack.c.b16 %v4839, %v4839
      %v4915 = vpack.c.b16 %v4840, %v4840
      %v4916 = vpack.c.b16 %v4841, %v4841
      %v4917 = vpack.c.b16 %v4842, %v4842
      %v4918 = vpack.c.b16 %v4843, %v4843
      %v4919 = vpack.c.b16 %v4844, %v4844
      %v4920 = vpack.c.b16 %v4845, %v4845
      %v4921 = vpack.c.b16 %v4846, %v4846
      %v4922 = vpack.c.b16 %v4847, %v4847
      %v4923 = vpack.c.b16 %v4848, %v4848
      %v4924 = vpack.c.b16 %v4849, %v4849
      %v4925 = vpack.c.b16 %v4850, %v4850
      %v4926 = vpack.c.b16 %v4851, %v4851
      %v4927 = vpack.c.b16 %v4852, %v4852
      %v4928 = vpack.c.b16 %v4853, %v4853
      %v4929 = vpack.c.b16 %v4854, %v4854
      %v4930 = vpack.c.b16 %v4855, %v4855
      %v4931 = vpack.c.b16 %v4856, %v4856
      %v4932 = vpack.c.b16 %v4857, %v4857
      %v4933 = vpack.c.b16 %v4858, %v4858
      %v4934 = vpack.c.b16 %v4859, %v4859
      %v4935 = vpack.c.b16 %v4860, %v4860
      %v4936 = vpack.c.b16 %v4861, %v4861
      %v4937 = vpack.c.b16 %v4862, %v4862
      %v4938 = vpack.c.b16 %v4863, %v4863
      %v4939 = vpack.c.b16 %v4864, %v4864
      %v4940 = vpack.c.b16 %v4865, %v4865
      %v4941 = vpack.c.b16 %v4866, %v4866
      %v4942 = vpack.c.b16 %v4867, %v4867
      %v4943 = vpack.c.b16 %v4868, %v4868
      %v4944 = vpack.c.b16 %v4869, %v4869
      %v4945 = vpack.c.b16 %v4870, %v4870
      %v4946 = vpack.c.b16 %v4871, %v4871
      %v4947 = vpack.c.b16 %v4872, %v4872
      %v4948 = vpack.c.b16 %v4873, %v4873
      %v4949 = vpack.c.b16 %v4874, %v4874
      %v4950 = vpack.c.b16 %v4875, %v4875
      %v4951 = vpack.c.b16 %v4876, %v4876
      %v4952 = vpack.c.b16 %v4877, %v4877
      %v4953 = vpack.c.b16 %v4878, %v4878
      %v4954 = vpack.c.b16 %v4879, %v4879
      %v4955 = vpack.c.b16 %v4880, %v4880
      %vm5031 = vcmask 60416
      %5032 = vst.msk [vmem:[%s379] sm:$0xf] %vm5031, %v4881
      %5033 = vst.msk [vmem:[%s379 + $0x4] sm:$0xf] %vm5031, %v4882
      %5034 = vst.msk [vmem:[%s379 + $0x8] sm:$0xf] %vm5031, %v4883
      %5035 = vst.msk [vmem:[%s379 + $0xc] sm:$0xf] %vm5031, %v4884
      %5036 = vst.msk [vmem:[%s379 + $0x10] sm:$0xf] %vm5031, %v4885
      %5037 = vst.msk [vmem:[%s379 + $0x14] sm:$0xf] %vm5031, %v4886
      %5038 = vst.msk [vmem:[%s379 + $0x18] sm:$0xf] %vm5031, %v4887
      %5039 = vst.msk [vmem:[%s379 + $0x1c] sm:$0xf] %vm5031, %v4888
      %5040 = vst.msk [vmem:[%s379 + $0x20] sm:$0xf] %vm5031, %v4889
      %5041 = vst.msk [vmem:[%s379 + $0x24] sm:$0xf] %vm5031, %v4890
      %5042 = vst.msk [vmem:[%s379 + $0x28] sm:$0xf] %vm5031, %v4891
      %5043 = vst.msk [vmem:[%s379 + $0x2c] sm:$0xf] %vm5031, %v4892
      %5044 = vst.msk [vmem:[%s379 + $0x30] sm:$0xf] %vm5031, %v4893
      %5045 = vst.msk [vmem:[%s379 + $0x34] sm:$0xf] %vm5031, %v4894
      %5046 = vst.msk [vmem:[%s379 + $0x38] sm:$0xf] %vm5031, %v4895
      %5047 = vst.msk [vmem:[%s379 + $0x3c] sm:$0xf] %vm5031, %v4896
      %5048 = vst.msk [vmem:[%s379 + $0x40] sm:$0xf] %vm5031, %v4897
      %5049 = vst.msk [vmem:[%s379 + $0x44] sm:$0xf] %vm5031, %v4898
      %5050 = vst.msk [vmem:[%s379 + $0x48] sm:$0xf] %vm5031, %v4899
      %5051 = vst.msk [vmem:[%s379 + $0x4c] sm:$0xf] %vm5031, %v4900
      %5052 = vst.msk [vmem:[%s379 + $0x50] sm:$0xf] %vm5031, %v4901
      %5053 = vst.msk [vmem:[%s379 + $0x54] sm:$0xf] %vm5031, %v4902
      %5054 = vst.msk [vmem:[%s379 + $0x58] sm:$0xf] %vm5031, %v4903
      %5055 = vst.msk [vmem:[%s379 + $0x5c] sm:$0xf] %vm5031, %v4904
      %5056 = vst.msk [vmem:[%s379 + $0x60] sm:$0xf] %vm5031, %v4905
      %5057 = vst.msk [vmem:[%s379 + $0x64] sm:$0xf] %vm5031, %v4906
      %5058 = vst.msk [vmem:[%s379 + $0x68] sm:$0xf] %vm5031, %v4907
      %5059 = vst.msk [vmem:[%s379 + $0x6c] sm:$0xf] %vm5031, %v4908
      %5060 = vst.msk [vmem:[%s379 + $0x70] sm:$0xf] %vm5031, %v4909
      %5061 = vst.msk [vmem:[%s379 + $0x74] sm:$0xf] %vm5031, %v4910
      %5062 = vst.msk [vmem:[%s379 + $0x78] sm:$0xf] %vm5031, %v4911
      %5063 = vst.msk [vmem:[%s379 + $0x7c] sm:$0xf] %vm5031, %v4912
      %5064 = vst.msk [vmem:[%s379 + $0x80] sm:$0xf] %vm5031, %v4913
      %5065 = vst.msk [vmem:[%s379 + $0x84] sm:$0xf] %vm5031, %v4914
      %5066 = vst.msk [vmem:[%s379 + $0x88] sm:$0xf] %vm5031, %v4915
      %5067 = vst.msk [vmem:[%s379 + $0x8c] sm:$0xf] %vm5031, %v4916
      %5068 = vst.msk [vmem:[%s379 + $0x90] sm:$0xf] %vm5031, %v4917
      %5069 = vst.msk [vmem:[%s379 + $0x94] sm:$0xf] %vm5031, %v4918
      %5070 = vst.msk [vmem:[%s379 + $0x98] sm:$0xf] %vm5031, %v4919
      %5071 = vst.msk [vmem:[%s379 + $0x9c] sm:$0xf] %vm5031, %v4920
      %5072 = vst.msk [vmem:[%s379 + $0xa0] sm:$0xf] %vm5031, %v4921
      %5073 = vst.msk [vmem:[%s379 + $0xa4] sm:$0xf] %vm5031, %v4922
      %5074 = vst.msk [vmem:[%s379 + $0xa8] sm:$0xf] %vm5031, %v4923
      %5075 = vst.msk [vmem:[%s379 + $0xac] sm:$0xf] %vm5031, %v4924
      %5076 = vst.msk [vmem:[%s379 + $0xb0] sm:$0xf] %vm5031, %v4925
      %5077 = vst.msk [vmem:[%s379 + $0xb4] sm:$0xf] %vm5031, %v4926
      %5078 = vst.msk [vmem:[%s379 + $0xb8] sm:$0xf] %vm5031, %v4927
      %5079 = vst.msk [vmem:[%s379 + $0xbc] sm:$0xf] %vm5031, %v4928
      %5080 = vst.msk [vmem:[%s379 + $0xc0] sm:$0xf] %vm5031, %v4929
      %5081 = vst.msk [vmem:[%s379 + $0xc4] sm:$0xf] %vm5031, %v4930
      %5082 = vst.msk [vmem:[%s379 + $0xc8] sm:$0xf] %vm5031, %v4931
      %5083 = vst.msk [vmem:[%s379 + $0xcc] sm:$0xf] %vm5031, %v4932
      %5084 = vst.msk [vmem:[%s379 + $0xd0] sm:$0xf] %vm5031, %v4933
      %5085 = vst.msk [vmem:[%s379 + $0xd4] sm:$0xf] %vm5031, %v4934
      %5086 = vst.msk [vmem:[%s379 + $0xd8] sm:$0xf] %vm5031, %v4935
      %5087 = vst.msk [vmem:[%s379 + $0xdc] sm:$0xf] %vm5031, %v4936
      %5088 = vst.msk [vmem:[%s379 + $0xe0] sm:$0xf] %vm5031, %v4937
      %5089 = vst.msk [vmem:[%s379 + $0xe4] sm:$0xf] %vm5031, %v4938
      %5090 = vst.msk [vmem:[%s379 + $0xe8] sm:$0xf] %vm5031, %v4939
      %5091 = vst.msk [vmem:[%s379 + $0xec] sm:$0xf] %vm5031, %v4940
      %5092 = vst.msk [vmem:[%s379 + $0xf0] sm:$0xf] %vm5031, %v4941
      %5093 = vst.msk [vmem:[%s379 + $0xf4] sm:$0xf] %vm5031, %v4942
      %5094 = vst.msk [vmem:[%s379 + $0xf8] sm:$0xf] %vm5031, %v4943
      %5095 = vst.msk [vmem:[%s379 + $0xfc] sm:$0xf] %vm5031, %v4944
      %5096 = vst.msk [vmem:[%s379 + $0x100] sm:$0xf] %vm5031, %v4945
      %5097 = vst.msk [vmem:[%s379 + $0x104] sm:$0xf] %vm5031, %v4946
      %5098 = vst.msk [vmem:[%s379 + $0x108] sm:$0xf] %vm5031, %v4947
      %5099 = vst.msk [vmem:[%s379 + $0x10c] sm:$0xf] %vm5031, %v4948
      %5100 = vst.msk [vmem:[%s379 + $0x110] sm:$0xf] %vm5031, %v4949
      %5101 = vst.msk [vmem:[%s379 + $0x114] sm:$0xf] %vm5031, %v4950
      %5102 = vst.msk [vmem:[%s379 + $0x118] sm:$0xf] %vm5031, %v4951
      %5103 = vst.msk [vmem:[%s379 + $0x11c] sm:$0xf] %vm5031, %v4952
      %5104 = vst.msk [vmem:[%s379 + $0x120] sm:$0xf] %vm5031, %v4953
      %5105 = vst.msk [vmem:[%s379 + $0x124] sm:$0xf] %vm5031, %v4954
      %5106 = vst.msk [vmem:[%s379 + $0x128] sm:$0xf] %vm5031, %v4955
      %v5107 = vld [vmem:[%s369] sm:$0xff]
      %v5108 = vld [vmem:[%s369 + $0x8] sm:$0xff]
      %v5109 = vld [vmem:[%s369 + $0x10] sm:$0xff]
      %v5110 = vld [vmem:[%s369 + $0x18] sm:$0xff]
      %v5111 = vld [vmem:[%s369 + $0x20] sm:$0xff]
      %v5112 = vld [vmem:[%s369 + $0x28] sm:$0xff]
      %v5113 = vld [vmem:[%s369 + $0x30] sm:$0xff]
      %v5114 = vld [vmem:[%s369 + $0x38] sm:$0xff]
      %v5115 = vld [vmem:[%s369 + $0x40] sm:$0xff]
      %v5116 = vld [vmem:[%s369 + $0x48] sm:$0xff]
      %v5117 = vld [vmem:[%s369 + $0x50] sm:$0xff]
      %v5118 = vld [vmem:[%s369 + $0x58] sm:$0xff]
      %v5119 = vld [vmem:[%s369 + $0x60] sm:$0xff]
      %v5120 = vld [vmem:[%s369 + $0x68] sm:$0xff]
      %v5121 = vld [vmem:[%s369 + $0x70] sm:$0xff]
      %v5122 = vld [vmem:[%s369 + $0x78] sm:$0xff]
      %v5123 = vld [vmem:[%s369 + $0x80] sm:$0xff]
      %v5124 = vld [vmem:[%s369 + $0x88] sm:$0xff]
      %v5125 = vld [vmem:[%s369 + $0x90] sm:$0xff]
      %v5126 = vld [vmem:[%s369 + $0x98] sm:$0xff]
      %v5127 = vld [vmem:[%s369 + $0xa0] sm:$0xff]
      %v5128 = vld [vmem:[%s369 + $0xa8] sm:$0xff]
      %v5129 = vld [vmem:[%s369 + $0xb0] sm:$0xff]
      %v5130 = vld [vmem:[%s369 + $0xb8] sm:$0xff]
      %v5131 = vld [vmem:[%s369 + $0xc0] sm:$0xff]
      %v5132 = vld [vmem:[%s369 + $0xc8] sm:$0xff]
      %v5133 = vld [vmem:[%s369 + $0xd0] sm:$0xff]
      %v5134 = vld [vmem:[%s369 + $0xd8] sm:$0xff]
      %v5135 = vld [vmem:[%s369 + $0xe0] sm:$0xff]
      %v5136 = vld [vmem:[%s369 + $0xe8] sm:$0xff]
      %v5137 = vld [vmem:[%s369 + $0xf0] sm:$0xff]
      %v5138 = vld [vmem:[%s369 + $0xf8] sm:$0xff]
      %v5139 = vld [vmem:[%s369 + $0x100] sm:$0xff]
      %v5140 = vld [vmem:[%s369 + $0x108] sm:$0xff]
      %v5141 = vld [vmem:[%s369 + $0x110] sm:$0xff]
      %v5142 = vld [vmem:[%s369 + $0x118] sm:$0xff]
      %v5143 = vld [vmem:[%s369 + $0x120] sm:$0xff]
      %v5144 = vld [vmem:[%s369 + $0x128] sm:$0xff]
      %v5145 = vld [vmem:[%s369 + $0x130] sm:$0xff]
      %v5146 = vld [vmem:[%s369 + $0x138] sm:$0xff]
      %v5147 = vld [vmem:[%s369 + $0x140] sm:$0xff]
      %v5148 = vld [vmem:[%s369 + $0x148] sm:$0xff]
      %v5149 = vld [vmem:[%s369 + $0x150] sm:$0xff]
      %v5150 = vld [vmem:[%s369 + $0x158] sm:$0xff]
      %v5151 = vld [vmem:[%s369 + $0x160] sm:$0xff]
      %v5152 = vld [vmem:[%s369 + $0x168] sm:$0xff]
      %v5153 = vld [vmem:[%s369 + $0x170] sm:$0xff]
      %v5154 = vld [vmem:[%s369 + $0x178] sm:$0xff]
      %v5155 = vld [vmem:[%s369 + $0x180] sm:$0xff]
      %v5156 = vld [vmem:[%s369 + $0x188] sm:$0xff]
      %v5157 = vld [vmem:[%s369 + $0x190] sm:$0xff]
      %v5158 = vld [vmem:[%s369 + $0x198] sm:$0xff]
      %v5159 = vld [vmem:[%s369 + $0x1a0] sm:$0xff]
      %v5160 = vld [vmem:[%s369 + $0x1a8] sm:$0xff]
      %v5161 = vld [vmem:[%s369 + $0x1b0] sm:$0xff]
      %v5162 = vld [vmem:[%s369 + $0x1b8] sm:$0xff]
      %v5163 = vld [vmem:[%s369 + $0x1c0] sm:$0xff]
      %v5164 = vld [vmem:[%s369 + $0x1c8] sm:$0xff]
      %v5165 = vld [vmem:[%s369 + $0x1d0] sm:$0xff]
      %v5166 = vld [vmem:[%s369 + $0x1d8] sm:$0xff]
      %v5167 = vld [vmem:[%s369 + $0x1e0] sm:$0xff]
      %v5168 = vld [vmem:[%s369 + $0x1e8] sm:$0xff]
      %v5169 = vld [vmem:[%s369 + $0x1f0] sm:$0xff]
      %v5170 = vld [vmem:[%s369 + $0x1f8] sm:$0xff]
      %v5171 = vld [vmem:[%s369 + $0x200] sm:$0xff]
      %v5172 = vld [vmem:[%s369 + $0x208] sm:$0xff]
      %v5173 = vld [vmem:[%s369 + $0x210] sm:$0xff]
      %v5174 = vld [vmem:[%s369 + $0x218] sm:$0xff]
      %v5175 = vld [vmem:[%s369 + $0x220] sm:$0xff]
      %v5176 = vld [vmem:[%s369 + $0x228] sm:$0xff]
      %v5177 = vld [vmem:[%s369 + $0x230] sm:$0xff]
      %v5178 = vld [vmem:[%s369 + $0x238] sm:$0xff]
      %v5179 = vld [vmem:[%s369 + $0x240] sm:$0xff]
      %v5180 = vld [vmem:[%s369 + $0x248] sm:$0xff]
      %v5181 = vld [vmem:[%s369 + $0x250] sm:$0xff]
      %5183 = vset.pattern.permute.xlu0 0
      %5184 = vperm.xlu0 %5183, %v5107
      %v5185 = vpop.permute.xlu0 %5184
      %5188 = vset.pattern.permute.xlu0 0
      %5189 = vperm.xlu0 %5188, %v5108
      %v5190 = vpop.permute.xlu0 %5189
      %5193 = vset.pattern.permute.xlu0 0
      %5194 = vperm.xlu0 %5193, %v5109
      %v5195 = vpop.permute.xlu0 %5194
      %5198 = vset.pattern.permute.xlu0 0
      %5199 = vperm.xlu0 %5198, %v5110
      %v5200 = vpop.permute.xlu0 %5199
      %5203 = vset.pattern.permute.xlu0 0
      %5204 = vperm.xlu0 %5203, %v5111
      %v5205 = vpop.permute.xlu0 %5204
      %5208 = vset.pattern.permute.xlu0 0
      %5209 = vperm.xlu0 %5208, %v5112
      %v5210 = vpop.permute.xlu0 %5209
      %5213 = vset.pattern.permute.xlu0 0
      %5214 = vperm.xlu0 %5213, %v5113
      %v5215 = vpop.permute.xlu0 %5214
      %5218 = vset.pattern.permute.xlu0 0
      %5219 = vperm.xlu0 %5218, %v5114
      %v5220 = vpop.permute.xlu0 %5219
      %5223 = vset.pattern.permute.xlu0 0
      %5224 = vperm.xlu0 %5223, %v5115
      %v5225 = vpop.permute.xlu0 %5224
      %5228 = vset.pattern.permute.xlu0 0
      %5229 = vperm.xlu0 %5228, %v5116
      %v5230 = vpop.permute.xlu0 %5229
      %5233 = vset.pattern.permute.xlu0 0
      %5234 = vperm.xlu0 %5233, %v5117
      %v5235 = vpop.permute.xlu0 %5234
      %5238 = vset.pattern.permute.xlu0 0
      %5239 = vperm.xlu0 %5238, %v5118
      %v5240 = vpop.permute.xlu0 %5239
      %5243 = vset.pattern.permute.xlu0 0
      %5244 = vperm.xlu0 %5243, %v5119
      %v5245 = vpop.permute.xlu0 %5244
      %5248 = vset.pattern.permute.xlu0 0
      %5249 = vperm.xlu0 %5248, %v5120
      %v5250 = vpop.permute.xlu0 %5249
      %5253 = vset.pattern.permute.xlu0 0
      %5254 = vperm.xlu0 %5253, %v5121
      %v5255 = vpop.permute.xlu0 %5254
      %5258 = vset.pattern.permute.xlu0 0
      %5259 = vperm.xlu0 %5258, %v5122
      %v5260 = vpop.permute.xlu0 %5259
      %5263 = vset.pattern.permute.xlu0 0
      %5264 = vperm.xlu0 %5263, %v5123
      %v5265 = vpop.permute.xlu0 %5264
      %5268 = vset.pattern.permute.xlu0 0
      %5269 = vperm.xlu0 %5268, %v5124
      %v5270 = vpop.permute.xlu0 %5269
      %5273 = vset.pattern.permute.xlu0 0
      %5274 = vperm.xlu0 %5273, %v5125
      %v5275 = vpop.permute.xlu0 %5274
      %5278 = vset.pattern.permute.xlu0 0
      %5279 = vperm.xlu0 %5278, %v5126
      %v5280 = vpop.permute.xlu0 %5279
      %5283 = vset.pattern.permute.xlu0 0
      %5284 = vperm.xlu0 %5283, %v5127
      %v5285 = vpop.permute.xlu0 %5284
      %5288 = vset.pattern.permute.xlu0 0
      %5289 = vperm.xlu0 %5288, %v5128
      %v5290 = vpop.permute.xlu0 %5289
      %5293 = vset.pattern.permute.xlu0 0
      %5294 = vperm.xlu0 %5293, %v5129
      %v5295 = vpop.permute.xlu0 %5294
      %5298 = vset.pattern.permute.xlu0 0
      %5299 = vperm.xlu0 %5298, %v5130
      %v5300 = vpop.permute.xlu0 %5299
      %5303 = vset.pattern.permute.xlu0 0
      %5304 = vperm.xlu0 %5303, %v5131
      %v5305 = vpop.permute.xlu0 %5304
      %5308 = vset.pattern.permute.xlu0 0
      %5309 = vperm.xlu0 %5308, %v5132
      %v5310 = vpop.permute.xlu0 %5309
      %5313 = vset.pattern.permute.xlu0 0
      %5314 = vperm.xlu0 %5313, %v5133
      %v5315 = vpop.permute.xlu0 %5314
      %5318 = vset.pattern.permute.xlu0 0
      %5319 = vperm.xlu0 %5318, %v5134
      %v5320 = vpop.permute.xlu0 %5319
      %5323 = vset.pattern.permute.xlu0 0
      %5324 = vperm.xlu0 %5323, %v5135
      %v5325 = vpop.permute.xlu0 %5324
      %5328 = vset.pattern.permute.xlu0 0
      %5329 = vperm.xlu0 %5328, %v5136
      %v5330 = vpop.permute.xlu0 %5329
      %5333 = vset.pattern.permute.xlu0 0
      %5334 = vperm.xlu0 %5333, %v5137
      %v5335 = vpop.permute.xlu0 %5334
      %5338 = vset.pattern.permute.xlu0 0
      %5339 = vperm.xlu0 %5338, %v5138
      %v5340 = vpop.permute.xlu0 %5339
      %5343 = vset.pattern.permute.xlu0 0
      %5344 = vperm.xlu0 %5343, %v5139
      %v5345 = vpop.permute.xlu0 %5344
      %5348 = vset.pattern.permute.xlu0 0
      %5349 = vperm.xlu0 %5348, %v5140
      %v5350 = vpop.permute.xlu0 %5349
      %5353 = vset.pattern.permute.xlu0 0
      %5354 = vperm.xlu0 %5353, %v5141
      %v5355 = vpop.permute.xlu0 %5354
      %5358 = vset.pattern.permute.xlu0 0
      %5359 = vperm.xlu0 %5358, %v5142
      %v5360 = vpop.permute.xlu0 %5359
      %5363 = vset.pattern.permute.xlu0 0
      %5364 = vperm.xlu0 %5363, %v5143
      %v5365 = vpop.permute.xlu0 %5364
      %5368 = vset.pattern.permute.xlu0 0
      %5369 = vperm.xlu0 %5368, %v5144
      %v5370 = vpop.permute.xlu0 %5369
      %5373 = vset.pattern.permute.xlu0 0
      %5374 = vperm.xlu0 %5373, %v5145
      %v5375 = vpop.permute.xlu0 %5374
      %5378 = vset.pattern.permute.xlu0 0
      %5379 = vperm.xlu0 %5378, %v5146
      %v5380 = vpop.permute.xlu0 %5379
      %5383 = vset.pattern.permute.xlu0 0
      %5384 = vperm.xlu0 %5383, %v5147
      %v5385 = vpop.permute.xlu0 %5384
      %5388 = vset.pattern.permute.xlu0 0
      %5389 = vperm.xlu0 %5388, %v5148
      %v5390 = vpop.permute.xlu0 %5389
      %5393 = vset.pattern.permute.xlu0 0
      %5394 = vperm.xlu0 %5393, %v5149
      %v5395 = vpop.permute.xlu0 %5394
      %5398 = vset.pattern.permute.xlu0 0
      %5399 = vperm.xlu0 %5398, %v5150
      %v5400 = vpop.permute.xlu0 %5399
      %5403 = vset.pattern.permute.xlu0 0
      %5404 = vperm.xlu0 %5403, %v5151
      %v5405 = vpop.permute.xlu0 %5404
      %5408 = vset.pattern.permute.xlu0 0
      %5409 = vperm.xlu0 %5408, %v5152
      %v5410 = vpop.permute.xlu0 %5409
      %5413 = vset.pattern.permute.xlu0 0
      %5414 = vperm.xlu0 %5413, %v5153
      %v5415 = vpop.permute.xlu0 %5414
      %5418 = vset.pattern.permute.xlu0 0
      %5419 = vperm.xlu0 %5418, %v5154
      %v5420 = vpop.permute.xlu0 %5419
      %5423 = vset.pattern.permute.xlu0 0
      %5424 = vperm.xlu0 %5423, %v5155
      %v5425 = vpop.permute.xlu0 %5424
      %5428 = vset.pattern.permute.xlu0 0
      %5429 = vperm.xlu0 %5428, %v5156
      %v5430 = vpop.permute.xlu0 %5429
      %5433 = vset.pattern.permute.xlu0 0
      %5434 = vperm.xlu0 %5433, %v5157
      %v5435 = vpop.permute.xlu0 %5434
      %5438 = vset.pattern.permute.xlu0 0
      %5439 = vperm.xlu0 %5438, %v5158
      %v5440 = vpop.permute.xlu0 %5439
      %5443 = vset.pattern.permute.xlu0 0
      %5444 = vperm.xlu0 %5443, %v5159
      %v5445 = vpop.permute.xlu0 %5444
      %5448 = vset.pattern.permute.xlu0 0
      %5449 = vperm.xlu0 %5448, %v5160
      %v5450 = vpop.permute.xlu0 %5449
      %5453 = vset.pattern.permute.xlu0 0
      %5454 = vperm.xlu0 %5453, %v5161
      %v5455 = vpop.permute.xlu0 %5454
      %5458 = vset.pattern.permute.xlu0 0
      %5459 = vperm.xlu0 %5458, %v5162
      %v5460 = vpop.permute.xlu0 %5459
      %5463 = vset.pattern.permute.xlu0 0
      %5464 = vperm.xlu0 %5463, %v5163
      %v5465 = vpop.permute.xlu0 %5464
      %5468 = vset.pattern.permute.xlu0 0
      %5469 = vperm.xlu0 %5468, %v5164
      %v5470 = vpop.permute.xlu0 %5469
      %5473 = vset.pattern.permute.xlu0 0
      %5474 = vperm.xlu0 %5473, %v5165
      %v5475 = vpop.permute.xlu0 %5474
      %5478 = vset.pattern.permute.xlu0 0
      %5479 = vperm.xlu0 %5478, %v5166
      %v5480 = vpop.permute.xlu0 %5479
      %5483 = vset.pattern.permute.xlu0 0
      %5484 = vperm.xlu0 %5483, %v5167
      %v5485 = vpop.permute.xlu0 %5484
      %5488 = vset.pattern.permute.xlu0 0
      %5489 = vperm.xlu0 %5488, %v5168
      %v5490 = vpop.permute.xlu0 %5489
      %5493 = vset.pattern.permute.xlu0 0
      %5494 = vperm.xlu0 %5493, %v5169
      %v5495 = vpop.permute.xlu0 %5494
      %5498 = vset.pattern.permute.xlu0 0
      %5499 = vperm.xlu0 %5498, %v5170
      %v5500 = vpop.permute.xlu0 %5499
      %5503 = vset.pattern.permute.xlu0 0
      %5504 = vperm.xlu0 %5503, %v5171
      %v5505 = vpop.permute.xlu0 %5504
      %5508 = vset.pattern.permute.xlu0 0
      %5509 = vperm.xlu0 %5508, %v5172
      %v5510 = vpop.permute.xlu0 %5509
      %5513 = vset.pattern.permute.xlu0 0
      %5514 = vperm.xlu0 %5513, %v5173
      %v5515 = vpop.permute.xlu0 %5514
      %5518 = vset.pattern.permute.xlu0 0
      %5519 = vperm.xlu0 %5518, %v5174
      %v5520 = vpop.permute.xlu0 %5519
      %5523 = vset.pattern.permute.xlu0 0
      %5524 = vperm.xlu0 %5523, %v5175
      %v5525 = vpop.permute.xlu0 %5524
      %5528 = vset.pattern.permute.xlu0 0
      %5529 = vperm.xlu0 %5528, %v5176
      %v5530 = vpop.permute.xlu0 %5529
      %5533 = vset.pattern.permute.xlu0 0
      %5534 = vperm.xlu0 %5533, %v5177
      %v5535 = vpop.permute.xlu0 %5534
      %5538 = vset.pattern.permute.xlu0 0
      %5539 = vperm.xlu0 %5538, %v5178
      %v5540 = vpop.permute.xlu0 %5539
      %5543 = vset.pattern.permute.xlu0 0
      %5544 = vperm.xlu0 %5543, %v5179
      %v5545 = vpop.permute.xlu0 %5544
      %5548 = vset.pattern.permute.xlu0 0
      %5549 = vperm.xlu0 %5548, %v5180
      %v5550 = vpop.permute.xlu0 %5549
      %5553 = vset.pattern.permute.xlu0 0
      %5554 = vperm.xlu0 %5553, %v5181
      %v5555 = vpop.permute.xlu0 %5554
      %v5557 = vmul.f32 %v4429, %v5185
      %v5558 = vmul.f32 %v4432, %v5190
      %v5559 = vmul.f32 %v4437, %v5195
      %v5560 = vmul.f32 %v4440, %v5200
      %v5561 = vmul.f32 %v4445, %v5205
      %v5562 = vmul.f32 %v4448, %v5210
      %v5563 = vmul.f32 %v4453, %v5215
      %v5564 = vmul.f32 %v4456, %v5220
      %v5565 = vmul.f32 %v4461, %v5225
      %v5566 = vmul.f32 %v4464, %v5230
      %v5567 = vmul.f32 %v4469, %v5235
      %v5568 = vmul.f32 %v4472, %v5240
      %v5569 = vmul.f32 %v4477, %v5245
      %v5570 = vmul.f32 %v4480, %v5250
      %v5571 = vmul.f32 %v4485, %v5255
      %v5572 = vmul.f32 %v4488, %v5260
      %v5573 = vmul.f32 %v4493, %v5265
      %v5574 = vmul.f32 %v4496, %v5270
      %v5575 = vmul.f32 %v4501, %v5275
      %v5576 = vmul.f32 %v4504, %v5280
      %v5577 = vmul.f32 %v4509, %v5285
      %v5578 = vmul.f32 %v4512, %v5290
      %v5579 = vmul.f32 %v4517, %v5295
      %v5580 = vmul.f32 %v4520, %v5300
      %v5581 = vmul.f32 %v4525, %v5305
      %v5582 = vmul.f32 %v4528, %v5310
      %v5583 = vmul.f32 %v4533, %v5315
      %v5584 = vmul.f32 %v4536, %v5320
      %v5585 = vmul.f32 %v4541, %v5325
      %v5586 = vmul.f32 %v4544, %v5330
      %v5587 = vmul.f32 %v4549, %v5335
      %v5588 = vmul.f32 %v4552, %v5340
      %v5589 = vmul.f32 %v4557, %v5345
      %v5590 = vmul.f32 %v4560, %v5350
      %v5591 = vmul.f32 %v4565, %v5355
      %v5592 = vmul.f32 %v4568, %v5360
      %v5593 = vmul.f32 %v4573, %v5365
      %v5594 = vmul.f32 %v4576, %v5370
      %v5595 = vmul.f32 %v4581, %v5375
      %v5596 = vmul.f32 %v4584, %v5380
      %v5597 = vmul.f32 %v4589, %v5385
      %v5598 = vmul.f32 %v4592, %v5390
      %v5599 = vmul.f32 %v4597, %v5395
      %v5600 = vmul.f32 %v4600, %v5400
      %v5601 = vmul.f32 %v4605, %v5405
      %v5602 = vmul.f32 %v4608, %v5410
      %v5603 = vmul.f32 %v4613, %v5415
      %v5604 = vmul.f32 %v4616, %v5420
      %v5605 = vmul.f32 %v4621, %v5425
      %v5606 = vmul.f32 %v4624, %v5430
      %v5607 = vmul.f32 %v4629, %v5435
      %v5608 = vmul.f32 %v4632, %v5440
      %v5609 = vmul.f32 %v4637, %v5445
      %v5610 = vmul.f32 %v4640, %v5450
      %v5611 = vmul.f32 %v4645, %v5455
      %v5612 = vmul.f32 %v4648, %v5460
      %v5613 = vmul.f32 %v4653, %v5465
      %v5614 = vmul.f32 %v4656, %v5470
      %v5615 = vmul.f32 %v4661, %v5475
      %v5616 = vmul.f32 %v4664, %v5480
      %v5617 = vmul.f32 %v4669, %v5485
      %v5618 = vmul.f32 %v4672, %v5490
      %v5619 = vmul.f32 %v4677, %v5495
      %v5620 = vmul.f32 %v4680, %v5500
      %v5621 = vmul.f32 %v4685, %v5505
      %v5622 = vmul.f32 %v4688, %v5510
      %v5623 = vmul.f32 %v4693, %v5515
      %v5624 = vmul.f32 %v4696, %v5520
      %v5625 = vmul.f32 %v4701, %v5525
      %v5626 = vmul.f32 %v4704, %v5530
      %v5627 = vmul.f32 %v4709, %v5535
      %v5628 = vmul.f32 %v4712, %v5540
      %v5629 = vmul.f32 %v4717, %v5545
      %v5630 = vmul.f32 %v4720, %v5550
      %v5631 = vmul.f32 %v4725, %v5555
      %v5632 = vsel %vm1737, %v5557, 0.0
      %v5633 = vsel %vm1737, %v5558, 0.0
      %v5634 = vadd.f32 %v5632, %v5633
      %v5635 = vsel %vm1737, %v5559, 0.0
      %v5636 = vadd.f32 %v5634, %v5635
      %v5637 = vsel %vm1737, %v5560, 0.0
      %v5638 = vadd.f32 %v5636, %v5637
      %v5639 = vsel %vm1737, %v5561, 0.0
      %v5640 = vadd.f32 %v5638, %v5639
      %v5641 = vsel %vm1737, %v5562, 0.0
      %v5642 = vadd.f32 %v5640, %v5641
      %v5643 = vsel %vm1737, %v5563, 0.0
      %v5644 = vadd.f32 %v5642, %v5643
      %v5645 = vsel %vm1737, %v5564, 0.0
      %v5646 = vadd.f32 %v5644, %v5645
      %v5647 = vsel %vm1737, %v5565, 0.0
      %v5648 = vadd.f32 %v5646, %v5647
      %v5649 = vsel %vm1737, %v5566, 0.0
      %v5650 = vadd.f32 %v5648, %v5649
      %v5651 = vsel %vm1737, %v5567, 0.0
      %v5652 = vadd.f32 %v5650, %v5651
      %v5653 = vsel %vm1737, %v5568, 0.0
      %v5654 = vadd.f32 %v5652, %v5653
      %v5655 = vsel %vm1737, %v5569, 0.0
      %v5656 = vadd.f32 %v5654, %v5655
      %v5657 = vsel %vm1737, %v5570, 0.0
      %v5658 = vadd.f32 %v5656, %v5657
      %v5659 = vsel %vm1737, %v5571, 0.0
      %v5660 = vadd.f32 %v5658, %v5659
      %v5661 = vsel %vm1737, %v5572, 0.0
      %v5662 = vadd.f32 %v5660, %v5661
      %v5663 = vsel %vm1737, %v5573, 0.0
      %v5664 = vadd.f32 %v5662, %v5663
      %v5665 = vsel %vm1737, %v5574, 0.0
      %v5666 = vadd.f32 %v5664, %v5665
      %v5667 = vsel %vm1737, %v5575, 0.0
      %v5668 = vadd.f32 %v5666, %v5667
      %v5669 = vsel %vm1737, %v5576, 0.0
      %v5670 = vadd.f32 %v5668, %v5669
      %v5671 = vsel %vm1737, %v5577, 0.0
      %v5672 = vadd.f32 %v5670, %v5671
      %v5673 = vsel %vm1737, %v5578, 0.0
      %v5674 = vadd.f32 %v5672, %v5673
      %v5675 = vsel %vm1737, %v5579, 0.0
      %v5676 = vadd.f32 %v5674, %v5675
      %v5677 = vsel %vm1737, %v5580, 0.0
      %v5678 = vadd.f32 %v5676, %v5677
      %v5679 = vsel %vm1737, %v5581, 0.0
      %v5680 = vadd.f32 %v5678, %v5679
      %v5681 = vsel %vm1737, %v5582, 0.0
      %v5682 = vadd.f32 %v5680, %v5681
      %v5683 = vsel %vm1737, %v5583, 0.0
      %v5684 = vadd.f32 %v5682, %v5683
      %v5685 = vsel %vm1737, %v5584, 0.0
      %v5686 = vadd.f32 %v5684, %v5685
      %v5687 = vsel %vm1737, %v5585, 0.0
      %v5688 = vadd.f32 %v5686, %v5687
      %v5689 = vsel %vm1737, %v5586, 0.0
      %v5690 = vadd.f32 %v5688, %v5689
      %v5691 = vsel %vm1737, %v5587, 0.0
      %v5692 = vadd.f32 %v5690, %v5691
      %v5693 = vsel %vm1737, %v5588, 0.0
      %v5694 = vadd.f32 %v5692, %v5693
      %v5695 = vsel %vm1737, %v5589, 0.0
      %v5696 = vadd.f32 %v5694, %v5695
      %v5697 = vsel %vm1737, %v5590, 0.0
      %v5698 = vadd.f32 %v5696, %v5697
      %v5699 = vsel %vm1737, %v5591, 0.0
      %v5700 = vadd.f32 %v5698, %v5699
      %v5701 = vsel %vm1737, %v5592, 0.0
      %v5702 = vadd.f32 %v5700, %v5701
      %v5703 = vsel %vm1737, %v5593, 0.0
      %v5704 = vadd.f32 %v5702, %v5703
      %v5705 = vsel %vm1737, %v5594, 0.0
      %v5706 = vadd.f32 %v5704, %v5705
      %v5707 = vsel %vm1737, %v5595, 0.0
      %v5708 = vadd.f32 %v5706, %v5707
      %v5709 = vsel %vm1737, %v5596, 0.0
      %v5710 = vadd.f32 %v5708, %v5709
      %v5711 = vsel %vm1737, %v5597, 0.0
      %v5712 = vadd.f32 %v5710, %v5711
      %v5713 = vsel %vm1737, %v5598, 0.0
      %v5714 = vadd.f32 %v5712, %v5713
      %v5715 = vsel %vm1737, %v5599, 0.0
      %v5716 = vadd.f32 %v5714, %v5715
      %v5717 = vsel %vm1737, %v5600, 0.0
      %v5718 = vadd.f32 %v5716, %v5717
      %v5719 = vsel %vm1737, %v5601, 0.0
      %v5720 = vadd.f32 %v5718, %v5719
      %v5721 = vsel %vm1737, %v5602, 0.0
      %v5722 = vadd.f32 %v5720, %v5721
      %v5723 = vsel %vm1737, %v5603, 0.0
      %v5724 = vadd.f32 %v5722, %v5723
      %v5725 = vsel %vm1737, %v5604, 0.0
      %v5726 = vadd.f32 %v5724, %v5725
      %v5727 = vsel %vm1737, %v5605, 0.0
      %v5728 = vadd.f32 %v5726, %v5727
      %v5729 = vsel %vm1737, %v5606, 0.0
      %v5730 = vadd.f32 %v5728, %v5729
      %v5731 = vsel %vm1737, %v5607, 0.0
      %v5732 = vadd.f32 %v5730, %v5731
      %v5733 = vsel %vm1737, %v5608, 0.0
      %v5734 = vadd.f32 %v5732, %v5733
      %v5735 = vsel %vm1737, %v5609, 0.0
      %v5736 = vadd.f32 %v5734, %v5735
      %v5737 = vsel %vm1737, %v5610, 0.0
      %v5738 = vadd.f32 %v5736, %v5737
      %v5739 = vsel %vm1737, %v5611, 0.0
      %v5740 = vadd.f32 %v5738, %v5739
      %v5741 = vsel %vm1737, %v5612, 0.0
      %v5742 = vadd.f32 %v5740, %v5741
      %v5743 = vsel %vm1737, %v5613, 0.0
      %v5744 = vadd.f32 %v5742, %v5743
      %v5745 = vsel %vm1737, %v5614, 0.0
      %v5746 = vadd.f32 %v5744, %v5745
      %v5747 = vsel %vm1737, %v5615, 0.0
      %v5748 = vadd.f32 %v5746, %v5747
      %v5749 = vsel %vm1737, %v5616, 0.0
      %v5750 = vadd.f32 %v5748, %v5749
      %v5751 = vsel %vm1737, %v5617, 0.0
      %v5752 = vadd.f32 %v5750, %v5751
      %v5753 = vsel %vm1737, %v5618, 0.0
      %v5754 = vadd.f32 %v5752, %v5753
      %v5755 = vsel %vm1737, %v5619, 0.0
      %v5756 = vadd.f32 %v5754, %v5755
      %v5757 = vsel %vm1737, %v5620, 0.0
      %v5758 = vadd.f32 %v5756, %v5757
      %v5759 = vsel %vm1737, %v5621, 0.0
      %v5760 = vadd.f32 %v5758, %v5759
      %v5761 = vsel %vm1737, %v5622, 0.0
      %v5762 = vadd.f32 %v5760, %v5761
      %v5763 = vsel %vm1737, %v5623, 0.0
      %v5764 = vadd.f32 %v5762, %v5763
      %v5765 = vsel %vm1737, %v5624, 0.0
      %v5766 = vadd.f32 %v5764, %v5765
      %v5767 = vsel %vm1737, %v5625, 0.0
      %v5768 = vadd.f32 %v5766, %v5767
      %v5769 = vsel %vm1737, %v5626, 0.0
      %v5770 = vadd.f32 %v5768, %v5769
      %v5771 = vsel %vm1737, %v5627, 0.0
      %v5772 = vadd.f32 %v5770, %v5771
      %v5773 = vsel %vm1737, %v5628, 0.0
      %v5774 = vadd.f32 %v5772, %v5773
      %v5775 = vsel %vm1737, %v5629, 0.0
      %v5776 = vadd.f32 %v5774, %v5775
      %v5777 = vsel %vm1737, %v5630, 0.0
      %v5778 = vadd.f32 %v5776, %v5777
      %v5779 = vsel %vm1737, %v5631, 0.0
      %v5780 = vadd.f32 %v5778, %v5779
      %v5781 = vrot.slane %v5780, 4
      %v5782 = vadd.f32 %v5780, %v5781
      %v5783 = vrot.slane %v5782, 2
      %v5784 = vadd.f32 %v5782, %v5783
      %v5785 = vrot.slane %v5784, 1
      %v5786 = vadd.f32 %v5784, %v5785
      %v5787 = vmul.f32 %v5557, %v4429
      %v5788 = vmul.f32 %v5558, %v4432
      %v5789 = vmul.f32 %v5559, %v4437
      %v5790 = vmul.f32 %v5560, %v4440
      %v5791 = vmul.f32 %v5561, %v4445
      %v5792 = vmul.f32 %v5562, %v4448
      %v5793 = vmul.f32 %v5563, %v4453
      %v5794 = vmul.f32 %v5564, %v4456
      %v5795 = vmul.f32 %v5565, %v4461
      %v5796 = vmul.f32 %v5566, %v4464
      %v5797 = vmul.f32 %v5567, %v4469
      %v5798 = vmul.f32 %v5568, %v4472
      %v5799 = vmul.f32 %v5569, %v4477
      %v5800 = vmul.f32 %v5570, %v4480
      %v5801 = vmul.f32 %v5571, %v4485
      %v5802 = vmul.f32 %v5572, %v4488
      %v5803 = vmul.f32 %v5573, %v4493
      %v5804 = vmul.f32 %v5574, %v4496
      %v5805 = vmul.f32 %v5575, %v4501
      %v5806 = vmul.f32 %v5576, %v4504
      %v5807 = vmul.f32 %v5577, %v4509
      %v5808 = vmul.f32 %v5578, %v4512
      %v5809 = vmul.f32 %v5579, %v4517
      %v5810 = vmul.f32 %v5580, %v4520
      %v5811 = vmul.f32 %v5581, %v4525
      %v5812 = vmul.f32 %v5582, %v4528
      %v5813 = vmul.f32 %v5583, %v4533
      %v5814 = vmul.f32 %v5584, %v4536
      %v5815 = vmul.f32 %v5585, %v4541
      %v5816 = vmul.f32 %v5586, %v4544
      %v5817 = vmul.f32 %v5587, %v4549
      %v5818 = vmul.f32 %v5588, %v4552
      %v5819 = vmul.f32 %v5589, %v4557
      %v5820 = vmul.f32 %v5590, %v4560
      %v5821 = vmul.f32 %v5591, %v4565
      %v5822 = vmul.f32 %v5592, %v4568
      %v5823 = vmul.f32 %v5593, %v4573
      %v5824 = vmul.f32 %v5594, %v4576
      %v5825 = vmul.f32 %v5595, %v4581
      %v5826 = vmul.f32 %v5596, %v4584
      %v5827 = vmul.f32 %v5597, %v4589
      %v5828 = vmul.f32 %v5598, %v4592
      %v5829 = vmul.f32 %v5599, %v4597
      %v5830 = vmul.f32 %v5600, %v4600
      %v5831 = vmul.f32 %v5601, %v4605
      %v5832 = vmul.f32 %v5602, %v4608
      %v5833 = vmul.f32 %v5603, %v4613
      %v5834 = vmul.f32 %v5604, %v4616
      %v5835 = vmul.f32 %v5605, %v4621
      %v5836 = vmul.f32 %v5606, %v4624
      %v5837 = vmul.f32 %v5607, %v4629
      %v5838 = vmul.f32 %v5608, %v4632
      %v5839 = vmul.f32 %v5609, %v4637
      %v5840 = vmul.f32 %v5610, %v4640
      %v5841 = vmul.f32 %v5611, %v4645
      %v5842 = vmul.f32 %v5612, %v4648
      %v5843 = vmul.f32 %v5613, %v4653
      %v5844 = vmul.f32 %v5614, %v4656
      %v5845 = vmul.f32 %v5615, %v4661
      %v5846 = vmul.f32 %v5616, %v4664
      %v5847 = vmul.f32 %v5617, %v4669
      %v5848 = vmul.f32 %v5618, %v4672
      %v5849 = vmul.f32 %v5619, %v4677
      %v5850 = vmul.f32 %v5620, %v4680
      %v5851 = vmul.f32 %v5621, %v4685
      %v5852 = vmul.f32 %v5622, %v4688
      %v5853 = vmul.f32 %v5623, %v4693
      %v5854 = vmul.f32 %v5624, %v4696
      %v5855 = vmul.f32 %v5625, %v4701
      %v5856 = vmul.f32 %v5626, %v4704
      %v5857 = vmul.f32 %v5627, %v4709
      %v5858 = vmul.f32 %v5628, %v4712
      %v5859 = vmul.f32 %v5629, %v4717
      %v5860 = vmul.f32 %v5630, %v4720
      %v5861 = vmul.f32 %v5631, %v4725
      %v5862 = vsel %vm1737, %v5787, 0.0
      %v5863 = vsel %vm1737, %v5788, 0.0
      %v5864 = vadd.f32 %v5862, %v5863
      %v5865 = vsel %vm1737, %v5789, 0.0
      %v5866 = vadd.f32 %v5864, %v5865
      %v5867 = vsel %vm1737, %v5790, 0.0
      %v5868 = vadd.f32 %v5866, %v5867
      %v5869 = vsel %vm1737, %v5791, 0.0
      %v5870 = vadd.f32 %v5868, %v5869
      %v5871 = vsel %vm1737, %v5792, 0.0
      %v5872 = vadd.f32 %v5870, %v5871
      %v5873 = vsel %vm1737, %v5793, 0.0
      %v5874 = vadd.f32 %v5872, %v5873
      %v5875 = vsel %vm1737, %v5794, 0.0
      %v5876 = vadd.f32 %v5874, %v5875
      %v5877 = vsel %vm1737, %v5795, 0.0
      %v5878 = vadd.f32 %v5876, %v5877
      %v5879 = vsel %vm1737, %v5796, 0.0
      %v5880 = vadd.f32 %v5878, %v5879
      %v5881 = vsel %vm1737, %v5797, 0.0
      %v5882 = vadd.f32 %v5880, %v5881
      %v5883 = vsel %vm1737, %v5798, 0.0
      %v5884 = vadd.f32 %v5882, %v5883
      %v5885 = vsel %vm1737, %v5799, 0.0
      %v5886 = vadd.f32 %v5884, %v5885
      %v5887 = vsel %vm1737, %v5800, 0.0
      %v5888 = vadd.f32 %v5886, %v5887
      %v5889 = vsel %vm1737, %v5801, 0.0
      %v5890 = vadd.f32 %v5888, %v5889
      %v5891 = vsel %vm1737, %v5802, 0.0
      %v5892 = vadd.f32 %v5890, %v5891
      %v5893 = vsel %vm1737, %v5803, 0.0
      %v5894 = vadd.f32 %v5892, %v5893
      %v5895 = vsel %vm1737, %v5804, 0.0
      %v5896 = vadd.f32 %v5894, %v5895
      %v5897 = vsel %vm1737, %v5805, 0.0
      %v5898 = vadd.f32 %v5896, %v5897
      %v5899 = vsel %vm1737, %v5806, 0.0
      %v5900 = vadd.f32 %v5898, %v5899
      %v5901 = vsel %vm1737, %v5807, 0.0
      %v5902 = vadd.f32 %v5900, %v5901
      %v5903 = vsel %vm1737, %v5808, 0.0
      %v5904 = vadd.f32 %v5902, %v5903
      %v5905 = vsel %vm1737, %v5809, 0.0
      %v5906 = vadd.f32 %v5904, %v5905
      %v5907 = vsel %vm1737, %v5810, 0.0
      %v5908 = vadd.f32 %v5906, %v5907
      %v5909 = vsel %vm1737, %v5811, 0.0
      %v5910 = vadd.f32 %v5908, %v5909
      %v5911 = vsel %vm1737, %v5812, 0.0
      %v5912 = vadd.f32 %v5910, %v5911
      %v5913 = vsel %vm1737, %v5813, 0.0
      %v5914 = vadd.f32 %v5912, %v5913
      %v5915 = vsel %vm1737, %v5814, 0.0
      %v5916 = vadd.f32 %v5914, %v5915
      %v5917 = vsel %vm1737, %v5815, 0.0
      %v5918 = vadd.f32 %v5916, %v5917
      %v5919 = vsel %vm1737, %v5816, 0.0
      %v5920 = vadd.f32 %v5918, %v5919
      %v5921 = vsel %vm1737, %v5817, 0.0
      %v5922 = vadd.f32 %v5920, %v5921
      %v5923 = vsel %vm1737, %v5818, 0.0
      %v5924 = vadd.f32 %v5922, %v5923
      %v5925 = vsel %vm1737, %v5819, 0.0
      %v5926 = vadd.f32 %v5924, %v5925
      %v5927 = vsel %vm1737, %v5820, 0.0
      %v5928 = vadd.f32 %v5926, %v5927
      %v5929 = vsel %vm1737, %v5821, 0.0
      %v5930 = vadd.f32 %v5928, %v5929
      %v5931 = vsel %vm1737, %v5822, 0.0
      %v5932 = vadd.f32 %v5930, %v5931
      %v5933 = vsel %vm1737, %v5823, 0.0
      %v5934 = vadd.f32 %v5932, %v5933
      %v5935 = vsel %vm1737, %v5824, 0.0
      %v5936 = vadd.f32 %v5934, %v5935
      %v5937 = vsel %vm1737, %v5825, 0.0
      %v5938 = vadd.f32 %v5936, %v5937
      %v5939 = vsel %vm1737, %v5826, 0.0
      %v5940 = vadd.f32 %v5938, %v5939
      %v5941 = vsel %vm1737, %v5827, 0.0
      %v5942 = vadd.f32 %v5940, %v5941
      %v5943 = vsel %vm1737, %v5828, 0.0
      %v5944 = vadd.f32 %v5942, %v5943
      %v5945 = vsel %vm1737, %v5829, 0.0
      %v5946 = vadd.f32 %v5944, %v5945
      %v5947 = vsel %vm1737, %v5830, 0.0
      %v5948 = vadd.f32 %v5946, %v5947
      %v5949 = vsel %vm1737, %v5831, 0.0
      %v5950 = vadd.f32 %v5948, %v5949
      %v5951 = vsel %vm1737, %v5832, 0.0
      %v5952 = vadd.f32 %v5950, %v5951
      %v5953 = vsel %vm1737, %v5833, 0.0
      %v5954 = vadd.f32 %v5952, %v5953
      %v5955 = vsel %vm1737, %v5834, 0.0
      %v5956 = vadd.f32 %v5954, %v5955
      %v5957 = vsel %vm1737, %v5835, 0.0
      %v5958 = vadd.f32 %v5956, %v5957
      %v5959 = vsel %vm1737, %v5836, 0.0
      %v5960 = vadd.f32 %v5958, %v5959
      %v5961 = vsel %vm1737, %v5837, 0.0
      %v5962 = vadd.f32 %v5960, %v5961
      %v5963 = vsel %vm1737, %v5838, 0.0
      %v5964 = vadd.f32 %v5962, %v5963
      %v5965 = vsel %vm1737, %v5839, 0.0
      %v5966 = vadd.f32 %v5964, %v5965
      %v5967 = vsel %vm1737, %v5840, 0.0
      %v5968 = vadd.f32 %v5966, %v5967
      %v5969 = vsel %vm1737, %v5841, 0.0
      %v5970 = vadd.f32 %v5968, %v5969
      %v5971 = vsel %vm1737, %v5842, 0.0
      %v5972 = vadd.f32 %v5970, %v5971
      %v5973 = vsel %vm1737, %v5843, 0.0
      %v5974 = vadd.f32 %v5972, %v5973
      %v5975 = vsel %vm1737, %v5844, 0.0
      %v5976 = vadd.f32 %v5974, %v5975
      %v5977 = vsel %vm1737, %v5845, 0.0
      %v5978 = vadd.f32 %v5976, %v5977
      %v5979 = vsel %vm1737, %v5846, 0.0
      %v5980 = vadd.f32 %v5978, %v5979
      %v5981 = vsel %vm1737, %v5847, 0.0
      %v5982 = vadd.f32 %v5980, %v5981
      %v5983 = vsel %vm1737, %v5848, 0.0
      %v5984 = vadd.f32 %v5982, %v5983
      %v5985 = vsel %vm1737, %v5849, 0.0
      %v5986 = vadd.f32 %v5984, %v5985
      %v5987 = vsel %vm1737, %v5850, 0.0
      %v5988 = vadd.f32 %v5986, %v5987
      %v5989 = vsel %vm1737, %v5851, 0.0
      %v5990 = vadd.f32 %v5988, %v5989
      %v5991 = vsel %vm1737, %v5852, 0.0
      %v5992 = vadd.f32 %v5990, %v5991
      %v5993 = vsel %vm1737, %v5853, 0.0
      %v5994 = vadd.f32 %v5992, %v5993
      %v5995 = vsel %vm1737, %v5854, 0.0
      %v5996 = vadd.f32 %v5994, %v5995
      %v5997 = vsel %vm1737, %v5855, 0.0
      %v5998 = vadd.f32 %v5996, %v5997
      %v5999 = vsel %vm1737, %v5856, 0.0
      %v6000 = vadd.f32 %v5998, %v5999
      %v6001 = vsel %vm1737, %v5857, 0.0
      %v6002 = vadd.f32 %v6000, %v6001
      %v6003 = vsel %vm1737, %v5858, 0.0
      %v6004 = vadd.f32 %v6002, %v6003
      %v6005 = vsel %vm1737, %v5859, 0.0
      %v6006 = vadd.f32 %v6004, %v6005
      %v6007 = vsel %vm1737, %v5860, 0.0
      %v6008 = vadd.f32 %v6006, %v6007
      %v6009 = vsel %vm1737, %v5861, 0.0
      %v6010 = vadd.f32 %v6008, %v6009
      %v6011 = vrot.slane %v6010, 4
      %v6012 = vadd.f32 %v6010, %v6011
      %v6013 = vrot.slane %v6012, 2
      %v6014 = vadd.f32 %v6012, %v6013
      %v6015 = vrot.slane %v6014, 1
      %v6016 = vadd.f32 %v6014, %v6015
      %6017 = vst.msk [vmem:[%s388] sm:$0xff] %vm1737, %v5786
      %6018 = vst.msk [vmem:[%s396] sm:$0xff] %vm1737, %v6016
      %s6019 = smul.u32 75, %s23
      %p6020 = scmp.lt.s32.totalorder %s22, 1
      %s6021 = scalar_select %p6020, %s22, 1
      %p6022 = scmp.lt.s32.totalorder %s6019, 149
      %s6023 = scalar_select %p6022, %s6019, 149
      %s6024 = smul.addr %s6021, 150
      %s6025 = sadd.s32 %s6023, %s6024
      %s6026 = smul.addr %s6025, 4
      %s6027 = scalar_lea.vmem %s4, %s6026
      %p6028 = scmp.lt.s32.totalorder %s22, 1
      %s6029 = scalar_select %p6028, %s22, 1
      %p6030 = scmp.lt.s32.totalorder %s23, 1
      %s6031 = scalar_select %p6030, %s23, 1
      %s6032 = smul.addr %s6029, 2
      %s6033 = sadd.s32 %s6031, %s6032
      %s6034 = smul.addr %s6033, 8
      %s6035 = scalar_lea.vmem %s5, %s6034
      %p6036 = scmp.lt.s32.totalorder %s22, 1
      %s6037 = scalar_select %p6036, %s22, 1
      %p6038 = scmp.lt.s32.totalorder %s23, 1
      %s6039 = scalar_select %p6038, %s23, 1
      %s6040 = smul.addr %s6037, 2
      %s6041 = sadd.s32 %s6039, %s6040
      %s6042 = smul.addr %s6041, 8
      %s6043 = scalar_lea.vmem %s6, %s6042
      // Predicated region
      $region37: #{double_conv_forward.6} parent=35 // pred_check
        %p6044 = pneg %p155
      $region38: #{double_conv_forward.6} parent=35 // pred_check_branch
        %6046 = sbr.rel (%p6044) target = $region40
      $region39: #{double_conv_forward.6} parent=35 // pred_region
        %s6047 = smul.u32 75, %s23
      $region40: #{double_conv_forward.6} parent=35 // pred_fallthru
        _
      // Predicated region
      $region41: #{double_conv_forward.6} parent=35 // pred_check
        %p6048 = pneg %p183
      $region42: #{double_conv_forward.6} parent=35 // pred_check_branch
        %6050 = sbr.rel (%p6048) target = $region44
      $region43: #{double_conv_forward.6} parent=35 // pred_region
        _
      $region44: #{double_conv_forward.6} parent=35 // pred_fallthru
        _
      // Predicated region
      $region45: #{double_conv_forward.6} parent=35 // pred_check
        %p6051 = pneg %p211
      $region46: #{double_conv_forward.6} parent=35 // pred_check_branch
        %6053 = sbr.rel (%p6051) target = $region48
      $region47: #{double_conv_forward.6} parent=35 // pred_region
        _
      $region48: #{double_conv_forward.6} parent=35 // pred_fallthru
        _
    $region36: #{double_conv_forward.6} parent=5 // pred_fallthru
      _
    %p6054 = scmp.le.s32.totalorder 2, %s13
    // Predicated region
    $region49: #{double_conv_forward.6} parent=5 // pred_check
      %p6055 = pneg %p6054
    $region50: #{double_conv_forward.6} parent=5 // pred_check_branch
      %6057 = sbr.rel (%p6055) target = $region52
    $region51: #{double_conv_forward.6} parent=5 // pred_region
      %s6058 = ssub.s32 %s13, 2
      // Predicated region
      $region53: #{double_conv_forward.6} parent=51 // pred_check
        %p6059 = pneg %p161
      $region54: #{double_conv_forward.6} parent=51 // pred_check_branch
        %6061 = sbr.rel (%p6059) target = $region56
      $region55: #{double_conv_forward.6} parent=51 // pred_region
        %s6062 = smul.u32 75, %s25
        %p6063 = scmp.lt.s32.totalorder %s24, 1
        %s6064 = scalar_select %p6063, %s24, 1
        %p6065 = scmp.lt.s32.totalorder %s6062, 149
        %s6066 = scalar_select %p6065, %s6062, 149
        %s6067 = smul.addr %s6064, 150
        %s6068 = sadd.s32 %s6066, %s6067
        %s6069 = smul.addr %s6068, 4
        %s6070 = scalar_lea.vmem %s4, %s6069
      $region56: #{double_conv_forward.6} parent=51 // pred_fallthru
        _
      // Predicated region
      $region57: #{double_conv_forward.6} parent=51 // pred_check
        %p6071 = pneg %p189
      $region58: #{double_conv_forward.6} parent=51 // pred_check_branch
        %6073 = sbr.rel (%p6071) target = $region60
      $region59: #{double_conv_forward.6} parent=51 // pred_region
        %p6074 = scmp.lt.s32.totalorder %s24, 1
        %s6075 = scalar_select %p6074, %s24, 1
        %p6076 = scmp.lt.s32.totalorder %s25, 1
        %s6077 = scalar_select %p6076, %s25, 1
        %s6078 = smul.addr %s6075, 2
        %s6079 = sadd.s32 %s6077, %s6078
        %s6080 = smul.addr %s6079, 8
        %s6081 = scalar_lea.vmem %s5, %s6080
      $region60: #{double_conv_forward.6} parent=51 // pred_fallthru
        _
      // Predicated region
      $region61: #{double_conv_forward.6} parent=51 // pred_check
        %p6082 = pneg %p217
      $region62: #{double_conv_forward.6} parent=51 // pred_check_branch
        %6084 = sbr.rel (%p6082) target = $region64
      $region63: #{double_conv_forward.6} parent=51 // pred_region
        %p6085 = scmp.lt.s32.totalorder %s24, 1
        %s6086 = scalar_select %p6085, %s24, 1
        %p6087 = scmp.lt.s32.totalorder %s25, 1
        %s6088 = scalar_select %p6087, %s25, 1
        %s6089 = smul.addr %s6086, 2
        %s6090 = sadd.s32 %s6088, %s6089
        %s6091 = smul.addr %s6090, 8
        %s6092 = scalar_lea.vmem %s6, %s6091
      $region64: #{double_conv_forward.6} parent=51 // pred_fallthru
        _
    $region52: #{double_conv_forward.6} parent=5 // pred_fallthru
      _
  $region6: #{double_conv_forward.6} parent=0 // loop_footer
    %s17 = sadd.s32 1, %s13
  $region7: #{double_conv_forward.6} parent=0 // loop_footer_branch
    %12 = sbr.rel target = $region3
  $region8: #{double_conv_forward.6} parent=0 // loop_exit
    _

</llo_original>
